<compile_context>
chip_gen: v5e
topology: v5e:2x2
jax: 0.10.0
libtpu: 0.0.40
codegen_flags: <defaults>
</compile_context>

<pallas_src>
import functools

import jax
import jax.numpy as jnp
from jax.experimental import pallas as pl
from jax.experimental.pallas import tpu as pltpu


_VMEM_LIMIT = 48 * 1024 * 1024          # <= v7x 64 MiB physical VMEM
_W_RESIDENT_BYTES = 4 * 1024 * 1024     # keep W resident (K-invariant) below this


def _round_up(x, m):
    return (x + m - 1) // m * m


def _choose_tile_m(m, cp):
    """Pick (tm, Mp).  Full-dim blocks for tiny M (no pad/slice)."""
    cap = 1024 if cp <= 128 else 512
    if m % 8 == 0:
        for t in (1024, 512, 256, 128, 64, 32, 16, 8):
            if t <= cap and t <= m and m % t == 0:
                return t, m
    if m <= cap:                          # block dim == full array dim is legal
        return m, m
    mp = _round_up(m, 8)
    for t in (1024, 512, 256, 128, 64, 32, 16, 8):
        if t <= cap and t <= mp and mp % t == 0:
            return t, mp
    return 8, _round_up(m, 8)


# ----------------------------------------------------------------------------
# Pallas kernels
# ----------------------------------------------------------------------------
def _mm_kernel(a_ref, w_ref, b_ref, o_ref, s_ref, acc_ref, *,
               out_act, emit_stats, w_resident, tk):
    """(g, m, k) grid step of  out[g] = out_act(A[g] @ W[g] + b) plus fused
    per-channel [sum; sumsq] BatchNorm partials of the pre-activation output.

    a_ref:(tm,tk) bf16   w_ref:(tk|Kp,Cp) bf16   b_ref:(1,Cp) f32
    o_ref:(tm,Cp)        s_ref:(2,Cp) f32        acc_ref:(tm,Cp) f32 scratch
    """
    k = pl.program_id(2)

    @pl.when(k == 0)
    def _():
        acc_ref[...] = jnp.zeros_like(acc_ref)

    if w_resident:
        wk = w_ref[pl.ds(pl.multiple_of(k * tk, tk), tk), :]
    else:
        wk = w_ref[...]
    acc_ref[...] += jnp.dot(a_ref[...], wk, preferred_element_type=jnp.float32)

    @pl.when(k == pl.num_programs(2) - 1)
    def _():
        y = acc_ref[...] + b_ref[...]
        if emit_stats:                     # BN stats on the pre-activation output
            s_ref[0:1, :] = jnp.sum(y, axis=0, keepdims=True)
            s_ref[1:2, :] = jnp.sum(y * y, axis=0, keepdims=True)
        else:
            s_ref[...] = jnp.zeros_like(s_ref)
        if out_act == "tanh":
            y = jnp.tanh(y)
        elif out_act == "relu":
            y = jnp.maximum(y, 0.0)
        o_ref[...] = y.astype(o_ref.dtype)


def _bn_apply_kernel(x_ref, sc_ref, sh_ref, o_ref):
    x = x_ref[...].astype(jnp.float32)
    o_ref[...] = (x * sc_ref[...] + sh_ref[...]).astype(o_ref.dtype)


# ----------------------------------------------------------------------------
# Kernel wrappers
# ----------------------------------------------------------------------------
def conv_matmul(a, w, b, out_act="none", emit_stats=True, out_dtype=jnp.bfloat16):
    """a:(G,M,K) bf16, w:(G,K,C), b:(C,) -> (y:(G,M,Cp) out_dtype, stats:(G,nm,2,Cp) f32)."""
    G, M, K = a.shape
    C = w.shape[-1]
    Cp = _round_up(C, 128)
    Kp = _round_up(K, 128)

    if Kp <= 1024:
        tk = Kp
    else:
        tk = next(c for c in (1024, 512, 256, 128) if Kp % c == 0)
    tm, Mp = _choose_tile_m(M, Cp)
    nm, nk = Mp // tm, Kp // tk

    a_p = a
    if (Mp, Kp) != (M, K):
        a_p = jnp.pad(a, ((0, 0), (0, Mp - M), (0, Kp - K)))
    a_p = a_p.astype(jnp.bfloat16)
    w_p = jnp.pad(w, ((0, 0), (0, Kp - K), (0, Cp - C))).astype(jnp.bfloat16)
    b_p = jnp.pad(b.astype(jnp.float32), (0, Cp - C)).reshape(1, Cp)

    w_resident = (Kp * Cp * 2) <= _W_RESIDENT_BYTES
    if w_resident:        # single W DMA per g, sliced along K inside the kernel
        w_spec = pl.BlockSpec((None, Kp, Cp), lambda g, i, k: (g, 0, 0))
    else:
        w_spec = pl.BlockSpec((None, tk, Cp), lambda g, i, k: (g, k, 0))

    kern = functools.partial(_mm_kernel, out_act=out_act, emit_stats=emit_stats,
                             w_resident=w_resident, tk=tk)
    y, stats = pl.pallas_call(
        kern,
        out_shape=(jax.ShapeDtypeStruct((G, Mp, Cp), out_dtype),
                   jax.ShapeDtypeStruct((G, nm, 2, Cp), jnp.float32)),
        grid=(G, nm, nk),
        in_specs=[
            pl.BlockSpec((None, tm, tk), lambda g, i, k: (g, i, k)),
            w_spec,
            pl.BlockSpec((1, Cp), lambda g, i, k: (0, 0)),
        ],
        out_specs=(pl.BlockSpec((None, tm, Cp), lambda g, i, k: (g, i, 0)),
                   pl.BlockSpec((None, None, 2, Cp), lambda g, i, k: (g, i, 0, 0))),
        scratch_shapes=[pltpu.VMEM((tm, Cp), jnp.float32)],
        compiler_params=pltpu.CompilerParams(
            dimension_semantics=("parallel", "parallel", "arbitrary"),
            vmem_limit_bytes=_VMEM_LIMIT),
    )(a_p, w_p, b_p)

    if Mp != M:
        y = y[:, :M]
    return y, stats


def batch_norm_apply(x_nhwc, c_real, stats, count, gamma, beta, eps=1e-5,
                     out_dtype=jnp.bfloat16):
    """Training-mode BatchNorm2d using stats partials fused into the conv kernel."""
    N, H, W, Cp = x_nhwc.shape
    s = jnp.sum(stats, axis=(0, 1))                      # (2, Cp), tiny
    mean = s[0, :c_real] / count
    # NOTE: single-pass E[x^2]-E[x]^2 in f32; clamped against tiny negatives.
    var = jnp.maximum(s[1, :c_real] / count - mean * mean, 0.0)
    inv = jax.lax.rsqrt(var + eps)
    scale = gamma * inv
    shift = beta - mean * scale
    scale = jnp.pad(scale, (0, Cp - c_real)).reshape(1, Cp).astype(jnp.float32)
    shift = jnp.pad(shift, (0, Cp - c_real)).reshape(1, Cp).astype(jnp.float32)

    M = N * H * W
    tm, Mp = _choose_tile_m(M, Cp)
    x2 = x_nhwc.reshape(M, Cp)
    if Mp != M:
        x2 = jnp.pad(x2, ((0, Mp - M), (0, 0)))

    y = pl.pallas_call(
        _bn_apply_kernel,
        out_shape=jax.ShapeDtypeStruct((Mp, Cp), out_dtype),
        grid=(Mp // tm,),
        in_specs=[pl.BlockSpec((tm, Cp), lambda i: (i, 0)),
                  pl.BlockSpec((1, Cp), lambda i: (0, 0)),
                  pl.BlockSpec((1, Cp), lambda i: (0, 0))],
        out_specs=pl.BlockSpec((tm, Cp), lambda i: (i, 0)),
        compiler_params=pltpu.CompilerParams(
            dimension_semantics=("parallel",),
            vmem_limit_bytes=_VMEM_LIMIT),
    )(x2, scale, shift)
    if Mp != M:
        y = y[:M]
    return y.reshape(N, H, W, Cp)


# ----------------------------------------------------------------------------
# JAX glue: conv / conv-transpose lowering to the fused matmul kernel
# ----------------------------------------------------------------------------
def _apply_act(x, act):
    if act == "lrelu":
        return jnp.where(x >= 0, x, 0.2 * x)
    if act == "relu":
        return jnp.maximum(x, jnp.zeros((), x.dtype))
    return x


def conv2d_s2(seg, w_torch, bias, act="none", out_act="none", emit_stats=True,
              out_dtype=jnp.bfloat16):
    """nn.Conv2d(Cin, Cout, 4, stride=2, padding=1).  seg=(arr(N,H,W,Cpad), Cin)."""
    x, C = seg
    N, H, W = x.shape[:3]
    cout = w_torch.shape[0]
    Ho, Wo = H // 2, W // 2

    xr = _apply_act(x[..., :C], act)                       # fused into tap gather
    xp = jnp.pad(xr, ((0, 0), (1, 1), (1, 1), (0, 0)))
    cols = []
    for kh in range(4):
        for kw in range(4):
            cols.append(xp[:, kh:kh + 2 * (Ho - 1) + 1:2,
                              kw:kw + 2 * (Wo - 1) + 1:2, :])
    a = jnp.concatenate(cols, axis=-1).reshape(N * Ho * Wo, 16 * C)
    wk = jnp.transpose(w_torch, (2, 3, 1, 0)).reshape(16 * C, cout)

    y, stats = conv_matmul(a[None], wk[None], bias, out_act=out_act,
                           emit_stats=emit_stats, out_dtype=out_dtype)
    Cp = y.shape[-1]
    return y[0].reshape(N, Ho, Wo, Cp), stats, N * Ho * Wo


def conv_transpose2d_s2(segs, w_torch, bias, act="relu", out_act="none",
                        emit_stats=True, out_dtype=jnp.bfloat16):
    """nn.ConvTranspose2d(Cin, Cout, 4, stride=2, padding=1) on a lazy channel
    concat.  segs: list of (arr(N,H,W,Cpad), C_real); sum(C_real) == Cin.

    4-phase decomposition: output (2m+a, 2n+b) needs only a 2x2 input window,
    so each phase is a (N*H*W, 4*Cin) x (4*Cin, Cout) matmul (no zero dilation).
    """
    N, H, W = segs[0][0].shape[:3]
    cout = w_torch.shape[1]
    cin_tot = sum(c for _, c in segs)
    xps = [jnp.pad(_apply_act(arr[..., :c], act), ((0, 0), (1, 1), (1, 1), (0, 0)))
           for arr, c in segs]

    a_phases, w_phases = [], []
    for ph_h in (0, 1):
        for ph_w in (0, 1):
            taps, wrows = [], []
            for dh in (0, 1):
                for dw in (0, 1):
                    for xp in xps:
                        taps.append(xp[:, ph_h + dh:ph_h + dh + H,
                                          ph_w + dw:ph_w + dw + W, :])
                    kh = (3 - 2 * dh) if ph_h == 0 else (2 - 2 * dh)
                    kw = (3 - 2 * dw) if ph_w == 0 else (2 - 2 * dw)
                    wrows.append(w_torch[:, :, kh, kw])          # (Cin, Cout)
            a_phases.append(jnp.concatenate(taps, axis=-1).reshape(N * H * W,
                                                                   4 * cin_tot))
            w_phases.append(jnp.concatenate(wrows, axis=0))      # (4*Cin, Cout)

    A = jnp.stack(a_phases, axis=0)          # (4, M, 4*Cin)
    Wm = jnp.stack(w_phases, axis=0)         # (4, 4*Cin, Cout)
    y, stats = conv_matmul(A, Wm, bias, out_act=out_act,
                           emit_stats=emit_stats, out_dtype=out_dtype)
    Cp = y.shape[-1]
    # TODO(synk): fuse this phase interleave into the BN-apply output index_map.
    y = y.reshape(2, 2, N, H, W, Cp)
    y = jnp.transpose(y, (2, 3, 0, 4, 1, 5)).reshape(N, 2 * H, 2 * W, Cp)
    return y, stats, 4 * N * H * W


# ----------------------------------------------------------------------------
# U-Net construction (deterministic synthetic parameters) and forward
# ----------------------------------------------------------------------------
def _init_conv(key, cout, cin):
    return jax.random.normal(key, (cout, cin, 4, 4), jnp.float32) * 0.02


def _init_convT(key, cin, cout):
    return jax.random.normal(key, (cin, cout, 4, 4), jnp.float32) * 0.02


def make_skip_block(key, outer_nc, inner_nc, input_nc=None, submodule=None,
                    outermost=False, innermost=False):
    if input_nc is None:
        input_nc = outer_nc
    k = jax.random.split(key, 3)
    p = {"outermost": outermost, "innermost": innermost, "sub": submodule}
    # downconv: Conv2d(input_nc, inner_nc, 4, 2, 1, bias=False)  (BatchNorm -> no bias)
    p["down_w"] = _init_conv(k[0], inner_nc, input_nc)
    p["down_b"] = jnp.zeros((inner_nc,), jnp.float32)
    if outermost:
        # ConvTranspose2d(inner_nc*2, outer_nc, 4, 2, 1)  (bias=True by default)
        p["up_w"] = _init_convT(k[1], inner_nc * 2, outer_nc)
        p["up_b"] = jax.random.normal(k[2], (outer_nc,), jnp.float32) * 0.02
    elif innermost:
        p["up_w"] = _init_convT(k[1], inner_nc, outer_nc)
        p["up_b"] = jnp.zeros((outer_nc,), jnp.float32)
        p["upnorm_g"] = jnp.ones((outer_nc,), jnp.float32)
        p["upnorm_b"] = jnp.zeros((outer_nc,), jnp.float32)
    else:
        p["up_w"] = _init_convT(k[1], inner_nc * 2, outer_nc)
        p["up_b"] = jnp.zeros((outer_nc,), jnp.float32)
        p["downnorm_g"] = jnp.ones((inner_nc,), jnp.float32)
        p["downnorm_b"] = jnp.zeros((inner_nc,), jnp.float32)
        p["upnorm_g"] = jnp.ones((outer_nc,), jnp.float32)
        p["upnorm_b"] = jnp.zeros((outer_nc,), jnp.float32)
    return p


def skip_block_forward(p, x_seg):
    """x_seg: (NHWC array with padded channels, real channel count).

    Mirrors UnetSkipConnectionBlock.forward; the skip `torch.cat` is kept lazy
    as a list of channel segments (no concat HBM pass)."""
    if p["outermost"]:
        cd = p["down_w"].shape[0]
        d, _, _ = conv2d_s2(x_seg, p["down_w"], p["down_b"], act="none",
                            emit_stats=False)
        mid = skip_block_forward(p["sub"], (d, cd))
        # up = ReLU -> ConvTranspose2d -> Tanh  (tanh fused; final output in f32)
        y, _, _ = conv_transpose2d_s2(mid, p["up_w"], p["up_b"], act="relu",
                                      out_act="tanh", emit_stats=False,
                                      out_dtype=jnp.float32)
        return y
    elif p["innermost"]:
        cd = p["down_w"].shape[0]
        cu = p["up_w"].shape[1]
        # LeakyReLU fused into the tap gather; ReLU fused into the conv epilogue.
        d, _, _ = conv2d_s2(x_seg, p["down_w"], p["down_b"], act="lrelu",
                            out_act="relu", emit_stats=False)
        up, s_up, cnt = conv_transpose2d_s2([(d, cd)], p["up_w"], p["up_b"],
                                            act="none")
        up = batch_norm_apply(up, cu, s_up, cnt, p["upnorm_g"], p["upnorm_b"])
        return [x_seg, (up, cu)]
    else:
        cd = p["down_w"].shape[0]
        cu = p["up_w"].shape[1]
        d, s_d, cnt_d = conv2d_s2(x_seg, p["down_w"], p["down_b"], act="lrelu")
        d = batch_norm_apply(d, cd, s_d, cnt_d, p["downnorm_g"], p["downnorm_b"])
        mid = skip_block_forward(p["sub"], (d, cd))
        up, s_u, cnt_u = conv_transpose2d_s2(mid, p["up_w"], p["up_b"], act="relu")
        up = batch_norm_apply(up, cu, s_u, cnt_u, p["upnorm_g"], p["upnorm_b"])
        return [x_seg, (up, cu)]
        # TODO(synk): nn.Dropout(0.5) path (use_dropout=True) not exercised here.


def make_unet_generator(key, input_nc, output_nc, num_downs, ngf=64):
    keys = jax.random.split(key, num_downs + 1)
    ki = 0
    block = make_skip_block(keys[ki], ngf * 8, ngf * 8, innermost=True); ki += 1
    for _ in range(num_downs - 5):
        block = make_skip_block(keys[ki], ngf * 8, ngf * 8, submodule=block); ki += 1
    block = make_skip_block(keys[ki], ngf * 4, ngf * 8, submodule=block); ki += 1
    block = make_skip_block(keys[ki], ngf * 2, ngf * 4, submodule=block); ki += 1
    block = make_skip_block(keys[ki], ngf, ngf * 2, submodule=block); ki += 1
    block = make_skip_block(keys[ki], output_nc, ngf, input_nc=input_nc,
                            submodule=block, outermost=True)
    return block


def unet_forward(params, x_nchw):
    # NCHW -> NHWC; intermediate activations run in bf16 (final output f32).
    x = jnp.transpose(x_nchw, (0, 2, 3, 1)).astype(jnp.bfloat16)
    y = skip_block_forward(params, (x, x.shape[-1]))
    out_nc = params["up_w"].shape[1]
    y = y[..., :out_nc]                                    # drop channel padding once
    return jnp.transpose(y, (0, 3, 1, 2)).astype(jnp.float32)   # NHWC -> NCHW


# ----------------------------------------------------------------------------
if __name__ == "__main__":
    key = jax.random.PRNGKey(0)
    k_param, k_input = jax.random.split(key)

    # UnetGenerator(input_nc=3, output_nc=3, num_downs=5, ngf=8)
    INPUT_NC, OUTPUT_NC, NUM_DOWNS, NGF = 3, 3, 5, 8
    params = make_unet_generator(k_param, INPUT_NC, OUTPUT_NC, NUM_DOWNS, ngf=NGF)

    # input spatial must be divisible by 2**num_downs -> 32
    x = jax.random.normal(k_input, (2, INPUT_NC, 32, 32), jnp.float32)

    fwd = jax.jit(lambda inp: unet_forward(params, inp))
    out = fwd(x)
    jax.block_until_ready(out)

    assert out.shape == (2, OUTPUT_NC, 32, 32), out.shape
    assert bool(jnp.all(jnp.isfinite(out)))
    print("KERNEL_OK")
</pallas_src>

<mosaic_0001>
module attributes {stable_mosaic.version = 11 : i64} {
  func.func @_mm_kernel(%arg0: i32, %arg1: i32, %arg2: i32, %arg3: memref<1x512x128xbf16, #tpu.memory_space<vmem>>, %arg4: memref<1x128x128xbf16, #tpu.memory_space<vmem>>, %arg5: memref<1x128xf32, #tpu.memory_space<vmem>>, %arg6: memref<1x512x128xbf16, #tpu.memory_space<vmem>>, %arg7: memref<1x1x2x128xf32, #tpu.memory_space<vmem>>, %arg8: memref<512x128xf32, #tpu.memory_space<vmem>>) attributes {dimension_semantics = [#tpu.dimension_semantics<parallel>, #tpu.dimension_semantics<parallel>, #tpu.dimension_semantics<arbitrary>], iteration_bounds = array<i64: 1, 1, 1>, scalar_prefetch = 0 : i64, scratch_operands = 1 : i64, tpu.core_type = #tpu.core_type<tc>, window_params = [{transform_indices = @transform_0, window_bounds = array<i64: 1, 512, 128>}, {transform_indices = @transform_1, window_bounds = array<i64: 1, 128, 128>}, {pipeline_mode = #tpu.pipeline_mode<synchronous>, transform_indices = @transform_2, window_bounds = array<i64: 1, 128>}, {transform_indices = @transform_3, window_bounds = array<i64: 1, 512, 128>}, {transform_indices = @transform_4, window_bounds = array<i64: 1, 1, 2, 128>}]} {
    %c0_i32 = arith.constant 0 : i32
    %0 = arith.cmpi eq, %arg2, %c0_i32 : i32
    %1 = arith.extui %0 : i1 to i32
    %c0_i32_0 = arith.constant 0 : i32
    %2 = arith.cmpi ne, %1, %c0_i32_0 : i32
    scf.if %2 {
      %cst_11 = arith.constant 0.000000e+00 : f32
      %17 = vector.broadcast %cst_11 : f32 to vector<512x128xf32>
      %c0_12 = arith.constant 0 : index
      %c0_13 = arith.constant 0 : index
      %18 = vector.load %arg8[%c0_12, %c0_13] : memref<512x128xf32, #tpu.memory_space<vmem>>, vector<512x128xf32>
      tpu.vector_store %arg8[%c0_12, %c0_13], %17 {strides = array<i32>} : memref<512x128xf32, #tpu.memory_space<vmem>>, vector<512x128xf32>,
    } else {
    }
    %c128_i32 = arith.constant 128 : i32
    %3 = arith.muli %arg2, %c128_i32 : i32
    %4 = tpu.assume_multiple %3, 128 : i32
    %c0 = arith.constant 0 : index
    %5 = arith.index_cast %4 : i32 to index
    %c0_1 = arith.constant 0 : index
    %6 = vector.load %arg4[%c0, %5, %c0_1] : memref<1x128x128xbf16, #tpu.memory_space<vmem>>, vector<1x128x128xbf16>
    %7 = vector.shape_cast %6 : vector<1x128x128xbf16> to vector<128x128xbf16>
    %c0_2 = arith.constant 0 : index
    %c0_3 = arith.constant 0 : index
    %8 = vector.load %arg8[%c0_2, %c0_3] : memref<512x128xf32, #tpu.memory_space<vmem>>, vector<512x128xf32>
    %c0_4 = arith.constant 0 : index
    %c0_5 = arith.constant 0 : index
    %c0_6 = arith.constant 0 : index
    %9 = vector.load %arg3[%c0_4, %c0_5, %c0_6] : memref<1x512x128xbf16, #tpu.memory_space<vmem>>, vector<1x512x128xbf16>
    %10 = vector.shape_cast %9 : vector<1x512x128xbf16> to vector<512x128xbf16>
    %cst = arith.constant dense<0.000000e+00> : vector<512x128xf32>
    %11 = tpu.matmul %10, %7, %cst {dimension_numbers = #tpu.dot_dimension_numbers<[1], [0], [0], [1], [0, 0, 1, 1], [], []>} : vector<512x128xbf16>, vector<128x128xbf16>, vector<512x128xf32> -> vector<512x128xf32>
    %12 = arith.addf %8, %11 : vector<512x128xf32>
    %c0_7 = arith.constant 0 : index
    %c0_8 = arith.constant 0 : index
    %13 = vector.load %arg8[%c0_7, %c0_8] : memref<512x128xf32, #tpu.memory_space<vmem>>, vector<512x128xf32>
    tpu.vector_store %arg8[%c0_7, %c0_8], %12 {strides = array<i32>} : memref<512x128xf32, #tpu.memory_space<vmem>>, vector<512x128xf32>,
    %c0_i32_9 = arith.constant 0 : i32
    %14 = arith.cmpi eq, %arg2, %c0_i32_9 : i32
    %15 = arith.extui %14 : i1 to i32
    %c0_i32_10 = arith.constant 0 : i32
    %16 = arith.cmpi ne, %15, %c0_i32_10 : i32
    scf.if %16 {
      %c0_11 = arith.constant 0 : index
      %c0_12 = arith.constant 0 : index
      %17 = vector.load %arg8[%c0_11, %c0_12] : memref<512x128xf32, #tpu.memory_space<vmem>>, vector<512x128xf32>
      %c0_13 = arith.constant 0 : index
      %c0_14 = arith.constant 0 : index
      %18 = vector.load %arg5[%c0_13, %c0_14] : memref<1x128xf32, #tpu.memory_space<vmem>>, vector<1x128xf32>
      %19 = vector.broadcast %18 : vector<1x128xf32> to vector<512x128xf32>
      %20 = arith.addf %17, %19 : vector<512x128xf32>
      %cst_15 = arith.constant 0.000000e+00 : f32
      %21 = vector.broadcast %cst_15 : f32 to vector<2x128xf32>
      %c0_16 = arith.constant 0 : index
      %c0_17 = arith.constant 0 : index
      %c0_18 = arith.constant 0 : index
      %c0_19 = arith.constant 0 : index
      %22 = vector.load %arg7[%c0_16, %c0_17, %c0_18, %c0_19] : memref<1x1x2x128xf32, #tpu.memory_space<vmem>>, vector<1x1x2x128xf32>
      %23 = vector.shape_cast %22 : vector<1x1x2x128xf32> to vector<2x128xf32>
      %24 = vector.shape_cast %21 : vector<2x128xf32> to vector<1x1x2x128xf32>
      tpu.vector_store %arg7[%c0_16, %c0_17, %c0_18, %c0_19], %24 {strides = array<i32>} : memref<1x1x2x128xf32, #tpu.memory_space<vmem>>, vector<1x1x2x128xf32>,
      %25 = arith.truncf %20 : vector<512x128xf32> to vector<512x128xbf16>
      %c0_20 = arith.constant 0 : index
      %c0_21 = arith.constant 0 : index
      %c0_22 = arith.constant 0 : index
      %26 = vector.load %arg6[%c0_20, %c0_21, %c0_22] : memref<1x512x128xbf16, #tpu.memory_space<vmem>>, vector<1x512x128xbf16>
      %27 = vector.shape_cast %26 : vector<1x512x128xbf16> to vector<512x128xbf16>
      %28 = vector.shape_cast %25 : vector<512x128xbf16> to vector<1x512x128xbf16>
      tpu.vector_store %arg6[%c0_20, %c0_21, %c0_22], %28 {strides = array<i32>} : memref<1x512x128xbf16, #tpu.memory_space<vmem>>, vector<1x512x128xbf16>,
    } else {
    }
    return
  }
  func.func @transform_0(%arg0: i32, %arg1: i32, %arg2: i32) -> (i32, i32, i32) {
    %c0_i32 = arith.constant 0 : i32
    return %arg0, %arg1, %arg2 : i32, i32, i32
  }
  func.func @transform_1(%arg0: i32, %arg1: i32, %arg2: i32) -> (i32, i32, i32) {
    %c0_i32 = arith.constant 0 : i32
    %c0_i32_0 = arith.constant 0 : i32
    %c0_i32_1 = arith.constant 0 : i32
    return %arg0, %c0_i32, %c0_i32_0 : i32, i32, i32
  }
  func.func @transform_2(%arg0: i32, %arg1: i32, %arg2: i32) -> (i32, i32) {
    %c0_i32 = arith.constant 0 : i32
    %c0_i32_0 = arith.constant 0 : i32
    %c0_i32_1 = arith.constant 0 : i32
    return %c0_i32, %c0_i32_0 : i32, i32
  }
  func.func @transform_3(%arg0: i32, %arg1: i32, %arg2: i32) -> (i32, i32, i32) {
    %c0_i32 = arith.constant 0 : i32
    %c0_i32_0 = arith.constant 0 : i32
    return %arg0, %arg1, %c0_i32 : i32, i32, i32
  }
  func.func @transform_4(%arg0: i32, %arg1: i32, %arg2: i32) -> (i32, i32, i32, i32) {
    %c0_i32 = arith.constant 0 : i32
    %c0_i32_0 = arith.constant 0 : i32
    %c0_i32_1 = arith.constant 0 : i32
    return %arg0, %arg1, %c0_i32, %c0_i32_0 : i32, i32, i32, i32
  }
}

module attributes {stable_mosaic.version = 11 : i64} {
  func.func @_bn_apply_kernel(%arg0: i32, %arg1: memref<128x128xbf16, #tpu.memory_space<vmem>>, %arg2: memref<1x128xf32, #tpu.memory_space<vmem>>, %arg3: memref<1x128xf32, #tpu.memory_space<vmem>>, %arg4: memref<128x128xbf16, #tpu.memory_space<vmem>>) attributes {dimension_semantics = [#tpu.dimension_semantics<parallel>], iteration_bounds = array<i64: 1>, scalar_prefetch = 0 : i64, scratch_operands = 0 : i64, tpu.core_type = #tpu.core_type<tc>, window_params = [{transform_indices = @transform_0, window_bounds = array<i64: 128, 128>}, {pipeline_mode = #tpu.pipeline_mode<synchronous>, transform_indices = @transform_1, window_bounds = array<i64: 1, 128>}, {pipeline_mode = #tpu.pipeline_mode<synchronous>, transform_indices = @transform_2, window_bounds = array<i64: 1, 128>}, {transform_indices = @transform_3, window_bounds = array<i64: 128, 128>}]} {
    %c0 = arith.constant 0 : index
    %c0_0 = arith.constant 0 : index
    %0 = vector.load %arg1[%c0, %c0_0] : memref<128x128xbf16, #tpu.memory_space<vmem>>, vector<128x128xbf16>
    %1 = arith.extf %0 : vector<128x128xbf16> to vector<128x128xf32>
    %c0_1 = arith.constant 0 : index
    %c0_2 = arith.constant 0 : index
    %2 = vector.load %arg2[%c0_1, %c0_2] : memref<1x128xf32, #tpu.memory_space<vmem>>, vector<1x128xf32>
    %3 = vector.broadcast %2 : vector<1x128xf32> to vector<128x128xf32>
    %4 = arith.mulf %1, %3 : vector<128x128xf32>
    %c0_3 = arith.constant 0 : index
    %c0_4 = arith.constant 0 : index
    %5 = vector.load %arg3[%c0_3, %c0_4] : memref<1x128xf32, #tpu.memory_space<vmem>>, vector<1x128xf32>
    %6 = vector.broadcast %5 : vector<1x128xf32> to vector<128x128xf32>
    %7 = arith.addf %4, %6 : vector<128x128xf32>
    %8 = arith.truncf %7 : vector<128x128xf32> to vector<128x128xbf16>
    %c0_5 = arith.constant 0 : index
    %c0_6 = arith.constant 0 : index
    %9 = vector.load %arg4[%c0_5, %c0_6] : memref<128x128xbf16, #tpu.memory_space<vmem>>, vector<128x128xbf16>
    tpu.vector_store %arg4[%c0_5, %c0_6], %8 {strides = array<i32>} : memref<128x128xbf16, #tpu.memory_space<vmem>>, vector<128x128xbf16>,
    return
  }
  func.func @transform_0(%arg0: i32) -> (i32, i32) {
    %c0_i32 = arith.constant 0 : i32
    %c0_i32_0 = arith.constant 0 : i32
    return %arg0, %c0_i32 : i32, i32
  }
  func.func @transform_1(%arg0: i32) -> (i32, i32) {
    %c0_i32 = arith.constant 0 : i32
    %c0_i32_0 = arith.constant 0 : i32
    %c0_i32_1 = arith.constant 0 : i32
    return %c0_i32, %c0_i32_0 : i32, i32
  }
  func.func @transform_2(%arg0: i32) -> (i32, i32) {
    %c0_i32 = arith.constant 0 : i32
    %c0_i32_0 = arith.constant 0 : i32
    %c0_i32_1 = arith.constant 0 : i32
    return %c0_i32, %c0_i32_0 : i32, i32
  }
  func.func @transform_3(%arg0: i32) -> (i32, i32) {
    %c0_i32 = arith.constant 0 : i32
    %c0_i32_0 = arith.constant 0 : i32
    return %arg0, %c0_i32 : i32, i32
  }
}

module attributes {stable_mosaic.version = 11 : i64} {
  func.func @_mm_kernel(%arg0: i32, %arg1: i32, %arg2: i32, %arg3: memref<1x128x128xbf16, #tpu.memory_space<vmem>>, %arg4: memref<1x128x128xbf16, #tpu.memory_space<vmem>>, %arg5: memref<1x128xf32, #tpu.memory_space<vmem>>, %arg6: memref<1x128x128xbf16, #tpu.memory_space<vmem>>, %arg7: memref<1x1x2x128xf32, #tpu.memory_space<vmem>>, %arg8: memref<128x128xf32, #tpu.memory_space<vmem>>) attributes {dimension_semantics = [#tpu.dimension_semantics<parallel>, #tpu.dimension_semantics<parallel>, #tpu.dimension_semantics<arbitrary>], iteration_bounds = array<i64: 1, 1, 1>, scalar_prefetch = 0 : i64, scratch_operands = 1 : i64, tpu.core_type = #tpu.core_type<tc>, window_params = [{transform_indices = @transform_0, window_bounds = array<i64: 1, 128, 128>}, {transform_indices = @transform_1, window_bounds = array<i64: 1, 128, 128>}, {pipeline_mode = #tpu.pipeline_mode<synchronous>, transform_indices = @transform_2, window_bounds = array<i64: 1, 128>}, {transform_indices = @transform_3, window_bounds = array<i64: 1, 128, 128>}, {transform_indices = @transform_4, window_bounds = array<i64: 1, 1, 2, 128>}]} {
    %c0_i32 = arith.constant 0 : i32
    %0 = arith.cmpi eq, %arg2, %c0_i32 : i32
    %1 = arith.extui %0 : i1 to i32
    %c0_i32_0 = arith.constant 0 : i32
    %2 = arith.cmpi ne, %1, %c0_i32_0 : i32
    scf.if %2 {
      %cst_11 = arith.constant 0.000000e+00 : f32
      %17 = vector.broadcast %cst_11 : f32 to vector<128x128xf32>
      %c0_12 = arith.constant 0 : index
      %c0_13 = arith.constant 0 : index
      %18 = vector.load %arg8[%c0_12, %c0_13] : memref<128x128xf32, #tpu.memory_space<vmem>>, vector<128x128xf32>
      tpu.vector_store %arg8[%c0_12, %c0_13], %17 {strides = array<i32>} : memref<128x128xf32, #tpu.memory_space<vmem>>, vector<128x128xf32>,
    } else {
    }
    %c128_i32 = arith.constant 128 : i32
    %3 = arith.muli %arg2, %c128_i32 : i32
    %4 = tpu.assume_multiple %3, 128 : i32
    %c0 = arith.constant 0 : index
    %5 = arith.index_cast %4 : i32 to index
    %c0_1 = arith.constant 0 : index
    %6 = vector.load %arg4[%c0, %5, %c0_1] : memref<1x128x128xbf16, #tpu.memory_space<vmem>>, vector<1x128x128xbf16>
    %7 = vector.shape_cast %6 : vector<1x128x128xbf16> to vector<128x128xbf16>
    %c0_2 = arith.constant 0 : index
    %c0_3 = arith.constant 0 : index
    %8 = vector.load %arg8[%c0_2, %c0_3] : memref<128x128xf32, #tpu.memory_space<vmem>>, vector<128x128xf32>
    %c0_4 = arith.constant 0 : index
    %c0_5 = arith.constant 0 : index
    %c0_6 = arith.constant 0 : index
    %9 = vector.load %arg3[%c0_4, %c0_5, %c0_6] : memref<1x128x128xbf16, #tpu.memory_space<vmem>>, vector<1x128x128xbf16>
    %10 = vector.shape_cast %9 : vector<1x128x128xbf16> to vector<128x128xbf16>
    %cst = arith.constant dense<0.000000e+00> : vector<128x128xf32>
    %11 = tpu.matmul %10, %7, %cst {dimension_numbers = #tpu.dot_dimension_numbers<[1], [0], [0], [1], [0, 0, 1, 1], [], []>} : vector<128x128xbf16>, vector<128x128xbf16>, vector<128x128xf32> -> vector<128x128xf32>
    %12 = arith.addf %8, %11 : vector<128x128xf32>
    %c0_7 = arith.constant 0 : index
    %c0_8 = arith.constant 0 : index
    %13 = vector.load %arg8[%c0_7, %c0_8] : memref<128x128xf32, #tpu.memory_space<vmem>>, vector<128x128xf32>
    tpu.vector_store %arg8[%c0_7, %c0_8], %12 {strides = array<i32>} : memref<128x128xf32, #tpu.memory_space<vmem>>, vector<128x128xf32>,
    %c0_i32_9 = arith.constant 0 : i32
    %14 = arith.cmpi eq, %arg2, %c0_i32_9 : i32
    %15 = arith.extui %14 : i1 to i32
    %c0_i32_10 = arith.constant 0 : i32
    %16 = arith.cmpi ne, %15, %c0_i32_10 : i32
    scf.if %16 {
      %c0_11 = arith.constant 0 : index
      %c0_12 = arith.constant 0 : index
      %17 = vector.load %arg8[%c0_11, %c0_12] : memref<128x128xf32, #tpu.memory_space<vmem>>, vector<128x128xf32>
      %c0_13 = arith.constant 0 : index
      %c0_14 = arith.constant 0 : index
      %18 = vector.load %arg5[%c0_13, %c0_14] : memref<1x128xf32, #tpu.memory_space<vmem>>, vector<1x128xf32>
      %19 = vector.broadcast %18 : vector<1x128xf32> to vector<128x128xf32>
      %20 = arith.addf %17, %19 : vector<128x128xf32>
      %cst_15 = arith.constant dense<0.000000e+00> : vector<128xf32>
      %21 = vector.multi_reduction <add>, %20, %cst_15 [0] : vector<128x128xf32> to vector<128xf32>
      %22 = vector.shape_cast %21 : vector<128xf32> to vector<1x128xf32>
      %c0_16 = arith.constant 0 : index
      %c0_17 = arith.constant 0 : index
      %c0_18 = arith.constant 0 : index
      %c0_19 = arith.constant 0 : index
      %23 = vector.load %arg7[%c0_16, %c0_17, %c0_18, %c0_19] : memref<1x1x2x128xf32, #tpu.memory_space<vmem>>, vector<1x1x1x128xf32>
      %24 = vector.shape_cast %23 : vector<1x1x1x128xf32> to vector<1x128xf32>
      %25 = vector.shape_cast %22 : vector<1x128xf32> to vector<1x1x1x128xf32>
      tpu.vector_store %arg7[%c0_16, %c0_17, %c0_18, %c0_19], %25 {strides = array<i32>} : memref<1x1x2x128xf32, #tpu.memory_space<vmem>>, vector<1x1x1x128xf32>,
      %26 = arith.mulf %20, %20 : vector<128x128xf32>
      %cst_20 = arith.constant dense<0.000000e+00> : vector<128xf32>
      %27 = vector.multi_reduction <add>, %26, %cst_20 [0] : vector<128x128xf32> to vector<128xf32>
      %28 = vector.shape_cast %27 : vector<128xf32> to vector<1x128xf32>
      %c0_21 = arith.constant 0 : index
      %c0_22 = arith.constant 0 : index
      %c1 = arith.constant 1 : index
      %c0_23 = arith.constant 0 : index
      %29 = vector.load %arg7[%c0_21, %c0_22, %c1, %c0_23] : memref<1x1x2x128xf32, #tpu.memory_space<vmem>>, vector<1x1x1x128xf32>
      %30 = vector.shape_cast %29 : vector<1x1x1x128xf32> to vector<1x128xf32>
      %31 = vector.shape_cast %28 : vector<1x128xf32> to vector<1x1x1x128xf32>
      tpu.vector_store %arg7[%c0_21, %c0_22, %c1, %c0_23], %31 {strides = array<i32>} : memref<1x1x2x128xf32, #tpu.memory_space<vmem>>, vector<1x1x1x128xf32>,
      %32 = arith.truncf %20 : vector<128x128xf32> to vector<128x128xbf16>
      %c0_24 = arith.constant 0 : index
      %c0_25 = arith.constant 0 : index
      %c0_26 = arith.constant 0 : index
      %33 = vector.load %arg6[%c0_24, %c0_25, %c0_26] : memref<1x128x128xbf16, #tpu.memory_space<vmem>>, vector<1x128x128xbf16>
      %34 = vector.shape_cast %33 : vector<1x128x128xbf16> to vector<128x128xbf16>
      %35 = vector.shape_cast %32 : vector<128x128xbf16> to vector<1x128x128xbf16>
      tpu.vector_store %arg6[%c0_24, %c0_25, %c0_26], %35 {strides = array<i32>} : memref<1x128x128xbf16, #tpu.memory_space<vmem>>, vector<1x128x128xbf16>,
    } else {
    }
    return
  }
  func.func @transform_0(%arg0: i32, %arg1: i32, %arg2: i32) -> (i32, i32, i32) {
    %c0_i32 = arith.constant 0 : i32
    return %arg0, %arg1, %arg2 : i32, i32, i32
  }
  func.func @transform_1(%arg0: i32, %arg1: i32, %arg2: i32) -> (i32, i32, i32) {
    %c0_i32 = arith.constant 0 : i32
    %c0_i32_0 = arith.constant 0 : i32
    %c0_i32_1 = arith.constant 0 : i32
    return %arg0, %c0_i32, %c0_i32_0 : i32, i32, i32
  }
  func.func @transform_2(%arg0: i32, %arg1: i32, %arg2: i32) -> (i32, i32) {
    %c0_i32 = arith.constant 0 : i32
    %c0_i32_0 = arith.constant 0 : i32
    %c0_i32_1 = arith.constant 0 : i32
    return %c0_i32, %c0_i32_0 : i32, i32
  }
  func.func @transform_3(%arg0: i32, %arg1: i32, %arg2: i32) -> (i32, i32, i32) {
    %c0_i32 = arith.constant 0 : i32
    %c0_i32_0 = arith.constant 0 : i32
    return %arg0, %arg1, %c0_i32 : i32, i32, i32
  }
  func.func @transform_4(%arg0: i32, %arg1: i32, %arg2: i32) -> (i32, i32, i32, i32) {
    %c0_i32 = arith.constant 0 : i32
    %c0_i32_0 = arith.constant 0 : i32
    %c0_i32_1 = arith.constant 0 : i32
    return %arg0, %arg1, %c0_i32, %c0_i32_0 : i32, i32, i32, i32
  }
}

module attributes {stable_mosaic.version = 11 : i64} {
  func.func @_mm_kernel(%arg0: i32, %arg1: i32, %arg2: i32, %arg3: memref<1x32x256xbf16, #tpu.memory_space<vmem>>, %arg4: memref<1x256x128xbf16, #tpu.memory_space<vmem>>, %arg5: memref<1x128xf32, #tpu.memory_space<vmem>>, %arg6: memref<1x32x128xbf16, #tpu.memory_space<vmem>>, %arg7: memref<1x1x2x128xf32, #tpu.memory_space<vmem>>, %arg8: memref<32x128xf32, #tpu.memory_space<vmem>>) attributes {dimension_semantics = [#tpu.dimension_semantics<parallel>, #tpu.dimension_semantics<parallel>, #tpu.dimension_semantics<arbitrary>], iteration_bounds = array<i64: 1, 1, 1>, scalar_prefetch = 0 : i64, scratch_operands = 1 : i64, tpu.core_type = #tpu.core_type<tc>, window_params = [{transform_indices = @transform_0, window_bounds = array<i64: 1, 32, 256>}, {transform_indices = @transform_1, window_bounds = array<i64: 1, 256, 128>}, {pipeline_mode = #tpu.pipeline_mode<synchronous>, transform_indices = @transform_2, window_bounds = array<i64: 1, 128>}, {transform_indices = @transform_3, window_bounds = array<i64: 1, 32, 128>}, {transform_indices = @transform_4, window_bounds = array<i64: 1, 1, 2, 128>}]} {
    %c0_i32 = arith.constant 0 : i32
    %0 = arith.cmpi eq, %arg2, %c0_i32 : i32
    %1 = arith.extui %0 : i1 to i32
    %c0_i32_0 = arith.constant 0 : i32
    %2 = arith.cmpi ne, %1, %c0_i32_0 : i32
    scf.if %2 {
      %cst_11 = arith.constant 0.000000e+00 : f32
      %17 = vector.broadcast %cst_11 : f32 to vector<32x128xf32>
      %c0_12 = arith.constant 0 : index
      %c0_13 = arith.constant 0 : index
      %18 = vector.load %arg8[%c0_12, %c0_13] : memref<32x128xf32, #tpu.memory_space<vmem>>, vector<32x128xf32>
      tpu.vector_store %arg8[%c0_12, %c0_13], %17 {strides = array<i32>} : memref<32x128xf32, #tpu.memory_space<vmem>>, vector<32x128xf32>,
    } else {
    }
    %c256_i32 = arith.constant 256 : i32
    %3 = arith.muli %arg2, %c256_i32 : i32
    %4 = tpu.assume_multiple %3, 256 : i32
    %c0 = arith.constant 0 : index
    %5 = arith.index_cast %4 : i32 to index
    %c0_1 = arith.constant 0 : index
    %6 = vector.load %arg4[%c0, %5, %c0_1] : memref<1x256x128xbf16, #tpu.memory_space<vmem>>, vector<1x256x128xbf16>
    %7 = vector.shape_cast %6 : vector<1x256x128xbf16> to vector<256x128xbf16>
    %c0_2 = arith.constant 0 : index
    %c0_3 = arith.constant 0 : index
    %8 = vector.load %arg8[%c0_2, %c0_3] : memref<32x128xf32, #tpu.memory_space<vmem>>, vector<32x128xf32>
    %c0_4 = arith.constant 0 : index
    %c0_5 = arith.constant 0 : index
    %c0_6 = arith.constant 0 : index
    %9 = vector.load %arg3[%c0_4, %c0_5, %c0_6] : memref<1x32x256xbf16, #tpu.memory_space<vmem>>, vector<1x32x256xbf16>
    %10 = vector.shape_cast %9 : vector<1x32x256xbf16> to vector<32x256xbf16>
    %cst = arith.constant dense<0.000000e+00> : vector<32x128xf32>
    %11 = tpu.matmul %10, %7, %cst {dimension_numbers = #tpu.dot_dimension_numbers<[1], [0], [0], [1], [0, 0, 1, 1], [], []>} : vector<32x256xbf16>, vector<256x128xbf16>, vector<32x128xf32> -> vector<32x128xf32>
    %12 = arith.addf %8, %11 : vector<32x128xf32>
    %c0_7 = arith.constant 0 : index
    %c0_8 = arith.constant 0 : index
    %13 = vector.load %arg8[%c0_7, %c0_8] : memref<32x128xf32, #tpu.memory_space<vmem>>, vector<32x128xf32>
    tpu.vector_store %arg8[%c0_7, %c0_8], %12 {strides = array<i32>} : memref<32x128xf32, #tpu.memory_space<vmem>>, vector<32x128xf32>,
    %c0_i32_9 = arith.constant 0 : i32
    %14 = arith.cmpi eq, %arg2, %c0_i32_9 : i32
    %15 = arith.extui %14 : i1 to i32
    %c0_i32_10 = arith.constant 0 : i32
    %16 = arith.cmpi ne, %15, %c0_i32_10 : i32
    scf.if %16 {
      %c0_11 = arith.constant 0 : index
      %c0_12 = arith.constant 0 : index
      %17 = vector.load %arg8[%c0_11, %c0_12] : memref<32x128xf32, #tpu.memory_space<vmem>>, vector<32x128xf32>
      %c0_13 = arith.constant 0 : index
      %c0_14 = arith.constant 0 : index
      %18 = vector.load %arg5[%c0_13, %c0_14] : memref<1x128xf32, #tpu.memory_space<vmem>>, vector<1x128xf32>
      %19 = vector.broadcast %18 : vector<1x128xf32> to vector<32x128xf32>
      %20 = arith.addf %17, %19 : vector<32x128xf32>
      %cst_15 = arith.constant dense<0.000000e+00> : vector<128xf32>
      %21 = vector.multi_reduction <add>, %20, %cst_15 [0] : vector<32x128xf32> to vector<128xf32>
      %22 = vector.shape_cast %21 : vector<128xf32> to vector<1x128xf32>
      %c0_16 = arith.constant 0 : index
      %c0_17 = arith.constant 0 : index
      %c0_18 = arith.constant 0 : index
      %c0_19 = arith.constant 0 : index
      %23 = vector.load %arg7[%c0_16, %c0_17, %c0_18, %c0_19] : memref<1x1x2x128xf32, #tpu.memory_space<vmem>>, vector<1x1x1x128xf32>
      %24 = vector.shape_cast %23 : vector<1x1x1x128xf32> to vector<1x128xf32>
      %25 = vector.shape_cast %22 : vector<1x128xf32> to vector<1x1x1x128xf32>
      tpu.vector_store %arg7[%c0_16, %c0_17, %c0_18, %c0_19], %25 {strides = array<i32>} : memref<1x1x2x128xf32, #tpu.memory_space<vmem>>, vector<1x1x1x128xf32>,
      %26 = arith.mulf %20, %20 : vector<32x128xf32>
      %cst_20 = arith.constant dense<0.000000e+00> : vector<128xf32>
      %27 = vector.multi_reduction <add>, %26, %cst_20 [0] : vector<32x128xf32> to vector<128xf32>
      %28 = vector.shape_cast %27 : vector<128xf32> to vector<1x128xf32>
      %c0_21 = arith.constant 0 : index
      %c0_22 = arith.constant 0 : index
      %c1 = arith.constant 1 : index
      %c0_23 = arith.constant 0 : index
      %29 = vector.load %arg7[%c0_21, %c0_22, %c1, %c0_23] : memref<1x1x2x128xf32, #tpu.memory_space<vmem>>, vector<1x1x1x128xf32>
      %30 = vector.shape_cast %29 : vector<1x1x1x128xf32> to vector<1x128xf32>
      %31 = vector.shape_cast %28 : vector<1x128xf32> to vector<1x1x1x128xf32>
      tpu.vector_store %arg7[%c0_21, %c0_22, %c1, %c0_23], %31 {strides = array<i32>} : memref<1x1x2x128xf32, #tpu.memory_space<vmem>>, vector<1x1x1x128xf32>,
      %32 = arith.truncf %20 : vector<32x128xf32> to vector<32x128xbf16>
      %c0_24 = arith.constant 0 : index
      %c0_25 = arith.constant 0 : index
      %c0_26 = arith.constant 0 : index
      %33 = vector.load %arg6[%c0_24, %c0_25, %c0_26] : memref<1x32x128xbf16, #tpu.memory_space<vmem>>, vector<1x32x128xbf16>
      %34 = vector.shape_cast %33 : vector<1x32x128xbf16> to vector<32x128xbf16>
      %35 = vector.shape_cast %32 : vector<32x128xbf16> to vector<1x32x128xbf16>
      tpu.vector_store %arg6[%c0_24, %c0_25, %c0_26], %35 {strides = array<i32>} : memref<1x32x128xbf16, #tpu.memory_space<vmem>>, vector<1x32x128xbf16>,
    } else {
    }
    return
  }
  func.func @transform_0(%arg0: i32, %arg1: i32, %arg2: i32) -> (i32, i32, i32) {
    %c0_i32 = arith.constant 0 : i32
    return %arg0, %arg1, %arg2 : i32, i32, i32
  }
  func.func @transform_1(%arg0: i32, %arg1: i32, %arg2: i32) -> (i32, i32, i32) {
    %c0_i32 = arith.constant 0 : i32
    %c0_i32_0 = arith.constant 0 : i32
    %c0_i32_1 = arith.constant 0 : i32
    return %arg0, %c0_i32, %c0_i32_0 : i32, i32, i32
  }
  func.func @transform_2(%arg0: i32, %arg1: i32, %arg2: i32) -> (i32, i32) {
    %c0_i32 = arith.constant 0 : i32
    %c0_i32_0 = arith.constant 0 : i32
    %c0_i32_1 = arith.constant 0 : i32
    return %c0_i32, %c0_i32_0 : i32, i32
  }
  func.func @transform_3(%arg0: i32, %arg1: i32, %arg2: i32) -> (i32, i32, i32) {
    %c0_i32 = arith.constant 0 : i32
    %c0_i32_0 = arith.constant 0 : i32
    return %arg0, %arg1, %c0_i32 : i32, i32, i32
  }
  func.func @transform_4(%arg0: i32, %arg1: i32, %arg2: i32) -> (i32, i32, i32, i32) {
    %c0_i32 = arith.constant 0 : i32
    %c0_i32_0 = arith.constant 0 : i32
    %c0_i32_1 = arith.constant 0 : i32
    return %arg0, %arg1, %c0_i32, %c0_i32_0 : i32, i32, i32, i32
  }
}

module attributes {stable_mosaic.version = 11 : i64} {
  func.func @_bn_apply_kernel(%arg0: i32, %arg1: memref<32x128xbf16, #tpu.memory_space<vmem>>, %arg2: memref<1x128xf32, #tpu.memory_space<vmem>>, %arg3: memref<1x128xf32, #tpu.memory_space<vmem>>, %arg4: memref<32x128xbf16, #tpu.memory_space<vmem>>) attributes {dimension_semantics = [#tpu.dimension_semantics<parallel>], iteration_bounds = array<i64: 1>, scalar_prefetch = 0 : i64, scratch_operands = 0 : i64, tpu.core_type = #tpu.core_type<tc>, window_params = [{transform_indices = @transform_0, window_bounds = array<i64: 32, 128>}, {pipeline_mode = #tpu.pipeline_mode<synchronous>, transform_indices = @transform_1, window_bounds = array<i64: 1, 128>}, {pipeline_mode = #tpu.pipeline_mode<synchronous>, transform_indices = @transform_2, window_bounds = array<i64: 1, 128>}, {transform_indices = @transform_3, window_bounds = array<i64: 32, 128>}]} {
    %c0 = arith.constant 0 : index
    %c0_0 = arith.constant 0 : index
    %0 = vector.load %arg1[%c0, %c0_0] : memref<32x128xbf16, #tpu.memory_space<vmem>>, vector<32x128xbf16>
    %1 = arith.extf %0 : vector<32x128xbf16> to vector<32x128xf32>
    %c0_1 = arith.constant 0 : index
    %c0_2 = arith.constant 0 : index
    %2 = vector.load %arg2[%c0_1, %c0_2] : memref<1x128xf32, #tpu.memory_space<vmem>>, vector<1x128xf32>
    %3 = vector.broadcast %2 : vector<1x128xf32> to vector<32x128xf32>
    %4 = arith.mulf %1, %3 : vector<32x128xf32>
    %c0_3 = arith.constant 0 : index
    %c0_4 = arith.constant 0 : index
    %5 = vector.load %arg3[%c0_3, %c0_4] : memref<1x128xf32, #tpu.memory_space<vmem>>, vector<1x128xf32>
    %6 = vector.broadcast %5 : vector<1x128xf32> to vector<32x128xf32>
    %7 = arith.addf %4, %6 : vector<32x128xf32>
    %8 = arith.truncf %7 : vector<32x128xf32> to vector<32x128xbf16>
    %c0_5 = arith.constant 0 : index
    %c0_6 = arith.constant 0 : index
    %9 = vector.load %arg4[%c0_5, %c0_6] : memref<32x128xbf16, #tpu.memory_space<vmem>>, vector<32x128xbf16>
    tpu.vector_store %arg4[%c0_5, %c0_6], %8 {strides = array<i32>} : memref<32x128xbf16, #tpu.memory_space<vmem>>, vector<32x128xbf16>,
    return
  }
  func.func @transform_0(%arg0: i32) -> (i32, i32) {
    %c0_i32 = arith.constant 0 : i32
    %c0_i32_0 = arith.constant 0 : i32
    return %arg0, %c0_i32 : i32, i32
  }
  func.func @transform_1(%arg0: i32) -> (i32, i32) {
    %c0_i32 = arith.constant 0 : i32
    %c0_i32_0 = arith.constant 0 : i32
    %c0_i32_1 = arith.constant 0 : i32
    return %c0_i32, %c0_i32_0 : i32, i32
  }
  func.func @transform_2(%arg0: i32) -> (i32, i32) {
    %c0_i32 = arith.constant 0 : i32
    %c0_i32_0 = arith.constant 0 : i32
    %c0_i32_1 = arith.constant 0 : i32
    return %c0_i32, %c0_i32_0 : i32, i32
  }
  func.func @transform_3(%arg0: i32) -> (i32, i32) {
    %c0_i32 = arith.constant 0 : i32
    %c0_i32_0 = arith.constant 0 : i32
    return %arg0, %c0_i32 : i32, i32
  }
}

module attributes {stable_mosaic.version = 11 : i64} {
  func.func @_bn_apply_kernel(%arg0: i32, %arg1: memref<8x128xbf16, #tpu.memory_space<vmem>>, %arg2: memref<1x128xf32, #tpu.memory_space<vmem>>, %arg3: memref<1x128xf32, #tpu.memory_space<vmem>>, %arg4: memref<8x128xbf16, #tpu.memory_space<vmem>>) attributes {dimension_semantics = [#tpu.dimension_semantics<parallel>], iteration_bounds = array<i64: 1>, scalar_prefetch = 0 : i64, scratch_operands = 0 : i64, tpu.core_type = #tpu.core_type<tc>, window_params = [{transform_indices = @transform_0, window_bounds = array<i64: 8, 128>}, {pipeline_mode = #tpu.pipeline_mode<synchronous>, transform_indices = @transform_1, window_bounds = array<i64: 1, 128>}, {pipeline_mode = #tpu.pipeline_mode<synchronous>, transform_indices = @transform_2, window_bounds = array<i64: 1, 128>}, {transform_indices = @transform_3, window_bounds = array<i64: 8, 128>}]} {
    %c0 = arith.constant 0 : index
    %c0_0 = arith.constant 0 : index
    %0 = vector.load %arg1[%c0, %c0_0] : memref<8x128xbf16, #tpu.memory_space<vmem>>, vector<8x128xbf16>
    %1 = arith.extf %0 : vector<8x128xbf16> to vector<8x128xf32>
    %c0_1 = arith.constant 0 : index
    %c0_2 = arith.constant 0 : index
    %2 = vector.load %arg2[%c0_1, %c0_2] : memref<1x128xf32, #tpu.memory_space<vmem>>, vector<1x128xf32>
    %3 = vector.broadcast %2 : vector<1x128xf32> to vector<8x128xf32>
    %4 = arith.mulf %1, %3 : vector<8x128xf32>
    %c0_3 = arith.constant 0 : index
    %c0_4 = arith.constant 0 : index
    %5 = vector.load %arg3[%c0_3, %c0_4] : memref<1x128xf32, #tpu.memory_space<vmem>>, vector<1x128xf32>
    %6 = vector.broadcast %5 : vector<1x128xf32> to vector<8x128xf32>
    %7 = arith.addf %4, %6 : vector<8x128xf32>
    %8 = arith.truncf %7 : vector<8x128xf32> to vector<8x128xbf16>
    %c0_5 = arith.constant 0 : index
    %c0_6 = arith.constant 0 : index
    %9 = vector.load %arg4[%c0_5, %c0_6] : memref<8x128xbf16, #tpu.memory_space<vmem>>, vector<8x128xbf16>
    tpu.vector_store %arg4[%c0_5, %c0_6], %8 {strides = array<i32>} : memref<8x128xbf16, #tpu.memory_space<vmem>>, vector<8x128xbf16>,
    return
  }
  func.func @transform_0(%arg0: i32) -> (i32, i32) {
    %c0_i32 = arith.constant 0 : i32
    %c0_i32_0 = arith.constant 0 : i32
    return %arg0, %c0_i32 : i32, i32
  }
  func.func @transform_1(%arg0: i32) -> (i32, i32) {
    %c0_i32 = arith.constant 0 : i32
    %c0_i32_0 = arith.constant 0 : i32
    %c0_i32_1 = arith.constant 0 : i32
    return %c0_i32, %c0_i32_0 : i32, i32
  }
  func.func @transform_2(%arg0: i32) -> (i32, i32) {
    %c0_i32 = arith.constant 0 : i32
    %c0_i32_0 = arith.constant 0 : i32
    %c0_i32_1 = arith.constant 0 : i32
    return %c0_i32, %c0_i32_0 : i32, i32
  }
  func.func @transform_3(%arg0: i32) -> (i32, i32) {
    %c0_i32 = arith.constant 0 : i32
    %c0_i32_0 = arith.constant 0 : i32
    return %arg0, %c0_i32 : i32, i32
  }
}

module attributes {stable_mosaic.version = 11 : i64} {
  func.func @_mm_kernel(%arg0: i32, %arg1: i32, %arg2: i32, %arg3: memref<1x8x512xbf16, #tpu.memory_space<vmem>>, %arg4: memref<1x512x128xbf16, #tpu.memory_space<vmem>>, %arg5: memref<1x128xf32, #tpu.memory_space<vmem>>, %arg6: memref<1x8x128xbf16, #tpu.memory_space<vmem>>, %arg7: memref<1x1x2x128xf32, #tpu.memory_space<vmem>>, %arg8: memref<8x128xf32, #tpu.memory_space<vmem>>) attributes {dimension_semantics = [#tpu.dimension_semantics<parallel>, #tpu.dimension_semantics<parallel>, #tpu.dimension_semantics<arbitrary>], iteration_bounds = array<i64: 1, 1, 1>, scalar_prefetch = 0 : i64, scratch_operands = 1 : i64, tpu.core_type = #tpu.core_type<tc>, window_params = [{transform_indices = @transform_0, window_bounds = array<i64: 1, 8, 512>}, {transform_indices = @transform_1, window_bounds = array<i64: 1, 512, 128>}, {pipeline_mode = #tpu.pipeline_mode<synchronous>, transform_indices = @transform_2, window_bounds = array<i64: 1, 128>}, {transform_indices = @transform_3, window_bounds = array<i64: 1, 8, 128>}, {transform_indices = @transform_4, window_bounds = array<i64: 1, 1, 2, 128>}]} {
    %c0_i32 = arith.constant 0 : i32
    %0 = arith.cmpi eq, %arg2, %c0_i32 : i32
    %1 = arith.extui %0 : i1 to i32
    %c0_i32_0 = arith.constant 0 : i32
    %2 = arith.cmpi ne, %1, %c0_i32_0 : i32
    scf.if %2 {
      %cst_11 = arith.constant 0.000000e+00 : f32
      %17 = vector.broadcast %cst_11 : f32 to vector<8x128xf32>
      %c0_12 = arith.constant 0 : index
      %c0_13 = arith.constant 0 : index
      %18 = vector.load %arg8[%c0_12, %c0_13] : memref<8x128xf32, #tpu.memory_space<vmem>>, vector<8x128xf32>
      tpu.vector_store %arg8[%c0_12, %c0_13], %17 {strides = array<i32>} : memref<8x128xf32, #tpu.memory_space<vmem>>, vector<8x128xf32>,
    } else {
    }
    %c512_i32 = arith.constant 512 : i32
    %3 = arith.muli %arg2, %c512_i32 : i32
    %4 = tpu.assume_multiple %3, 512 : i32
    %c0 = arith.constant 0 : index
    %5 = arith.index_cast %4 : i32 to index
    %c0_1 = arith.constant 0 : index
    %6 = vector.load %arg4[%c0, %5, %c0_1] : memref<1x512x128xbf16, #tpu.memory_space<vmem>>, vector<1x512x128xbf16>
    %7 = vector.shape_cast %6 : vector<1x512x128xbf16> to vector<512x128xbf16>
    %c0_2 = arith.constant 0 : index
    %c0_3 = arith.constant 0 : index
    %8 = vector.load %arg8[%c0_2, %c0_3] : memref<8x128xf32, #tpu.memory_space<vmem>>, vector<8x128xf32>
    %c0_4 = arith.constant 0 : index
    %c0_5 = arith.constant 0 : index
    %c0_6 = arith.constant 0 : index
    %9 = vector.load %arg3[%c0_4, %c0_5, %c0_6] : memref<1x8x512xbf16, #tpu.memory_space<vmem>>, vector<1x8x512xbf16>
    %10 = vector.shape_cast %9 : vector<1x8x512xbf16> to vector<8x512xbf16>
    %cst = arith.constant dense<0.000000e+00> : vector<8x128xf32>
    %11 = tpu.matmul %10, %7, %cst {dimension_numbers = #tpu.dot_dimension_numbers<[1], [0], [0], [1], [0, 0, 1, 1], [], []>} : vector<8x512xbf16>, vector<512x128xbf16>, vector<8x128xf32> -> vector<8x128xf32>
    %12 = arith.addf %8, %11 : vector<8x128xf32>
    %c0_7 = arith.constant 0 : index
    %c0_8 = arith.constant 0 : index
    %13 = vector.load %arg8[%c0_7, %c0_8] : memref<8x128xf32, #tpu.memory_space<vmem>>, vector<8x128xf32>
    tpu.vector_store %arg8[%c0_7, %c0_8], %12 {strides = array<i32>} : memref<8x128xf32, #tpu.memory_space<vmem>>, vector<8x128xf32>,
    %c0_i32_9 = arith.constant 0 : i32
    %14 = arith.cmpi eq, %arg2, %c0_i32_9 : i32
    %15 = arith.extui %14 : i1 to i32
    %c0_i32_10 = arith.constant 0 : i32
    %16 = arith.cmpi ne, %15, %c0_i32_10 : i32
    scf.if %16 {
      %c0_11 = arith.constant 0 : index
      %c0_12 = arith.constant 0 : index
      %17 = vector.load %arg8[%c0_11, %c0_12] : memref<8x128xf32, #tpu.memory_space<vmem>>, vector<8x128xf32>
      %c0_13 = arith.constant 0 : index
      %c0_14 = arith.constant 0 : index
      %18 = vector.load %arg5[%c0_13, %c0_14] : memref<1x128xf32, #tpu.memory_space<vmem>>, vector<1x128xf32>
      %19 = vector.broadcast %18 : vector<1x128xf32> to vector<8x128xf32>
      %20 = arith.addf %17, %19 : vector<8x128xf32>
      %cst_15 = arith.constant dense<0.000000e+00> : vector<128xf32>
      %21 = vector.multi_reduction <add>, %20, %cst_15 [0] : vector<8x128xf32> to vector<128xf32>
      %22 = vector.shape_cast %21 : vector<128xf32> to vector<1x128xf32>
      %c0_16 = arith.constant 0 : index
      %c0_17 = arith.constant 0 : index
      %c0_18 = arith.constant 0 : index
      %c0_19 = arith.constant 0 : index
      %23 = vector.load %arg7[%c0_16, %c0_17, %c0_18, %c0_19] : memref<1x1x2x128xf32, #tpu.memory_space<vmem>>, vector<1x1x1x128xf32>
      %24 = vector.shape_cast %23 : vector<1x1x1x128xf32> to vector<1x128xf32>
      %25 = vector.shape_cast %22 : vector<1x128xf32> to vector<1x1x1x128xf32>
      tpu.vector_store %arg7[%c0_16, %c0_17, %c0_18, %c0_19], %25 {strides = array<i32>} : memref<1x1x2x128xf32, #tpu.memory_space<vmem>>, vector<1x1x1x128xf32>,
      %26 = arith.mulf %20, %20 : vector<8x128xf32>
      %cst_20 = arith.constant dense<0.000000e+00> : vector<128xf32>
      %27 = vector.multi_reduction <add>, %26, %cst_20 [0] : vector<8x128xf32> to vector<128xf32>
      %28 = vector.shape_cast %27 : vector<128xf32> to vector<1x128xf32>
      %c0_21 = arith.constant 0 : index
      %c0_22 = arith.constant 0 : index
      %c1 = arith.constant 1 : index
      %c0_23 = arith.constant 0 : index
      %29 = vector.load %arg7[%c0_21, %c0_22, %c1, %c0_23] : memref<1x1x2x128xf32, #tpu.memory_space<vmem>>, vector<1x1x1x128xf32>
      %30 = vector.shape_cast %29 : vector<1x1x1x128xf32> to vector<1x128xf32>
      %31 = vector.shape_cast %28 : vector<1x128xf32> to vector<1x1x1x128xf32>
      tpu.vector_store %arg7[%c0_21, %c0_22, %c1, %c0_23], %31 {strides = array<i32>} : memref<1x1x2x128xf32, #tpu.memory_space<vmem>>, vector<1x1x1x128xf32>,
      %32 = arith.truncf %20 : vector<8x128xf32> to vector<8x128xbf16>
      %c0_24 = arith.constant 0 : index
      %c0_25 = arith.constant 0 : index
      %c0_26 = arith.constant 0 : index
      %33 = vector.load %arg6[%c0_24, %c0_25, %c0_26] : memref<1x8x128xbf16, #tpu.memory_space<vmem>>, vector<1x8x128xbf16>
      %34 = vector.shape_cast %33 : vector<1x8x128xbf16> to vector<8x128xbf16>
      %35 = vector.shape_cast %32 : vector<8x128xbf16> to vector<1x8x128xbf16>
      tpu.vector_store %arg6[%c0_24, %c0_25, %c0_26], %35 {strides = array<i32>} : memref<1x8x128xbf16, #tpu.memory_space<vmem>>, vector<1x8x128xbf16>,
    } else {
    }
    return
  }
  func.func @transform_0(%arg0: i32, %arg1: i32, %arg2: i32) -> (i32, i32, i32) {
    %c0_i32 = arith.constant 0 : i32
    return %arg0, %arg1, %arg2 : i32, i32, i32
  }
  func.func @transform_1(%arg0: i32, %arg1: i32, %arg2: i32) -> (i32, i32, i32) {
    %c0_i32 = arith.constant 0 : i32
    %c0_i32_0 = arith.constant 0 : i32
    %c0_i32_1 = arith.constant 0 : i32
    return %arg0, %c0_i32, %c0_i32_0 : i32, i32, i32
  }
  func.func @transform_2(%arg0: i32, %arg1: i32, %arg2: i32) -> (i32, i32) {
    %c0_i32 = arith.constant 0 : i32
    %c0_i32_0 = arith.constant 0 : i32
    %c0_i32_1 = arith.constant 0 : i32
    return %c0_i32, %c0_i32_0 : i32, i32
  }
  func.func @transform_3(%arg0: i32, %arg1: i32, %arg2: i32) -> (i32, i32, i32) {
    %c0_i32 = arith.constant 0 : i32
    %c0_i32_0 = arith.constant 0 : i32
    return %arg0, %arg1, %c0_i32 : i32, i32, i32
  }
  func.func @transform_4(%arg0: i32, %arg1: i32, %arg2: i32) -> (i32, i32, i32, i32) {
    %c0_i32 = arith.constant 0 : i32
    %c0_i32_0 = arith.constant 0 : i32
    %c0_i32_1 = arith.constant 0 : i32
    return %arg0, %arg1, %c0_i32, %c0_i32_0 : i32, i32, i32, i32
  }
}

module attributes {stable_mosaic.version = 11 : i64} {
  func.func @_mm_kernel(%arg0: i32, %arg1: i32, %arg2: i32, %arg3: memref<1x2x1024xbf16, #tpu.memory_space<vmem>>, %arg4: memref<1x1024x128xbf16, #tpu.memory_space<vmem>>, %arg5: memref<1x128xf32, #tpu.memory_space<vmem>>, %arg6: memref<1x2x128xbf16, #tpu.memory_space<vmem>>, %arg7: memref<1x1x2x128xf32, #tpu.memory_space<vmem>>, %arg8: memref<2x128xf32, #tpu.memory_space<vmem>>) attributes {dimension_semantics = [#tpu.dimension_semantics<parallel>, #tpu.dimension_semantics<parallel>, #tpu.dimension_semantics<arbitrary>], iteration_bounds = array<i64: 1, 1, 1>, scalar_prefetch = 0 : i64, scratch_operands = 1 : i64, tpu.core_type = #tpu.core_type<tc>, window_params = [{transform_indices = @transform_0, window_bounds = array<i64: 1, 2, 1024>}, {transform_indices = @transform_1, window_bounds = array<i64: 1, 1024, 128>}, {pipeline_mode = #tpu.pipeline_mode<synchronous>, transform_indices = @transform_2, window_bounds = array<i64: 1, 128>}, {transform_indices = @transform_3, window_bounds = array<i64: 1, 2, 128>}, {transform_indices = @transform_4, window_bounds = array<i64: 1, 1, 2, 128>}]} {
    %c0_i32 = arith.constant 0 : i32
    %0 = arith.cmpi eq, %arg2, %c0_i32 : i32
    %1 = arith.extui %0 : i1 to i32
    %c0_i32_0 = arith.constant 0 : i32
    %2 = arith.cmpi ne, %1, %c0_i32_0 : i32
    scf.if %2 {
      %cst_11 = arith.constant 0.000000e+00 : f32
      %17 = vector.broadcast %cst_11 : f32 to vector<2x128xf32>
      %c0_12 = arith.constant 0 : index
      %c0_13 = arith.constant 0 : index
      %18 = vector.load %arg8[%c0_12, %c0_13] : memref<2x128xf32, #tpu.memory_space<vmem>>, vector<2x128xf32>
      tpu.vector_store %arg8[%c0_12, %c0_13], %17 {strides = array<i32>} : memref<2x128xf32, #tpu.memory_space<vmem>>, vector<2x128xf32>,
    } else {
    }
    %c1024_i32 = arith.constant 1024 : i32
    %3 = arith.muli %arg2, %c1024_i32 : i32
    %4 = tpu.assume_multiple %3, 1024 : i32
    %c0 = arith.constant 0 : index
    %5 = arith.index_cast %4 : i32 to index
    %c0_1 = arith.constant 0 : index
    %6 = vector.load %arg4[%c0, %5, %c0_1] : memref<1x1024x128xbf16, #tpu.memory_space<vmem>>, vector<1x1024x128xbf16>
    %7 = vector.shape_cast %6 : vector<1x1024x128xbf16> to vector<1024x128xbf16>
    %c0_2 = arith.constant 0 : index
    %c0_3 = arith.constant 0 : index
    %8 = vector.load %arg8[%c0_2, %c0_3] : memref<2x128xf32, #tpu.memory_space<vmem>>, vector<2x128xf32>
    %c0_4 = arith.constant 0 : index
    %c0_5 = arith.constant 0 : index
    %c0_6 = arith.constant 0 : index
    %9 = vector.load %arg3[%c0_4, %c0_5, %c0_6] : memref<1x2x1024xbf16, #tpu.memory_space<vmem>>, vector<1x2x1024xbf16>
    %10 = vector.shape_cast %9 : vector<1x2x1024xbf16> to vector<2x1024xbf16>
    %cst = arith.constant dense<0.000000e+00> : vector<2x128xf32>
    %11 = tpu.matmul %10, %7, %cst {dimension_numbers = #tpu.dot_dimension_numbers<[1], [0], [0], [1], [0, 0, 1, 1], [], []>} : vector<2x1024xbf16>, vector<1024x128xbf16>, vector<2x128xf32> -> vector<2x128xf32>
    %12 = arith.addf %8, %11 : vector<2x128xf32>
    %c0_7 = arith.constant 0 : index
    %c0_8 = arith.constant 0 : index
    %13 = vector.load %arg8[%c0_7, %c0_8] : memref<2x128xf32, #tpu.memory_space<vmem>>, vector<2x128xf32>
    tpu.vector_store %arg8[%c0_7, %c0_8], %12 {strides = array<i32>} : memref<2x128xf32, #tpu.memory_space<vmem>>, vector<2x128xf32>,
    %c0_i32_9 = arith.constant 0 : i32
    %14 = arith.cmpi eq, %arg2, %c0_i32_9 : i32
    %15 = arith.extui %14 : i1 to i32
    %c0_i32_10 = arith.constant 0 : i32
    %16 = arith.cmpi ne, %15, %c0_i32_10 : i32
    scf.if %16 {
      %c0_11 = arith.constant 0 : index
      %c0_12 = arith.constant 0 : index
      %17 = vector.load %arg8[%c0_11, %c0_12] : memref<2x128xf32, #tpu.memory_space<vmem>>, vector<2x128xf32>
      %c0_13 = arith.constant 0 : index
      %c0_14 = arith.constant 0 : index
      %18 = vector.load %arg5[%c0_13, %c0_14] : memref<1x128xf32, #tpu.memory_space<vmem>>, vector<1x128xf32>
      %19 = vector.broadcast %18 : vector<1x128xf32> to vector<2x128xf32>
      %20 = arith.addf %17, %19 : vector<2x128xf32>
      %cst_15 = arith.constant 0.000000e+00 : f32
      %21 = vector.broadcast %cst_15 : f32 to vector<2x128xf32>
      %c0_16 = arith.constant 0 : index
      %c0_17 = arith.constant 0 : index
      %c0_18 = arith.constant 0 : index
      %c0_19 = arith.constant 0 : index
      %22 = vector.load %arg7[%c0_16, %c0_17, %c0_18, %c0_19] : memref<1x1x2x128xf32, #tpu.memory_space<vmem>>, vector<1x1x2x128xf32>
      %23 = vector.shape_cast %22 : vector<1x1x2x128xf32> to vector<2x128xf32>
      %24 = vector.shape_cast %21 : vector<2x128xf32> to vector<1x1x2x128xf32>
      tpu.vector_store %arg7[%c0_16, %c0_17, %c0_18, %c0_19], %24 {strides = array<i32>} : memref<1x1x2x128xf32, #tpu.memory_space<vmem>>, vector<1x1x2x128xf32>,
      %cst_20 = arith.constant 0.000000e+00 : f32
      %25 = vector.broadcast %cst_20 : f32 to vector<2x128xf32>
      %26 = arith.maximumf %20, %25 : vector<2x128xf32>
      %27 = arith.truncf %26 : vector<2x128xf32> to vector<2x128xbf16>
      %c0_21 = arith.constant 0 : index
      %c0_22 = arith.constant 0 : index
      %c0_23 = arith.constant 0 : index
      %28 = vector.load %arg6[%c0_21, %c0_22, %c0_23] : memref<1x2x128xbf16, #tpu.memory_space<vmem>>, vector<1x2x128xbf16>
      %29 = vector.shape_cast %28 : vector<1x2x128xbf16> to vector<2x128xbf16>
      %30 = vector.shape_cast %27 : vector<2x128xbf16> to vector<1x2x128xbf16>
      tpu.vector_store %arg6[%c0_21, %c0_22, %c0_23], %30 {strides = array<i32>} : memref<1x2x128xbf16, #tpu.memory_space<vmem>>, vector<1x2x128xbf16>,
    } else {
    }
    return
  }
  func.func @transform_0(%arg0: i32, %arg1: i32, %arg2: i32) -> (i32, i32, i32) {
    %c0_i32 = arith.constant 0 : i32
    return %arg0, %arg1, %arg2 : i32, i32, i32
  }
  func.func @transform_1(%arg0: i32, %arg1: i32, %arg2: i32) -> (i32, i32, i32) {
    %c0_i32 = arith.constant 0 : i32
    %c0_i32_0 = arith.constant 0 : i32
    %c0_i32_1 = arith.constant 0 : i32
    return %arg0, %c0_i32, %c0_i32_0 : i32, i32, i32
  }
  func.func @transform_2(%arg0: i32, %arg1: i32, %arg2: i32) -> (i32, i32) {
    %c0_i32 = arith.constant 0 : i32
    %c0_i32_0 = arith.constant 0 : i32
    %c0_i32_1 = arith.constant 0 : i32
    return %c0_i32, %c0_i32_0 : i32, i32
  }
  func.func @transform_3(%arg0: i32, %arg1: i32, %arg2: i32) -> (i32, i32, i32) {
    %c0_i32 = arith.constant 0 : i32
    %c0_i32_0 = arith.constant 0 : i32
    return %arg0, %arg1, %c0_i32 : i32, i32, i32
  }
  func.func @transform_4(%arg0: i32, %arg1: i32, %arg2: i32) -> (i32, i32, i32, i32) {
    %c0_i32 = arith.constant 0 : i32
    %c0_i32_0 = arith.constant 0 : i32
    %c0_i32_1 = arith.constant 0 : i32
    return %arg0, %arg1, %c0_i32, %c0_i32_0 : i32, i32, i32, i32
  }
}

module attributes {stable_mosaic.version = 11 : i64} {
  func.func @_mm_kernel(%arg0: i32, %arg1: i32, %arg2: i32, %arg3: memref<1x2x256xbf16, #tpu.memory_space<vmem>>, %arg4: memref<1x256x128xbf16, #tpu.memory_space<vmem>>, %arg5: memref<1x128xf32, #tpu.memory_space<vmem>>, %arg6: memref<1x2x128xbf16, #tpu.memory_space<vmem>>, %arg7: memref<1x1x2x128xf32, #tpu.memory_space<vmem>>, %arg8: memref<2x128xf32, #tpu.memory_space<vmem>>) attributes {dimension_semantics = [#tpu.dimension_semantics<parallel>, #tpu.dimension_semantics<parallel>, #tpu.dimension_semantics<arbitrary>], iteration_bounds = array<i64: 4, 1, 1>, scalar_prefetch = 0 : i64, scratch_operands = 1 : i64, tpu.core_type = #tpu.core_type<tc>, window_params = [{transform_indices = @transform_0, window_bounds = array<i64: 1, 2, 256>}, {transform_indices = @transform_1, window_bounds = array<i64: 1, 256, 128>}, {pipeline_mode = #tpu.pipeline_mode<synchronous>, transform_indices = @transform_2, window_bounds = array<i64: 1, 128>}, {transform_indices = @transform_3, window_bounds = array<i64: 1, 2, 128>}, {transform_indices = @transform_4, window_bounds = array<i64: 1, 1, 2, 128>}]} {
    %c0_i32 = arith.constant 0 : i32
    %0 = arith.cmpi eq, %arg2, %c0_i32 : i32
    %1 = arith.extui %0 : i1 to i32
    %c0_i32_0 = arith.constant 0 : i32
    %2 = arith.cmpi ne, %1, %c0_i32_0 : i32
    scf.if %2 {
      %cst_11 = arith.constant 0.000000e+00 : f32
      %17 = vector.broadcast %cst_11 : f32 to vector<2x128xf32>
      %c0_12 = arith.constant 0 : index
      %c0_13 = arith.constant 0 : index
      %18 = vector.load %arg8[%c0_12, %c0_13] : memref<2x128xf32, #tpu.memory_space<vmem>>, vector<2x128xf32>
      tpu.vector_store %arg8[%c0_12, %c0_13], %17 {strides = array<i32>} : memref<2x128xf32, #tpu.memory_space<vmem>>, vector<2x128xf32>,
    } else {
    }
    %c256_i32 = arith.constant 256 : i32
    %3 = arith.muli %arg2, %c256_i32 : i32
    %4 = tpu.assume_multiple %3, 256 : i32
    %c0 = arith.constant 0 : index
    %5 = arith.index_cast %4 : i32 to index
    %c0_1 = arith.constant 0 : index
    %6 = vector.load %arg4[%c0, %5, %c0_1] : memref<1x256x128xbf16, #tpu.memory_space<vmem>>, vector<1x256x128xbf16>
    %7 = vector.shape_cast %6 : vector<1x256x128xbf16> to vector<256x128xbf16>
    %c0_2 = arith.constant 0 : index
    %c0_3 = arith.constant 0 : index
    %8 = vector.load %arg8[%c0_2, %c0_3] : memref<2x128xf32, #tpu.memory_space<vmem>>, vector<2x128xf32>
    %c0_4 = arith.constant 0 : index
    %c0_5 = arith.constant 0 : index
    %c0_6 = arith.constant 0 : index
    %9 = vector.load %arg3[%c0_4, %c0_5, %c0_6] : memref<1x2x256xbf16, #tpu.memory_space<vmem>>, vector<1x2x256xbf16>
    %10 = vector.shape_cast %9 : vector<1x2x256xbf16> to vector<2x256xbf16>
    %cst = arith.constant dense<0.000000e+00> : vector<2x128xf32>
    %11 = tpu.matmul %10, %7, %cst {dimension_numbers = #tpu.dot_dimension_numbers<[1], [0], [0], [1], [0, 0, 1, 1], [], []>} : vector<2x256xbf16>, vector<256x128xbf16>, vector<2x128xf32> -> vector<2x128xf32>
    %12 = arith.addf %8, %11 : vector<2x128xf32>
    %c0_7 = arith.constant 0 : index
    %c0_8 = arith.constant 0 : index
    %13 = vector.load %arg8[%c0_7, %c0_8] : memref<2x128xf32, #tpu.memory_space<vmem>>, vector<2x128xf32>
    tpu.vector_store %arg8[%c0_7, %c0_8], %12 {strides = array<i32>} : memref<2x128xf32, #tpu.memory_space<vmem>>, vector<2x128xf32>,
    %c0_i32_9 = arith.constant 0 : i32
    %14 = arith.cmpi eq, %arg2, %c0_i32_9 : i32
    %15 = arith.extui %14 : i1 to i32
    %c0_i32_10 = arith.constant 0 : i32
    %16 = arith.cmpi ne, %15, %c0_i32_10 : i32
    scf.if %16 {
      %c0_11 = arith.constant 0 : index
      %c0_12 = arith.constant 0 : index
      %17 = vector.load %arg8[%c0_11, %c0_12] : memref<2x128xf32, #tpu.memory_space<vmem>>, vector<2x128xf32>
      %c0_13 = arith.constant 0 : index
      %c0_14 = arith.constant 0 : index
      %18 = vector.load %arg5[%c0_13, %c0_14] : memref<1x128xf32, #tpu.memory_space<vmem>>, vector<1x128xf32>
      %19 = vector.broadcast %18 : vector<1x128xf32> to vector<2x128xf32>
      %20 = arith.addf %17, %19 : vector<2x128xf32>
      %cst_15 = arith.constant dense<0.000000e+00> : vector<128xf32>
      %21 = vector.multi_reduction <add>, %20, %cst_15 [0] : vector<2x128xf32> to vector<128xf32>
      %22 = vector.shape_cast %21 : vector<128xf32> to vector<1x128xf32>
      %c0_16 = arith.constant 0 : index
      %c0_17 = arith.constant 0 : index
      %c0_18 = arith.constant 0 : index
      %c0_19 = arith.constant 0 : index
      %23 = vector.load %arg7[%c0_16, %c0_17, %c0_18, %c0_19] : memref<1x1x2x128xf32, #tpu.memory_space<vmem>>, vector<1x1x1x128xf32>
      %24 = vector.shape_cast %23 : vector<1x1x1x128xf32> to vector<1x128xf32>
      %25 = vector.shape_cast %22 : vector<1x128xf32> to vector<1x1x1x128xf32>
      tpu.vector_store %arg7[%c0_16, %c0_17, %c0_18, %c0_19], %25 {strides = array<i32>} : memref<1x1x2x128xf32, #tpu.memory_space<vmem>>, vector<1x1x1x128xf32>,
      %26 = arith.mulf %20, %20 : vector<2x128xf32>
      %cst_20 = arith.constant dense<0.000000e+00> : vector<128xf32>
      %27 = vector.multi_reduction <add>, %26, %cst_20 [0] : vector<2x128xf32> to vector<128xf32>
      %28 = vector.shape_cast %27 : vector<128xf32> to vector<1x128xf32>
      %c0_21 = arith.constant 0 : index
      %c0_22 = arith.constant 0 : index
      %c1 = arith.constant 1 : index
      %c0_23 = arith.constant 0 : index
      %29 = vector.load %arg7[%c0_21, %c0_22, %c1, %c0_23] : memref<1x1x2x128xf32, #tpu.memory_space<vmem>>, vector<1x1x1x128xf32>
      %30 = vector.shape_cast %29 : vector<1x1x1x128xf32> to vector<1x128xf32>
      %31 = vector.shape_cast %28 : vector<1x128xf32> to vector<1x1x1x128xf32>
      tpu.vector_store %arg7[%c0_21, %c0_22, %c1, %c0_23], %31 {strides = array<i32>} : memref<1x1x2x128xf32, #tpu.memory_space<vmem>>, vector<1x1x1x128xf32>,
      %32 = arith.truncf %20 : vector<2x128xf32> to vector<2x128xbf16>
      %c0_24 = arith.constant 0 : index
      %c0_25 = arith.constant 0 : index
      %c0_26 = arith.constant 0 : index
      %33 = vector.load %arg6[%c0_24, %c0_25, %c0_26] : memref<1x2x128xbf16, #tpu.memory_space<vmem>>, vector<1x2x128xbf16>
      %34 = vector.shape_cast %33 : vector<1x2x128xbf16> to vector<2x128xbf16>
      %35 = vector.shape_cast %32 : vector<2x128xbf16> to vector<1x2x128xbf16>
      tpu.vector_store %arg6[%c0_24, %c0_25, %c0_26], %35 {strides = array<i32>} : memref<1x2x128xbf16, #tpu.memory_space<vmem>>, vector<1x2x128xbf16>,
    } else {
    }
    return
  }
  func.func @transform_0(%arg0: i32, %arg1: i32, %arg2: i32) -> (i32, i32, i32) {
    %c0_i32 = arith.constant 0 : i32
    return %arg0, %arg1, %arg2 : i32, i32, i32
  }
  func.func @transform_1(%arg0: i32, %arg1: i32, %arg2: i32) -> (i32, i32, i32) {
    %c0_i32 = arith.constant 0 : i32
    %c0_i32_0 = arith.constant 0 : i32
    %c0_i32_1 = arith.constant 0 : i32
    return %arg0, %c0_i32, %c0_i32_0 : i32, i32, i32
  }
  func.func @transform_2(%arg0: i32, %arg1: i32, %arg2: i32) -> (i32, i32) {
    %c0_i32 = arith.constant 0 : i32
    %c0_i32_0 = arith.constant 0 : i32
    %c0_i32_1 = arith.constant 0 : i32
    return %c0_i32, %c0_i32_0 : i32, i32
  }
  func.func @transform_3(%arg0: i32, %arg1: i32, %arg2: i32) -> (i32, i32, i32) {
    %c0_i32 = arith.constant 0 : i32
    %c0_i32_0 = arith.constant 0 : i32
    return %arg0, %arg1, %c0_i32 : i32, i32, i32
  }
  func.func @transform_4(%arg0: i32, %arg1: i32, %arg2: i32) -> (i32, i32, i32, i32) {
    %c0_i32 = arith.constant 0 : i32
    %c0_i32_0 = arith.constant 0 : i32
    %c0_i32_1 = arith.constant 0 : i32
    return %arg0, %arg1, %c0_i32, %c0_i32_0 : i32, i32, i32, i32
  }
}

module attributes {stable_mosaic.version = 11 : i64} {
  func.func @_mm_kernel(%arg0: i32, %arg1: i32, %arg2: i32, %arg3: memref<1x8x512xbf16, #tpu.memory_space<vmem>>, %arg4: memref<1x512x128xbf16, #tpu.memory_space<vmem>>, %arg5: memref<1x128xf32, #tpu.memory_space<vmem>>, %arg6: memref<1x8x128xbf16, #tpu.memory_space<vmem>>, %arg7: memref<1x1x2x128xf32, #tpu.memory_space<vmem>>, %arg8: memref<8x128xf32, #tpu.memory_space<vmem>>) attributes {dimension_semantics = [#tpu.dimension_semantics<parallel>, #tpu.dimension_semantics<parallel>, #tpu.dimension_semantics<arbitrary>], iteration_bounds = array<i64: 4, 1, 1>, scalar_prefetch = 0 : i64, scratch_operands = 1 : i64, tpu.core_type = #tpu.core_type<tc>, window_params = [{transform_indices = @transform_0, window_bounds = array<i64: 1, 8, 512>}, {transform_indices = @transform_1, window_bounds = array<i64: 1, 512, 128>}, {pipeline_mode = #tpu.pipeline_mode<synchronous>, transform_indices = @transform_2, window_bounds = array<i64: 1, 128>}, {transform_indices = @transform_3, window_bounds = array<i64: 1, 8, 128>}, {transform_indices = @transform_4, window_bounds = array<i64: 1, 1, 2, 128>}]} {
    %c0_i32 = arith.constant 0 : i32
    %0 = arith.cmpi eq, %arg2, %c0_i32 : i32
    %1 = arith.extui %0 : i1 to i32
    %c0_i32_0 = arith.constant 0 : i32
    %2 = arith.cmpi ne, %1, %c0_i32_0 : i32
    scf.if %2 {
      %cst_11 = arith.constant 0.000000e+00 : f32
      %17 = vector.broadcast %cst_11 : f32 to vector<8x128xf32>
      %c0_12 = arith.constant 0 : index
      %c0_13 = arith.constant 0 : index
      %18 = vector.load %arg8[%c0_12, %c0_13] : memref<8x128xf32, #tpu.memory_space<vmem>>, vector<8x128xf32>
      tpu.vector_store %arg8[%c0_12, %c0_13], %17 {strides = array<i32>} : memref<8x128xf32, #tpu.memory_space<vmem>>, vector<8x128xf32>,
    } else {
    }
    %c512_i32 = arith.constant 512 : i32
    %3 = arith.muli %arg2, %c512_i32 : i32
    %4 = tpu.assume_multiple %3, 512 : i32
    %c0 = arith.constant 0 : index
    %5 = arith.index_cast %4 : i32 to index
    %c0_1 = arith.constant 0 : index
    %6 = vector.load %arg4[%c0, %5, %c0_1] : memref<1x512x128xbf16, #tpu.memory_space<vmem>>, vector<1x512x128xbf16>
    %7 = vector.shape_cast %6 : vector<1x512x128xbf16> to vector<512x128xbf16>
    %c0_2 = arith.constant 0 : index
    %c0_3 = arith.constant 0 : index
    %8 = vector.load %arg8[%c0_2, %c0_3] : memref<8x128xf32, #tpu.memory_space<vmem>>, vector<8x128xf32>
    %c0_4 = arith.constant 0 : index
    %c0_5 = arith.constant 0 : index
    %c0_6 = arith.constant 0 : index
    %9 = vector.load %arg3[%c0_4, %c0_5, %c0_6] : memref<1x8x512xbf16, #tpu.memory_space<vmem>>, vector<1x8x512xbf16>
    %10 = vector.shape_cast %9 : vector<1x8x512xbf16> to vector<8x512xbf16>
    %cst = arith.constant dense<0.000000e+00> : vector<8x128xf32>
    %11 = tpu.matmul %10, %7, %cst {dimension_numbers = #tpu.dot_dimension_numbers<[1], [0], [0], [1], [0, 0, 1, 1], [], []>} : vector<8x512xbf16>, vector<512x128xbf16>, vector<8x128xf32> -> vector<8x128xf32>
    %12 = arith.addf %8, %11 : vector<8x128xf32>
    %c0_7 = arith.constant 0 : index
    %c0_8 = arith.constant 0 : index
    %13 = vector.load %arg8[%c0_7, %c0_8] : memref<8x128xf32, #tpu.memory_space<vmem>>, vector<8x128xf32>
    tpu.vector_store %arg8[%c0_7, %c0_8], %12 {strides = array<i32>} : memref<8x128xf32, #tpu.memory_space<vmem>>, vector<8x128xf32>,
    %c0_i32_9 = arith.constant 0 : i32
    %14 = arith.cmpi eq, %arg2, %c0_i32_9 : i32
    %15 = arith.extui %14 : i1 to i32
    %c0_i32_10 = arith.constant 0 : i32
    %16 = arith.cmpi ne, %15, %c0_i32_10 : i32
    scf.if %16 {
      %c0_11 = arith.constant 0 : index
      %c0_12 = arith.constant 0 : index
      %17 = vector.load %arg8[%c0_11, %c0_12] : memref<8x128xf32, #tpu.memory_space<vmem>>, vector<8x128xf32>
      %c0_13 = arith.constant 0 : index
      %c0_14 = arith.constant 0 : index
      %18 = vector.load %arg5[%c0_13, %c0_14] : memref<1x128xf32, #tpu.memory_space<vmem>>, vector<1x128xf32>
      %19 = vector.broadcast %18 : vector<1x128xf32> to vector<8x128xf32>
      %20 = arith.addf %17, %19 : vector<8x128xf32>
      %cst_15 = arith.constant dense<0.000000e+00> : vector<128xf32>
      %21 = vector.multi_reduction <add>, %20, %cst_15 [0] : vector<8x128xf32> to vector<128xf32>
      %22 = vector.shape_cast %21 : vector<128xf32> to vector<1x128xf32>
      %c0_16 = arith.constant 0 : index
      %c0_17 = arith.constant 0 : index
      %c0_18 = arith.constant 0 : index
      %c0_19 = arith.constant 0 : index
      %23 = vector.load %arg7[%c0_16, %c0_17, %c0_18, %c0_19] : memref<1x1x2x128xf32, #tpu.memory_space<vmem>>, vector<1x1x1x128xf32>
      %24 = vector.shape_cast %23 : vector<1x1x1x128xf32> to vector<1x128xf32>
      %25 = vector.shape_cast %22 : vector<1x128xf32> to vector<1x1x1x128xf32>
      tpu.vector_store %arg7[%c0_16, %c0_17, %c0_18, %c0_19], %25 {strides = array<i32>} : memref<1x1x2x128xf32, #tpu.memory_space<vmem>>, vector<1x1x1x128xf32>,
      %26 = arith.mulf %20, %20 : vector<8x128xf32>
      %cst_20 = arith.constant dense<0.000000e+00> : vector<128xf32>
      %27 = vector.multi_reduction <add>, %26, %cst_20 [0] : vector<8x128xf32> to vector<128xf32>
      %28 = vector.shape_cast %27 : vector<128xf32> to vector<1x128xf32>
      %c0_21 = arith.constant 0 : index
      %c0_22 = arith.constant 0 : index
      %c1 = arith.constant 1 : index
      %c0_23 = arith.constant 0 : index
      %29 = vector.load %arg7[%c0_21, %c0_22, %c1, %c0_23] : memref<1x1x2x128xf32, #tpu.memory_space<vmem>>, vector<1x1x1x128xf32>
      %30 = vector.shape_cast %29 : vector<1x1x1x128xf32> to vector<1x128xf32>
      %31 = vector.shape_cast %28 : vector<1x128xf32> to vector<1x1x1x128xf32>
      tpu.vector_store %arg7[%c0_21, %c0_22, %c1, %c0_23], %31 {strides = array<i32>} : memref<1x1x2x128xf32, #tpu.memory_space<vmem>>, vector<1x1x1x128xf32>,
      %32 = arith.truncf %20 : vector<8x128xf32> to vector<8x128xbf16>
      %c0_24 = arith.constant 0 : index
      %c0_25 = arith.constant 0 : index
      %c0_26 = arith.constant 0 : index
      %33 = vector.load %arg6[%c0_24, %c0_25, %c0_26] : memref<1x8x128xbf16, #tpu.memory_space<vmem>>, vector<1x8x128xbf16>
      %34 = vector.shape_cast %33 : vector<1x8x128xbf16> to vector<8x128xbf16>
      %35 = vector.shape_cast %32 : vector<8x128xbf16> to vector<1x8x128xbf16>
      tpu.vector_store %arg6[%c0_24, %c0_25, %c0_26], %35 {strides = array<i32>} : memref<1x8x128xbf16, #tpu.memory_space<vmem>>, vector<1x8x128xbf16>,
    } else {
    }
    return
  }
  func.func @transform_0(%arg0: i32, %arg1: i32, %arg2: i32) -> (i32, i32, i32) {
    %c0_i32 = arith.constant 0 : i32
    return %arg0, %arg1, %arg2 : i32, i32, i32
  }
  func.func @transform_1(%arg0: i32, %arg1: i32, %arg2: i32) -> (i32, i32, i32) {
    %c0_i32 = arith.constant 0 : i32
    %c0_i32_0 = arith.constant 0 : i32
    %c0_i32_1 = arith.constant 0 : i32
    return %arg0, %c0_i32, %c0_i32_0 : i32, i32, i32
  }
  func.func @transform_2(%arg0: i32, %arg1: i32, %arg2: i32) -> (i32, i32) {
    %c0_i32 = arith.constant 0 : i32
    %c0_i32_0 = arith.constant 0 : i32
    %c0_i32_1 = arith.constant 0 : i32
    return %c0_i32, %c0_i32_0 : i32, i32
  }
  func.func @transform_3(%arg0: i32, %arg1: i32, %arg2: i32) -> (i32, i32, i32) {
    %c0_i32 = arith.constant 0 : i32
    %c0_i32_0 = arith.constant 0 : i32
    return %arg0, %arg1, %c0_i32 : i32, i32, i32
  }
  func.func @transform_4(%arg0: i32, %arg1: i32, %arg2: i32) -> (i32, i32, i32, i32) {
    %c0_i32 = arith.constant 0 : i32
    %c0_i32_0 = arith.constant 0 : i32
    %c0_i32_1 = arith.constant 0 : i32
    return %arg0, %arg1, %c0_i32, %c0_i32_0 : i32, i32, i32, i32
  }
}

module attributes {stable_mosaic.version = 11 : i64} {
  func.func @_mm_kernel(%arg0: i32, %arg1: i32, %arg2: i32, %arg3: memref<1x32x256xbf16, #tpu.memory_space<vmem>>, %arg4: memref<1x256x128xbf16, #tpu.memory_space<vmem>>, %arg5: memref<1x128xf32, #tpu.memory_space<vmem>>, %arg6: memref<1x32x128xbf16, #tpu.memory_space<vmem>>, %arg7: memref<1x1x2x128xf32, #tpu.memory_space<vmem>>, %arg8: memref<32x128xf32, #tpu.memory_space<vmem>>) attributes {dimension_semantics = [#tpu.dimension_semantics<parallel>, #tpu.dimension_semantics<parallel>, #tpu.dimension_semantics<arbitrary>], iteration_bounds = array<i64: 4, 1, 1>, scalar_prefetch = 0 : i64, scratch_operands = 1 : i64, tpu.core_type = #tpu.core_type<tc>, window_params = [{transform_indices = @transform_0, window_bounds = array<i64: 1, 32, 256>}, {transform_indices = @transform_1, window_bounds = array<i64: 1, 256, 128>}, {pipeline_mode = #tpu.pipeline_mode<synchronous>, transform_indices = @transform_2, window_bounds = array<i64: 1, 128>}, {transform_indices = @transform_3, window_bounds = array<i64: 1, 32, 128>}, {transform_indices = @transform_4, window_bounds = array<i64: 1, 1, 2, 128>}]} {
    %c0_i32 = arith.constant 0 : i32
    %0 = arith.cmpi eq, %arg2, %c0_i32 : i32
    %1 = arith.extui %0 : i1 to i32
    %c0_i32_0 = arith.constant 0 : i32
    %2 = arith.cmpi ne, %1, %c0_i32_0 : i32
    scf.if %2 {
      %cst_11 = arith.constant 0.000000e+00 : f32
      %17 = vector.broadcast %cst_11 : f32 to vector<32x128xf32>
      %c0_12 = arith.constant 0 : index
      %c0_13 = arith.constant 0 : index
      %18 = vector.load %arg8[%c0_12, %c0_13] : memref<32x128xf32, #tpu.memory_space<vmem>>, vector<32x128xf32>
      tpu.vector_store %arg8[%c0_12, %c0_13], %17 {strides = array<i32>} : memref<32x128xf32, #tpu.memory_space<vmem>>, vector<32x128xf32>,
    } else {
    }
    %c256_i32 = arith.constant 256 : i32
    %3 = arith.muli %arg2, %c256_i32 : i32
    %4 = tpu.assume_multiple %3, 256 : i32
    %c0 = arith.constant 0 : index
    %5 = arith.index_cast %4 : i32 to index
    %c0_1 = arith.constant 0 : index
    %6 = vector.load %arg4[%c0, %5, %c0_1] : memref<1x256x128xbf16, #tpu.memory_space<vmem>>, vector<1x256x128xbf16>
    %7 = vector.shape_cast %6 : vector<1x256x128xbf16> to vector<256x128xbf16>
    %c0_2 = arith.constant 0 : index
    %c0_3 = arith.constant 0 : index
    %8 = vector.load %arg8[%c0_2, %c0_3] : memref<32x128xf32, #tpu.memory_space<vmem>>, vector<32x128xf32>
    %c0_4 = arith.constant 0 : index
    %c0_5 = arith.constant 0 : index
    %c0_6 = arith.constant 0 : index
    %9 = vector.load %arg3[%c0_4, %c0_5, %c0_6] : memref<1x32x256xbf16, #tpu.memory_space<vmem>>, vector<1x32x256xbf16>
    %10 = vector.shape_cast %9 : vector<1x32x256xbf16> to vector<32x256xbf16>
    %cst = arith.constant dense<0.000000e+00> : vector<32x128xf32>
    %11 = tpu.matmul %10, %7, %cst {dimension_numbers = #tpu.dot_dimension_numbers<[1], [0], [0], [1], [0, 0, 1, 1], [], []>} : vector<32x256xbf16>, vector<256x128xbf16>, vector<32x128xf32> -> vector<32x128xf32>
    %12 = arith.addf %8, %11 : vector<32x128xf32>
    %c0_7 = arith.constant 0 : index
    %c0_8 = arith.constant 0 : index
    %13 = vector.load %arg8[%c0_7, %c0_8] : memref<32x128xf32, #tpu.memory_space<vmem>>, vector<32x128xf32>
    tpu.vector_store %arg8[%c0_7, %c0_8], %12 {strides = array<i32>} : memref<32x128xf32, #tpu.memory_space<vmem>>, vector<32x128xf32>,
    %c0_i32_9 = arith.constant 0 : i32
    %14 = arith.cmpi eq, %arg2, %c0_i32_9 : i32
    %15 = arith.extui %14 : i1 to i32
    %c0_i32_10 = arith.constant 0 : i32
    %16 = arith.cmpi ne, %15, %c0_i32_10 : i32
    scf.if %16 {
      %c0_11 = arith.constant 0 : index
      %c0_12 = arith.constant 0 : index
      %17 = vector.load %arg8[%c0_11, %c0_12] : memref<32x128xf32, #tpu.memory_space<vmem>>, vector<32x128xf32>
      %c0_13 = arith.constant 0 : index
      %c0_14 = arith.constant 0 : index
      %18 = vector.load %arg5[%c0_13, %c0_14] : memref<1x128xf32, #tpu.memory_space<vmem>>, vector<1x128xf32>
      %19 = vector.broadcast %18 : vector<1x128xf32> to vector<32x128xf32>
      %20 = arith.addf %17, %19 : vector<32x128xf32>
      %cst_15 = arith.constant dense<0.000000e+00> : vector<128xf32>
      %21 = vector.multi_reduction <add>, %20, %cst_15 [0] : vector<32x128xf32> to vector<128xf32>
      %22 = vector.shape_cast %21 : vector<128xf32> to vector<1x128xf32>
      %c0_16 = arith.constant 0 : index
      %c0_17 = arith.constant 0 : index
      %c0_18 = arith.constant 0 : index
      %c0_19 = arith.constant 0 : index
      %23 = vector.load %arg7[%c0_16, %c0_17, %c0_18, %c0_19] : memref<1x1x2x128xf32, #tpu.memory_space<vmem>>, vector<1x1x1x128xf32>
      %24 = vector.shape_cast %23 : vector<1x1x1x128xf32> to vector<1x128xf32>
      %25 = vector.shape_cast %22 : vector<1x128xf32> to vector<1x1x1x128xf32>
      tpu.vector_store %arg7[%c0_16, %c0_17, %c0_18, %c0_19], %25 {strides = array<i32>} : memref<1x1x2x128xf32, #tpu.memory_space<vmem>>, vector<1x1x1x128xf32>,
      %26 = arith.mulf %20, %20 : vector<32x128xf32>
      %cst_20 = arith.constant dense<0.000000e+00> : vector<128xf32>
      %27 = vector.multi_reduction <add>, %26, %cst_20 [0] : vector<32x128xf32> to vector<128xf32>
      %28 = vector.shape_cast %27 : vector<128xf32> to vector<1x128xf32>
      %c0_21 = arith.constant 0 : index
      %c0_22 = arith.constant 0 : index
      %c1 = arith.constant 1 : index
      %c0_23 = arith.constant 0 : index
      %29 = vector.load %arg7[%c0_21, %c0_22, %c1, %c0_23] : memref<1x1x2x128xf32, #tpu.memory_space<vmem>>, vector<1x1x1x128xf32>
      %30 = vector.shape_cast %29 : vector<1x1x1x128xf32> to vector<1x128xf32>
      %31 = vector.shape_cast %28 : vector<1x128xf32> to vector<1x1x1x128xf32>
      tpu.vector_store %arg7[%c0_21, %c0_22, %c1, %c0_23], %31 {strides = array<i32>} : memref<1x1x2x128xf32, #tpu.memory_space<vmem>>, vector<1x1x1x128xf32>,
      %32 = arith.truncf %20 : vector<32x128xf32> to vector<32x128xbf16>
      %c0_24 = arith.constant 0 : index
      %c0_25 = arith.constant 0 : index
      %c0_26 = arith.constant 0 : index
      %33 = vector.load %arg6[%c0_24, %c0_25, %c0_26] : memref<1x32x128xbf16, #tpu.memory_space<vmem>>, vector<1x32x128xbf16>
      %34 = vector.shape_cast %33 : vector<1x32x128xbf16> to vector<32x128xbf16>
      %35 = vector.shape_cast %32 : vector<32x128xbf16> to vector<1x32x128xbf16>
      tpu.vector_store %arg6[%c0_24, %c0_25, %c0_26], %35 {strides = array<i32>} : memref<1x32x128xbf16, #tpu.memory_space<vmem>>, vector<1x32x128xbf16>,
    } else {
    }
    return
  }
  func.func @transform_0(%arg0: i32, %arg1: i32, %arg2: i32) -> (i32, i32, i32) {
    %c0_i32 = arith.constant 0 : i32
    return %arg0, %arg1, %arg2 : i32, i32, i32
  }
  func.func @transform_1(%arg0: i32, %arg1: i32, %arg2: i32) -> (i32, i32, i32) {
    %c0_i32 = arith.constant 0 : i32
    %c0_i32_0 = arith.constant 0 : i32
    %c0_i32_1 = arith.constant 0 : i32
    return %arg0, %c0_i32, %c0_i32_0 : i32, i32, i32
  }
  func.func @transform_2(%arg0: i32, %arg1: i32, %arg2: i32) -> (i32, i32) {
    %c0_i32 = arith.constant 0 : i32
    %c0_i32_0 = arith.constant 0 : i32
    %c0_i32_1 = arith.constant 0 : i32
    return %c0_i32, %c0_i32_0 : i32, i32
  }
  func.func @transform_3(%arg0: i32, %arg1: i32, %arg2: i32) -> (i32, i32, i32) {
    %c0_i32 = arith.constant 0 : i32
    %c0_i32_0 = arith.constant 0 : i32
    return %arg0, %arg1, %c0_i32 : i32, i32, i32
  }
  func.func @transform_4(%arg0: i32, %arg1: i32, %arg2: i32) -> (i32, i32, i32, i32) {
    %c0_i32 = arith.constant 0 : i32
    %c0_i32_0 = arith.constant 0 : i32
    %c0_i32_1 = arith.constant 0 : i32
    return %arg0, %arg1, %c0_i32, %c0_i32_0 : i32, i32, i32, i32
  }
}

module attributes {stable_mosaic.version = 11 : i64} {
  func.func @_mm_kernel(%arg0: i32, %arg1: i32, %arg2: i32, %arg3: memref<1x128x128xbf16, #tpu.memory_space<vmem>>, %arg4: memref<1x128x128xbf16, #tpu.memory_space<vmem>>, %arg5: memref<1x128xf32, #tpu.memory_space<vmem>>, %arg6: memref<1x128x128xbf16, #tpu.memory_space<vmem>>, %arg7: memref<1x1x2x128xf32, #tpu.memory_space<vmem>>, %arg8: memref<128x128xf32, #tpu.memory_space<vmem>>) attributes {dimension_semantics = [#tpu.dimension_semantics<parallel>, #tpu.dimension_semantics<parallel>, #tpu.dimension_semantics<arbitrary>], iteration_bounds = array<i64: 4, 1, 1>, scalar_prefetch = 0 : i64, scratch_operands = 1 : i64, tpu.core_type = #tpu.core_type<tc>, window_params = [{transform_indices = @transform_0, window_bounds = array<i64: 1, 128, 128>}, {transform_indices = @transform_1, window_bounds = array<i64: 1, 128, 128>}, {pipeline_mode = #tpu.pipeline_mode<synchronous>, transform_indices = @transform_2, window_bounds = array<i64: 1, 128>}, {transform_indices = @transform_3, window_bounds = array<i64: 1, 128, 128>}, {transform_indices = @transform_4, window_bounds = array<i64: 1, 1, 2, 128>}]} {
    %c0_i32 = arith.constant 0 : i32
    %0 = arith.cmpi eq, %arg2, %c0_i32 : i32
    %1 = arith.extui %0 : i1 to i32
    %c0_i32_0 = arith.constant 0 : i32
    %2 = arith.cmpi ne, %1, %c0_i32_0 : i32
    scf.if %2 {
      %cst_11 = arith.constant 0.000000e+00 : f32
      %17 = vector.broadcast %cst_11 : f32 to vector<128x128xf32>
      %c0_12 = arith.constant 0 : index
      %c0_13 = arith.constant 0 : index
      %18 = vector.load %arg8[%c0_12, %c0_13] : memref<128x128xf32, #tpu.memory_space<vmem>>, vector<128x128xf32>
      tpu.vector_store %arg8[%c0_12, %c0_13], %17 {strides = array<i32>} : memref<128x128xf32, #tpu.memory_space<vmem>>, vector<128x128xf32>,
    } else {
    }
    %c128_i32 = arith.constant 128 : i32
    %3 = arith.muli %arg2, %c128_i32 : i32
    %4 = tpu.assume_multiple %3, 128 : i32
    %c0 = arith.constant 0 : index
    %5 = arith.index_cast %4 : i32 to index
    %c0_1 = arith.constant 0 : index
    %6 = vector.load %arg4[%c0, %5, %c0_1] : memref<1x128x128xbf16, #tpu.memory_space<vmem>>, vector<1x128x128xbf16>
    %7 = vector.shape_cast %6 : vector<1x128x128xbf16> to vector<128x128xbf16>
    %c0_2 = arith.constant 0 : index
    %c0_3 = arith.constant 0 : index
    %8 = vector.load %arg8[%c0_2, %c0_3] : memref<128x128xf32, #tpu.memory_space<vmem>>, vector<128x128xf32>
    %c0_4 = arith.constant 0 : index
    %c0_5 = arith.constant 0 : index
    %c0_6 = arith.constant 0 : index
    %9 = vector.load %arg3[%c0_4, %c0_5, %c0_6] : memref<1x128x128xbf16, #tpu.memory_space<vmem>>, vector<1x128x128xbf16>
    %10 = vector.shape_cast %9 : vector<1x128x128xbf16> to vector<128x128xbf16>
    %cst = arith.constant dense<0.000000e+00> : vector<128x128xf32>
    %11 = tpu.matmul %10, %7, %cst {dimension_numbers = #tpu.dot_dimension_numbers<[1], [0], [0], [1], [0, 0, 1, 1], [], []>} : vector<128x128xbf16>, vector<128x128xbf16>, vector<128x128xf32> -> vector<128x128xf32>
    %12 = arith.addf %8, %11 : vector<128x128xf32>
    %c0_7 = arith.constant 0 : index
    %c0_8 = arith.constant 0 : index
    %13 = vector.load %arg8[%c0_7, %c0_8] : memref<128x128xf32, #tpu.memory_space<vmem>>, vector<128x128xf32>
    tpu.vector_store %arg8[%c0_7, %c0_8], %12 {strides = array<i32>} : memref<128x128xf32, #tpu.memory_space<vmem>>, vector<128x128xf32>,
    %c0_i32_9 = arith.constant 0 : i32
    %14 = arith.cmpi eq, %arg2, %c0_i32_9 : i32
    %15 = arith.extui %14 : i1 to i32
    %c0_i32_10 = arith.constant 0 : i32
    %16 = arith.cmpi ne, %15, %c0_i32_10 : i32
    scf.if %16 {
      %c0_11 = arith.constant 0 : index
      %c0_12 = arith.constant 0 : index
      %17 = vector.load %arg8[%c0_11, %c0_12] : memref<128x128xf32, #tpu.memory_space<vmem>>, vector<128x128xf32>
      %c0_13 = arith.constant 0 : index
      %c0_14 = arith.constant 0 : index
      %18 = vector.load %arg5[%c0_13, %c0_14] : memref<1x128xf32, #tpu.memory_space<vmem>>, vector<1x128xf32>
      %19 = vector.broadcast %18 : vector<1x128xf32> to vector<128x128xf32>
      %20 = arith.addf %17, %19 : vector<128x128xf32>
      %cst_15 = arith.constant dense<0.000000e+00> : vector<128xf32>
      %21 = vector.multi_reduction <add>, %20, %cst_15 [0] : vector<128x128xf32> to vector<128xf32>
      %22 = vector.shape_cast %21 : vector<128xf32> to vector<1x128xf32>
      %c0_16 = arith.constant 0 : index
      %c0_17 = arith.constant 0 : index
      %c0_18 = arith.constant 0 : index
      %c0_19 = arith.constant 0 : index
      %23 = vector.load %arg7[%c0_16, %c0_17, %c0_18, %c0_19] : memref<1x1x2x128xf32, #tpu.memory_space<vmem>>, vector<1x1x1x128xf32>
      %24 = vector.shape_cast %23 : vector<1x1x1x128xf32> to vector<1x128xf32>
      %25 = vector.shape_cast %22 : vector<1x128xf32> to vector<1x1x1x128xf32>
      tpu.vector_store %arg7[%c0_16, %c0_17, %c0_18, %c0_19], %25 {strides = array<i32>} : memref<1x1x2x128xf32, #tpu.memory_space<vmem>>, vector<1x1x1x128xf32>,
      %26 = arith.mulf %20, %20 : vector<128x128xf32>
      %cst_20 = arith.constant dense<0.000000e+00> : vector<128xf32>
      %27 = vector.multi_reduction <add>, %26, %cst_20 [0] : vector<128x128xf32> to vector<128xf32>
      %28 = vector.shape_cast %27 : vector<128xf32> to vector<1x128xf32>
      %c0_21 = arith.constant 0 : index
      %c0_22 = arith.constant 0 : index
      %c1 = arith.constant 1 : index
      %c0_23 = arith.constant 0 : index
      %29 = vector.load %arg7[%c0_21, %c0_22, %c1, %c0_23] : memref<1x1x2x128xf32, #tpu.memory_space<vmem>>, vector<1x1x1x128xf32>
      %30 = vector.shape_cast %29 : vector<1x1x1x128xf32> to vector<1x128xf32>
      %31 = vector.shape_cast %28 : vector<1x128xf32> to vector<1x1x1x128xf32>
      tpu.vector_store %arg7[%c0_21, %c0_22, %c1, %c0_23], %31 {strides = array<i32>} : memref<1x1x2x128xf32, #tpu.memory_space<vmem>>, vector<1x1x1x128xf32>,
      %32 = arith.truncf %20 : vector<128x128xf32> to vector<128x128xbf16>
      %c0_24 = arith.constant 0 : index
      %c0_25 = arith.constant 0 : index
      %c0_26 = arith.constant 0 : index
      %33 = vector.load %arg6[%c0_24, %c0_25, %c0_26] : memref<1x128x128xbf16, #tpu.memory_space<vmem>>, vector<1x128x128xbf16>
      %34 = vector.shape_cast %33 : vector<1x128x128xbf16> to vector<128x128xbf16>
      %35 = vector.shape_cast %32 : vector<128x128xbf16> to vector<1x128x128xbf16>
      tpu.vector_store %arg6[%c0_24, %c0_25, %c0_26], %35 {strides = array<i32>} : memref<1x128x128xbf16, #tpu.memory_space<vmem>>, vector<1x128x128xbf16>,
    } else {
    }
    return
  }
  func.func @transform_0(%arg0: i32, %arg1: i32, %arg2: i32) -> (i32, i32, i32) {
    %c0_i32 = arith.constant 0 : i32
    return %arg0, %arg1, %arg2 : i32, i32, i32
  }
  func.func @transform_1(%arg0: i32, %arg1: i32, %arg2: i32) -> (i32, i32, i32) {
    %c0_i32 = arith.constant 0 : i32
    %c0_i32_0 = arith.constant 0 : i32
    %c0_i32_1 = arith.constant 0 : i32
    return %arg0, %c0_i32, %c0_i32_0 : i32, i32, i32
  }
  func.func @transform_2(%arg0: i32, %arg1: i32, %arg2: i32) -> (i32, i32) {
    %c0_i32 = arith.constant 0 : i32
    %c0_i32_0 = arith.constant 0 : i32
    %c0_i32_1 = arith.constant 0 : i32
    return %c0_i32, %c0_i32_0 : i32, i32
  }
  func.func @transform_3(%arg0: i32, %arg1: i32, %arg2: i32) -> (i32, i32, i32) {
    %c0_i32 = arith.constant 0 : i32
    %c0_i32_0 = arith.constant 0 : i32
    return %arg0, %arg1, %c0_i32 : i32, i32, i32
  }
  func.func @transform_4(%arg0: i32, %arg1: i32, %arg2: i32) -> (i32, i32, i32, i32) {
    %c0_i32 = arith.constant 0 : i32
    %c0_i32_0 = arith.constant 0 : i32
    %c0_i32_1 = arith.constant 0 : i32
    return %arg0, %arg1, %c0_i32, %c0_i32_0 : i32, i32, i32, i32
  }
}

module attributes {stable_mosaic.version = 11 : i64} {
  func.func @_bn_apply_kernel(%arg0: i32, %arg1: memref<512x128xbf16, #tpu.memory_space<vmem>>, %arg2: memref<1x128xf32, #tpu.memory_space<vmem>>, %arg3: memref<1x128xf32, #tpu.memory_space<vmem>>, %arg4: memref<512x128xbf16, #tpu.memory_space<vmem>>) attributes {dimension_semantics = [#tpu.dimension_semantics<parallel>], iteration_bounds = array<i64: 1>, scalar_prefetch = 0 : i64, scratch_operands = 0 : i64, tpu.core_type = #tpu.core_type<tc>, window_params = [{transform_indices = @transform_0, window_bounds = array<i64: 512, 128>}, {pipeline_mode = #tpu.pipeline_mode<synchronous>, transform_indices = @transform_1, window_bounds = array<i64: 1, 128>}, {pipeline_mode = #tpu.pipeline_mode<synchronous>, transform_indices = @transform_2, window_bounds = array<i64: 1, 128>}, {transform_indices = @transform_3, window_bounds = array<i64: 512, 128>}]} {
    %c0 = arith.constant 0 : index
    %c0_0 = arith.constant 0 : index
    %0 = vector.load %arg1[%c0, %c0_0] : memref<512x128xbf16, #tpu.memory_space<vmem>>, vector<512x128xbf16>
    %1 = arith.extf %0 : vector<512x128xbf16> to vector<512x128xf32>
    %c0_1 = arith.constant 0 : index
    %c0_2 = arith.constant 0 : index
    %2 = vector.load %arg2[%c0_1, %c0_2] : memref<1x128xf32, #tpu.memory_space<vmem>>, vector<1x128xf32>
    %3 = vector.broadcast %2 : vector<1x128xf32> to vector<512x128xf32>
    %4 = arith.mulf %1, %3 : vector<512x128xf32>
    %c0_3 = arith.constant 0 : index
    %c0_4 = arith.constant 0 : index
    %5 = vector.load %arg3[%c0_3, %c0_4] : memref<1x128xf32, #tpu.memory_space<vmem>>, vector<1x128xf32>
    %6 = vector.broadcast %5 : vector<1x128xf32> to vector<512x128xf32>
    %7 = arith.addf %4, %6 : vector<512x128xf32>
    %8 = arith.truncf %7 : vector<512x128xf32> to vector<512x128xbf16>
    %c0_5 = arith.constant 0 : index
    %c0_6 = arith.constant 0 : index
    %9 = vector.load %arg4[%c0_5, %c0_6] : memref<512x128xbf16, #tpu.memory_space<vmem>>, vector<512x128xbf16>
    tpu.vector_store %arg4[%c0_5, %c0_6], %8 {strides = array<i32>} : memref<512x128xbf16, #tpu.memory_space<vmem>>, vector<512x128xbf16>,
    return
  }
  func.func @transform_0(%arg0: i32) -> (i32, i32) {
    %c0_i32 = arith.constant 0 : i32
    %c0_i32_0 = arith.constant 0 : i32
    return %arg0, %c0_i32 : i32, i32
  }
  func.func @transform_1(%arg0: i32) -> (i32, i32) {
    %c0_i32 = arith.constant 0 : i32
    %c0_i32_0 = arith.constant 0 : i32
    %c0_i32_1 = arith.constant 0 : i32
    return %c0_i32, %c0_i32_0 : i32, i32
  }
  func.func @transform_2(%arg0: i32) -> (i32, i32) {
    %c0_i32 = arith.constant 0 : i32
    %c0_i32_0 = arith.constant 0 : i32
    %c0_i32_1 = arith.constant 0 : i32
    return %c0_i32, %c0_i32_0 : i32, i32
  }
  func.func @transform_3(%arg0: i32) -> (i32, i32) {
    %c0_i32 = arith.constant 0 : i32
    %c0_i32_0 = arith.constant 0 : i32
    return %arg0, %c0_i32 : i32, i32
  }
}

module attributes {stable_mosaic.version = 11 : i64} {
  func.func @_mm_kernel(%arg0: i32, %arg1: i32, %arg2: i32, %arg3: memref<1x512x128xbf16, #tpu.memory_space<vmem>>, %arg4: memref<1x128x128xbf16, #tpu.memory_space<vmem>>, %arg5: memref<1x128xf32, #tpu.memory_space<vmem>>, %arg6: memref<1x512x128xf32, #tpu.memory_space<vmem>>, %arg7: memref<1x1x2x128xf32, #tpu.memory_space<vmem>>, %arg8: memref<512x128xf32, #tpu.memory_space<vmem>>) attributes {dimension_semantics = [#tpu.dimension_semantics<parallel>, #tpu.dimension_semantics<parallel>, #tpu.dimension_semantics<arbitrary>], iteration_bounds = array<i64: 4, 1, 1>, scalar_prefetch = 0 : i64, scratch_operands = 1 : i64, tpu.core_type = #tpu.core_type<tc>, window_params = [{transform_indices = @transform_0, window_bounds = array<i64: 1, 512, 128>}, {transform_indices = @transform_1, window_bounds = array<i64: 1, 128, 128>}, {pipeline_mode = #tpu.pipeline_mode<synchronous>, transform_indices = @transform_2, window_bounds = array<i64: 1, 128>}, {transform_indices = @transform_3, window_bounds = array<i64: 1, 512, 128>}, {transform_indices = @transform_4, window_bounds = array<i64: 1, 1, 2, 128>}]} {
    %c0_i32 = arith.constant 0 : i32
    %0 = arith.cmpi eq, %arg2, %c0_i32 : i32
    %1 = arith.extui %0 : i1 to i32
    %c0_i32_0 = arith.constant 0 : i32
    %2 = arith.cmpi ne, %1, %c0_i32_0 : i32
    scf.if %2 {
      %cst_11 = arith.constant 0.000000e+00 : f32
      %17 = vector.broadcast %cst_11 : f32 to vector<512x128xf32>
      %c0_12 = arith.constant 0 : index
      %c0_13 = arith.constant 0 : index
      %18 = vector.load %arg8[%c0_12, %c0_13] : memref<512x128xf32, #tpu.memory_space<vmem>>, vector<512x128xf32>
      tpu.vector_store %arg8[%c0_12, %c0_13], %17 {strides = array<i32>} : memref<512x128xf32, #tpu.memory_space<vmem>>, vector<512x128xf32>,
    } else {
    }
    %c128_i32 = arith.constant 128 : i32
    %3 = arith.muli %arg2, %c128_i32 : i32
    %4 = tpu.assume_multiple %3, 128 : i32
    %c0 = arith.constant 0 : index
    %5 = arith.index_cast %4 : i32 to index
    %c0_1 = arith.constant 0 : index
    %6 = vector.load %arg4[%c0, %5, %c0_1] : memref<1x128x128xbf16, #tpu.memory_space<vmem>>, vector<1x128x128xbf16>
    %7 = vector.shape_cast %6 : vector<1x128x128xbf16> to vector<128x128xbf16>
    %c0_2 = arith.constant 0 : index
    %c0_3 = arith.constant 0 : index
    %8 = vector.load %arg8[%c0_2, %c0_3] : memref<512x128xf32, #tpu.memory_space<vmem>>, vector<512x128xf32>
    %c0_4 = arith.constant 0 : index
    %c0_5 = arith.constant 0 : index
    %c0_6 = arith.constant 0 : index
    %9 = vector.load %arg3[%c0_4, %c0_5, %c0_6] : memref<1x512x128xbf16, #tpu.memory_space<vmem>>, vector<1x512x128xbf16>
    %10 = vector.shape_cast %9 : vector<1x512x128xbf16> to vector<512x128xbf16>
    %cst = arith.constant dense<0.000000e+00> : vector<512x128xf32>
    %11 = tpu.matmul %10, %7, %cst {dimension_numbers = #tpu.dot_dimension_numbers<[1], [0], [0], [1], [0, 0, 1, 1], [], []>} : vector<512x128xbf16>, vector<128x128xbf16>, vector<512x128xf32> -> vector<512x128xf32>
    %12 = arith.addf %8, %11 : vector<512x128xf32>
    %c0_7 = arith.constant 0 : index
    %c0_8 = arith.constant 0 : index
    %13 = vector.load %arg8[%c0_7, %c0_8] : memref<512x128xf32, #tpu.memory_space<vmem>>, vector<512x128xf32>
    tpu.vector_store %arg8[%c0_7, %c0_8], %12 {strides = array<i32>} : memref<512x128xf32, #tpu.memory_space<vmem>>, vector<512x128xf32>,
    %c0_i32_9 = arith.constant 0 : i32
    %14 = arith.cmpi eq, %arg2, %c0_i32_9 : i32
    %15 = arith.extui %14 : i1 to i32
    %c0_i32_10 = arith.constant 0 : i32
    %16 = arith.cmpi ne, %15, %c0_i32_10 : i32
    scf.if %16 {
      %c0_11 = arith.constant 0 : index
      %c0_12 = arith.constant 0 : index
      %17 = vector.load %arg8[%c0_11, %c0_12] : memref<512x128xf32, #tpu.memory_space<vmem>>, vector<512x128xf32>
      %c0_13 = arith.constant 0 : index
      %c0_14 = arith.constant 0 : index
      %18 = vector.load %arg5[%c0_13, %c0_14] : memref<1x128xf32, #tpu.memory_space<vmem>>, vector<1x128xf32>
      %19 = vector.broadcast %18 : vector<1x128xf32> to vector<512x128xf32>
      %20 = arith.addf %17, %19 : vector<512x128xf32>
      %cst_15 = arith.constant 0.000000e+00 : f32
      %21 = vector.broadcast %cst_15 : f32 to vector<2x128xf32>
      %c0_16 = arith.constant 0 : index
      %c0_17 = arith.constant 0 : index
      %c0_18 = arith.constant 0 : index
      %c0_19 = arith.constant 0 : index
      %22 = vector.load %arg7[%c0_16, %c0_17, %c0_18, %c0_19] : memref<1x1x2x128xf32, #tpu.memory_space<vmem>>, vector<1x1x2x128xf32>
      %23 = vector.shape_cast %22 : vector<1x1x2x128xf32> to vector<2x128xf32>
      %24 = vector.shape_cast %21 : vector<2x128xf32> to vector<1x1x2x128xf32>
      tpu.vector_store %arg7[%c0_16, %c0_17, %c0_18, %c0_19], %24 {strides = array<i32>} : memref<1x1x2x128xf32, #tpu.memory_space<vmem>>, vector<1x1x2x128xf32>,
      %25 = math.tanh %20 : vector<512x128xf32>
      %c0_20 = arith.constant 0 : index
      %c0_21 = arith.constant 0 : index
      %c0_22 = arith.constant 0 : index
      %26 = vector.load %arg6[%c0_20, %c0_21, %c0_22] : memref<1x512x128xf32, #tpu.memory_space<vmem>>, vector<1x512x128xf32>
      %27 = vector.shape_cast %26 : vector<1x512x128xf32> to vector<512x128xf32>
      %28 = vector.shape_cast %25 : vector<512x128xf32> to vector<1x512x128xf32>
      tpu.vector_store %arg6[%c0_20, %c0_21, %c0_22], %28 {strides = array<i32>} : memref<1x512x128xf32, #tpu.memory_space<vmem>>, vector<1x512x128xf32>,
    } else {
    }
    return
  }
  func.func @transform_0(%arg0: i32, %arg1: i32, %arg2: i32) -> (i32, i32, i32) {
    %c0_i32 = arith.constant 0 : i32
    return %arg0, %arg1, %arg2 : i32, i32, i32
  }
  func.func @transform_1(%arg0: i32, %arg1: i32, %arg2: i32) -> (i32, i32, i32) {
    %c0_i32 = arith.constant 0 : i32
    %c0_i32_0 = arith.constant 0 : i32
    %c0_i32_1 = arith.constant 0 : i32
    return %arg0, %c0_i32, %c0_i32_0 : i32, i32, i32
  }
  func.func @transform_2(%arg0: i32, %arg1: i32, %arg2: i32) -> (i32, i32) {
    %c0_i32 = arith.constant 0 : i32
    %c0_i32_0 = arith.constant 0 : i32
    %c0_i32_1 = arith.constant 0 : i32
    return %c0_i32, %c0_i32_0 : i32, i32
  }
  func.func @transform_3(%arg0: i32, %arg1: i32, %arg2: i32) -> (i32, i32, i32) {
    %c0_i32 = arith.constant 0 : i32
    %c0_i32_0 = arith.constant 0 : i32
    return %arg0, %arg1, %c0_i32 : i32, i32, i32
  }
  func.func @transform_4(%arg0: i32, %arg1: i32, %arg2: i32) -> (i32, i32, i32, i32) {
    %c0_i32 = arith.constant 0 : i32
    %c0_i32_0 = arith.constant 0 : i32
    %c0_i32_1 = arith.constant 0 : i32
    return %arg0, %arg1, %c0_i32, %c0_i32_0 : i32, i32, i32, i32
  }
}

</mosaic_0001>

<llo_original>
// kernel: _lambda_.17
$region0: #{_lambda_.17}
  #allocation0 [shape = 'u32[]', space=smem, size = 0x4, offset = 0x4, fixed_abs, tag = 'smem constant byte address 0x4 - core index']
  #allocation1 [shape = 'u32[72,128]{1,0:T(1,128)}', space=vmem, size = 0x9000, scoped, tag = 'internal scratch']
  #allocation2 [shape = 'f32[512,128]{1,0:T(8,128)}', space=vmem, size = 0x40000, scoped, tag = 'scratch operand']
  %s0 = inlined_call_operand.vmem [shape: bf16[1,512,128], index: 0, kind: input, shape index: {}]
  %s1 = inlined_call_operand.vmem [shape: bf16[1,128,128], index: 1, kind: input, shape index: {}]
  %s2 = inlined_call_operand.vmem [shape: f32[1,128], index: 2, kind: input, shape index: {}]
  %s3 = inlined_call_operand.vmem [shape: bf16[1,512,128], index: 3, kind: output, shape index: {0}]
  %s4 = inlined_call_operand.hbm [shape: f32[1,1,2,128], index: 4, kind: output, shape index: {1}]
  %5 = xla_tuple %s3, %s4
  %s6 = sld [smem:[#allocation0]]
  $region38: #{_lambda_.17} parent=0
    _
  %s8 = ssub.s32 1, %s6
  %s9 = scalar_select 0, %s8, %s6
  $region1: #{_lambda_.17} parent=0
    #allocation3 [shape = 'u8[1024]{0}', space=vmem, size = 0x400, scoped, tag = 'output window, operand 1, single buffered']
    #allocation4 [shape = 's32[1]{0}', space=sflag, size = 0x4, scoped, tag = 'scoped memory for _lambda_.17']
    %10 = vsyncpa [#allocation4], 0
    // Predicated region
    $region2: #{_lambda_.17} parent=1 // pred_check
      _
    $region3: #{_lambda_.17} parent=1 // pred_check_branch
      %12 = sbr.rel (0) target = $region5
    $region4: #{_lambda_.17} parent=1 // pred_region
      _
    $region5: #{_lambda_.17} parent=1 // pred_fallthru
      _
    // Predicated region
    $region6: #{_lambda_.17} parent=1 // pred_check
      _
    $region7: #{_lambda_.17} parent=1 // pred_check_branch
      %14 = sbr.rel (0) target = $region9
    $region8: #{_lambda_.17} parent=1 // pred_region
      _
    $region9: #{_lambda_.17} parent=1 // pred_fallthru
      _
    // Predicated region
    $region10: #{_lambda_.17} parent=1 // pred_check
      _
    $region11: #{_lambda_.17} parent=1 // pred_check_branch
      %16 = sbr.rel (0) target = $region13
    $region12: #{_lambda_.17} parent=1 // pred_region
      _
    $region13: #{_lambda_.17} parent=1 // pred_fallthru
      _
    %p17 = scmp.eq.s32.totalorder 0, 0
    // Predicated region
    $region14: #{_lambda_.17} parent=1 // pred_check
      %p18 = pneg %p17
    $region15: #{_lambda_.17} parent=1 // pred_check_branch
      %20 = sbr.rel (%p18) target = $region17
    $region16: #{_lambda_.17} parent=1 // pred_region
      %21 = vst [vmem:[#allocation2] sm:$0xff] 0.0
      %22 = vst [vmem:[#allocation2 + $0x8] sm:$0xff] 0.0
      %23 = vst [vmem:[#allocation2 + $0x10] sm:$0xff] 0.0
      %24 = vst [vmem:[#allocation2 + $0x18] sm:$0xff] 0.0
      %25 = vst [vmem:[#allocation2 + $0x20] sm:$0xff] 0.0
      %26 = vst [vmem:[#allocation2 + $0x28] sm:$0xff] 0.0
      %27 = vst [vmem:[#allocation2 + $0x30] sm:$0xff] 0.0
      %28 = vst [vmem:[#allocation2 + $0x38] sm:$0xff] 0.0
      %29 = vst [vmem:[#allocation2 + $0x40] sm:$0xff] 0.0
      %30 = vst [vmem:[#allocation2 + $0x48] sm:$0xff] 0.0
      %31 = vst [vmem:[#allocation2 + $0x50] sm:$0xff] 0.0
      %32 = vst [vmem:[#allocation2 + $0x58] sm:$0xff] 0.0
      %33 = vst [vmem:[#allocation2 + $0x60] sm:$0xff] 0.0
      %34 = vst [vmem:[#allocation2 + $0x68] sm:$0xff] 0.0
      %35 = vst [vmem:[#allocation2 + $0x70] sm:$0xff] 0.0
      %36 = vst [vmem:[#allocation2 + $0x78] sm:$0xff] 0.0
      %37 = vst [vmem:[#allocation2 + $0x80] sm:$0xff] 0.0
      %38 = vst [vmem:[#allocation2 + $0x88] sm:$0xff] 0.0
      %39 = vst [vmem:[#allocation2 + $0x90] sm:$0xff] 0.0
      %40 = vst [vmem:[#allocation2 + $0x98] sm:$0xff] 0.0
      %41 = vst [vmem:[#allocation2 + $0xa0] sm:$0xff] 0.0
      %42 = vst [vmem:[#allocation2 + $0xa8] sm:$0xff] 0.0
      %43 = vst [vmem:[#allocation2 + $0xb0] sm:$0xff] 0.0
      %44 = vst [vmem:[#allocation2 + $0xb8] sm:$0xff] 0.0
      %45 = vst [vmem:[#allocation2 + $0xc0] sm:$0xff] 0.0
      %46 = vst [vmem:[#allocation2 + $0xc8] sm:$0xff] 0.0
      %47 = vst [vmem:[#allocation2 + $0xd0] sm:$0xff] 0.0
      %48 = vst [vmem:[#allocation2 + $0xd8] sm:$0xff] 0.0
      %49 = vst [vmem:[#allocation2 + $0xe0] sm:$0xff] 0.0
      %50 = vst [vmem:[#allocation2 + $0xe8] sm:$0xff] 0.0
      %51 = vst [vmem:[#allocation2 + $0xf0] sm:$0xff] 0.0
      %52 = vst [vmem:[#allocation2 + $0xf8] sm:$0xff] 0.0
      %53 = vst [vmem:[#allocation2 + $0x100] sm:$0xff] 0.0
      %54 = vst [vmem:[#allocation2 + $0x108] sm:$0xff] 0.0
      %55 = vst [vmem:[#allocation2 + $0x110] sm:$0xff] 0.0
      %56 = vst [vmem:[#allocation2 + $0x118] sm:$0xff] 0.0
      %57 = vst [vmem:[#allocation2 + $0x120] sm:$0xff] 0.0
      %58 = vst [vmem:[#allocation2 + $0x128] sm:$0xff] 0.0
      %59 = vst [vmem:[#allocation2 + $0x130] sm:$0xff] 0.0
      %60 = vst [vmem:[#allocation2 + $0x138] sm:$0xff] 0.0
      %61 = vst [vmem:[#allocation2 + $0x140] sm:$0xff] 0.0
      %62 = vst [vmem:[#allocation2 + $0x148] sm:$0xff] 0.0
      %63 = vst [vmem:[#allocation2 + $0x150] sm:$0xff] 0.0
      %64 = vst [vmem:[#allocation2 + $0x158] sm:$0xff] 0.0
      %65 = vst [vmem:[#allocation2 + $0x160] sm:$0xff] 0.0
      %66 = vst [vmem:[#allocation2 + $0x168] sm:$0xff] 0.0
      %67 = vst [vmem:[#allocation2 + $0x170] sm:$0xff] 0.0
      %68 = vst [vmem:[#allocation2 + $0x178] sm:$0xff] 0.0
      %69 = vst [vmem:[#allocation2 + $0x180] sm:$0xff] 0.0
      %70 = vst [vmem:[#allocation2 + $0x188] sm:$0xff] 0.0
      %71 = vst [vmem:[#allocation2 + $0x190] sm:$0xff] 0.0
      %72 = vst [vmem:[#allocation2 + $0x198] sm:$0xff] 0.0
      %73 = vst [vmem:[#allocation2 + $0x1a0] sm:$0xff] 0.0
      %74 = vst [vmem:[#allocation2 + $0x1a8] sm:$0xff] 0.0
      %75 = vst [vmem:[#allocation2 + $0x1b0] sm:$0xff] 0.0
      %76 = vst [vmem:[#allocation2 + $0x1b8] sm:$0xff] 0.0
      %77 = vst [vmem:[#allocation2 + $0x1c0] sm:$0xff] 0.0
      %78 = vst [vmem:[#allocation2 + $0x1c8] sm:$0xff] 0.0
      %79 = vst [vmem:[#allocation2 + $0x1d0] sm:$0xff] 0.0
      %80 = vst [vmem:[#allocation2 + $0x1d8] sm:$0xff] 0.0
      %81 = vst [vmem:[#allocation2 + $0x1e0] sm:$0xff] 0.0
      %82 = vst [vmem:[#allocation2 + $0x1e8] sm:$0xff] 0.0
      %83 = vst [vmem:[#allocation2 + $0x1f0] sm:$0xff] 0.0
      %84 = vst [vmem:[#allocation2 + $0x1f8] sm:$0xff] 0.0
    $region17: #{_lambda_.17} parent=1 // pred_fallthru
      _
    %s85 = smul.u32 0, 128
    %s86 = sshra.s32 %s85, 3
    %s87 = sand.u32 %s85, 7
    %s88 = smul.addr %s86, 4
    %s89 = scalar_lea.vmem %s1, %s88
    %v90 = vld [vmem:[%s89] sm:$0xf]
    %v91 = vld [vmem:[%s89 + $0x4] sm:$0xf]
    %v92 = vld [vmem:[%s89 + $0x8] sm:$0xf]
    %v93 = vld [vmem:[%s89 + $0xc] sm:$0xf]
    %v94 = vld [vmem:[%s89 + $0x10] sm:$0xf]
    %v95 = vld [vmem:[%s89 + $0x14] sm:$0xf]
    %v96 = vld [vmem:[%s89 + $0x18] sm:$0xf]
    %v97 = vld [vmem:[%s89 + $0x1c] sm:$0xf]
    %v98 = vld [vmem:[%s89 + $0x20] sm:$0xf]
    %v99 = vld [vmem:[%s89 + $0x24] sm:$0xf]
    %v100 = vld [vmem:[%s89 + $0x28] sm:$0xf]
    %v101 = vld [vmem:[%s89 + $0x2c] sm:$0xf]
    %v102 = vld [vmem:[%s89 + $0x30] sm:$0xf]
    %v103 = vld [vmem:[%s89 + $0x34] sm:$0xf]
    %v104 = vld [vmem:[%s89 + $0x38] sm:$0xf]
    %v105 = vld [vmem:[%s89 + $0x3c] sm:$0xf]
    %v106 = vld [vmem:[#allocation2] sm:$0xff]
    %v107 = vld [vmem:[#allocation2 + $0x8] sm:$0xff]
    %v108 = vld [vmem:[#allocation2 + $0x10] sm:$0xff]
    %v109 = vld [vmem:[#allocation2 + $0x18] sm:$0xff]
    %v110 = vld [vmem:[#allocation2 + $0x20] sm:$0xff]
    %v111 = vld [vmem:[#allocation2 + $0x28] sm:$0xff]
    %v112 = vld [vmem:[#allocation2 + $0x30] sm:$0xff]
    %v113 = vld [vmem:[#allocation2 + $0x38] sm:$0xff]
    %v114 = vld [vmem:[#allocation2 + $0x40] sm:$0xff]
    %v115 = vld [vmem:[#allocation2 + $0x48] sm:$0xff]
    %v116 = vld [vmem:[#allocation2 + $0x50] sm:$0xff]
    %v117 = vld [vmem:[#allocation2 + $0x58] sm:$0xff]
    %v118 = vld [vmem:[#allocation2 + $0x60] sm:$0xff]
    %v119 = vld [vmem:[#allocation2 + $0x68] sm:$0xff]
    %v120 = vld [vmem:[#allocation2 + $0x70] sm:$0xff]
    %v121 = vld [vmem:[#allocation2 + $0x78] sm:$0xff]
    %v122 = vld [vmem:[#allocation2 + $0x80] sm:$0xff]
    %v123 = vld [vmem:[#allocation2 + $0x88] sm:$0xff]
    %v124 = vld [vmem:[#allocation2 + $0x90] sm:$0xff]
    %v125 = vld [vmem:[#allocation2 + $0x98] sm:$0xff]
    %v126 = vld [vmem:[#allocation2 + $0xa0] sm:$0xff]
    %v127 = vld [vmem:[#allocation2 + $0xa8] sm:$0xff]
    %v128 = vld [vmem:[#allocation2 + $0xb0] sm:$0xff]
    %v129 = vld [vmem:[#allocation2 + $0xb8] sm:$0xff]
    %v130 = vld [vmem:[#allocation2 + $0xc0] sm:$0xff]
    %v131 = vld [vmem:[#allocation2 + $0xc8] sm:$0xff]
    %v132 = vld [vmem:[#allocation2 + $0xd0] sm:$0xff]
    %v133 = vld [vmem:[#allocation2 + $0xd8] sm:$0xff]
    %v134 = vld [vmem:[#allocation2 + $0xe0] sm:$0xff]
    %v135 = vld [vmem:[#allocation2 + $0xe8] sm:$0xff]
    %v136 = vld [vmem:[#allocation2 + $0xf0] sm:$0xff]
    %v137 = vld [vmem:[#allocation2 + $0xf8] sm:$0xff]
    %v138 = vld [vmem:[#allocation2 + $0x100] sm:$0xff]
    %v139 = vld [vmem:[#allocation2 + $0x108] sm:$0xff]
    %v140 = vld [vmem:[#allocation2 + $0x110] sm:$0xff]
    %v141 = vld [vmem:[#allocation2 + $0x118] sm:$0xff]
    %v142 = vld [vmem:[#allocation2 + $0x120] sm:$0xff]
    %v143 = vld [vmem:[#allocation2 + $0x128] sm:$0xff]
    %v144 = vld [vmem:[#allocation2 + $0x130] sm:$0xff]
    %v145 = vld [vmem:[#allocation2 + $0x138] sm:$0xff]
    %v146 = vld [vmem:[#allocation2 + $0x140] sm:$0xff]
    %v147 = vld [vmem:[#allocation2 + $0x148] sm:$0xff]
    %v148 = vld [vmem:[#allocation2 + $0x150] sm:$0xff]
    %v149 = vld [vmem:[#allocation2 + $0x158] sm:$0xff]
    %v150 = vld [vmem:[#allocation2 + $0x160] sm:$0xff]
    %v151 = vld [vmem:[#allocation2 + $0x168] sm:$0xff]
    %v152 = vld [vmem:[#allocation2 + $0x170] sm:$0xff]
    %v153 = vld [vmem:[#allocation2 + $0x178] sm:$0xff]
    %v154 = vld [vmem:[#allocation2 + $0x180] sm:$0xff]
    %v155 = vld [vmem:[#allocation2 + $0x188] sm:$0xff]
    %v156 = vld [vmem:[#allocation2 + $0x190] sm:$0xff]
    %v157 = vld [vmem:[#allocation2 + $0x198] sm:$0xff]
    %v158 = vld [vmem:[#allocation2 + $0x1a0] sm:$0xff]
    %v159 = vld [vmem:[#allocation2 + $0x1a8] sm:$0xff]
    %v160 = vld [vmem:[#allocation2 + $0x1b0] sm:$0xff]
    %v161 = vld [vmem:[#allocation2 + $0x1b8] sm:$0xff]
    %v162 = vld [vmem:[#allocation2 + $0x1c0] sm:$0xff]
    %v163 = vld [vmem:[#allocation2 + $0x1c8] sm:$0xff]
    %v164 = vld [vmem:[#allocation2 + $0x1d0] sm:$0xff]
    %v165 = vld [vmem:[#allocation2 + $0x1d8] sm:$0xff]
    %v166 = vld [vmem:[#allocation2 + $0x1e0] sm:$0xff]
    %v167 = vld [vmem:[#allocation2 + $0x1e8] sm:$0xff]
    %v168 = vld [vmem:[#allocation2 + $0x1f0] sm:$0xff]
    %v169 = vld [vmem:[#allocation2 + $0x1f8] sm:$0xff]
    %v170 = vld [vmem:[%s0] sm:$0xf]
    %v171 = vld [vmem:[%s0 + $0x4] sm:$0xf]
    %v172 = vld [vmem:[%s0 + $0x8] sm:$0xf]
    %v173 = vld [vmem:[%s0 + $0xc] sm:$0xf]
    %v174 = vld [vmem:[%s0 + $0x10] sm:$0xf]
    %v175 = vld [vmem:[%s0 + $0x14] sm:$0xf]
    %v176 = vld [vmem:[%s0 + $0x18] sm:$0xf]
    %v177 = vld [vmem:[%s0 + $0x1c] sm:$0xf]
    %v178 = vld [vmem:[%s0 + $0x20] sm:$0xf]
    %v179 = vld [vmem:[%s0 + $0x24] sm:$0xf]
    %v180 = vld [vmem:[%s0 + $0x28] sm:$0xf]
    %v181 = vld [vmem:[%s0 + $0x2c] sm:$0xf]
    %v182 = vld [vmem:[%s0 + $0x30] sm:$0xf]
    %v183 = vld [vmem:[%s0 + $0x34] sm:$0xf]
    %v184 = vld [vmem:[%s0 + $0x38] sm:$0xf]
    %v185 = vld [vmem:[%s0 + $0x3c] sm:$0xf]
    %v186 = vld [vmem:[%s0 + $0x40] sm:$0xf]
    %v187 = vld [vmem:[%s0 + $0x44] sm:$0xf]
    %v188 = vld [vmem:[%s0 + $0x48] sm:$0xf]
    %v189 = vld [vmem:[%s0 + $0x4c] sm:$0xf]
    %v190 = vld [vmem:[%s0 + $0x50] sm:$0xf]
    %v191 = vld [vmem:[%s0 + $0x54] sm:$0xf]
    %v192 = vld [vmem:[%s0 + $0x58] sm:$0xf]
    %v193 = vld [vmem:[%s0 + $0x5c] sm:$0xf]
    %v194 = vld [vmem:[%s0 + $0x60] sm:$0xf]
    %v195 = vld [vmem:[%s0 + $0x64] sm:$0xf]
    %v196 = vld [vmem:[%s0 + $0x68] sm:$0xf]
    %v197 = vld [vmem:[%s0 + $0x6c] sm:$0xf]
    %v198 = vld [vmem:[%s0 + $0x70] sm:$0xf]
    %v199 = vld [vmem:[%s0 + $0x74] sm:$0xf]
    %v200 = vld [vmem:[%s0 + $0x78] sm:$0xf]
    %v201 = vld [vmem:[%s0 + $0x7c] sm:$0xf]
    %v202 = vld [vmem:[%s0 + $0x80] sm:$0xf]
    %v203 = vld [vmem:[%s0 + $0x84] sm:$0xf]
    %v204 = vld [vmem:[%s0 + $0x88] sm:$0xf]
    %v205 = vld [vmem:[%s0 + $0x8c] sm:$0xf]
    %v206 = vld [vmem:[%s0 + $0x90] sm:$0xf]
    %v207 = vld [vmem:[%s0 + $0x94] sm:$0xf]
    %v208 = vld [vmem:[%s0 + $0x98] sm:$0xf]
    %v209 = vld [vmem:[%s0 + $0x9c] sm:$0xf]
    %v210 = vld [vmem:[%s0 + $0xa0] sm:$0xf]
    %v211 = vld [vmem:[%s0 + $0xa4] sm:$0xf]
    %v212 = vld [vmem:[%s0 + $0xa8] sm:$0xf]
    %v213 = vld [vmem:[%s0 + $0xac] sm:$0xf]
    %v214 = vld [vmem:[%s0 + $0xb0] sm:$0xf]
    %v215 = vld [vmem:[%s0 + $0xb4] sm:$0xf]
    %v216 = vld [vmem:[%s0 + $0xb8] sm:$0xf]
    %v217 = vld [vmem:[%s0 + $0xbc] sm:$0xf]
    %v218 = vld [vmem:[%s0 + $0xc0] sm:$0xf]
    %v219 = vld [vmem:[%s0 + $0xc4] sm:$0xf]
    %v220 = vld [vmem:[%s0 + $0xc8] sm:$0xf]
    %v221 = vld [vmem:[%s0 + $0xcc] sm:$0xf]
    %v222 = vld [vmem:[%s0 + $0xd0] sm:$0xf]
    %v223 = vld [vmem:[%s0 + $0xd4] sm:$0xf]
    %v224 = vld [vmem:[%s0 + $0xd8] sm:$0xf]
    %v225 = vld [vmem:[%s0 + $0xdc] sm:$0xf]
    %v226 = vld [vmem:[%s0 + $0xe0] sm:$0xf]
    %v227 = vld [vmem:[%s0 + $0xe4] sm:$0xf]
    %v228 = vld [vmem:[%s0 + $0xe8] sm:$0xf]
    %v229 = vld [vmem:[%s0 + $0xec] sm:$0xf]
    %v230 = vld [vmem:[%s0 + $0xf0] sm:$0xf]
    %v231 = vld [vmem:[%s0 + $0xf4] sm:$0xf]
    %v232 = vld [vmem:[%s0 + $0xf8] sm:$0xf]
    %v233 = vld [vmem:[%s0 + $0xfc] sm:$0xf]
    %v298 = vunpack.c.l.b16 %v170
    %v299 = vunpack.c.l.b16 %v171
    %v300 = vunpack.c.l.b16 %v172
    %v301 = vunpack.c.l.b16 %v173
    %v302 = vunpack.c.l.b16 %v174
    %v303 = vunpack.c.l.b16 %v175
    %v304 = vunpack.c.l.b16 %v176
    %v305 = vunpack.c.l.b16 %v177
    %v306 = vunpack.c.l.b16 %v178
    %v307 = vunpack.c.l.b16 %v179
    %v308 = vunpack.c.l.b16 %v180
    %v309 = vunpack.c.l.b16 %v181
    %v310 = vunpack.c.l.b16 %v182
    %v311 = vunpack.c.l.b16 %v183
    %v312 = vunpack.c.l.b16 %v184
    %v313 = vunpack.c.l.b16 %v185
    %v314 = vunpack.c.l.b16 %v186
    %v315 = vunpack.c.l.b16 %v187
    %v316 = vunpack.c.l.b16 %v188
    %v317 = vunpack.c.l.b16 %v189
    %v318 = vunpack.c.l.b16 %v190
    %v319 = vunpack.c.l.b16 %v191
    %v320 = vunpack.c.l.b16 %v192
    %v321 = vunpack.c.l.b16 %v193
    %v322 = vunpack.c.l.b16 %v194
    %v323 = vunpack.c.l.b16 %v195
    %v324 = vunpack.c.l.b16 %v196
    %v325 = vunpack.c.l.b16 %v197
    %v326 = vunpack.c.l.b16 %v198
    %v327 = vunpack.c.l.b16 %v199
    %v328 = vunpack.c.l.b16 %v200
    %v329 = vunpack.c.l.b16 %v201
    %v330 = vunpack.c.l.b16 %v202
    %v331 = vunpack.c.l.b16 %v203
    %v332 = vunpack.c.l.b16 %v204
    %v333 = vunpack.c.l.b16 %v205
    %v334 = vunpack.c.l.b16 %v206
    %v335 = vunpack.c.l.b16 %v207
    %v336 = vunpack.c.l.b16 %v208
    %v337 = vunpack.c.l.b16 %v209
    %v338 = vunpack.c.l.b16 %v210
    %v339 = vunpack.c.l.b16 %v211
    %v340 = vunpack.c.l.b16 %v212
    %v341 = vunpack.c.l.b16 %v213
    %v342 = vunpack.c.l.b16 %v214
    %v343 = vunpack.c.l.b16 %v215
    %v344 = vunpack.c.l.b16 %v216
    %v345 = vunpack.c.l.b16 %v217
    %v346 = vunpack.c.l.b16 %v218
    %v347 = vunpack.c.l.b16 %v219
    %v348 = vunpack.c.l.b16 %v220
    %v349 = vunpack.c.l.b16 %v221
    %v350 = vunpack.c.l.b16 %v222
    %v351 = vunpack.c.l.b16 %v223
    %v352 = vunpack.c.l.b16 %v224
    %v353 = vunpack.c.l.b16 %v225
    %v354 = vunpack.c.l.b16 %v226
    %v355 = vunpack.c.l.b16 %v227
    %v356 = vunpack.c.l.b16 %v228
    %v357 = vunpack.c.l.b16 %v229
    %v358 = vunpack.c.l.b16 %v230
    %v359 = vunpack.c.l.b16 %v231
    %v360 = vunpack.c.l.b16 %v232
    %v361 = vunpack.c.l.b16 %v233
    %v362 = vpack.c.b16 %v299, %v298
    %v363 = vpack.c.b16 %v301, %v300
    %v364 = vpack.c.b16 %v303, %v302
    %v365 = vpack.c.b16 %v305, %v304
    %v366 = vpack.c.b16 %v307, %v306
    %v367 = vpack.c.b16 %v309, %v308
    %v368 = vpack.c.b16 %v311, %v310
    %v369 = vpack.c.b16 %v313, %v312
    %v370 = vpack.c.b16 %v315, %v314
    %v371 = vpack.c.b16 %v317, %v316
    %v372 = vpack.c.b16 %v319, %v318
    %v373 = vpack.c.b16 %v321, %v320
    %v374 = vpack.c.b16 %v323, %v322
    %v375 = vpack.c.b16 %v325, %v324
    %v376 = vpack.c.b16 %v327, %v326
    %v377 = vpack.c.b16 %v329, %v328
    %v378 = vpack.c.b16 %v331, %v330
    %v379 = vpack.c.b16 %v333, %v332
    %v380 = vpack.c.b16 %v335, %v334
    %v381 = vpack.c.b16 %v337, %v336
    %v382 = vpack.c.b16 %v339, %v338
    %v383 = vpack.c.b16 %v341, %v340
    %v384 = vpack.c.b16 %v343, %v342
    %v385 = vpack.c.b16 %v345, %v344
    %v386 = vpack.c.b16 %v347, %v346
    %v387 = vpack.c.b16 %v349, %v348
    %v388 = vpack.c.b16 %v351, %v350
    %v389 = vpack.c.b16 %v353, %v352
    %v390 = vpack.c.b16 %v355, %v354
    %v391 = vpack.c.b16 %v357, %v356
    %v392 = vpack.c.b16 %v359, %v358
    %v393 = vpack.c.b16 %v361, %v360
    %v442 = vunpack.c.l.b16 %v90
    %v443 = vunpack.c.l.b16 %v91
    %v444 = vunpack.c.l.b16 %v92
    %v445 = vunpack.c.l.b16 %v93
    %v446 = vunpack.c.l.b16 %v94
    %v447 = vunpack.c.l.b16 %v95
    %v448 = vunpack.c.l.b16 %v96
    %v449 = vunpack.c.l.b16 %v97
    %v450 = vunpack.c.l.b16 %v98
    %v451 = vunpack.c.l.b16 %v99
    %v452 = vunpack.c.l.b16 %v100
    %v453 = vunpack.c.l.b16 %v101
    %v454 = vunpack.c.l.b16 %v102
    %v455 = vunpack.c.l.b16 %v103
    %v456 = vunpack.c.l.b16 %v104
    %v457 = vunpack.c.l.b16 %v105
    %v458 = vpack.c.b16 %v443, %v442
    %v459 = vpack.c.b16 %v445, %v444
    %v460 = vpack.c.b16 %v447, %v446
    %v461 = vpack.c.b16 %v449, %v448
    %v462 = vpack.c.b16 %v451, %v450
    %v463 = vpack.c.b16 %v453, %v452
    %v464 = vpack.c.b16 %v455, %v454
    %v465 = vpack.c.b16 %v457, %v456
    %474 = vmatpush.bf16.msra.mxu0 %v465
    %475 = vmatpush.bf16.msra.mxu0 %v464
    %476 = vmatpush.bf16.msra.mxu0 %v463
    %477 = vmatpush.bf16.msra.mxu0 %v462
    %478 = vmatpush.bf16.msra.mxu0 %v461
    %479 = vmatpush.bf16.msra.mxu0 %v460
    %480 = vmatpush.bf16.msra.mxu0 %v459
    %481 = vmatpush.bf16.msra.mxu0 %v458
    %482 = vmatmul.bf16.gmra.mxu0 %v362
    %v483 = vpop.f32.mrf.mxu0
    %v484 = vadd.f32 0.0, %v483
    %v485 = vpop.f32.mrf.mxu0
    %v486 = vadd.f32 0.0, %v485
    %487 = vmatmul.bf16.gmra.mxu0 %v363
    %v488 = vpop.f32.mrf.mxu0
    %v489 = vadd.f32 0.0, %v488
    %v490 = vpop.f32.mrf.mxu0
    %v491 = vadd.f32 0.0, %v490
    %492 = vmatmul.bf16.gmra.mxu0 %v364
    %v493 = vpop.f32.mrf.mxu0
    %v494 = vadd.f32 0.0, %v493
    %v495 = vpop.f32.mrf.mxu0
    %v496 = vadd.f32 0.0, %v495
    %497 = vmatmul.bf16.gmra.mxu0 %v365
    %v498 = vpop.f32.mrf.mxu0
    %v499 = vadd.f32 0.0, %v498
    %v500 = vpop.f32.mrf.mxu0
    %v501 = vadd.f32 0.0, %v500
    %502 = vmatmul.bf16.gmra.mxu0 %v366
    %v503 = vpop.f32.mrf.mxu0
    %v504 = vadd.f32 0.0, %v503
    %v505 = vpop.f32.mrf.mxu0
    %v506 = vadd.f32 0.0, %v505
    %507 = vmatmul.bf16.gmra.mxu0 %v367
    %v508 = vpop.f32.mrf.mxu0
    %v509 = vadd.f32 0.0, %v508
    %v510 = vpop.f32.mrf.mxu0
    %v511 = vadd.f32 0.0, %v510
    %512 = vmatmul.bf16.gmra.mxu0 %v368
    %v513 = vpop.f32.mrf.mxu0
    %v514 = vadd.f32 0.0, %v513
    %v515 = vpop.f32.mrf.mxu0
    %v516 = vadd.f32 0.0, %v515
    %517 = vmatmul.bf16.gmra.mxu0 %v369
    %v518 = vpop.f32.mrf.mxu0
    %v519 = vadd.f32 0.0, %v518
    %v520 = vpop.f32.mrf.mxu0
    %v521 = vadd.f32 0.0, %v520
    %522 = vmatmul.bf16.gmra.mxu0 %v370
    %v523 = vpop.f32.mrf.mxu0
    %v524 = vadd.f32 0.0, %v523
    %v525 = vpop.f32.mrf.mxu0
    %v526 = vadd.f32 0.0, %v525
    %527 = vmatmul.bf16.gmra.mxu0 %v371
    %v528 = vpop.f32.mrf.mxu0
    %v529 = vadd.f32 0.0, %v528
    %v530 = vpop.f32.mrf.mxu0
    %v531 = vadd.f32 0.0, %v530
    %532 = vmatmul.bf16.gmra.mxu0 %v372
    %v533 = vpop.f32.mrf.mxu0
    %v534 = vadd.f32 0.0, %v533
    %v535 = vpop.f32.mrf.mxu0
    %v536 = vadd.f32 0.0, %v535
    %537 = vmatmul.bf16.gmra.mxu0 %v373
    %v538 = vpop.f32.mrf.mxu0
    %v539 = vadd.f32 0.0, %v538
    %v540 = vpop.f32.mrf.mxu0
    %v541 = vadd.f32 0.0, %v540
    %542 = vmatmul.bf16.gmra.mxu0 %v374
    %v543 = vpop.f32.mrf.mxu0
    %v544 = vadd.f32 0.0, %v543
    %v545 = vpop.f32.mrf.mxu0
    %v546 = vadd.f32 0.0, %v545
    %547 = vmatmul.bf16.gmra.mxu0 %v375
    %v548 = vpop.f32.mrf.mxu0
    %v549 = vadd.f32 0.0, %v548
    %v550 = vpop.f32.mrf.mxu0
    %v551 = vadd.f32 0.0, %v550
    %552 = vmatmul.bf16.gmra.mxu0 %v376
    %v553 = vpop.f32.mrf.mxu0
    %v554 = vadd.f32 0.0, %v553
    %v555 = vpop.f32.mrf.mxu0
    %v556 = vadd.f32 0.0, %v555
    %557 = vmatmul.bf16.gmra.mxu0 %v377
    %v558 = vpop.f32.mrf.mxu0
    %v559 = vadd.f32 0.0, %v558
    %v560 = vpop.f32.mrf.mxu0
    %v561 = vadd.f32 0.0, %v560
    %562 = vmatmul.bf16.gmra.mxu0 %v378
    %v563 = vpop.f32.mrf.mxu0
    %v564 = vadd.f32 0.0, %v563
    %v565 = vpop.f32.mrf.mxu0
    %v566 = vadd.f32 0.0, %v565
    %567 = vmatmul.bf16.gmra.mxu0 %v379
    %v568 = vpop.f32.mrf.mxu0
    %v569 = vadd.f32 0.0, %v568
    %v570 = vpop.f32.mrf.mxu0
    %v571 = vadd.f32 0.0, %v570
    %572 = vmatmul.bf16.gmra.mxu0 %v380
    %v573 = vpop.f32.mrf.mxu0
    %v574 = vadd.f32 0.0, %v573
    %v575 = vpop.f32.mrf.mxu0
    %v576 = vadd.f32 0.0, %v575
    %577 = vmatmul.bf16.gmra.mxu0 %v381
    %v578 = vpop.f32.mrf.mxu0
    %v579 = vadd.f32 0.0, %v578
    %v580 = vpop.f32.mrf.mxu0
    %v581 = vadd.f32 0.0, %v580
    %582 = vmatmul.bf16.gmra.mxu0 %v382
    %v583 = vpop.f32.mrf.mxu0
    %v584 = vadd.f32 0.0, %v583
    %v585 = vpop.f32.mrf.mxu0
    %v586 = vadd.f32 0.0, %v585
    %587 = vmatmul.bf16.gmra.mxu0 %v383
    %v588 = vpop.f32.mrf.mxu0
    %v589 = vadd.f32 0.0, %v588
    %v590 = vpop.f32.mrf.mxu0
    %v591 = vadd.f32 0.0, %v590
    %592 = vmatmul.bf16.gmra.mxu0 %v384
    %v593 = vpop.f32.mrf.mxu0
    %v594 = vadd.f32 0.0, %v593
    %v595 = vpop.f32.mrf.mxu0
    %v596 = vadd.f32 0.0, %v595
    %597 = vmatmul.bf16.gmra.mxu0 %v385
    %v598 = vpop.f32.mrf.mxu0
    %v599 = vadd.f32 0.0, %v598
    %v600 = vpop.f32.mrf.mxu0
    %v601 = vadd.f32 0.0, %v600
    %602 = vmatmul.bf16.gmra.mxu0 %v386
    %v603 = vpop.f32.mrf.mxu0
    %v604 = vadd.f32 0.0, %v603
    %v605 = vpop.f32.mrf.mxu0
    %v606 = vadd.f32 0.0, %v605
    %607 = vmatmul.bf16.gmra.mxu0 %v387
    %v608 = vpop.f32.mrf.mxu0
    %v609 = vadd.f32 0.0, %v608
    %v610 = vpop.f32.mrf.mxu0
    %v611 = vadd.f32 0.0, %v610
    %612 = vmatmul.bf16.gmra.mxu0 %v388
    %v613 = vpop.f32.mrf.mxu0
    %v614 = vadd.f32 0.0, %v613
    %v615 = vpop.f32.mrf.mxu0
    %v616 = vadd.f32 0.0, %v615
    %617 = vmatmul.bf16.gmra.mxu0 %v389
    %v618 = vpop.f32.mrf.mxu0
    %v619 = vadd.f32 0.0, %v618
    %v620 = vpop.f32.mrf.mxu0
    %v621 = vadd.f32 0.0, %v620
    %622 = vmatmul.bf16.gmra.mxu0 %v390
    %v623 = vpop.f32.mrf.mxu0
    %v624 = vadd.f32 0.0, %v623
    %v625 = vpop.f32.mrf.mxu0
    %v626 = vadd.f32 0.0, %v625
    %627 = vmatmul.bf16.gmra.mxu0 %v391
    %v628 = vpop.f32.mrf.mxu0
    %v629 = vadd.f32 0.0, %v628
    %v630 = vpop.f32.mrf.mxu0
    %v631 = vadd.f32 0.0, %v630
    %632 = vmatmul.bf16.gmra.mxu0 %v392
    %v633 = vpop.f32.mrf.mxu0
    %v634 = vadd.f32 0.0, %v633
    %v635 = vpop.f32.mrf.mxu0
    %v636 = vadd.f32 0.0, %v635
    %637 = vmatmul.bf16.gmra.mxu0 %v393
    %v638 = vpop.f32.mrf.mxu0
    %v639 = vadd.f32 0.0, %v638
    %v640 = vpop.f32.mrf.mxu0
    %v641 = vadd.f32 0.0, %v640
    %642 = vdwg.mxu0
    %v643 = vadd.f32 %v106, %v484
    %v644 = vadd.f32 %v107, %v486
    %v645 = vadd.f32 %v108, %v489
    %v646 = vadd.f32 %v109, %v491
    %v647 = vadd.f32 %v110, %v494
    %v648 = vadd.f32 %v111, %v496
    %v649 = vadd.f32 %v112, %v499
    %v650 = vadd.f32 %v113, %v501
    %v651 = vadd.f32 %v114, %v504
    %v652 = vadd.f32 %v115, %v506
    %v653 = vadd.f32 %v116, %v509
    %v654 = vadd.f32 %v117, %v511
    %v655 = vadd.f32 %v118, %v514
    %v656 = vadd.f32 %v119, %v516
    %v657 = vadd.f32 %v120, %v519
    %v658 = vadd.f32 %v121, %v521
    %v659 = vadd.f32 %v122, %v524
    %v660 = vadd.f32 %v123, %v526
    %v661 = vadd.f32 %v124, %v529
    %v662 = vadd.f32 %v125, %v531
    %v663 = vadd.f32 %v126, %v534
    %v664 = vadd.f32 %v127, %v536
    %v665 = vadd.f32 %v128, %v539
    %v666 = vadd.f32 %v129, %v541
    %v667 = vadd.f32 %v130, %v544
    %v668 = vadd.f32 %v131, %v546
    %v669 = vadd.f32 %v132, %v549
    %v670 = vadd.f32 %v133, %v551
    %v671 = vadd.f32 %v134, %v554
    %v672 = vadd.f32 %v135, %v556
    %v673 = vadd.f32 %v136, %v559
    %v674 = vadd.f32 %v137, %v561
    %v675 = vadd.f32 %v138, %v564
    %v676 = vadd.f32 %v139, %v566
    %v677 = vadd.f32 %v140, %v569
    %v678 = vadd.f32 %v141, %v571
    %v679 = vadd.f32 %v142, %v574
    %v680 = vadd.f32 %v143, %v576
    %v681 = vadd.f32 %v144, %v579
    %v682 = vadd.f32 %v145, %v581
    %v683 = vadd.f32 %v146, %v584
    %v684 = vadd.f32 %v147, %v586
    %v685 = vadd.f32 %v148, %v589
    %v686 = vadd.f32 %v149, %v591
    %v687 = vadd.f32 %v150, %v594
    %v688 = vadd.f32 %v151, %v596
    %v689 = vadd.f32 %v152, %v599
    %v690 = vadd.f32 %v153, %v601
    %v691 = vadd.f32 %v154, %v604
    %v692 = vadd.f32 %v155, %v606
    %v693 = vadd.f32 %v156, %v609
    %v694 = vadd.f32 %v157, %v611
    %v695 = vadd.f32 %v158, %v614
    %v696 = vadd.f32 %v159, %v616
    %v697 = vadd.f32 %v160, %v619
    %v698 = vadd.f32 %v161, %v621
    %v699 = vadd.f32 %v162, %v624
    %v700 = vadd.f32 %v163, %v626
    %v701 = vadd.f32 %v164, %v629
    %v702 = vadd.f32 %v165, %v631
    %v703 = vadd.f32 %v166, %v634
    %v704 = vadd.f32 %v167, %v636
    %v705 = vadd.f32 %v168, %v639
    %v706 = vadd.f32 %v169, %v641
    %707 = vst [vmem:[#allocation2] sm:$0xff] %v643
    %708 = vst [vmem:[#allocation2 + $0x8] sm:$0xff] %v644
    %709 = vst [vmem:[#allocation2 + $0x10] sm:$0xff] %v645
    %710 = vst [vmem:[#allocation2 + $0x18] sm:$0xff] %v646
    %711 = vst [vmem:[#allocation2 + $0x20] sm:$0xff] %v647
    %712 = vst [vmem:[#allocation2 + $0x28] sm:$0xff] %v648
    %713 = vst [vmem:[#allocation2 + $0x30] sm:$0xff] %v649
    %714 = vst [vmem:[#allocation2 + $0x38] sm:$0xff] %v650
    %715 = vst [vmem:[#allocation2 + $0x40] sm:$0xff] %v651
    %716 = vst [vmem:[#allocation2 + $0x48] sm:$0xff] %v652
    %717 = vst [vmem:[#allocation2 + $0x50] sm:$0xff] %v653
    %718 = vst [vmem:[#allocation2 + $0x58] sm:$0xff] %v654
    %719 = vst [vmem:[#allocation2 + $0x60] sm:$0xff] %v655
    %720 = vst [vmem:[#allocation2 + $0x68] sm:$0xff] %v656
    %721 = vst [vmem:[#allocation2 + $0x70] sm:$0xff] %v657
    %722 = vst [vmem:[#allocation2 + $0x78] sm:$0xff] %v658
    %723 = vst [vmem:[#allocation2 + $0x80] sm:$0xff] %v659
    %724 = vst [vmem:[#allocation2 + $0x88] sm:$0xff] %v660
    %725 = vst [vmem:[#allocation2 + $0x90] sm:$0xff] %v661
    %726 = vst [vmem:[#allocation2 + $0x98] sm:$0xff] %v662
    %727 = vst [vmem:[#allocation2 + $0xa0] sm:$0xff] %v663
    %728 = vst [vmem:[#allocation2 + $0xa8] sm:$0xff] %v664
    %729 = vst [vmem:[#allocation2 + $0xb0] sm:$0xff] %v665
    %730 = vst [vmem:[#allocation2 + $0xb8] sm:$0xff] %v666
    %731 = vst [vmem:[#allocation2 + $0xc0] sm:$0xff] %v667
    %732 = vst [vmem:[#allocation2 + $0xc8] sm:$0xff] %v668
    %733 = vst [vmem:[#allocation2 + $0xd0] sm:$0xff] %v669
    %734 = vst [vmem:[#allocation2 + $0xd8] sm:$0xff] %v670
    %735 = vst [vmem:[#allocation2 + $0xe0] sm:$0xff] %v671
    %736 = vst [vmem:[#allocation2 + $0xe8] sm:$0xff] %v672
    %737 = vst [vmem:[#allocation2 + $0xf0] sm:$0xff] %v673
    %738 = vst [vmem:[#allocation2 + $0xf8] sm:$0xff] %v674
    %739 = vst [vmem:[#allocation2 + $0x100] sm:$0xff] %v675
    %740 = vst [vmem:[#allocation2 + $0x108] sm:$0xff] %v676
    %741 = vst [vmem:[#allocation2 + $0x110] sm:$0xff] %v677
    %742 = vst [vmem:[#allocation2 + $0x118] sm:$0xff] %v678
    %743 = vst [vmem:[#allocation2 + $0x120] sm:$0xff] %v679
    %744 = vst [vmem:[#allocation2 + $0x128] sm:$0xff] %v680
    %745 = vst [vmem:[#allocation2 + $0x130] sm:$0xff] %v681
    %746 = vst [vmem:[#allocation2 + $0x138] sm:$0xff] %v682
    %747 = vst [vmem:[#allocation2 + $0x140] sm:$0xff] %v683
    %748 = vst [vmem:[#allocation2 + $0x148] sm:$0xff] %v684
    %749 = vst [vmem:[#allocation2 + $0x150] sm:$0xff] %v685
    %750 = vst [vmem:[#allocation2 + $0x158] sm:$0xff] %v686
    %751 = vst [vmem:[#allocation2 + $0x160] sm:$0xff] %v687
    %752 = vst [vmem:[#allocation2 + $0x168] sm:$0xff] %v688
    %753 = vst [vmem:[#allocation2 + $0x170] sm:$0xff] %v689
    %754 = vst [vmem:[#allocation2 + $0x178] sm:$0xff] %v690
    %755 = vst [vmem:[#allocation2 + $0x180] sm:$0xff] %v691
    %756 = vst [vmem:[#allocation2 + $0x188] sm:$0xff] %v692
    %757 = vst [vmem:[#allocation2 + $0x190] sm:$0xff] %v693
    %758 = vst [vmem:[#allocation2 + $0x198] sm:$0xff] %v694
    %759 = vst [vmem:[#allocation2 + $0x1a0] sm:$0xff] %v695
    %760 = vst [vmem:[#allocation2 + $0x1a8] sm:$0xff] %v696
    %761 = vst [vmem:[#allocation2 + $0x1b0] sm:$0xff] %v697
    %762 = vst [vmem:[#allocation2 + $0x1b8] sm:$0xff] %v698
    %763 = vst [vmem:[#allocation2 + $0x1c0] sm:$0xff] %v699
    %764 = vst [vmem:[#allocation2 + $0x1c8] sm:$0xff] %v700
    %765 = vst [vmem:[#allocation2 + $0x1d0] sm:$0xff] %v701
    %766 = vst [vmem:[#allocation2 + $0x1d8] sm:$0xff] %v702
    %767 = vst [vmem:[#allocation2 + $0x1e0] sm:$0xff] %v703
    %768 = vst [vmem:[#allocation2 + $0x1e8] sm:$0xff] %v704
    %769 = vst [vmem:[#allocation2 + $0x1f0] sm:$0xff] %v705
    %770 = vst [vmem:[#allocation2 + $0x1f8] sm:$0xff] %v706
    // Predicated region
    $region18: #{_lambda_.17} parent=1 // pred_check
      %p771 = pneg %p17
    $region19: #{_lambda_.17} parent=1 // pred_check_branch
      %773 = sbr.rel (%p771) target = $region21
    $region20: #{_lambda_.17} parent=1 // pred_region
      %v774 = vld [vmem:[#allocation2] sm:$0xff]
      %v775 = vld [vmem:[#allocation2 + $0x8] sm:$0xff]
      %v776 = vld [vmem:[#allocation2 + $0x10] sm:$0xff]
      %v777 = vld [vmem:[#allocation2 + $0x18] sm:$0xff]
      %v778 = vld [vmem:[#allocation2 + $0x20] sm:$0xff]
      %v779 = vld [vmem:[#allocation2 + $0x28] sm:$0xff]
      %v780 = vld [vmem:[#allocation2 + $0x30] sm:$0xff]
      %v781 = vld [vmem:[#allocation2 + $0x38] sm:$0xff]
      %v782 = vld [vmem:[#allocation2 + $0x40] sm:$0xff]
      %v783 = vld [vmem:[#allocation2 + $0x48] sm:$0xff]
      %v784 = vld [vmem:[#allocation2 + $0x50] sm:$0xff]
      %v785 = vld [vmem:[#allocation2 + $0x58] sm:$0xff]
      %v786 = vld [vmem:[#allocation2 + $0x60] sm:$0xff]
      %v787 = vld [vmem:[#allocation2 + $0x68] sm:$0xff]
      %v788 = vld [vmem:[#allocation2 + $0x70] sm:$0xff]
      %v789 = vld [vmem:[#allocation2 + $0x78] sm:$0xff]
      %v790 = vld [vmem:[#allocation2 + $0x80] sm:$0xff]
      %v791 = vld [vmem:[#allocation2 + $0x88] sm:$0xff]
      %v792 = vld [vmem:[#allocation2 + $0x90] sm:$0xff]
      %v793 = vld [vmem:[#allocation2 + $0x98] sm:$0xff]
      %v794 = vld [vmem:[#allocation2 + $0xa0] sm:$0xff]
      %v795 = vld [vmem:[#allocation2 + $0xa8] sm:$0xff]
      %v796 = vld [vmem:[#allocation2 + $0xb0] sm:$0xff]
      %v797 = vld [vmem:[#allocation2 + $0xb8] sm:$0xff]
      %v798 = vld [vmem:[#allocation2 + $0xc0] sm:$0xff]
      %v799 = vld [vmem:[#allocation2 + $0xc8] sm:$0xff]
      %v800 = vld [vmem:[#allocation2 + $0xd0] sm:$0xff]
      %v801 = vld [vmem:[#allocation2 + $0xd8] sm:$0xff]
      %v802 = vld [vmem:[#allocation2 + $0xe0] sm:$0xff]
      %v803 = vld [vmem:[#allocation2 + $0xe8] sm:$0xff]
      %v804 = vld [vmem:[#allocation2 + $0xf0] sm:$0xff]
      %v805 = vld [vmem:[#allocation2 + $0xf8] sm:$0xff]
      %v806 = vld [vmem:[#allocation2 + $0x100] sm:$0xff]
      %v807 = vld [vmem:[#allocation2 + $0x108] sm:$0xff]
      %v808 = vld [vmem:[#allocation2 + $0x110] sm:$0xff]
      %v809 = vld [vmem:[#allocation2 + $0x118] sm:$0xff]
      %v810 = vld [vmem:[#allocation2 + $0x120] sm:$0xff]
      %v811 = vld [vmem:[#allocation2 + $0x128] sm:$0xff]
      %v812 = vld [vmem:[#allocation2 + $0x130] sm:$0xff]
      %v813 = vld [vmem:[#allocation2 + $0x138] sm:$0xff]
      %v814 = vld [vmem:[#allocation2 + $0x140] sm:$0xff]
      %v815 = vld [vmem:[#allocation2 + $0x148] sm:$0xff]
      %v816 = vld [vmem:[#allocation2 + $0x150] sm:$0xff]
      %v817 = vld [vmem:[#allocation2 + $0x158] sm:$0xff]
      %v818 = vld [vmem:[#allocation2 + $0x160] sm:$0xff]
      %v819 = vld [vmem:[#allocation2 + $0x168] sm:$0xff]
      %v820 = vld [vmem:[#allocation2 + $0x170] sm:$0xff]
      %v821 = vld [vmem:[#allocation2 + $0x178] sm:$0xff]
      %v822 = vld [vmem:[#allocation2 + $0x180] sm:$0xff]
      %v823 = vld [vmem:[#allocation2 + $0x188] sm:$0xff]
      %v824 = vld [vmem:[#allocation2 + $0x190] sm:$0xff]
      %v825 = vld [vmem:[#allocation2 + $0x198] sm:$0xff]
      %v826 = vld [vmem:[#allocation2 + $0x1a0] sm:$0xff]
      %v827 = vld [vmem:[#allocation2 + $0x1a8] sm:$0xff]
      %v828 = vld [vmem:[#allocation2 + $0x1b0] sm:$0xff]
      %v829 = vld [vmem:[#allocation2 + $0x1b8] sm:$0xff]
      %v830 = vld [vmem:[#allocation2 + $0x1c0] sm:$0xff]
      %v831 = vld [vmem:[#allocation2 + $0x1c8] sm:$0xff]
      %v832 = vld [vmem:[#allocation2 + $0x1d0] sm:$0xff]
      %v833 = vld [vmem:[#allocation2 + $0x1d8] sm:$0xff]
      %v834 = vld [vmem:[#allocation2 + $0x1e0] sm:$0xff]
      %v835 = vld [vmem:[#allocation2 + $0x1e8] sm:$0xff]
      %v836 = vld [vmem:[#allocation2 + $0x1f0] sm:$0xff]
      %v837 = vld [vmem:[#allocation2 + $0x1f8] sm:$0xff]
      %v838 = vld [vmem:[%s2] sm:$0x1]
      %v840 = vperm.slane %v838, 0
      %v842 = vadd.f32 %v774, %v840
      %v843 = vadd.f32 %v775, %v840
      %v844 = vadd.f32 %v776, %v840
      %v845 = vadd.f32 %v777, %v840
      %v846 = vadd.f32 %v778, %v840
      %v847 = vadd.f32 %v779, %v840
      %v848 = vadd.f32 %v780, %v840
      %v849 = vadd.f32 %v781, %v840
      %v850 = vadd.f32 %v782, %v840
      %v851 = vadd.f32 %v783, %v840
      %v852 = vadd.f32 %v784, %v840
      %v853 = vadd.f32 %v785, %v840
      %v854 = vadd.f32 %v786, %v840
      %v855 = vadd.f32 %v787, %v840
      %v856 = vadd.f32 %v788, %v840
      %v857 = vadd.f32 %v789, %v840
      %v858 = vadd.f32 %v790, %v840
      %v859 = vadd.f32 %v791, %v840
      %v860 = vadd.f32 %v792, %v840
      %v861 = vadd.f32 %v793, %v840
      %v862 = vadd.f32 %v794, %v840
      %v863 = vadd.f32 %v795, %v840
      %v864 = vadd.f32 %v796, %v840
      %v865 = vadd.f32 %v797, %v840
      %v866 = vadd.f32 %v798, %v840
      %v867 = vadd.f32 %v799, %v840
      %v868 = vadd.f32 %v800, %v840
      %v869 = vadd.f32 %v801, %v840
      %v870 = vadd.f32 %v802, %v840
      %v871 = vadd.f32 %v803, %v840
      %v872 = vadd.f32 %v804, %v840
      %v873 = vadd.f32 %v805, %v840
      %v874 = vadd.f32 %v806, %v840
      %v875 = vadd.f32 %v807, %v840
      %v876 = vadd.f32 %v808, %v840
      %v877 = vadd.f32 %v809, %v840
      %v878 = vadd.f32 %v810, %v840
      %v879 = vadd.f32 %v811, %v840
      %v880 = vadd.f32 %v812, %v840
      %v881 = vadd.f32 %v813, %v840
      %v882 = vadd.f32 %v814, %v840
      %v883 = vadd.f32 %v815, %v840
      %v884 = vadd.f32 %v816, %v840
      %v885 = vadd.f32 %v817, %v840
      %v886 = vadd.f32 %v818, %v840
      %v887 = vadd.f32 %v819, %v840
      %v888 = vadd.f32 %v820, %v840
      %v889 = vadd.f32 %v821, %v840
      %v890 = vadd.f32 %v822, %v840
      %v891 = vadd.f32 %v823, %v840
      %v892 = vadd.f32 %v824, %v840
      %v893 = vadd.f32 %v825, %v840
      %v894 = vadd.f32 %v826, %v840
      %v895 = vadd.f32 %v827, %v840
      %v896 = vadd.f32 %v828, %v840
      %v897 = vadd.f32 %v829, %v840
      %v898 = vadd.f32 %v830, %v840
      %v899 = vadd.f32 %v831, %v840
      %v900 = vadd.f32 %v832, %v840
      %v901 = vadd.f32 %v833, %v840
      %v902 = vadd.f32 %v834, %v840
      %v903 = vadd.f32 %v835, %v840
      %v904 = vadd.f32 %v836, %v840
      %v905 = vadd.f32 %v837, %v840
      %906 = vst [vmem:[#allocation3] sm:$0x3] 0.0
      %v907 = vpack.c.bf16 %v842, %v842
      %v908 = vpack.c.bf16 %v843, %v843
      %v909 = vpack.c.bf16 %v844, %v844
      %v910 = vpack.c.bf16 %v845, %v845
      %v911 = vpack.c.bf16 %v846, %v846
      %v912 = vpack.c.bf16 %v847, %v847
      %v913 = vpack.c.bf16 %v848, %v848
      %v914 = vpack.c.bf16 %v849, %v849
      %v915 = vpack.c.bf16 %v850, %v850
      %v916 = vpack.c.bf16 %v851, %v851
      %v917 = vpack.c.bf16 %v852, %v852
      %v918 = vpack.c.bf16 %v853, %v853
      %v919 = vpack.c.bf16 %v854, %v854
      %v920 = vpack.c.bf16 %v855, %v855
      %v921 = vpack.c.bf16 %v856, %v856
      %v922 = vpack.c.bf16 %v857, %v857
      %v923 = vpack.c.bf16 %v858, %v858
      %v924 = vpack.c.bf16 %v859, %v859
      %v925 = vpack.c.bf16 %v860, %v860
      %v926 = vpack.c.bf16 %v861, %v861
      %v927 = vpack.c.bf16 %v862, %v862
      %v928 = vpack.c.bf16 %v863, %v863
      %v929 = vpack.c.bf16 %v864, %v864
      %v930 = vpack.c.bf16 %v865, %v865
      %v931 = vpack.c.bf16 %v866, %v866
      %v932 = vpack.c.bf16 %v867, %v867
      %v933 = vpack.c.bf16 %v868, %v868
      %v934 = vpack.c.bf16 %v869, %v869
      %v935 = vpack.c.bf16 %v870, %v870
      %v936 = vpack.c.bf16 %v871, %v871
      %v937 = vpack.c.bf16 %v872, %v872
      %v938 = vpack.c.bf16 %v873, %v873
      %v939 = vpack.c.bf16 %v874, %v874
      %v940 = vpack.c.bf16 %v875, %v875
      %v941 = vpack.c.bf16 %v876, %v876
      %v942 = vpack.c.bf16 %v877, %v877
      %v943 = vpack.c.bf16 %v878, %v878
      %v944 = vpack.c.bf16 %v879, %v879
      %v945 = vpack.c.bf16 %v880, %v880
      %v946 = vpack.c.bf16 %v881, %v881
      %v947 = vpack.c.bf16 %v882, %v882
      %v948 = vpack.c.bf16 %v883, %v883
      %v949 = vpack.c.bf16 %v884, %v884
      %v950 = vpack.c.bf16 %v885, %v885
      %v951 = vpack.c.bf16 %v886, %v886
      %v952 = vpack.c.bf16 %v887, %v887
      %v953 = vpack.c.bf16 %v888, %v888
      %v954 = vpack.c.bf16 %v889, %v889
      %v955 = vpack.c.bf16 %v890, %v890
      %v956 = vpack.c.bf16 %v891, %v891
      %v957 = vpack.c.bf16 %v892, %v892
      %v958 = vpack.c.bf16 %v893, %v893
      %v959 = vpack.c.bf16 %v894, %v894
      %v960 = vpack.c.bf16 %v895, %v895
      %v961 = vpack.c.bf16 %v896, %v896
      %v962 = vpack.c.bf16 %v897, %v897
      %v963 = vpack.c.bf16 %v898, %v898
      %v964 = vpack.c.bf16 %v899, %v899
      %v965 = vpack.c.bf16 %v900, %v900
      %v966 = vpack.c.bf16 %v901, %v901
      %v967 = vpack.c.bf16 %v902, %v902
      %v968 = vpack.c.bf16 %v903, %v903
      %v969 = vpack.c.bf16 %v904, %v904
      %v970 = vpack.c.bf16 %v905, %v905
      %971 = vst [vmem:[%s3] sm:$0xf] %v907
      %972 = vst [vmem:[%s3 + $0x4] sm:$0xf] %v908
      %973 = vst [vmem:[%s3 + $0x8] sm:$0xf] %v909
      %974 = vst [vmem:[%s3 + $0xc] sm:$0xf] %v910
      %975 = vst [vmem:[%s3 + $0x10] sm:$0xf] %v911
      %976 = vst [vmem:[%s3 + $0x14] sm:$0xf] %v912
      %977 = vst [vmem:[%s3 + $0x18] sm:$0xf] %v913
      %978 = vst [vmem:[%s3 + $0x1c] sm:$0xf] %v914
      %979 = vst [vmem:[%s3 + $0x20] sm:$0xf] %v915
      %980 = vst [vmem:[%s3 + $0x24] sm:$0xf] %v916
      %981 = vst [vmem:[%s3 + $0x28] sm:$0xf] %v917
      %982 = vst [vmem:[%s3 + $0x2c] sm:$0xf] %v918
      %983 = vst [vmem:[%s3 + $0x30] sm:$0xf] %v919
      %984 = vst [vmem:[%s3 + $0x34] sm:$0xf] %v920
      %985 = vst [vmem:[%s3 + $0x38] sm:$0xf] %v921
      %986 = vst [vmem:[%s3 + $0x3c] sm:$0xf] %v922
      %987 = vst [vmem:[%s3 + $0x40] sm:$0xf] %v923
      %988 = vst [vmem:[%s3 + $0x44] sm:$0xf] %v924
      %989 = vst [vmem:[%s3 + $0x48] sm:$0xf] %v925
      %990 = vst [vmem:[%s3 + $0x4c] sm:$0xf] %v926
      %991 = vst [vmem:[%s3 + $0x50] sm:$0xf] %v927
      %992 = vst [vmem:[%s3 + $0x54] sm:$0xf] %v928
      %993 = vst [vmem:[%s3 + $0x58] sm:$0xf] %v929
      %994 = vst [vmem:[%s3 + $0x5c] sm:$0xf] %v930
      %995 = vst [vmem:[%s3 + $0x60] sm:$0xf] %v931
      %996 = vst [vmem:[%s3 + $0x64] sm:$0xf] %v932
      %997 = vst [vmem:[%s3 + $0x68] sm:$0xf] %v933
      %998 = vst [vmem:[%s3 + $0x6c] sm:$0xf] %v934
      %999 = vst [vmem:[%s3 + $0x70] sm:$0xf] %v935
      %1000 = vst [vmem:[%s3 + $0x74] sm:$0xf] %v936
      %1001 = vst [vmem:[%s3 + $0x78] sm:$0xf] %v937
      %1002 = vst [vmem:[%s3 + $0x7c] sm:$0xf] %v938
      %1003 = vst [vmem:[%s3 + $0x80] sm:$0xf] %v939
      %1004 = vst [vmem:[%s3 + $0x84] sm:$0xf] %v940
      %1005 = vst [vmem:[%s3 + $0x88] sm:$0xf] %v941
      %1006 = vst [vmem:[%s3 + $0x8c] sm:$0xf] %v942
      %1007 = vst [vmem:[%s3 + $0x90] sm:$0xf] %v943
      %1008 = vst [vmem:[%s3 + $0x94] sm:$0xf] %v944
      %1009 = vst [vmem:[%s3 + $0x98] sm:$0xf] %v945
      %1010 = vst [vmem:[%s3 + $0x9c] sm:$0xf] %v946
      %1011 = vst [vmem:[%s3 + $0xa0] sm:$0xf] %v947
      %1012 = vst [vmem:[%s3 + $0xa4] sm:$0xf] %v948
      %1013 = vst [vmem:[%s3 + $0xa8] sm:$0xf] %v949
      %1014 = vst [vmem:[%s3 + $0xac] sm:$0xf] %v950
      %1015 = vst [vmem:[%s3 + $0xb0] sm:$0xf] %v951
      %1016 = vst [vmem:[%s3 + $0xb4] sm:$0xf] %v952
      %1017 = vst [vmem:[%s3 + $0xb8] sm:$0xf] %v953
      %1018 = vst [vmem:[%s3 + $0xbc] sm:$0xf] %v954
      %1019 = vst [vmem:[%s3 + $0xc0] sm:$0xf] %v955
      %1020 = vst [vmem:[%s3 + $0xc4] sm:$0xf] %v956
      %1021 = vst [vmem:[%s3 + $0xc8] sm:$0xf] %v957
      %1022 = vst [vmem:[%s3 + $0xcc] sm:$0xf] %v958
      %1023 = vst [vmem:[%s3 + $0xd0] sm:$0xf] %v959
      %1024 = vst [vmem:[%s3 + $0xd4] sm:$0xf] %v960
      %1025 = vst [vmem:[%s3 + $0xd8] sm:$0xf] %v961
      %1026 = vst [vmem:[%s3 + $0xdc] sm:$0xf] %v962
      %1027 = vst [vmem:[%s3 + $0xe0] sm:$0xf] %v963
      %1028 = vst [vmem:[%s3 + $0xe4] sm:$0xf] %v964
      %1029 = vst [vmem:[%s3 + $0xe8] sm:$0xf] %v965
      %1030 = vst [vmem:[%s3 + $0xec] sm:$0xf] %v966
      %1031 = vst [vmem:[%s3 + $0xf0] sm:$0xf] %v967
      %1032 = vst [vmem:[%s3 + $0xf4] sm:$0xf] %v968
      %1033 = vst [vmem:[%s3 + $0xf8] sm:$0xf] %v969
      %1034 = vst [vmem:[%s3 + $0xfc] sm:$0xf] %v970
    $region21: #{_lambda_.17} parent=1 // pred_fallthru
      _
    // Predicated region
    $region22: #{_lambda_.17} parent=1 // pred_check
      _
    $region23: #{_lambda_.17} parent=1 // pred_check_branch
      %1036 = sbr.rel (0) target = $region25
    $region24: #{_lambda_.17} parent=1 // pred_region
      _
    $region25: #{_lambda_.17} parent=1 // pred_fallthru
      _
    // Predicated region
    $region26: #{_lambda_.17} parent=1 // pred_check
      _
    $region27: #{_lambda_.17} parent=1 // pred_check_branch
      %1038 = sbr.rel (0) target = $region29
    $region28: #{_lambda_.17} parent=1 // pred_region
      %1040 = vsyncadd [#allocation4], 0
      %s1042 = sshll.u32 [#allocation3], 4
      %s1043 = int_to_ptr.vmem [resolvable:$true] %s1042
      %s1044 = sshll.u32 %s4, 4
      %s1045 = int_to_ptr.hbm [resolvable:$true] %s1044
      %1047 = dma.vmem_to_hbm [thread:$0]  %s1043, 32, %s1045, [#allocation4]
    $region29: #{_lambda_.17} parent=1 // pred_fallthru
      _
    // Predicated region
    $region30: #{_lambda_.17} parent=1 // pred_check
      _
    $region31: #{_lambda_.17} parent=1 // pred_check_branch
      %1049 = sbr.rel (0) target = $region33
    $region32: #{_lambda_.17} parent=1 // pred_region
      _
    $region33: #{_lambda_.17} parent=1 // pred_fallthru
      _
    // Predicated region
    $region34: #{_lambda_.17} parent=1 // pred_check
      _
    $region35: #{_lambda_.17} parent=1 // pred_check_branch
      %1051 = sbr.rel (0) target = $region37
    $region36: #{_lambda_.17} parent=1 // pred_region
      %1053 = dma.done [#allocation4], 32
    $region37: #{_lambda_.17} parent=1 // pred_fallthru
      _
    %1054 = vsyncpa [#allocation4], 1

// kernel: _lambda_.19
$region0: #{_lambda_.19}
  #allocation0 [shape = 'u32[]', space=smem, size = 0x4, offset = 0x4, fixed_abs, tag = 'smem constant byte address 0x4 - core index']
  #allocation1 [shape = 'u32[72,128]{1,0:T(1,128)}', space=vmem, size = 0x9000, scoped, tag = 'internal scratch']
  %s0 = inlined_call_operand.vmem [shape: bf16[128,128], index: 0, kind: input, shape index: {}]
  %s1 = inlined_call_operand.vmem [shape: f32[1,128], index: 1, kind: input, shape index: {}]
  %s2 = inlined_call_operand.vmem [shape: f32[1,128], index: 2, kind: input, shape index: {}]
  %s3 = inlined_call_operand.vmem [shape: bf16[128,128], index: 3, kind: output, shape index: {}]
  %s4 = sld [smem:[#allocation0]]
  $region22: #{_lambda_.19} parent=0
    _
  %s6 = ssub.s32 1, %s4
  %s7 = scalar_select 0, %s6, %s4
  // Predicated region
  $region2: #{_lambda_.19} parent=0 // pred_check
    _
  $region3: #{_lambda_.19} parent=0 // pred_check_branch
    %9 = sbr.rel (0) target = $region5
  $region4: #{_lambda_.19} parent=0 // pred_region
    _
  $region5: #{_lambda_.19} parent=0 // pred_fallthru
    _
  // Predicated region
  $region6: #{_lambda_.19} parent=0 // pred_check
    _
  $region7: #{_lambda_.19} parent=0 // pred_check_branch
    %11 = sbr.rel (0) target = $region9
  $region8: #{_lambda_.19} parent=0 // pred_region
    _
  $region9: #{_lambda_.19} parent=0 // pred_fallthru
    _
  // Predicated region
  $region10: #{_lambda_.19} parent=0 // pred_check
    _
  $region11: #{_lambda_.19} parent=0 // pred_check_branch
    %13 = sbr.rel (0) target = $region13
  $region12: #{_lambda_.19} parent=0 // pred_region
    _
  $region13: #{_lambda_.19} parent=0 // pred_fallthru
    _
  %v14 = vld [vmem:[%s0] sm:$0xf]
  %v15 = vld [vmem:[%s0 + $0x4] sm:$0xf]
  %v16 = vld [vmem:[%s0 + $0x8] sm:$0xf]
  %v17 = vld [vmem:[%s0 + $0xc] sm:$0xf]
  %v18 = vld [vmem:[%s0 + $0x10] sm:$0xf]
  %v19 = vld [vmem:[%s0 + $0x14] sm:$0xf]
  %v20 = vld [vmem:[%s0 + $0x18] sm:$0xf]
  %v21 = vld [vmem:[%s0 + $0x1c] sm:$0xf]
  %v22 = vld [vmem:[%s0 + $0x20] sm:$0xf]
  %v23 = vld [vmem:[%s0 + $0x24] sm:$0xf]
  %v24 = vld [vmem:[%s0 + $0x28] sm:$0xf]
  %v25 = vld [vmem:[%s0 + $0x2c] sm:$0xf]
  %v26 = vld [vmem:[%s0 + $0x30] sm:$0xf]
  %v27 = vld [vmem:[%s0 + $0x34] sm:$0xf]
  %v28 = vld [vmem:[%s0 + $0x38] sm:$0xf]
  %v29 = vld [vmem:[%s0 + $0x3c] sm:$0xf]
  %v30 = vunpack.c.l.bf16 %v14
  %v31 = vunpack.c.l.bf16 %v15
  %v32 = vunpack.c.l.bf16 %v16
  %v33 = vunpack.c.l.bf16 %v17
  %v34 = vunpack.c.l.bf16 %v18
  %v35 = vunpack.c.l.bf16 %v19
  %v36 = vunpack.c.l.bf16 %v20
  %v37 = vunpack.c.l.bf16 %v21
  %v38 = vunpack.c.l.bf16 %v22
  %v39 = vunpack.c.l.bf16 %v23
  %v40 = vunpack.c.l.bf16 %v24
  %v41 = vunpack.c.l.bf16 %v25
  %v42 = vunpack.c.l.bf16 %v26
  %v43 = vunpack.c.l.bf16 %v27
  %v44 = vunpack.c.l.bf16 %v28
  %v45 = vunpack.c.l.bf16 %v29
  %v46 = vld [vmem:[%s1] sm:$0x1]
  %v48 = vperm.slane %v46, 0
  %v50 = vmul.f32 %v30, %v48
  %v51 = vmul.f32 %v31, %v48
  %v52 = vmul.f32 %v32, %v48
  %v53 = vmul.f32 %v33, %v48
  %v54 = vmul.f32 %v34, %v48
  %v55 = vmul.f32 %v35, %v48
  %v56 = vmul.f32 %v36, %v48
  %v57 = vmul.f32 %v37, %v48
  %v58 = vmul.f32 %v38, %v48
  %v59 = vmul.f32 %v39, %v48
  %v60 = vmul.f32 %v40, %v48
  %v61 = vmul.f32 %v41, %v48
  %v62 = vmul.f32 %v42, %v48
  %v63 = vmul.f32 %v43, %v48
  %v64 = vmul.f32 %v44, %v48
  %v65 = vmul.f32 %v45, %v48
  %v66 = vld [vmem:[%s2] sm:$0x1]
  %v68 = vperm.slane %v66, 0
  %v70 = vadd.f32 %v50, %v68
  %v71 = vadd.f32 %v51, %v68
  %v72 = vadd.f32 %v52, %v68
  %v73 = vadd.f32 %v53, %v68
  %v74 = vadd.f32 %v54, %v68
  %v75 = vadd.f32 %v55, %v68
  %v76 = vadd.f32 %v56, %v68
  %v77 = vadd.f32 %v57, %v68
  %v78 = vadd.f32 %v58, %v68
  %v79 = vadd.f32 %v59, %v68
  %v80 = vadd.f32 %v60, %v68
  %v81 = vadd.f32 %v61, %v68
  %v82 = vadd.f32 %v62, %v68
  %v83 = vadd.f32 %v63, %v68
  %v84 = vadd.f32 %v64, %v68
  %v85 = vadd.f32 %v65, %v68
  %v86 = vpack.c.bf16 %v70, %v70
  %v87 = vpack.c.bf16 %v71, %v71
  %v88 = vpack.c.bf16 %v72, %v72
  %v89 = vpack.c.bf16 %v73, %v73
  %v90 = vpack.c.bf16 %v74, %v74
  %v91 = vpack.c.bf16 %v75, %v75
  %v92 = vpack.c.bf16 %v76, %v76
  %v93 = vpack.c.bf16 %v77, %v77
  %v94 = vpack.c.bf16 %v78, %v78
  %v95 = vpack.c.bf16 %v79, %v79
  %v96 = vpack.c.bf16 %v80, %v80
  %v97 = vpack.c.bf16 %v81, %v81
  %v98 = vpack.c.bf16 %v82, %v82
  %v99 = vpack.c.bf16 %v83, %v83
  %v100 = vpack.c.bf16 %v84, %v84
  %v101 = vpack.c.bf16 %v85, %v85
  %102 = vst [vmem:[%s3] sm:$0xf] %v86
  %103 = vst [vmem:[%s3 + $0x4] sm:$0xf] %v87
  %104 = vst [vmem:[%s3 + $0x8] sm:$0xf] %v88
  %105 = vst [vmem:[%s3 + $0xc] sm:$0xf] %v89
  %106 = vst [vmem:[%s3 + $0x10] sm:$0xf] %v90
  %107 = vst [vmem:[%s3 + $0x14] sm:$0xf] %v91
  %108 = vst [vmem:[%s3 + $0x18] sm:$0xf] %v92
  %109 = vst [vmem:[%s3 + $0x1c] sm:$0xf] %v93
  %110 = vst [vmem:[%s3 + $0x20] sm:$0xf] %v94
  %111 = vst [vmem:[%s3 + $0x24] sm:$0xf] %v95
  %112 = vst [vmem:[%s3 + $0x28] sm:$0xf] %v96
  %113 = vst [vmem:[%s3 + $0x2c] sm:$0xf] %v97
  %114 = vst [vmem:[%s3 + $0x30] sm:$0xf] %v98
  %115 = vst [vmem:[%s3 + $0x34] sm:$0xf] %v99
  %116 = vst [vmem:[%s3 + $0x38] sm:$0xf] %v100
  %117 = vst [vmem:[%s3 + $0x3c] sm:$0xf] %v101
  // Predicated region
  $region14: #{_lambda_.19} parent=0 // pred_check
    _
  $region15: #{_lambda_.19} parent=0 // pred_check_branch
    %119 = sbr.rel (0) target = $region17
  $region16: #{_lambda_.19} parent=0 // pred_region
    _
  $region17: #{_lambda_.19} parent=0 // pred_fallthru
    _
  // Predicated region
  $region18: #{_lambda_.19} parent=0 // pred_check
    _
  $region19: #{_lambda_.19} parent=0 // pred_check_branch
    %121 = sbr.rel (0) target = $region21
  $region20: #{_lambda_.19} parent=0 // pred_region
    _
  $region21: #{_lambda_.19} parent=0 // pred_fallthru
    _

// kernel: _lambda_.18
$region0: #{_lambda_.18}
  #allocation0 [shape = 'u32[]', space=smem, size = 0x4, offset = 0x4, fixed_abs, tag = 'smem constant byte address 0x4 - core index']
  #allocation1 [shape = 'u32[72,128]{1,0:T(1,128)}', space=vmem, size = 0x9000, scoped, tag = 'internal scratch']
  #allocation2 [shape = 'f32[128,128]{1,0:T(8,128)}', space=vmem, size = 0x10000, scoped, tag = 'scratch operand']
  %s0 = inlined_call_operand.vmem [shape: bf16[1,128,128], index: 0, kind: input, shape index: {}]
  %s1 = inlined_call_operand.vmem [shape: bf16[1,128,128], index: 1, kind: input, shape index: {}]
  %s2 = inlined_call_operand.vmem [shape: f32[1,128], index: 2, kind: input, shape index: {}]
  %s3 = inlined_call_operand.vmem [shape: bf16[1,128,128], index: 3, kind: output, shape index: {0}]
  %s4 = inlined_call_operand.vmem [shape: f32[1,1,2,128], index: 4, kind: output, shape index: {1}]
  %5 = xla_tuple %s3, %s4
  %s6 = sld [smem:[#allocation0]]
  $region38: #{_lambda_.18} parent=0
    _
  %s8 = ssub.s32 1, %s6
  %s9 = scalar_select 0, %s8, %s6
  // Predicated region
  $region2: #{_lambda_.18} parent=0 // pred_check
    _
  $region3: #{_lambda_.18} parent=0 // pred_check_branch
    %11 = sbr.rel (0) target = $region5
  $region4: #{_lambda_.18} parent=0 // pred_region
    _
  $region5: #{_lambda_.18} parent=0 // pred_fallthru
    _
  // Predicated region
  $region6: #{_lambda_.18} parent=0 // pred_check
    _
  $region7: #{_lambda_.18} parent=0 // pred_check_branch
    %13 = sbr.rel (0) target = $region9
  $region8: #{_lambda_.18} parent=0 // pred_region
    _
  $region9: #{_lambda_.18} parent=0 // pred_fallthru
    _
  // Predicated region
  $region10: #{_lambda_.18} parent=0 // pred_check
    _
  $region11: #{_lambda_.18} parent=0 // pred_check_branch
    %15 = sbr.rel (0) target = $region13
  $region12: #{_lambda_.18} parent=0 // pred_region
    _
  $region13: #{_lambda_.18} parent=0 // pred_fallthru
    _
  %p16 = scmp.eq.s32.totalorder 0, 0
  // Predicated region
  $region14: #{_lambda_.18} parent=0 // pred_check
    %p17 = pneg %p16
  $region15: #{_lambda_.18} parent=0 // pred_check_branch
    %19 = sbr.rel (%p17) target = $region17
  $region16: #{_lambda_.18} parent=0 // pred_region
    %20 = vst [vmem:[#allocation2] sm:$0xff] 0.0
    %21 = vst [vmem:[#allocation2 + $0x8] sm:$0xff] 0.0
    %22 = vst [vmem:[#allocation2 + $0x10] sm:$0xff] 0.0
    %23 = vst [vmem:[#allocation2 + $0x18] sm:$0xff] 0.0
    %24 = vst [vmem:[#allocation2 + $0x20] sm:$0xff] 0.0
    %25 = vst [vmem:[#allocation2 + $0x28] sm:$0xff] 0.0
    %26 = vst [vmem:[#allocation2 + $0x30] sm:$0xff] 0.0
    %27 = vst [vmem:[#allocation2 + $0x38] sm:$0xff] 0.0
    %28 = vst [vmem:[#allocation2 + $0x40] sm:$0xff] 0.0
    %29 = vst [vmem:[#allocation2 + $0x48] sm:$0xff] 0.0
    %30 = vst [vmem:[#allocation2 + $0x50] sm:$0xff] 0.0
    %31 = vst [vmem:[#allocation2 + $0x58] sm:$0xff] 0.0
    %32 = vst [vmem:[#allocation2 + $0x60] sm:$0xff] 0.0
    %33 = vst [vmem:[#allocation2 + $0x68] sm:$0xff] 0.0
    %34 = vst [vmem:[#allocation2 + $0x70] sm:$0xff] 0.0
    %35 = vst [vmem:[#allocation2 + $0x78] sm:$0xff] 0.0
  $region17: #{_lambda_.18} parent=0 // pred_fallthru
    _
  %s36 = smul.u32 0, 128
  %s37 = sshra.s32 %s36, 3
  %s38 = sand.u32 %s36, 7
  %s39 = smul.addr %s37, 4
  %s40 = scalar_lea.vmem %s1, %s39
  %v41 = vld [vmem:[%s40] sm:$0xf]
  %v42 = vld [vmem:[%s40 + $0x4] sm:$0xf]
  %v43 = vld [vmem:[%s40 + $0x8] sm:$0xf]
  %v44 = vld [vmem:[%s40 + $0xc] sm:$0xf]
  %v45 = vld [vmem:[%s40 + $0x10] sm:$0xf]
  %v46 = vld [vmem:[%s40 + $0x14] sm:$0xf]
  %v47 = vld [vmem:[%s40 + $0x18] sm:$0xf]
  %v48 = vld [vmem:[%s40 + $0x1c] sm:$0xf]
  %v49 = vld [vmem:[%s40 + $0x20] sm:$0xf]
  %v50 = vld [vmem:[%s40 + $0x24] sm:$0xf]
  %v51 = vld [vmem:[%s40 + $0x28] sm:$0xf]
  %v52 = vld [vmem:[%s40 + $0x2c] sm:$0xf]
  %v53 = vld [vmem:[%s40 + $0x30] sm:$0xf]
  %v54 = vld [vmem:[%s40 + $0x34] sm:$0xf]
  %v55 = vld [vmem:[%s40 + $0x38] sm:$0xf]
  %v56 = vld [vmem:[%s40 + $0x3c] sm:$0xf]
  %v57 = vld [vmem:[#allocation2] sm:$0xff]
  %v58 = vld [vmem:[#allocation2 + $0x8] sm:$0xff]
  %v59 = vld [vmem:[#allocation2 + $0x10] sm:$0xff]
  %v60 = vld [vmem:[#allocation2 + $0x18] sm:$0xff]
  %v61 = vld [vmem:[#allocation2 + $0x20] sm:$0xff]
  %v62 = vld [vmem:[#allocation2 + $0x28] sm:$0xff]
  %v63 = vld [vmem:[#allocation2 + $0x30] sm:$0xff]
  %v64 = vld [vmem:[#allocation2 + $0x38] sm:$0xff]
  %v65 = vld [vmem:[#allocation2 + $0x40] sm:$0xff]
  %v66 = vld [vmem:[#allocation2 + $0x48] sm:$0xff]
  %v67 = vld [vmem:[#allocation2 + $0x50] sm:$0xff]
  %v68 = vld [vmem:[#allocation2 + $0x58] sm:$0xff]
  %v69 = vld [vmem:[#allocation2 + $0x60] sm:$0xff]
  %v70 = vld [vmem:[#allocation2 + $0x68] sm:$0xff]
  %v71 = vld [vmem:[#allocation2 + $0x70] sm:$0xff]
  %v72 = vld [vmem:[#allocation2 + $0x78] sm:$0xff]
  %v73 = vld [vmem:[%s0] sm:$0xf]
  %v74 = vld [vmem:[%s0 + $0x4] sm:$0xf]
  %v75 = vld [vmem:[%s0 + $0x8] sm:$0xf]
  %v76 = vld [vmem:[%s0 + $0xc] sm:$0xf]
  %v77 = vld [vmem:[%s0 + $0x10] sm:$0xf]
  %v78 = vld [vmem:[%s0 + $0x14] sm:$0xf]
  %v79 = vld [vmem:[%s0 + $0x18] sm:$0xf]
  %v80 = vld [vmem:[%s0 + $0x1c] sm:$0xf]
  %v81 = vld [vmem:[%s0 + $0x20] sm:$0xf]
  %v82 = vld [vmem:[%s0 + $0x24] sm:$0xf]
  %v83 = vld [vmem:[%s0 + $0x28] sm:$0xf]
  %v84 = vld [vmem:[%s0 + $0x2c] sm:$0xf]
  %v85 = vld [vmem:[%s0 + $0x30] sm:$0xf]
  %v86 = vld [vmem:[%s0 + $0x34] sm:$0xf]
  %v87 = vld [vmem:[%s0 + $0x38] sm:$0xf]
  %v88 = vld [vmem:[%s0 + $0x3c] sm:$0xf]
  %v105 = vunpack.c.l.b16 %v73
  %v106 = vunpack.c.l.b16 %v74
  %v107 = vunpack.c.l.b16 %v75
  %v108 = vunpack.c.l.b16 %v76
  %v109 = vunpack.c.l.b16 %v77
  %v110 = vunpack.c.l.b16 %v78
  %v111 = vunpack.c.l.b16 %v79
  %v112 = vunpack.c.l.b16 %v80
  %v113 = vunpack.c.l.b16 %v81
  %v114 = vunpack.c.l.b16 %v82
  %v115 = vunpack.c.l.b16 %v83
  %v116 = vunpack.c.l.b16 %v84
  %v117 = vunpack.c.l.b16 %v85
  %v118 = vunpack.c.l.b16 %v86
  %v119 = vunpack.c.l.b16 %v87
  %v120 = vunpack.c.l.b16 %v88
  %v121 = vpack.c.b16 %v106, %v105
  %v122 = vpack.c.b16 %v108, %v107
  %v123 = vpack.c.b16 %v110, %v109
  %v124 = vpack.c.b16 %v112, %v111
  %v125 = vpack.c.b16 %v114, %v113
  %v126 = vpack.c.b16 %v116, %v115
  %v127 = vpack.c.b16 %v118, %v117
  %v128 = vpack.c.b16 %v120, %v119
  %v153 = vunpack.c.l.b16 %v41
  %v154 = vunpack.c.l.b16 %v42
  %v155 = vunpack.c.l.b16 %v43
  %v156 = vunpack.c.l.b16 %v44
  %v157 = vunpack.c.l.b16 %v45
  %v158 = vunpack.c.l.b16 %v46
  %v159 = vunpack.c.l.b16 %v47
  %v160 = vunpack.c.l.b16 %v48
  %v161 = vunpack.c.l.b16 %v49
  %v162 = vunpack.c.l.b16 %v50
  %v163 = vunpack.c.l.b16 %v51
  %v164 = vunpack.c.l.b16 %v52
  %v165 = vunpack.c.l.b16 %v53
  %v166 = vunpack.c.l.b16 %v54
  %v167 = vunpack.c.l.b16 %v55
  %v168 = vunpack.c.l.b16 %v56
  %v169 = vpack.c.b16 %v154, %v153
  %v170 = vpack.c.b16 %v156, %v155
  %v171 = vpack.c.b16 %v158, %v157
  %v172 = vpack.c.b16 %v160, %v159
  %v173 = vpack.c.b16 %v162, %v161
  %v174 = vpack.c.b16 %v164, %v163
  %v175 = vpack.c.b16 %v166, %v165
  %v176 = vpack.c.b16 %v168, %v167
  %185 = vmatpush.bf16.msra.mxu0 %v176
  %186 = vmatpush.bf16.msra.mxu0 %v175
  %187 = vmatpush.bf16.msra.mxu0 %v174
  %188 = vmatpush.bf16.msra.mxu0 %v173
  %189 = vmatpush.bf16.msra.mxu0 %v172
  %190 = vmatpush.bf16.msra.mxu0 %v171
  %191 = vmatpush.bf16.msra.mxu0 %v170
  %192 = vmatpush.bf16.msra.mxu0 %v169
  %193 = vmatmul.bf16.gmra.mxu0 %v121
  %v194 = vpop.f32.mrf.mxu0
  %v195 = vadd.f32 0.0, %v194
  %v196 = vpop.f32.mrf.mxu0
  %v197 = vadd.f32 0.0, %v196
  %198 = vmatmul.bf16.gmra.mxu0 %v122
  %v199 = vpop.f32.mrf.mxu0
  %v200 = vadd.f32 0.0, %v199
  %v201 = vpop.f32.mrf.mxu0
  %v202 = vadd.f32 0.0, %v201
  %203 = vmatmul.bf16.gmra.mxu0 %v123
  %v204 = vpop.f32.mrf.mxu0
  %v205 = vadd.f32 0.0, %v204
  %v206 = vpop.f32.mrf.mxu0
  %v207 = vadd.f32 0.0, %v206
  %208 = vmatmul.bf16.gmra.mxu0 %v124
  %v209 = vpop.f32.mrf.mxu0
  %v210 = vadd.f32 0.0, %v209
  %v211 = vpop.f32.mrf.mxu0
  %v212 = vadd.f32 0.0, %v211
  %213 = vmatmul.bf16.gmra.mxu0 %v125
  %v214 = vpop.f32.mrf.mxu0
  %v215 = vadd.f32 0.0, %v214
  %v216 = vpop.f32.mrf.mxu0
  %v217 = vadd.f32 0.0, %v216
  %218 = vmatmul.bf16.gmra.mxu0 %v126
  %v219 = vpop.f32.mrf.mxu0
  %v220 = vadd.f32 0.0, %v219
  %v221 = vpop.f32.mrf.mxu0
  %v222 = vadd.f32 0.0, %v221
  %223 = vmatmul.bf16.gmra.mxu0 %v127
  %v224 = vpop.f32.mrf.mxu0
  %v225 = vadd.f32 0.0, %v224
  %v226 = vpop.f32.mrf.mxu0
  %v227 = vadd.f32 0.0, %v226
  %228 = vmatmul.bf16.gmra.mxu0 %v128
  %v229 = vpop.f32.mrf.mxu0
  %v230 = vadd.f32 0.0, %v229
  %v231 = vpop.f32.mrf.mxu0
  %v232 = vadd.f32 0.0, %v231
  %233 = vdwg.mxu0
  %v234 = vadd.f32 %v57, %v195
  %v235 = vadd.f32 %v58, %v197
  %v236 = vadd.f32 %v59, %v200
  %v237 = vadd.f32 %v60, %v202
  %v238 = vadd.f32 %v61, %v205
  %v239 = vadd.f32 %v62, %v207
  %v240 = vadd.f32 %v63, %v210
  %v241 = vadd.f32 %v64, %v212
  %v242 = vadd.f32 %v65, %v215
  %v243 = vadd.f32 %v66, %v217
  %v244 = vadd.f32 %v67, %v220
  %v245 = vadd.f32 %v68, %v222
  %v246 = vadd.f32 %v69, %v225
  %v247 = vadd.f32 %v70, %v227
  %v248 = vadd.f32 %v71, %v230
  %v249 = vadd.f32 %v72, %v232
  %250 = vst [vmem:[#allocation2] sm:$0xff] %v234
  %251 = vst [vmem:[#allocation2 + $0x8] sm:$0xff] %v235
  %252 = vst [vmem:[#allocation2 + $0x10] sm:$0xff] %v236
  %253 = vst [vmem:[#allocation2 + $0x18] sm:$0xff] %v237
  %254 = vst [vmem:[#allocation2 + $0x20] sm:$0xff] %v238
  %255 = vst [vmem:[#allocation2 + $0x28] sm:$0xff] %v239
  %256 = vst [vmem:[#allocation2 + $0x30] sm:$0xff] %v240
  %257 = vst [vmem:[#allocation2 + $0x38] sm:$0xff] %v241
  %258 = vst [vmem:[#allocation2 + $0x40] sm:$0xff] %v242
  %259 = vst [vmem:[#allocation2 + $0x48] sm:$0xff] %v243
  %260 = vst [vmem:[#allocation2 + $0x50] sm:$0xff] %v244
  %261 = vst [vmem:[#allocation2 + $0x58] sm:$0xff] %v245
  %262 = vst [vmem:[#allocation2 + $0x60] sm:$0xff] %v246
  %263 = vst [vmem:[#allocation2 + $0x68] sm:$0xff] %v247
  %264 = vst [vmem:[#allocation2 + $0x70] sm:$0xff] %v248
  %265 = vst [vmem:[#allocation2 + $0x78] sm:$0xff] %v249
  // Predicated region
  $region18: #{_lambda_.18} parent=0 // pred_check
    %p266 = pneg %p16
  $region19: #{_lambda_.18} parent=0 // pred_check_branch
    %268 = sbr.rel (%p266) target = $region21
  $region20: #{_lambda_.18} parent=0 // pred_region
    %v269 = vld [vmem:[#allocation2] sm:$0xff]
    %v270 = vld [vmem:[#allocation2 + $0x8] sm:$0xff]
    %v271 = vld [vmem:[#allocation2 + $0x10] sm:$0xff]
    %v272 = vld [vmem:[#allocation2 + $0x18] sm:$0xff]
    %v273 = vld [vmem:[#allocation2 + $0x20] sm:$0xff]
    %v274 = vld [vmem:[#allocation2 + $0x28] sm:$0xff]
    %v275 = vld [vmem:[#allocation2 + $0x30] sm:$0xff]
    %v276 = vld [vmem:[#allocation2 + $0x38] sm:$0xff]
    %v277 = vld [vmem:[#allocation2 + $0x40] sm:$0xff]
    %v278 = vld [vmem:[#allocation2 + $0x48] sm:$0xff]
    %v279 = vld [vmem:[#allocation2 + $0x50] sm:$0xff]
    %v280 = vld [vmem:[#allocation2 + $0x58] sm:$0xff]
    %v281 = vld [vmem:[#allocation2 + $0x60] sm:$0xff]
    %v282 = vld [vmem:[#allocation2 + $0x68] sm:$0xff]
    %v283 = vld [vmem:[#allocation2 + $0x70] sm:$0xff]
    %v284 = vld [vmem:[#allocation2 + $0x78] sm:$0xff]
    %v285 = vld [vmem:[%s2] sm:$0x1]
    %v287 = vperm.slane %v285, 0
    %v289 = vadd.f32 %v269, %v287
    %v290 = vadd.f32 %v270, %v287
    %v291 = vadd.f32 %v271, %v287
    %v292 = vadd.f32 %v272, %v287
    %v293 = vadd.f32 %v273, %v287
    %v294 = vadd.f32 %v274, %v287
    %v295 = vadd.f32 %v275, %v287
    %v296 = vadd.f32 %v276, %v287
    %v297 = vadd.f32 %v277, %v287
    %v298 = vadd.f32 %v278, %v287
    %v299 = vadd.f32 %v279, %v287
    %v300 = vadd.f32 %v280, %v287
    %v301 = vadd.f32 %v281, %v287
    %v302 = vadd.f32 %v282, %v287
    %v303 = vadd.f32 %v283, %v287
    %v304 = vadd.f32 %v284, %v287
    %v305 = vadd.f32 %v289, %v290
    %v306 = vadd.f32 %v305, %v291
    %v307 = vadd.f32 %v306, %v292
    %v308 = vadd.f32 %v307, %v293
    %v309 = vadd.f32 %v308, %v294
    %v310 = vadd.f32 %v309, %v295
    %v311 = vadd.f32 %v310, %v296
    %v312 = vadd.f32 %v311, %v297
    %v313 = vadd.f32 %v312, %v298
    %v314 = vadd.f32 %v313, %v299
    %v315 = vadd.f32 %v314, %v300
    %v316 = vadd.f32 %v315, %v301
    %v317 = vadd.f32 %v316, %v302
    %v318 = vadd.f32 %v317, %v303
    %v319 = vadd.f32 %v318, %v304
    %v320 = vrot.slane %v319, 4
    %v321 = vadd.f32 %v319, %v320
    %v322 = vrot.slane %v321, 2
    %v323 = vadd.f32 %v321, %v322
    %v324 = vrot.slane %v323, 1
    %v325 = vadd.f32 %v323, %v324
    %326 = vst [vmem:[%s4] sm:$0x1] %v325
    %v327 = vmul.f32 %v289, %v289
    %v328 = vmul.f32 %v290, %v290
    %v329 = vmul.f32 %v291, %v291
    %v330 = vmul.f32 %v292, %v292
    %v331 = vmul.f32 %v293, %v293
    %v332 = vmul.f32 %v294, %v294
    %v333 = vmul.f32 %v295, %v295
    %v334 = vmul.f32 %v296, %v296
    %v335 = vmul.f32 %v297, %v297
    %v336 = vmul.f32 %v298, %v298
    %v337 = vmul.f32 %v299, %v299
    %v338 = vmul.f32 %v300, %v300
    %v339 = vmul.f32 %v301, %v301
    %v340 = vmul.f32 %v302, %v302
    %v341 = vmul.f32 %v303, %v303
    %v342 = vmul.f32 %v304, %v304
    %v343 = vadd.f32 %v327, %v328
    %v344 = vadd.f32 %v343, %v329
    %v345 = vadd.f32 %v344, %v330
    %v346 = vadd.f32 %v345, %v331
    %v347 = vadd.f32 %v346, %v332
    %v348 = vadd.f32 %v347, %v333
    %v349 = vadd.f32 %v348, %v334
    %v350 = vadd.f32 %v349, %v335
    %v351 = vadd.f32 %v350, %v336
    %v352 = vadd.f32 %v351, %v337
    %v353 = vadd.f32 %v352, %v338
    %v354 = vadd.f32 %v353, %v339
    %v355 = vadd.f32 %v354, %v340
    %v356 = vadd.f32 %v355, %v341
    %v357 = vadd.f32 %v356, %v342
    %v358 = vrot.slane %v357, 4
    %v359 = vadd.f32 %v357, %v358
    %v360 = vrot.slane %v359, 2
    %v361 = vadd.f32 %v359, %v360
    %v362 = vrot.slane %v361, 1
    %v363 = vadd.f32 %v361, %v362
    %364 = vst [vmem:[%s4 + $0x1] sm:$0x1] %v363
    %v365 = vpack.c.bf16 %v289, %v289
    %v366 = vpack.c.bf16 %v290, %v290
    %v367 = vpack.c.bf16 %v291, %v291
    %v368 = vpack.c.bf16 %v292, %v292
    %v369 = vpack.c.bf16 %v293, %v293
    %v370 = vpack.c.bf16 %v294, %v294
    %v371 = vpack.c.bf16 %v295, %v295
    %v372 = vpack.c.bf16 %v296, %v296
    %v373 = vpack.c.bf16 %v297, %v297
    %v374 = vpack.c.bf16 %v298, %v298
    %v375 = vpack.c.bf16 %v299, %v299
    %v376 = vpack.c.bf16 %v300, %v300
    %v377 = vpack.c.bf16 %v301, %v301
    %v378 = vpack.c.bf16 %v302, %v302
    %v379 = vpack.c.bf16 %v303, %v303
    %v380 = vpack.c.bf16 %v304, %v304
    %381 = vst [vmem:[%s3] sm:$0xf] %v365
    %382 = vst [vmem:[%s3 + $0x4] sm:$0xf] %v366
    %383 = vst [vmem:[%s3 + $0x8] sm:$0xf] %v367
    %384 = vst [vmem:[%s3 + $0xc] sm:$0xf] %v368
    %385 = vst [vmem:[%s3 + $0x10] sm:$0xf] %v369
    %386 = vst [vmem:[%s3 + $0x14] sm:$0xf] %v370
    %387 = vst [vmem:[%s3 + $0x18] sm:$0xf] %v371
    %388 = vst [vmem:[%s3 + $0x1c] sm:$0xf] %v372
    %389 = vst [vmem:[%s3 + $0x20] sm:$0xf] %v373
    %390 = vst [vmem:[%s3 + $0x24] sm:$0xf] %v374
    %391 = vst [vmem:[%s3 + $0x28] sm:$0xf] %v375
    %392 = vst [vmem:[%s3 + $0x2c] sm:$0xf] %v376
    %393 = vst [vmem:[%s3 + $0x30] sm:$0xf] %v377
    %394 = vst [vmem:[%s3 + $0x34] sm:$0xf] %v378
    %395 = vst [vmem:[%s3 + $0x38] sm:$0xf] %v379
    %396 = vst [vmem:[%s3 + $0x3c] sm:$0xf] %v380
  $region21: #{_lambda_.18} parent=0 // pred_fallthru
    _
  // Predicated region
  $region22: #{_lambda_.18} parent=0 // pred_check
    _
  $region23: #{_lambda_.18} parent=0 // pred_check_branch
    %398 = sbr.rel (0) target = $region25
  $region24: #{_lambda_.18} parent=0 // pred_region
    _
  $region25: #{_lambda_.18} parent=0 // pred_fallthru
    _
  // Predicated region
  $region26: #{_lambda_.18} parent=0 // pred_check
    _
  $region27: #{_lambda_.18} parent=0 // pred_check_branch
    %400 = sbr.rel (0) target = $region29
  $region28: #{_lambda_.18} parent=0 // pred_region
    _
  $region29: #{_lambda_.18} parent=0 // pred_fallthru
    _
  // Predicated region
  $region30: #{_lambda_.18} parent=0 // pred_check
    _
  $region31: #{_lambda_.18} parent=0 // pred_check_branch
    %402 = sbr.rel (0) target = $region33
  $region32: #{_lambda_.18} parent=0 // pred_region
    _
  $region33: #{_lambda_.18} parent=0 // pred_fallthru
    _
  // Predicated region
  $region34: #{_lambda_.18} parent=0 // pred_check
    _
  $region35: #{_lambda_.18} parent=0 // pred_check_branch
    %404 = sbr.rel (0) target = $region37
  $region36: #{_lambda_.18} parent=0 // pred_region
    _
  $region37: #{_lambda_.18} parent=0 // pred_fallthru
    _

// kernel: _lambda_.21
$region0: #{_lambda_.21}
  #allocation0 [shape = 'u32[]', space=smem, size = 0x4, offset = 0x4, fixed_abs, tag = 'smem constant byte address 0x4 - core index']
  #allocation1 [shape = 'u32[72,128]{1,0:T(1,128)}', space=vmem, size = 0x9000, scoped, tag = 'internal scratch']
  %s0 = inlined_call_operand.vmem [shape: bf16[32,128], index: 0, kind: input, shape index: {}]
  %s1 = inlined_call_operand.vmem [shape: f32[1,128], index: 1, kind: input, shape index: {}]
  %s2 = inlined_call_operand.vmem [shape: f32[1,128], index: 2, kind: input, shape index: {}]
  %s3 = inlined_call_operand.vmem [shape: bf16[32,128], index: 3, kind: output, shape index: {}]
  %s4 = sld [smem:[#allocation0]]
  $region22: #{_lambda_.21} parent=0
    _
  %s6 = ssub.s32 1, %s4
  %s7 = scalar_select 0, %s6, %s4
  // Predicated region
  $region2: #{_lambda_.21} parent=0 // pred_check
    _
  $region3: #{_lambda_.21} parent=0 // pred_check_branch
    %9 = sbr.rel (0) target = $region5
  $region4: #{_lambda_.21} parent=0 // pred_region
    _
  $region5: #{_lambda_.21} parent=0 // pred_fallthru
    _
  // Predicated region
  $region6: #{_lambda_.21} parent=0 // pred_check
    _
  $region7: #{_lambda_.21} parent=0 // pred_check_branch
    %11 = sbr.rel (0) target = $region9
  $region8: #{_lambda_.21} parent=0 // pred_region
    _
  $region9: #{_lambda_.21} parent=0 // pred_fallthru
    _
  // Predicated region
  $region10: #{_lambda_.21} parent=0 // pred_check
    _
  $region11: #{_lambda_.21} parent=0 // pred_check_branch
    %13 = sbr.rel (0) target = $region13
  $region12: #{_lambda_.21} parent=0 // pred_region
    _
  $region13: #{_lambda_.21} parent=0 // pred_fallthru
    _
  %v14 = vld [vmem:[%s0] sm:$0xf]
  %v15 = vld [vmem:[%s0 + $0x4] sm:$0xf]
  %v16 = vld [vmem:[%s0 + $0x8] sm:$0xf]
  %v17 = vld [vmem:[%s0 + $0xc] sm:$0xf]
  %v18 = vunpack.c.l.bf16 %v14
  %v19 = vunpack.c.l.bf16 %v15
  %v20 = vunpack.c.l.bf16 %v16
  %v21 = vunpack.c.l.bf16 %v17
  %v22 = vld [vmem:[%s1] sm:$0x1]
  %v24 = vperm.slane %v22, 0
  %v26 = vmul.f32 %v18, %v24
  %v27 = vmul.f32 %v19, %v24
  %v28 = vmul.f32 %v20, %v24
  %v29 = vmul.f32 %v21, %v24
  %v30 = vld [vmem:[%s2] sm:$0x1]
  %v32 = vperm.slane %v30, 0
  %v34 = vadd.f32 %v26, %v32
  %v35 = vadd.f32 %v27, %v32
  %v36 = vadd.f32 %v28, %v32
  %v37 = vadd.f32 %v29, %v32
  %v38 = vpack.c.bf16 %v34, %v34
  %v39 = vpack.c.bf16 %v35, %v35
  %v40 = vpack.c.bf16 %v36, %v36
  %v41 = vpack.c.bf16 %v37, %v37
  %42 = vst [vmem:[%s3] sm:$0xf] %v38
  %43 = vst [vmem:[%s3 + $0x4] sm:$0xf] %v39
  %44 = vst [vmem:[%s3 + $0x8] sm:$0xf] %v40
  %45 = vst [vmem:[%s3 + $0xc] sm:$0xf] %v41
  // Predicated region
  $region14: #{_lambda_.21} parent=0 // pred_check
    _
  $region15: #{_lambda_.21} parent=0 // pred_check_branch
    %47 = sbr.rel (0) target = $region17
  $region16: #{_lambda_.21} parent=0 // pred_region
    _
  $region17: #{_lambda_.21} parent=0 // pred_fallthru
    _
  // Predicated region
  $region18: #{_lambda_.21} parent=0 // pred_check
    _
  $region19: #{_lambda_.21} parent=0 // pred_check_branch
    %49 = sbr.rel (0) target = $region21
  $region20: #{_lambda_.21} parent=0 // pred_region
    _
  $region21: #{_lambda_.21} parent=0 // pred_fallthru
    _

// kernel: _lambda_.20
$region0: #{_lambda_.20}
  #allocation0 [shape = 'u32[]', space=smem, size = 0x4, offset = 0x4, fixed_abs, tag = 'smem constant byte address 0x4 - core index']
  #allocation1 [shape = 'u32[72,128]{1,0:T(1,128)}', space=vmem, size = 0x9000, scoped, tag = 'internal scratch']
  #allocation2 [shape = 'f32[32,128]{1,0:T(8,128)}', space=vmem, size = 0x4000, scoped, tag = 'scratch operand']
  %s0 = inlined_call_operand.vmem [shape: bf16[1,32,256], index: 0, kind: input, shape index: {}]
  %s1 = inlined_call_operand.vmem [shape: bf16[1,256,128], index: 1, kind: input, shape index: {}]
  %s2 = inlined_call_operand.vmem [shape: f32[1,128], index: 2, kind: input, shape index: {}]
  %s3 = inlined_call_operand.vmem [shape: bf16[1,32,128], index: 3, kind: output, shape index: {0}]
  %s4 = inlined_call_operand.vmem [shape: f32[1,1,2,128], index: 4, kind: output, shape index: {1}]
  %5 = xla_tuple %s3, %s4
  %s6 = sld [smem:[#allocation0]]
  $region38: #{_lambda_.20} parent=0
    _
  %s8 = ssub.s32 1, %s6
  %s9 = scalar_select 0, %s8, %s6
  // Predicated region
  $region2: #{_lambda_.20} parent=0 // pred_check
    _
  $region3: #{_lambda_.20} parent=0 // pred_check_branch
    %11 = sbr.rel (0) target = $region5
  $region4: #{_lambda_.20} parent=0 // pred_region
    _
  $region5: #{_lambda_.20} parent=0 // pred_fallthru
    _
  // Predicated region
  $region6: #{_lambda_.20} parent=0 // pred_check
    _
  $region7: #{_lambda_.20} parent=0 // pred_check_branch
    %13 = sbr.rel (0) target = $region9
  $region8: #{_lambda_.20} parent=0 // pred_region
    _
  $region9: #{_lambda_.20} parent=0 // pred_fallthru
    _
  // Predicated region
  $region10: #{_lambda_.20} parent=0 // pred_check
    _
  $region11: #{_lambda_.20} parent=0 // pred_check_branch
    %15 = sbr.rel (0) target = $region13
  $region12: #{_lambda_.20} parent=0 // pred_region
    _
  $region13: #{_lambda_.20} parent=0 // pred_fallthru
    _
  %p16 = scmp.eq.s32.totalorder 0, 0
  // Predicated region
  $region14: #{_lambda_.20} parent=0 // pred_check
    %p17 = pneg %p16
  $region15: #{_lambda_.20} parent=0 // pred_check_branch
    %19 = sbr.rel (%p17) target = $region17
  $region16: #{_lambda_.20} parent=0 // pred_region
    %20 = vst [vmem:[#allocation2] sm:$0xff] 0.0
    %21 = vst [vmem:[#allocation2 + $0x8] sm:$0xff] 0.0
    %22 = vst [vmem:[#allocation2 + $0x10] sm:$0xff] 0.0
    %23 = vst [vmem:[#allocation2 + $0x18] sm:$0xff] 0.0
  $region17: #{_lambda_.20} parent=0 // pred_fallthru
    _
  %s24 = smul.u32 0, 256
  %s25 = sshra.s32 %s24, 3
  %s26 = sand.u32 %s24, 7
  %s27 = smul.addr %s25, 4
  %s28 = scalar_lea.vmem %s1, %s27
  %v29 = vld [vmem:[%s28] sm:$0xf]
  %v30 = vld [vmem:[%s28 + $0x4] sm:$0xf]
  %v31 = vld [vmem:[%s28 + $0x8] sm:$0xf]
  %v32 = vld [vmem:[%s28 + $0xc] sm:$0xf]
  %v33 = vld [vmem:[%s28 + $0x10] sm:$0xf]
  %v34 = vld [vmem:[%s28 + $0x14] sm:$0xf]
  %v35 = vld [vmem:[%s28 + $0x18] sm:$0xf]
  %v36 = vld [vmem:[%s28 + $0x1c] sm:$0xf]
  %v37 = vld [vmem:[%s28 + $0x20] sm:$0xf]
  %v38 = vld [vmem:[%s28 + $0x24] sm:$0xf]
  %v39 = vld [vmem:[%s28 + $0x28] sm:$0xf]
  %v40 = vld [vmem:[%s28 + $0x2c] sm:$0xf]
  %v41 = vld [vmem:[%s28 + $0x30] sm:$0xf]
  %v42 = vld [vmem:[%s28 + $0x34] sm:$0xf]
  %v43 = vld [vmem:[%s28 + $0x38] sm:$0xf]
  %v44 = vld [vmem:[%s28 + $0x3c] sm:$0xf]
  %v45 = vld [vmem:[%s28 + $0x40] sm:$0xf]
  %v46 = vld [vmem:[%s28 + $0x44] sm:$0xf]
  %v47 = vld [vmem:[%s28 + $0x48] sm:$0xf]
  %v48 = vld [vmem:[%s28 + $0x4c] sm:$0xf]
  %v49 = vld [vmem:[%s28 + $0x50] sm:$0xf]
  %v50 = vld [vmem:[%s28 + $0x54] sm:$0xf]
  %v51 = vld [vmem:[%s28 + $0x58] sm:$0xf]
  %v52 = vld [vmem:[%s28 + $0x5c] sm:$0xf]
  %v53 = vld [vmem:[%s28 + $0x60] sm:$0xf]
  %v54 = vld [vmem:[%s28 + $0x64] sm:$0xf]
  %v55 = vld [vmem:[%s28 + $0x68] sm:$0xf]
  %v56 = vld [vmem:[%s28 + $0x6c] sm:$0xf]
  %v57 = vld [vmem:[%s28 + $0x70] sm:$0xf]
  %v58 = vld [vmem:[%s28 + $0x74] sm:$0xf]
  %v59 = vld [vmem:[%s28 + $0x78] sm:$0xf]
  %v60 = vld [vmem:[%s28 + $0x7c] sm:$0xf]
  %v61 = vld [vmem:[#allocation2] sm:$0xff]
  %v62 = vld [vmem:[#allocation2 + $0x8] sm:$0xff]
  %v63 = vld [vmem:[#allocation2 + $0x10] sm:$0xff]
  %v64 = vld [vmem:[#allocation2 + $0x18] sm:$0xff]
  %v65 = vld [vmem:[%s0] sm:$0xff]
  %v66 = vld [vmem:[%s0 + $0x8] sm:$0xff]
  %v67 = vld [vmem:[%s0 + $0x10] sm:$0xff]
  %v68 = vld [vmem:[%s0 + $0x18] sm:$0xff]
  %v73 = vunpack.c.l.b16 %v65
  %v74 = vunpack.c.h.b16 %v65
  %v75 = vunpack.c.l.b16 %v66
  %v76 = vunpack.c.h.b16 %v66
  %v77 = vunpack.c.l.b16 %v67
  %v78 = vunpack.c.h.b16 %v67
  %v79 = vunpack.c.l.b16 %v68
  %v80 = vunpack.c.h.b16 %v68
  %v81 = vpack.c.b16 %v75, %v73
  %v82 = vpack.c.b16 %v76, %v74
  %v83 = vpack.c.b16 %v79, %v77
  %v84 = vpack.c.b16 %v80, %v78
  %v121 = vunpack.c.l.b16 %v29
  %v122 = vunpack.c.l.b16 %v30
  %v123 = vunpack.c.l.b16 %v31
  %v124 = vunpack.c.l.b16 %v32
  %v125 = vunpack.c.l.b16 %v33
  %v126 = vunpack.c.l.b16 %v34
  %v127 = vunpack.c.l.b16 %v35
  %v128 = vunpack.c.l.b16 %v36
  %v129 = vunpack.c.l.b16 %v37
  %v130 = vunpack.c.l.b16 %v38
  %v131 = vunpack.c.l.b16 %v39
  %v132 = vunpack.c.l.b16 %v40
  %v133 = vunpack.c.l.b16 %v41
  %v134 = vunpack.c.l.b16 %v42
  %v135 = vunpack.c.l.b16 %v43
  %v136 = vunpack.c.l.b16 %v44
  %v137 = vunpack.c.l.b16 %v45
  %v138 = vunpack.c.l.b16 %v46
  %v139 = vunpack.c.l.b16 %v47
  %v140 = vunpack.c.l.b16 %v48
  %v141 = vunpack.c.l.b16 %v49
  %v142 = vunpack.c.l.b16 %v50
  %v143 = vunpack.c.l.b16 %v51
  %v144 = vunpack.c.l.b16 %v52
  %v145 = vunpack.c.l.b16 %v53
  %v146 = vunpack.c.l.b16 %v54
  %v147 = vunpack.c.l.b16 %v55
  %v148 = vunpack.c.l.b16 %v56
  %v149 = vunpack.c.l.b16 %v57
  %v150 = vunpack.c.l.b16 %v58
  %v151 = vunpack.c.l.b16 %v59
  %v152 = vunpack.c.l.b16 %v60
  %v153 = vpack.c.b16 %v122, %v121
  %v154 = vpack.c.b16 %v124, %v123
  %v155 = vpack.c.b16 %v126, %v125
  %v156 = vpack.c.b16 %v128, %v127
  %v157 = vpack.c.b16 %v130, %v129
  %v158 = vpack.c.b16 %v132, %v131
  %v159 = vpack.c.b16 %v134, %v133
  %v160 = vpack.c.b16 %v136, %v135
  %v161 = vpack.c.b16 %v138, %v137
  %v162 = vpack.c.b16 %v140, %v139
  %v163 = vpack.c.b16 %v142, %v141
  %v164 = vpack.c.b16 %v144, %v143
  %v165 = vpack.c.b16 %v146, %v145
  %v166 = vpack.c.b16 %v148, %v147
  %v167 = vpack.c.b16 %v150, %v149
  %v168 = vpack.c.b16 %v152, %v151
  %185 = vmatpush.bf16.msra.mxu0 %v160
  %186 = vmatpush.bf16.msra.mxu0 %v159
  %187 = vmatpush.bf16.msra.mxu0 %v158
  %188 = vmatpush.bf16.msra.mxu0 %v157
  %189 = vmatpush.bf16.msra.mxu0 %v156
  %190 = vmatpush.bf16.msra.mxu0 %v155
  %191 = vmatpush.bf16.msra.mxu0 %v154
  %192 = vmatpush.bf16.msra.mxu0 %v153
  %193 = vmatmul.bf16.gmra.mxu0 %v81
  %v194 = vpop.f32.mrf.mxu0
  %v195 = vadd.f32 0.0, %v194
  %v196 = vpop.f32.mrf.mxu0
  %v197 = vadd.f32 0.0, %v196
  %198 = vmatmul.bf16.gmra.mxu0 %v83
  %v199 = vpop.f32.mrf.mxu0
  %v200 = vadd.f32 0.0, %v199
  %v201 = vpop.f32.mrf.mxu0
  %v202 = vadd.f32 0.0, %v201
  %203 = vdwg.mxu0
  %204 = vmatpush.bf16.msra.mxu0 %v168
  %205 = vmatpush.bf16.msra.mxu0 %v167
  %206 = vmatpush.bf16.msra.mxu0 %v166
  %207 = vmatpush.bf16.msra.mxu0 %v165
  %208 = vmatpush.bf16.msra.mxu0 %v164
  %209 = vmatpush.bf16.msra.mxu0 %v163
  %210 = vmatpush.bf16.msra.mxu0 %v162
  %211 = vmatpush.bf16.msra.mxu0 %v161
  %212 = vmatmul.bf16.gmra.mxu0 %v82
  %v213 = vpop.f32.mrf.mxu0
  %v214 = vadd.f32 %v195, %v213
  %v215 = vpop.f32.mrf.mxu0
  %v216 = vadd.f32 %v197, %v215
  %217 = vmatmul.bf16.gmra.mxu0 %v84
  %v218 = vpop.f32.mrf.mxu0
  %v219 = vadd.f32 %v200, %v218
  %v220 = vpop.f32.mrf.mxu0
  %v221 = vadd.f32 %v202, %v220
  %222 = vdwg.mxu0
  %v223 = vadd.f32 %v61, %v214
  %v224 = vadd.f32 %v62, %v216
  %v225 = vadd.f32 %v63, %v219
  %v226 = vadd.f32 %v64, %v221
  %227 = vst [vmem:[#allocation2] sm:$0xff] %v223
  %228 = vst [vmem:[#allocation2 + $0x8] sm:$0xff] %v224
  %229 = vst [vmem:[#allocation2 + $0x10] sm:$0xff] %v225
  %230 = vst [vmem:[#allocation2 + $0x18] sm:$0xff] %v226
  // Predicated region
  $region18: #{_lambda_.20} parent=0 // pred_check
    %p231 = pneg %p16
  $region19: #{_lambda_.20} parent=0 // pred_check_branch
    %233 = sbr.rel (%p231) target = $region21
  $region20: #{_lambda_.20} parent=0 // pred_region
    %v234 = vld [vmem:[#allocation2] sm:$0xff]
    %v235 = vld [vmem:[#allocation2 + $0x8] sm:$0xff]
    %v236 = vld [vmem:[#allocation2 + $0x10] sm:$0xff]
    %v237 = vld [vmem:[#allocation2 + $0x18] sm:$0xff]
    %v238 = vld [vmem:[%s2] sm:$0x1]
    %v240 = vperm.slane %v238, 0
    %v242 = vadd.f32 %v234, %v240
    %v243 = vadd.f32 %v235, %v240
    %v244 = vadd.f32 %v236, %v240
    %v245 = vadd.f32 %v237, %v240
    %v246 = vadd.f32 %v242, %v243
    %v247 = vadd.f32 %v246, %v244
    %v248 = vadd.f32 %v247, %v245
    %v249 = vrot.slane %v248, 4
    %v250 = vadd.f32 %v248, %v249
    %v251 = vrot.slane %v250, 2
    %v252 = vadd.f32 %v250, %v251
    %v253 = vrot.slane %v252, 1
    %v254 = vadd.f32 %v252, %v253
    %255 = vst [vmem:[%s4] sm:$0x1] %v254
    %v256 = vmul.f32 %v242, %v242
    %v257 = vmul.f32 %v243, %v243
    %v258 = vmul.f32 %v244, %v244
    %v259 = vmul.f32 %v245, %v245
    %v260 = vadd.f32 %v256, %v257
    %v261 = vadd.f32 %v260, %v258
    %v262 = vadd.f32 %v261, %v259
    %v263 = vrot.slane %v262, 4
    %v264 = vadd.f32 %v262, %v263
    %v265 = vrot.slane %v264, 2
    %v266 = vadd.f32 %v264, %v265
    %v267 = vrot.slane %v266, 1
    %v268 = vadd.f32 %v266, %v267
    %269 = vst [vmem:[%s4 + $0x1] sm:$0x1] %v268
    %v270 = vpack.c.bf16 %v242, %v242
    %v271 = vpack.c.bf16 %v243, %v243
    %v272 = vpack.c.bf16 %v244, %v244
    %v273 = vpack.c.bf16 %v245, %v245
    %274 = vst [vmem:[%s3] sm:$0xf] %v270
    %275 = vst [vmem:[%s3 + $0x4] sm:$0xf] %v271
    %276 = vst [vmem:[%s3 + $0x8] sm:$0xf] %v272
    %277 = vst [vmem:[%s3 + $0xc] sm:$0xf] %v273
  $region21: #{_lambda_.20} parent=0 // pred_fallthru
    _
  // Predicated region
  $region22: #{_lambda_.20} parent=0 // pred_check
    _
  $region23: #{_lambda_.20} parent=0 // pred_check_branch
    %279 = sbr.rel (0) target = $region25
  $region24: #{_lambda_.20} parent=0 // pred_region
    _
  $region25: #{_lambda_.20} parent=0 // pred_fallthru
    _
  // Predicated region
  $region26: #{_lambda_.20} parent=0 // pred_check
    _
  $region27: #{_lambda_.20} parent=0 // pred_check_branch
    %281 = sbr.rel (0) target = $region29
  $region28: #{_lambda_.20} parent=0 // pred_region
    _
  $region29: #{_lambda_.20} parent=0 // pred_fallthru
    _
  // Predicated region
  $region30: #{_lambda_.20} parent=0 // pred_check
    _
  $region31: #{_lambda_.20} parent=0 // pred_check_branch
    %283 = sbr.rel (0) target = $region33
  $region32: #{_lambda_.20} parent=0 // pred_region
    _
  $region33: #{_lambda_.20} parent=0 // pred_fallthru
    _
  // Predicated region
  $region34: #{_lambda_.20} parent=0 // pred_check
    _
  $region35: #{_lambda_.20} parent=0 // pred_check_branch
    %285 = sbr.rel (0) target = $region37
  $region36: #{_lambda_.20} parent=0 // pred_region
    _
  $region37: #{_lambda_.20} parent=0 // pred_fallthru
    _

// kernel: _lambda_.23
$region0: #{_lambda_.23}
  #allocation0 [shape = 'u32[]', space=smem, size = 0x4, offset = 0x4, fixed_abs, tag = 'smem constant byte address 0x4 - core index']
  #allocation1 [shape = 'u32[72,128]{1,0:T(1,128)}', space=vmem, size = 0x9000, scoped, tag = 'internal scratch']
  %s0 = inlined_call_operand.vmem [shape: bf16[8,128], index: 0, kind: input, shape index: {}]
  %s1 = inlined_call_operand.vmem [shape: f32[1,128], index: 1, kind: input, shape index: {}]
  %s2 = inlined_call_operand.vmem [shape: f32[1,128], index: 2, kind: input, shape index: {}]
  %s3 = inlined_call_operand.vmem [shape: bf16[8,128], index: 3, kind: output, shape index: {}]
  %s4 = sld [smem:[#allocation0]]
  $region22: #{_lambda_.23} parent=0
    _
  %s6 = ssub.s32 1, %s4
  %s7 = scalar_select 0, %s6, %s4
  // Predicated region
  $region2: #{_lambda_.23} parent=0 // pred_check
    _
  $region3: #{_lambda_.23} parent=0 // pred_check_branch
    %9 = sbr.rel (0) target = $region5
  $region4: #{_lambda_.23} parent=0 // pred_region
    _
  $region5: #{_lambda_.23} parent=0 // pred_fallthru
    _
  // Predicated region
  $region6: #{_lambda_.23} parent=0 // pred_check
    _
  $region7: #{_lambda_.23} parent=0 // pred_check_branch
    %11 = sbr.rel (0) target = $region9
  $region8: #{_lambda_.23} parent=0 // pred_region
    _
  $region9: #{_lambda_.23} parent=0 // pred_fallthru
    _
  // Predicated region
  $region10: #{_lambda_.23} parent=0 // pred_check
    _
  $region11: #{_lambda_.23} parent=0 // pred_check_branch
    %13 = sbr.rel (0) target = $region13
  $region12: #{_lambda_.23} parent=0 // pred_region
    _
  $region13: #{_lambda_.23} parent=0 // pred_fallthru
    _
  %v14 = vld [vmem:[%s0] sm:$0xf]
  %v15 = vunpack.c.l.bf16 %v14
  %v16 = vld [vmem:[%s1] sm:$0x1]
  %v18 = vperm.slane %v16, 0
  %v20 = vmul.f32 %v15, %v18
  %v21 = vld [vmem:[%s2] sm:$0x1]
  %v23 = vperm.slane %v21, 0
  %v25 = vadd.f32 %v20, %v23
  %v26 = vpack.c.bf16 %v25, %v25
  %27 = vst [vmem:[%s3] sm:$0xf] %v26
  // Predicated region
  $region14: #{_lambda_.23} parent=0 // pred_check
    _
  $region15: #{_lambda_.23} parent=0 // pred_check_branch
    %29 = sbr.rel (0) target = $region17
  $region16: #{_lambda_.23} parent=0 // pred_region
    _
  $region17: #{_lambda_.23} parent=0 // pred_fallthru
    _
  // Predicated region
  $region18: #{_lambda_.23} parent=0 // pred_check
    _
  $region19: #{_lambda_.23} parent=0 // pred_check_branch
    %31 = sbr.rel (0) target = $region21
  $region20: #{_lambda_.23} parent=0 // pred_region
    _
  $region21: #{_lambda_.23} parent=0 // pred_fallthru
    _

// kernel: _lambda_.22
$region0: #{_lambda_.22}
  #allocation0 [shape = 'u32[]', space=smem, size = 0x4, offset = 0x4, fixed_abs, tag = 'smem constant byte address 0x4 - core index']
  #allocation1 [shape = 'u32[72,128]{1,0:T(1,128)}', space=vmem, size = 0x9000, scoped, tag = 'internal scratch']
  #allocation2 [shape = 'f32[8,128]{1,0:T(8,128)}', space=vmem, size = 0x1000, scoped, tag = 'scratch operand']
  %s0 = inlined_call_operand.vmem [shape: bf16[1,8,512], index: 0, kind: input, shape index: {}]
  %s1 = inlined_call_operand.vmem [shape: bf16[1,512,128], index: 1, kind: input, shape index: {}]
  %s2 = inlined_call_operand.vmem [shape: f32[1,128], index: 2, kind: input, shape index: {}]
  %s3 = inlined_call_operand.vmem [shape: bf16[1,8,128], index: 3, kind: output, shape index: {0}]
  %s4 = inlined_call_operand.vmem [shape: f32[1,1,2,128], index: 4, kind: output, shape index: {1}]
  %5 = xla_tuple %s3, %s4
  %s6 = sld [smem:[#allocation0]]
  $region38: #{_lambda_.22} parent=0
    _
  %s8 = ssub.s32 1, %s6
  %s9 = scalar_select 0, %s8, %s6
  // Predicated region
  $region2: #{_lambda_.22} parent=0 // pred_check
    _
  $region3: #{_lambda_.22} parent=0 // pred_check_branch
    %11 = sbr.rel (0) target = $region5
  $region4: #{_lambda_.22} parent=0 // pred_region
    _
  $region5: #{_lambda_.22} parent=0 // pred_fallthru
    _
  // Predicated region
  $region6: #{_lambda_.22} parent=0 // pred_check
    _
  $region7: #{_lambda_.22} parent=0 // pred_check_branch
    %13 = sbr.rel (0) target = $region9
  $region8: #{_lambda_.22} parent=0 // pred_region
    _
  $region9: #{_lambda_.22} parent=0 // pred_fallthru
    _
  // Predicated region
  $region10: #{_lambda_.22} parent=0 // pred_check
    _
  $region11: #{_lambda_.22} parent=0 // pred_check_branch
    %15 = sbr.rel (0) target = $region13
  $region12: #{_lambda_.22} parent=0 // pred_region
    _
  $region13: #{_lambda_.22} parent=0 // pred_fallthru
    _
  %p16 = scmp.eq.s32.totalorder 0, 0
  // Predicated region
  $region14: #{_lambda_.22} parent=0 // pred_check
    %p17 = pneg %p16
  $region15: #{_lambda_.22} parent=0 // pred_check_branch
    %19 = sbr.rel (%p17) target = $region17
  $region16: #{_lambda_.22} parent=0 // pred_region
    %20 = vst [vmem:[#allocation2] sm:$0xff] 0.0
  $region17: #{_lambda_.22} parent=0 // pred_fallthru
    _
  %s21 = smul.u32 0, 512
  %s22 = sshra.s32 %s21, 3
  %s23 = sand.u32 %s21, 7
  %s24 = smul.addr %s22, 4
  %s25 = scalar_lea.vmem %s1, %s24
  %v26 = vld [vmem:[%s25] sm:$0xf]
  %v27 = vld [vmem:[%s25 + $0x4] sm:$0xf]
  %v28 = vld [vmem:[%s25 + $0x8] sm:$0xf]
  %v29 = vld [vmem:[%s25 + $0xc] sm:$0xf]
  %v30 = vld [vmem:[%s25 + $0x10] sm:$0xf]
  %v31 = vld [vmem:[%s25 + $0x14] sm:$0xf]
  %v32 = vld [vmem:[%s25 + $0x18] sm:$0xf]
  %v33 = vld [vmem:[%s25 + $0x1c] sm:$0xf]
  %v34 = vld [vmem:[%s25 + $0x20] sm:$0xf]
  %v35 = vld [vmem:[%s25 + $0x24] sm:$0xf]
  %v36 = vld [vmem:[%s25 + $0x28] sm:$0xf]
  %v37 = vld [vmem:[%s25 + $0x2c] sm:$0xf]
  %v38 = vld [vmem:[%s25 + $0x30] sm:$0xf]
  %v39 = vld [vmem:[%s25 + $0x34] sm:$0xf]
  %v40 = vld [vmem:[%s25 + $0x38] sm:$0xf]
  %v41 = vld [vmem:[%s25 + $0x3c] sm:$0xf]
  %v42 = vld [vmem:[%s25 + $0x40] sm:$0xf]
  %v43 = vld [vmem:[%s25 + $0x44] sm:$0xf]
  %v44 = vld [vmem:[%s25 + $0x48] sm:$0xf]
  %v45 = vld [vmem:[%s25 + $0x4c] sm:$0xf]
  %v46 = vld [vmem:[%s25 + $0x50] sm:$0xf]
  %v47 = vld [vmem:[%s25 + $0x54] sm:$0xf]
  %v48 = vld [vmem:[%s25 + $0x58] sm:$0xf]
  %v49 = vld [vmem:[%s25 + $0x5c] sm:$0xf]
  %v50 = vld [vmem:[%s25 + $0x60] sm:$0xf]
  %v51 = vld [vmem:[%s25 + $0x64] sm:$0xf]
  %v52 = vld [vmem:[%s25 + $0x68] sm:$0xf]
  %v53 = vld [vmem:[%s25 + $0x6c] sm:$0xf]
  %v54 = vld [vmem:[%s25 + $0x70] sm:$0xf]
  %v55 = vld [vmem:[%s25 + $0x74] sm:$0xf]
  %v56 = vld [vmem:[%s25 + $0x78] sm:$0xf]
  %v57 = vld [vmem:[%s25 + $0x7c] sm:$0xf]
  %v58 = vld [vmem:[%s25 + $0x80] sm:$0xf]
  %v59 = vld [vmem:[%s25 + $0x84] sm:$0xf]
  %v60 = vld [vmem:[%s25 + $0x88] sm:$0xf]
  %v61 = vld [vmem:[%s25 + $0x8c] sm:$0xf]
  %v62 = vld [vmem:[%s25 + $0x90] sm:$0xf]
  %v63 = vld [vmem:[%s25 + $0x94] sm:$0xf]
  %v64 = vld [vmem:[%s25 + $0x98] sm:$0xf]
  %v65 = vld [vmem:[%s25 + $0x9c] sm:$0xf]
  %v66 = vld [vmem:[%s25 + $0xa0] sm:$0xf]
  %v67 = vld [vmem:[%s25 + $0xa4] sm:$0xf]
  %v68 = vld [vmem:[%s25 + $0xa8] sm:$0xf]
  %v69 = vld [vmem:[%s25 + $0xac] sm:$0xf]
  %v70 = vld [vmem:[%s25 + $0xb0] sm:$0xf]
  %v71 = vld [vmem:[%s25 + $0xb4] sm:$0xf]
  %v72 = vld [vmem:[%s25 + $0xb8] sm:$0xf]
  %v73 = vld [vmem:[%s25 + $0xbc] sm:$0xf]
  %v74 = vld [vmem:[%s25 + $0xc0] sm:$0xf]
  %v75 = vld [vmem:[%s25 + $0xc4] sm:$0xf]
  %v76 = vld [vmem:[%s25 + $0xc8] sm:$0xf]
  %v77 = vld [vmem:[%s25 + $0xcc] sm:$0xf]
  %v78 = vld [vmem:[%s25 + $0xd0] sm:$0xf]
  %v79 = vld [vmem:[%s25 + $0xd4] sm:$0xf]
  %v80 = vld [vmem:[%s25 + $0xd8] sm:$0xf]
  %v81 = vld [vmem:[%s25 + $0xdc] sm:$0xf]
  %v82 = vld [vmem:[%s25 + $0xe0] sm:$0xf]
  %v83 = vld [vmem:[%s25 + $0xe4] sm:$0xf]
  %v84 = vld [vmem:[%s25 + $0xe8] sm:$0xf]
  %v85 = vld [vmem:[%s25 + $0xec] sm:$0xf]
  %v86 = vld [vmem:[%s25 + $0xf0] sm:$0xf]
  %v87 = vld [vmem:[%s25 + $0xf4] sm:$0xf]
  %v88 = vld [vmem:[%s25 + $0xf8] sm:$0xf]
  %v89 = vld [vmem:[%s25 + $0xfc] sm:$0xf]
  %v90 = vld [vmem:[#allocation2] sm:$0xff]
  %v91 = vld [vmem:[%s0] sm:$0xff]
  %v92 = vld [vmem:[%s0 + $0x8] sm:$0xff]
  %v95 = vunpack.c.l.b16 %v91
  %v96 = vunpack.c.h.b16 %v91
  %v97 = vunpack.c.l.b16 %v92
  %v98 = vunpack.c.h.b16 %v92
  %v99 = vpack.c.b16 %v95, %v95
  %v100 = vpack.c.b16 %v96, %v96
  %v101 = vpack.c.b16 %v97, %v97
  %v102 = vpack.c.b16 %v98, %v98
  %v171 = vunpack.c.l.b16 %v26
  %v172 = vunpack.c.l.b16 %v27
  %v173 = vunpack.c.l.b16 %v28
  %v174 = vunpack.c.l.b16 %v29
  %v175 = vunpack.c.l.b16 %v30
  %v176 = vunpack.c.l.b16 %v31
  %v177 = vunpack.c.l.b16 %v32
  %v178 = vunpack.c.l.b16 %v33
  %v179 = vunpack.c.l.b16 %v34
  %v180 = vunpack.c.l.b16 %v35
  %v181 = vunpack.c.l.b16 %v36
  %v182 = vunpack.c.l.b16 %v37
  %v183 = vunpack.c.l.b16 %v38
  %v184 = vunpack.c.l.b16 %v39
  %v185 = vunpack.c.l.b16 %v40
  %v186 = vunpack.c.l.b16 %v41
  %v187 = vunpack.c.l.b16 %v42
  %v188 = vunpack.c.l.b16 %v43
  %v189 = vunpack.c.l.b16 %v44
  %v190 = vunpack.c.l.b16 %v45
  %v191 = vunpack.c.l.b16 %v46
  %v192 = vunpack.c.l.b16 %v47
  %v193 = vunpack.c.l.b16 %v48
  %v194 = vunpack.c.l.b16 %v49
  %v195 = vunpack.c.l.b16 %v50
  %v196 = vunpack.c.l.b16 %v51
  %v197 = vunpack.c.l.b16 %v52
  %v198 = vunpack.c.l.b16 %v53
  %v199 = vunpack.c.l.b16 %v54
  %v200 = vunpack.c.l.b16 %v55
  %v201 = vunpack.c.l.b16 %v56
  %v202 = vunpack.c.l.b16 %v57
  %v203 = vunpack.c.l.b16 %v58
  %v204 = vunpack.c.l.b16 %v59
  %v205 = vunpack.c.l.b16 %v60
  %v206 = vunpack.c.l.b16 %v61
  %v207 = vunpack.c.l.b16 %v62
  %v208 = vunpack.c.l.b16 %v63
  %v209 = vunpack.c.l.b16 %v64
  %v210 = vunpack.c.l.b16 %v65
  %v211 = vunpack.c.l.b16 %v66
  %v212 = vunpack.c.l.b16 %v67
  %v213 = vunpack.c.l.b16 %v68
  %v214 = vunpack.c.l.b16 %v69
  %v215 = vunpack.c.l.b16 %v70
  %v216 = vunpack.c.l.b16 %v71
  %v217 = vunpack.c.l.b16 %v72
  %v218 = vunpack.c.l.b16 %v73
  %v219 = vunpack.c.l.b16 %v74
  %v220 = vunpack.c.l.b16 %v75
  %v221 = vunpack.c.l.b16 %v76
  %v222 = vunpack.c.l.b16 %v77
  %v223 = vunpack.c.l.b16 %v78
  %v224 = vunpack.c.l.b16 %v79
  %v225 = vunpack.c.l.b16 %v80
  %v226 = vunpack.c.l.b16 %v81
  %v227 = vunpack.c.l.b16 %v82
  %v228 = vunpack.c.l.b16 %v83
  %v229 = vunpack.c.l.b16 %v84
  %v230 = vunpack.c.l.b16 %v85
  %v231 = vunpack.c.l.b16 %v86
  %v232 = vunpack.c.l.b16 %v87
  %v233 = vunpack.c.l.b16 %v88
  %v234 = vunpack.c.l.b16 %v89
  %v235 = vpack.c.b16 %v172, %v171
  %v236 = vpack.c.b16 %v174, %v173
  %v237 = vpack.c.b16 %v176, %v175
  %v238 = vpack.c.b16 %v178, %v177
  %v239 = vpack.c.b16 %v180, %v179
  %v240 = vpack.c.b16 %v182, %v181
  %v241 = vpack.c.b16 %v184, %v183
  %v242 = vpack.c.b16 %v186, %v185
  %v243 = vpack.c.b16 %v188, %v187
  %v244 = vpack.c.b16 %v190, %v189
  %v245 = vpack.c.b16 %v192, %v191
  %v246 = vpack.c.b16 %v194, %v193
  %v247 = vpack.c.b16 %v196, %v195
  %v248 = vpack.c.b16 %v198, %v197
  %v249 = vpack.c.b16 %v200, %v199
  %v250 = vpack.c.b16 %v202, %v201
  %v251 = vpack.c.b16 %v204, %v203
  %v252 = vpack.c.b16 %v206, %v205
  %v253 = vpack.c.b16 %v208, %v207
  %v254 = vpack.c.b16 %v210, %v209
  %v255 = vpack.c.b16 %v212, %v211
  %v256 = vpack.c.b16 %v214, %v213
  %v257 = vpack.c.b16 %v216, %v215
  %v258 = vpack.c.b16 %v218, %v217
  %v259 = vpack.c.b16 %v220, %v219
  %v260 = vpack.c.b16 %v222, %v221
  %v261 = vpack.c.b16 %v224, %v223
  %v262 = vpack.c.b16 %v226, %v225
  %v263 = vpack.c.b16 %v228, %v227
  %v264 = vpack.c.b16 %v230, %v229
  %v265 = vpack.c.b16 %v232, %v231
  %v266 = vpack.c.b16 %v234, %v233
  %299 = vmatpush.bf16.msra.mxu0 %v242
  %300 = vmatpush.bf16.msra.mxu0 %v241
  %301 = vmatpush.bf16.msra.mxu0 %v240
  %302 = vmatpush.bf16.msra.mxu0 %v239
  %303 = vmatpush.bf16.msra.mxu0 %v238
  %304 = vmatpush.bf16.msra.mxu0 %v237
  %305 = vmatpush.bf16.msra.mxu0 %v236
  %306 = vmatpush.bf16.msra.mxu0 %v235
  %307 = vmatmul.bf16.gmra.mxu0 %v99
  %v308 = vpop.f32.mrf.mxu0
  %v309 = vadd.f32 0.0, %v308
  %v310 = vpop.f32.mrf.mxu0
  %311 = vdwg.mxu0
  %312 = vmatpush.bf16.msra.mxu0 %v250
  %313 = vmatpush.bf16.msra.mxu0 %v249
  %314 = vmatpush.bf16.msra.mxu0 %v248
  %315 = vmatpush.bf16.msra.mxu0 %v247
  %316 = vmatpush.bf16.msra.mxu0 %v246
  %317 = vmatpush.bf16.msra.mxu0 %v245
  %318 = vmatpush.bf16.msra.mxu0 %v244
  %319 = vmatpush.bf16.msra.mxu0 %v243
  %320 = vmatmul.bf16.gmra.mxu0 %v100
  %v321 = vpop.f32.mrf.mxu0
  %v322 = vadd.f32 %v309, %v321
  %v323 = vpop.f32.mrf.mxu0
  %324 = vdwg.mxu0
  %325 = vmatpush.bf16.msra.mxu0 %v258
  %326 = vmatpush.bf16.msra.mxu0 %v257
  %327 = vmatpush.bf16.msra.mxu0 %v256
  %328 = vmatpush.bf16.msra.mxu0 %v255
  %329 = vmatpush.bf16.msra.mxu0 %v254
  %330 = vmatpush.bf16.msra.mxu0 %v253
  %331 = vmatpush.bf16.msra.mxu0 %v252
  %332 = vmatpush.bf16.msra.mxu0 %v251
  %333 = vmatmul.bf16.gmra.mxu0 %v101
  %v334 = vpop.f32.mrf.mxu0
  %v335 = vadd.f32 %v322, %v334
  %v336 = vpop.f32.mrf.mxu0
  %337 = vdwg.mxu0
  %338 = vmatpush.bf16.msra.mxu0 %v266
  %339 = vmatpush.bf16.msra.mxu0 %v265
  %340 = vmatpush.bf16.msra.mxu0 %v264
  %341 = vmatpush.bf16.msra.mxu0 %v263
  %342 = vmatpush.bf16.msra.mxu0 %v262
  %343 = vmatpush.bf16.msra.mxu0 %v261
  %344 = vmatpush.bf16.msra.mxu0 %v260
  %345 = vmatpush.bf16.msra.mxu0 %v259
  %346 = vmatmul.bf16.gmra.mxu0 %v102
  %v347 = vpop.f32.mrf.mxu0
  %v348 = vadd.f32 %v335, %v347
  %v349 = vpop.f32.mrf.mxu0
  %350 = vdwg.mxu0
  %v351 = vadd.f32 %v90, %v348
  %352 = vst [vmem:[#allocation2] sm:$0xff] %v351
  // Predicated region
  $region18: #{_lambda_.22} parent=0 // pred_check
    %p353 = pneg %p16
  $region19: #{_lambda_.22} parent=0 // pred_check_branch
    %355 = sbr.rel (%p353) target = $region21
  $region20: #{_lambda_.22} parent=0 // pred_region
    %v356 = vld [vmem:[#allocation2] sm:$0xff]
    %v357 = vld [vmem:[%s2] sm:$0x1]
    %v359 = vperm.slane %v357, 0
    %v361 = vadd.f32 %v356, %v359
    %v362 = vrot.slane %v361, 4
    %v363 = vadd.f32 %v361, %v362
    %v364 = vrot.slane %v363, 2
    %v365 = vadd.f32 %v363, %v364
    %v366 = vrot.slane %v365, 1
    %v367 = vadd.f32 %v365, %v366
    %368 = vst [vmem:[%s4] sm:$0x1] %v367
    %v369 = vmul.f32 %v361, %v361
    %v370 = vrot.slane %v369, 4
    %v371 = vadd.f32 %v369, %v370
    %v372 = vrot.slane %v371, 2
    %v373 = vadd.f32 %v371, %v372
    %v374 = vrot.slane %v373, 1
    %v375 = vadd.f32 %v373, %v374
    %376 = vst [vmem:[%s4 + $0x1] sm:$0x1] %v375
    %v377 = vpack.c.bf16 %v361, %v361
    %378 = vst [vmem:[%s3] sm:$0xf] %v377
  $region21: #{_lambda_.22} parent=0 // pred_fallthru
    _
  // Predicated region
  $region22: #{_lambda_.22} parent=0 // pred_check
    _
  $region23: #{_lambda_.22} parent=0 // pred_check_branch
    %380 = sbr.rel (0) target = $region25
  $region24: #{_lambda_.22} parent=0 // pred_region
    _
  $region25: #{_lambda_.22} parent=0 // pred_fallthru
    _
  // Predicated region
  $region26: #{_lambda_.22} parent=0 // pred_check
    _
  $region27: #{_lambda_.22} parent=0 // pred_check_branch
    %382 = sbr.rel (0) target = $region29
  $region28: #{_lambda_.22} parent=0 // pred_region
    _
  $region29: #{_lambda_.22} parent=0 // pred_fallthru
    _
  // Predicated region
  $region30: #{_lambda_.22} parent=0 // pred_check
    _
  $region31: #{_lambda_.22} parent=0 // pred_check_branch
    %384 = sbr.rel (0) target = $region33
  $region32: #{_lambda_.22} parent=0 // pred_region
    _
  $region33: #{_lambda_.22} parent=0 // pred_fallthru
    _
  // Predicated region
  $region34: #{_lambda_.22} parent=0 // pred_check
    _
  $region35: #{_lambda_.22} parent=0 // pred_check_branch
    %386 = sbr.rel (0) target = $region37
  $region36: #{_lambda_.22} parent=0 // pred_region
    _
  $region37: #{_lambda_.22} parent=0 // pred_fallthru
    _

// kernel: _lambda_.25
$region0: #{_lambda_.25}
  #allocation0 [shape = 'u32[]', space=smem, size = 0x4, offset = 0x4, fixed_abs, tag = 'smem constant byte address 0x4 - core index']
  #allocation1 [shape = 'u32[72,128]{1,0:T(1,128)}', space=vmem, size = 0x9000, scoped, tag = 'internal scratch']
  #allocation2 [shape = 'f32[2,128]{1,0:T(2,128)}', space=vmem, size = 0x400, scoped, tag = 'scratch operand']
  %s0 = inlined_call_operand.vmem [shape: bf16[4,2,256], index: 0, kind: input, shape index: {}]
  %s1 = inlined_call_operand.vmem [shape: bf16[4,256,128], index: 1, kind: input, shape index: {}]
  %s2 = inlined_call_operand.vmem [shape: f32[1,128], index: 2, kind: input, shape index: {}]
  %s3 = inlined_call_operand.vmem [shape: bf16[4,2,128], index: 3, kind: output, shape index: {0}]
  %s4 = inlined_call_operand.vmem [shape: f32[4,1,2,128], index: 4, kind: output, shape index: {1}]
  %5 = xla_tuple %s3, %s4
  %s6 = sld [smem:[#allocation0]]
  $region61: #{_lambda_.25} parent=0
    _
  %s8 = ssub.s32 1, %s6
  %s9 = scalar_select 0, %s8, %s6
  loop: start=0, step=1, limit=6
  $region2: #{_lambda_.25} parent=0 // loop_pre_header
    _
  $region3: #{_lambda_.25} parent=0 // loop_header
    %s11 = sphi 0, %s15
    %p12 = scmp.ge.s32.totalorder %s11, 6
    %s18 = sphi 0, %s37
    %s19 = sphi 0, %s33
    %s20 = sphi 0, %s29
    %s21 = sphi 0, %s18
    %s22 = sphi 0, %s19
    %s23 = sphi 0, %s20
    %s24 = sphi 0, %s21
    %s25 = sphi 0, %s22
    %s26 = sphi 0, %s23
    %s44 = sphi 0, %s46
    %s47 = sphi 0, %s44
    %s48 = sphi 0, %s47
    %s64 = sphi 0, %s48
    %s70 = sphi 0, %s72
    %s73 = sphi 0, %s70
    %s74 = sphi 0, %s73
    %s90 = sphi 0, %s74
    %s94 = sphi 0, %s94
    %s96 = sphi 0, %s94
    %s97 = sphi 0, %s96
    %s111 = sphi 0, %s97
    %s119 = sphi 0, %s121
    %s122 = sphi 0, %s119
    %s123 = sphi 0, %s122
    %s139 = sphi 0, %s123
    %s147 = sphi 0, %s149
    %s150 = sphi 0, %s147
    %s151 = sphi 0, %s150
    %s167 = sphi 0, %s151
  $region4: #{_lambda_.25} parent=0 // loop_header_branch
    %14 = sbr.rel (%p12) target = $region8
  $region5: #{_lambda_.25} parent=0 // loop_body
    %s16 = ssub.s32 %s11, 1
    %s17 = ssub.s32 %s11, 2
    %s27 = sadd.s32 1, %s20
    %p28 = scmp.ge.s32.totalorder %s27, 1
    %s29 = scalar_select %p28, 0, %s27
    %s30 = sadd.s32 1, %s19
    %s31 = scalar_select %p28, %s30, %s19
    %p32 = scmp.ge.s32.totalorder %s31, 1
    %s33 = scalar_select %p32, 0, %s31
    %s34 = sadd.s32 1, %s18
    %s35 = scalar_select %p32, %s34, %s18
    %p36 = scmp.ge.s32.totalorder %s35, 4
    %s37 = scalar_select %p36, 0, %s35
    %s38 = ssub.s32 %s18, %s37
    %s39 = ssub.s32 %s19, %s33
    %s40 = sor.u32 %s38, %s39
    %s41 = ssub.s32 %s20, %s29
    %s42 = sor.u32 %s40, %s41
    %p43 = scmp.eq.s32.totalorder %s42, 0
    %s45 = sadd.s32 %s44, 1
    %s46 = scalar_select %p43, %s44, %s45
    %p49 = pneg %p43
    %p50 = scmp.eq.s32.totalorder %s11, 3
    %p51 = por %p49, %p50
    %p52 = scmp.ne.s32.totalorder %s44, %s47
    %p53 = scmp.eq.s32.totalorder %s11, 0
    %p54 = por %p52, %p53
    %p55 = scmp.ne.s32.totalorder %s44, %s47
    %p56 = scmp.eq.s32.totalorder %s16, 3
    %p57 = por %p55, %p56
    %p58 = scmp.ne.s32.totalorder %s47, %s48
    %p59 = scmp.eq.s32.totalorder %s16, 0
    %p60 = por %p58, %p59
    %p61 = scmp.ne.s32.totalorder %s47, %s48
    %p62 = scmp.eq.s32.totalorder %s17, 3
    %p63 = por %p61, %p62
    %p65 = scmp.ne.s32.totalorder %s48, %s64
    %p66 = scmp.eq.s32.totalorder %s17, 0
    %p67 = por %p65, %p66
    %s68 = ssub.s32 %s18, %s37
    %p69 = scmp.eq.s32.totalorder %s68, 0
    %s71 = sadd.s32 %s70, 1
    %s72 = scalar_select %p69, %s70, %s71
    %p75 = pneg %p69
    %p76 = scmp.eq.s32.totalorder %s11, 3
    %p77 = por %p75, %p76
    %p78 = scmp.ne.s32.totalorder %s70, %s73
    %p79 = scmp.eq.s32.totalorder %s11, 0
    %p80 = por %p78, %p79
    %p81 = scmp.ne.s32.totalorder %s70, %s73
    %p82 = scmp.eq.s32.totalorder %s16, 3
    %p83 = por %p81, %p82
    %p84 = scmp.ne.s32.totalorder %s73, %s74
    %p85 = scmp.eq.s32.totalorder %s16, 0
    %p86 = por %p84, %p85
    %p87 = scmp.ne.s32.totalorder %s73, %s74
    %p88 = scmp.eq.s32.totalorder %s17, 3
    %p89 = por %p87, %p88
    %p91 = scmp.ne.s32.totalorder %s74, %s90
    %p92 = scmp.eq.s32.totalorder %s17, 0
    %p93 = por %p91, %p92
    %s95 = sadd.s32 %s94, 1
    %p98 = scmp.eq.s32.totalorder %s11, 3
    %p99 = scmp.ne.s32.totalorder %s94, %s96
    %p100 = scmp.eq.s32.totalorder %s11, 0
    %p101 = por %p99, %p100
    %p102 = scmp.ne.s32.totalorder %s94, %s96
    %p103 = scmp.eq.s32.totalorder %s16, 3
    %p104 = por %p102, %p103
    %p105 = scmp.ne.s32.totalorder %s96, %s97
    %p106 = scmp.eq.s32.totalorder %s16, 0
    %p107 = por %p105, %p106
    %p108 = scmp.ne.s32.totalorder %s96, %s97
    %p109 = scmp.eq.s32.totalorder %s17, 3
    %p110 = por %p108, %p109
    %p112 = scmp.ne.s32.totalorder %s97, %s111
    %p113 = scmp.eq.s32.totalorder %s17, 0
    %p114 = por %p112, %p113
    %s115 = ssub.s32 %s18, %s37
    %s116 = ssub.s32 %s19, %s33
    %s117 = sor.u32 %s115, %s116
    %p118 = scmp.eq.s32.totalorder %s117, 0
    %s120 = sadd.s32 %s119, 1
    %s121 = scalar_select %p118, %s119, %s120
    %p124 = pneg %p118
    %p125 = scmp.eq.s32.totalorder %s11, 3
    %p126 = por %p124, %p125
    %p127 = scmp.ne.s32.totalorder %s119, %s122
    %p128 = scmp.eq.s32.totalorder %s11, 0
    %p129 = por %p127, %p128
    %p130 = scmp.ne.s32.totalorder %s119, %s122
    %p131 = scmp.eq.s32.totalorder %s16, 3
    %p132 = por %p130, %p131
    %p133 = scmp.ne.s32.totalorder %s122, %s123
    %p134 = scmp.eq.s32.totalorder %s16, 0
    %p135 = por %p133, %p134
    %p136 = scmp.ne.s32.totalorder %s122, %s123
    %p137 = scmp.eq.s32.totalorder %s17, 3
    %p138 = por %p136, %p137
    %p140 = scmp.ne.s32.totalorder %s123, %s139
    %p141 = scmp.eq.s32.totalorder %s17, 0
    %p142 = por %p140, %p141
    %s143 = ssub.s32 %s18, %s37
    %s144 = ssub.s32 %s19, %s33
    %s145 = sor.u32 %s143, %s144
    %p146 = scmp.eq.s32.totalorder %s145, 0
    %s148 = sadd.s32 %s147, 1
    %s149 = scalar_select %p146, %s147, %s148
    %p152 = pneg %p146
    %p153 = scmp.eq.s32.totalorder %s11, 3
    %p154 = por %p152, %p153
    %p155 = scmp.ne.s32.totalorder %s147, %s150
    %p156 = scmp.eq.s32.totalorder %s11, 0
    %p157 = por %p155, %p156
    %p158 = scmp.ne.s32.totalorder %s147, %s150
    %p159 = scmp.eq.s32.totalorder %s16, 3
    %p160 = por %p158, %p159
    %p161 = scmp.ne.s32.totalorder %s150, %s151
    %p162 = scmp.eq.s32.totalorder %s16, 0
    %p163 = por %p161, %p162
    %p164 = scmp.ne.s32.totalorder %s150, %s151
    %p165 = scmp.eq.s32.totalorder %s17, 3
    %p166 = por %p164, %p165
    %p168 = scmp.ne.s32.totalorder %s151, %s167
    %p169 = scmp.eq.s32.totalorder %s17, 0
    %p170 = por %p168, %p169
    %p171 = scmp.le.s32.totalorder 1, %s11
    %p172 = scmp.lt.s32.totalorder %s11, 5
    %p173 = pnand %p171, %p172
    %p174 = pneg %p173
    // Predicated region
    $region9: #{_lambda_.25} parent=5 // pred_check
      _
    $region10: #{_lambda_.25} parent=5 // pred_check_branch
      %176 = sbr.rel (%p173) target = $region12
    $region11: #{_lambda_.25} parent=5 // pred_region
      %s177 = ssub.s32 %s11, 1
      // Predicated region
      $region13: #{_lambda_.25} parent=11 // pred_check
        %p178 = pneg %p107
      $region14: #{_lambda_.25} parent=11 // pred_check_branch
        %180 = sbr.rel (%p178) target = $region16
      $region15: #{_lambda_.25} parent=11 // pred_region
        _
      $region16: #{_lambda_.25} parent=11 // pred_fallthru
        _
    $region12: #{_lambda_.25} parent=5 // pred_fallthru
      _
    %p181 = scmp.lt.s32.totalorder %s11, 4
    // Predicated region
    $region17: #{_lambda_.25} parent=5 // pred_check
      %p182 = pneg %p181
    $region18: #{_lambda_.25} parent=5 // pred_check_branch
      %184 = sbr.rel (%p182) target = $region20
    $region19: #{_lambda_.25} parent=5 // pred_region
      // Predicated region
      $region21: #{_lambda_.25} parent=19 // pred_check
        %p185 = pneg %p54
      $region22: #{_lambda_.25} parent=19 // pred_check_branch
        %187 = sbr.rel (%p185) target = $region24
      $region23: #{_lambda_.25} parent=19 // pred_region
        %s188 = smul.u32 2, %s20
        %p189 = scmp.lt.s32.totalorder %s18, 3
        %s190 = scalar_select %p189, %s18, 3
        %p191 = scmp.lt.s32.totalorder %s19, 0
        %s192 = scalar_select %p191, %s19, 0
        %p193 = scmp.lt.s32.totalorder %s188, 1
        %s194 = scalar_select %p193, %s188, 1
        %s195 = smul.addr %s192, 2
        %s196 = sadd.s32 %s194, %s195
        %s197 = smul.addr %s190, 2
        %s198 = sadd.s32 %s196, %s197
        %s199 = scalar_lea.vmem %s0, %s198
        %s200 = smul.u32 2, %s20
      $region24: #{_lambda_.25} parent=19 // pred_fallthru
        _
      // Predicated region
      $region25: #{_lambda_.25} parent=19 // pred_check
        %p201 = pneg %p80
      $region26: #{_lambda_.25} parent=19 // pred_check_branch
        %203 = sbr.rel (%p201) target = $region28
      $region27: #{_lambda_.25} parent=19 // pred_region
        %p204 = scmp.lt.s32.totalorder %s18, 3
        %s205 = scalar_select %p204, %s18, 3
        %s206 = smul.addr %s205, 32
        %s207 = smul.addr %s206, 4
        %s208 = scalar_lea.vmem %s1, %s207
      $region28: #{_lambda_.25} parent=19 // pred_fallthru
        _
    $region20: #{_lambda_.25} parent=5 // pred_fallthru
      _
    %p209 = scmp.le.s32.totalorder 1, %s11
    %p210 = scmp.lt.s32.totalorder %s11, 5
    %p211 = pnand %p209, %p210
    %p212 = pneg %p211
    // Predicated region
    $region29: #{_lambda_.25} parent=5 // pred_check
      _
    $region30: #{_lambda_.25} parent=5 // pred_check_branch
      %214 = sbr.rel (%p211) target = $region32
    $region31: #{_lambda_.25} parent=5 // pred_region
      %s215 = ssub.s32 %s11, 1
      %s216 = smul.u32 2, %s23
      %p217 = scmp.lt.s32.totalorder %s21, 3
      %s218 = scalar_select %p217, %s21, 3
      %p219 = scmp.lt.s32.totalorder %s22, 0
      %s220 = scalar_select %p219, %s22, 0
      %p221 = scmp.lt.s32.totalorder %s216, 1
      %s222 = scalar_select %p221, %s216, 1
      %s223 = smul.addr %s220, 2
      %s224 = sadd.s32 %s222, %s223
      %s225 = smul.addr %s218, 2
      %s226 = sadd.s32 %s224, %s225
      %s227 = scalar_lea.vmem %s0, %s226
      %p228 = pneg %p60
      %p229 = pneg %p57
      %p230 = scmp.lt.s32.totalorder %s21, 3
      %s231 = scalar_select %p230, %s21, 3
      %s232 = smul.addr %s231, 32
      %s233 = smul.addr %s232, 4
      %s234 = scalar_lea.vmem %s1, %s233
      %p235 = pneg %p86
      %p236 = pneg %p83
      %p237 = pneg %p107
      %p238 = pneg %p104
      %p239 = pneg %p135
      %p240 = pneg %p132
      %p241 = scmp.lt.s32.totalorder %s21, 3
      %s242 = scalar_select %p241, %s21, 3
      %p243 = scmp.lt.s32.totalorder %s22, 0
      %s244 = scalar_select %p243, %s22, 0
      %s245 = sadd.s32 %s244, %s242
      %s246 = scalar_lea.vmem %s3, %s245
      %p247 = pneg %p163
      %p248 = pneg %p160
      %p249 = scmp.lt.s32.totalorder %s21, 3
      %s250 = scalar_select %p249, %s21, 3
      %p251 = scmp.lt.s32.totalorder %s22, 0
      %s252 = scalar_select %p251, %s22, 0
      %s253 = sadd.s32 %s252, %s250
      %s254 = smul.addr %s253, 2
      %s255 = scalar_lea.vmem %s4, %s254
      %s256 = smul.u32 2, %s23
      %p257 = scmp.lt.s32.totalorder %s21, 3
      %s258 = scalar_select %p257, %s21, 3
      %p259 = scmp.lt.s32.totalorder %s22, 0
      %s260 = scalar_select %p259, %s22, 0
      %p261 = scmp.lt.s32.totalorder %s256, 1
      %s262 = scalar_select %p261, %s256, 1
      %s263 = smul.addr %s260, 2
      %s264 = sadd.s32 %s262, %s263
      %s265 = smul.addr %s258, 2
      %s266 = sadd.s32 %s264, %s265
      %s267 = scalar_lea.vmem %s0, %s266
      %s268 = smul.u32 2, %s23
      %p269 = scmp.lt.s32.totalorder %s21, 3
      %s270 = scalar_select %p269, %s21, 3
      %s271 = smul.addr %s270, 32
      %s272 = smul.addr %s271, 4
      %s273 = scalar_lea.vmem %s1, %s272
      %p274 = scmp.lt.s32.totalorder %s21, 3
      %s275 = scalar_select %p274, %s21, 3
      %p276 = scmp.lt.s32.totalorder %s22, 0
      %s277 = scalar_select %p276, %s22, 0
      %s278 = sadd.s32 %s277, %s275
      %s279 = scalar_lea.vmem %s3, %s278
      %p280 = scmp.lt.s32.totalorder %s21, 3
      %s281 = scalar_select %p280, %s21, 3
      %p282 = scmp.lt.s32.totalorder %s22, 0
      %s283 = scalar_select %p282, %s22, 0
      %s284 = sadd.s32 %s283, %s281
      %s285 = smul.addr %s284, 2
      %s286 = scalar_lea.vmem %s4, %s285
      %p287 = scmp.eq.s32.totalorder %s23, 0
      // Predicated region
      $region33: #{_lambda_.25} parent=31 // pred_check
        %p288 = pneg %p287
      $region34: #{_lambda_.25} parent=31 // pred_check_branch
        %290 = sbr.rel (%p288) target = $region36
      $region35: #{_lambda_.25} parent=31 // pred_region
        %291 = vst [vmem:[#allocation2] sm:$0x3] 0.0
      $region36: #{_lambda_.25} parent=31 // pred_fallthru
        _
      %s292 = smul.u32 %s23, 256
      %s293 = sshra.s32 %s292, 3
      %s294 = sand.u32 %s292, 7
      %s295 = smul.addr %s293, 4
      %s296 = scalar_lea.vmem %s273, %s295
      %v297 = vld [vmem:[%s296] sm:$0xf]
      %v298 = vld [vmem:[%s296 + $0x4] sm:$0xf]
      %v299 = vld [vmem:[%s296 + $0x8] sm:$0xf]
      %v300 = vld [vmem:[%s296 + $0xc] sm:$0xf]
      %v301 = vld [vmem:[%s296 + $0x10] sm:$0xf]
      %v302 = vld [vmem:[%s296 + $0x14] sm:$0xf]
      %v303 = vld [vmem:[%s296 + $0x18] sm:$0xf]
      %v304 = vld [vmem:[%s296 + $0x1c] sm:$0xf]
      %v305 = vld [vmem:[%s296 + $0x20] sm:$0xf]
      %v306 = vld [vmem:[%s296 + $0x24] sm:$0xf]
      %v307 = vld [vmem:[%s296 + $0x28] sm:$0xf]
      %v308 = vld [vmem:[%s296 + $0x2c] sm:$0xf]
      %v309 = vld [vmem:[%s296 + $0x30] sm:$0xf]
      %v310 = vld [vmem:[%s296 + $0x34] sm:$0xf]
      %v311 = vld [vmem:[%s296 + $0x38] sm:$0xf]
      %v312 = vld [vmem:[%s296 + $0x3c] sm:$0xf]
      %v313 = vld [vmem:[%s296 + $0x40] sm:$0xf]
      %v314 = vld [vmem:[%s296 + $0x44] sm:$0xf]
      %v315 = vld [vmem:[%s296 + $0x48] sm:$0xf]
      %v316 = vld [vmem:[%s296 + $0x4c] sm:$0xf]
      %v317 = vld [vmem:[%s296 + $0x50] sm:$0xf]
      %v318 = vld [vmem:[%s296 + $0x54] sm:$0xf]
      %v319 = vld [vmem:[%s296 + $0x58] sm:$0xf]
      %v320 = vld [vmem:[%s296 + $0x5c] sm:$0xf]
      %v321 = vld [vmem:[%s296 + $0x60] sm:$0xf]
      %v322 = vld [vmem:[%s296 + $0x64] sm:$0xf]
      %v323 = vld [vmem:[%s296 + $0x68] sm:$0xf]
      %v324 = vld [vmem:[%s296 + $0x6c] sm:$0xf]
      %v325 = vld [vmem:[%s296 + $0x70] sm:$0xf]
      %v326 = vld [vmem:[%s296 + $0x74] sm:$0xf]
      %v327 = vld [vmem:[%s296 + $0x78] sm:$0xf]
      %v328 = vld [vmem:[%s296 + $0x7c] sm:$0xf]
      %v329 = vld [vmem:[#allocation2] sm:$0x3]
      %v330 = vld [vmem:[%s267] sm:$0x3]
      %332 = vst [vmem:[#allocation1] ss:$9 sm:$0xff] %v330
      %v333 = vld [vmem:[#allocation1] sm:$0xff]
      %v334 = vld [vmem:[#allocation1 + $0x9] sm:$0xff]
      %v369 = vunpack.c.l.b16 %v297
      %v370 = vunpack.c.l.b16 %v298
      %v371 = vunpack.c.l.b16 %v299
      %v372 = vunpack.c.l.b16 %v300
      %v373 = vunpack.c.l.b16 %v301
      %v374 = vunpack.c.l.b16 %v302
      %v375 = vunpack.c.l.b16 %v303
      %v376 = vunpack.c.l.b16 %v304
      %v377 = vunpack.c.l.b16 %v305
      %v378 = vunpack.c.l.b16 %v306
      %v379 = vunpack.c.l.b16 %v307
      %v380 = vunpack.c.l.b16 %v308
      %v381 = vunpack.c.l.b16 %v309
      %v382 = vunpack.c.l.b16 %v310
      %v383 = vunpack.c.l.b16 %v311
      %v384 = vunpack.c.l.b16 %v312
      %v385 = vunpack.c.l.b16 %v313
      %v386 = vunpack.c.l.b16 %v314
      %v387 = vunpack.c.l.b16 %v315
      %v388 = vunpack.c.l.b16 %v316
      %v389 = vunpack.c.l.b16 %v317
      %v390 = vunpack.c.l.b16 %v318
      %v391 = vunpack.c.l.b16 %v319
      %v392 = vunpack.c.l.b16 %v320
      %v393 = vunpack.c.l.b16 %v321
      %v394 = vunpack.c.l.b16 %v322
      %v395 = vunpack.c.l.b16 %v323
      %v396 = vunpack.c.l.b16 %v324
      %v397 = vunpack.c.l.b16 %v325
      %v398 = vunpack.c.l.b16 %v326
      %v399 = vunpack.c.l.b16 %v327
      %v400 = vunpack.c.l.b16 %v328
      %v401 = vpack.c.b16 %v370, %v369
      %v402 = vpack.c.b16 %v372, %v371
      %v403 = vpack.c.b16 %v374, %v373
      %v404 = vpack.c.b16 %v376, %v375
      %v405 = vpack.c.b16 %v378, %v377
      %v406 = vpack.c.b16 %v380, %v379
      %v407 = vpack.c.b16 %v382, %v381
      %v408 = vpack.c.b16 %v384, %v383
      %v409 = vpack.c.b16 %v386, %v385
      %v410 = vpack.c.b16 %v388, %v387
      %v411 = vpack.c.b16 %v390, %v389
      %v412 = vpack.c.b16 %v392, %v391
      %v413 = vpack.c.b16 %v394, %v393
      %v414 = vpack.c.b16 %v396, %v395
      %v415 = vpack.c.b16 %v398, %v397
      %v416 = vpack.c.b16 %v400, %v399
      %433 = vmatpush.bf16.msra.mxu0 %v408
      %434 = vmatpush.bf16.msra.mxu0 %v407
      %435 = vmatpush.bf16.msra.mxu0 %v406
      %436 = vmatpush.bf16.msra.mxu0 %v405
      %437 = vmatpush.bf16.msra.mxu0 %v404
      %438 = vmatpush.bf16.msra.mxu0 %v403
      %439 = vmatpush.bf16.msra.mxu0 %v402
      %440 = vmatpush.bf16.msra.mxu0 %v401
      %441 = vmatmul.bf16.gmra.mxu0 %v333
      %v442 = vpop.f32.mrf.mxu0
      %v443 = vadd.f32 0.0, %v442
      %v444 = vpop.f32.mrf.mxu0
      %445 = vdwg.mxu0
      %446 = vmatpush.bf16.msra.mxu0 %v416
      %447 = vmatpush.bf16.msra.mxu0 %v415
      %448 = vmatpush.bf16.msra.mxu0 %v414
      %449 = vmatpush.bf16.msra.mxu0 %v413
      %450 = vmatpush.bf16.msra.mxu0 %v412
      %451 = vmatpush.bf16.msra.mxu0 %v411
      %452 = vmatpush.bf16.msra.mxu0 %v410
      %453 = vmatpush.bf16.msra.mxu0 %v409
      %454 = vmatmul.bf16.gmra.mxu0 %v334
      %v455 = vpop.f32.mrf.mxu0
      %v456 = vadd.f32 %v443, %v455
      %v457 = vpop.f32.mrf.mxu0
      %458 = vdwg.mxu0
      %v459 = vadd.f32 %v329, %v456
      %460 = vst [vmem:[#allocation2] sm:$0x3] %v459
      // Predicated region
      $region37: #{_lambda_.25} parent=31 // pred_check
        %p461 = pneg %p287
      $region38: #{_lambda_.25} parent=31 // pred_check_branch
        %463 = sbr.rel (%p461) target = $region40
      $region39: #{_lambda_.25} parent=31 // pred_region
        %v464 = vld [vmem:[#allocation2] sm:$0x3]
        %v465 = vld [vmem:[%s2] sm:$0x1]
        %v467 = vperm.slane %v465, 0
        %v469 = vadd.f32 %v464, %v467
        %vm470 = vcmask 1041408
        %v471 = vsel %vm470, %v469, 0.0
        %v472 = vrot.slane %v471, 4
        %v473 = vadd.f32 %v471, %v472
        %v474 = vrot.slane %v473, 2
        %v475 = vadd.f32 %v473, %v474
        %v476 = vrot.slane %v475, 1
        %v477 = vadd.f32 %v475, %v476
        %478 = vst [vmem:[%s286] sm:$0x1] %v477
        %v479 = vmul.f32 %v469, %v469
        %v480 = vsel %vm470, %v479, 0.0
        %v481 = vrot.slane %v480, 4
        %v482 = vadd.f32 %v480, %v481
        %v483 = vrot.slane %v482, 2
        %v484 = vadd.f32 %v482, %v483
        %v485 = vrot.slane %v484, 1
        %v486 = vadd.f32 %v484, %v485
        %487 = vst [vmem:[%s286 + $0x1] sm:$0x1] %v486
        %v488 = vpack.c.bf16 %v469, %v469
        %489 = vst [vmem:[%s279] sm:$0x1] %v488
      $region40: #{_lambda_.25} parent=31 // pred_fallthru
        _
      %p490 = scmp.lt.s32.totalorder %s21, 3
      %s491 = scalar_select %p490, %s21, 3
      %p492 = scmp.lt.s32.totalorder %s22, 0
      %s493 = scalar_select %p492, %s22, 0
      %s494 = sadd.s32 %s493, %s491
      %s495 = scalar_lea.vmem %s3, %s494
      %p496 = scmp.lt.s32.totalorder %s21, 3
      %s497 = scalar_select %p496, %s21, 3
      %p498 = scmp.lt.s32.totalorder %s22, 0
      %s499 = scalar_select %p498, %s22, 0
      %s500 = sadd.s32 %s499, %s497
      %s501 = smul.addr %s500, 2
      %s502 = scalar_lea.vmem %s4, %s501
      // Predicated region
      $region41: #{_lambda_.25} parent=31 // pred_check
        %p503 = pneg %p132
      $region42: #{_lambda_.25} parent=31 // pred_check_branch
        %505 = sbr.rel (%p503) target = $region44
      $region43: #{_lambda_.25} parent=31 // pred_region
        _
      $region44: #{_lambda_.25} parent=31 // pred_fallthru
        _
      // Predicated region
      $region45: #{_lambda_.25} parent=31 // pred_check
        %p506 = pneg %p160
      $region46: #{_lambda_.25} parent=31 // pred_check_branch
        %508 = sbr.rel (%p506) target = $region48
      $region47: #{_lambda_.25} parent=31 // pred_region
        _
      $region48: #{_lambda_.25} parent=31 // pred_fallthru
        _
    $region32: #{_lambda_.25} parent=5 // pred_fallthru
      _
    %p509 = scmp.le.s32.totalorder 2, %s11
    // Predicated region
    $region49: #{_lambda_.25} parent=5 // pred_check
      %p510 = pneg %p509
    $region50: #{_lambda_.25} parent=5 // pred_check_branch
      %512 = sbr.rel (%p510) target = $region52
    $region51: #{_lambda_.25} parent=5 // pred_region
      %s513 = ssub.s32 %s11, 2
      // Predicated region
      $region53: #{_lambda_.25} parent=51 // pred_check
        %p514 = pneg %p138
      $region54: #{_lambda_.25} parent=51 // pred_check_branch
        %516 = sbr.rel (%p514) target = $region56
      $region55: #{_lambda_.25} parent=51 // pred_region
        %p517 = scmp.lt.s32.totalorder %s24, 3
        %s518 = scalar_select %p517, %s24, 3
        %p519 = scmp.lt.s32.totalorder %s25, 0
        %s520 = scalar_select %p519, %s25, 0
        %s521 = sadd.s32 %s520, %s518
        %s522 = scalar_lea.vmem %s3, %s521
      $region56: #{_lambda_.25} parent=51 // pred_fallthru
        _
      // Predicated region
      $region57: #{_lambda_.25} parent=51 // pred_check
        %p523 = pneg %p166
      $region58: #{_lambda_.25} parent=51 // pred_check_branch
        %525 = sbr.rel (%p523) target = $region60
      $region59: #{_lambda_.25} parent=51 // pred_region
        %p526 = scmp.lt.s32.totalorder %s24, 3
        %s527 = scalar_select %p526, %s24, 3
        %p528 = scmp.lt.s32.totalorder %s25, 0
        %s529 = scalar_select %p528, %s25, 0
        %s530 = sadd.s32 %s529, %s527
        %s531 = smul.addr %s530, 2
        %s532 = scalar_lea.vmem %s4, %s531
      $region60: #{_lambda_.25} parent=51 // pred_fallthru
        _
    $region52: #{_lambda_.25} parent=5 // pred_fallthru
      _
  $region6: #{_lambda_.25} parent=0 // loop_footer
    %s15 = sadd.s32 1, %s11
  $region7: #{_lambda_.25} parent=0 // loop_footer_branch
    %10 = sbr.rel target = $region3
  $region8: #{_lambda_.25} parent=0 // loop_exit
    _

// kernel: _lambda_.24
$region0: #{_lambda_.24}
  #allocation0 [shape = 'u32[]', space=smem, size = 0x4, offset = 0x4, fixed_abs, tag = 'smem constant byte address 0x4 - core index']
  #allocation1 [shape = 'u32[72,128]{1,0:T(1,128)}', space=vmem, size = 0x9000, scoped, tag = 'internal scratch']
  #allocation2 [shape = 'f32[2,128]{1,0:T(2,128)}', space=vmem, size = 0x400, scoped, tag = 'scratch operand']
  %s0 = inlined_call_operand.vmem [shape: bf16[1,2,1024], index: 0, kind: input, shape index: {}]
  %s1 = inlined_call_operand.vmem [shape: bf16[1,1024,128], index: 1, kind: input, shape index: {}]
  %s2 = inlined_call_operand.vmem [shape: f32[1,128], index: 2, kind: input, shape index: {}]
  %s3 = inlined_call_operand.vmem [shape: bf16[1,2,128], index: 3, kind: output, shape index: {0}]
  %s4 = inlined_call_operand.hbm [shape: f32[1,1,2,128], index: 4, kind: output, shape index: {1}]
  %5 = xla_tuple %s3, %s4
  %s6 = sld [smem:[#allocation0]]
  $region38: #{_lambda_.24} parent=0
    _
  %s8 = ssub.s32 1, %s6
  %s9 = scalar_select 0, %s8, %s6
  $region1: #{_lambda_.24} parent=0
    #allocation3 [shape = 'u8[1024]{0}', space=vmem, size = 0x400, scoped, tag = 'output window, operand 1, single buffered']
    #allocation4 [shape = 's32[1]{0}', space=sflag, size = 0x4, scoped, tag = 'scoped memory for _lambda_.24']
    %10 = vsyncpa [#allocation4], 0
    // Predicated region
    $region2: #{_lambda_.24} parent=1 // pred_check
      _
    $region3: #{_lambda_.24} parent=1 // pred_check_branch
      %12 = sbr.rel (0) target = $region5
    $region4: #{_lambda_.24} parent=1 // pred_region
      _
    $region5: #{_lambda_.24} parent=1 // pred_fallthru
      _
    // Predicated region
    $region6: #{_lambda_.24} parent=1 // pred_check
      _
    $region7: #{_lambda_.24} parent=1 // pred_check_branch
      %14 = sbr.rel (0) target = $region9
    $region8: #{_lambda_.24} parent=1 // pred_region
      _
    $region9: #{_lambda_.24} parent=1 // pred_fallthru
      _
    // Predicated region
    $region10: #{_lambda_.24} parent=1 // pred_check
      _
    $region11: #{_lambda_.24} parent=1 // pred_check_branch
      %16 = sbr.rel (0) target = $region13
    $region12: #{_lambda_.24} parent=1 // pred_region
      _
    $region13: #{_lambda_.24} parent=1 // pred_fallthru
      _
    %p17 = scmp.eq.s32.totalorder 0, 0
    // Predicated region
    $region14: #{_lambda_.24} parent=1 // pred_check
      %p18 = pneg %p17
    $region15: #{_lambda_.24} parent=1 // pred_check_branch
      %20 = sbr.rel (%p18) target = $region17
    $region16: #{_lambda_.24} parent=1 // pred_region
      %21 = vst [vmem:[#allocation2] sm:$0x3] 0.0
    $region17: #{_lambda_.24} parent=1 // pred_fallthru
      _
    %s22 = smul.u32 0, 1024
    %s23 = sshra.s32 %s22, 3
    %s24 = sand.u32 %s22, 7
    %s25 = smul.addr %s23, 4
    %s26 = scalar_lea.vmem %s1, %s25
    %v27 = vld [vmem:[%s26] sm:$0xf]
    %v28 = vld [vmem:[%s26 + $0x4] sm:$0xf]
    %v29 = vld [vmem:[%s26 + $0x8] sm:$0xf]
    %v30 = vld [vmem:[%s26 + $0xc] sm:$0xf]
    %v31 = vld [vmem:[%s26 + $0x10] sm:$0xf]
    %v32 = vld [vmem:[%s26 + $0x14] sm:$0xf]
    %v33 = vld [vmem:[%s26 + $0x18] sm:$0xf]
    %v34 = vld [vmem:[%s26 + $0x1c] sm:$0xf]
    %v35 = vld [vmem:[%s26 + $0x20] sm:$0xf]
    %v36 = vld [vmem:[%s26 + $0x24] sm:$0xf]
    %v37 = vld [vmem:[%s26 + $0x28] sm:$0xf]
    %v38 = vld [vmem:[%s26 + $0x2c] sm:$0xf]
    %v39 = vld [vmem:[%s26 + $0x30] sm:$0xf]
    %v40 = vld [vmem:[%s26 + $0x34] sm:$0xf]
    %v41 = vld [vmem:[%s26 + $0x38] sm:$0xf]
    %v42 = vld [vmem:[%s26 + $0x3c] sm:$0xf]
    %v43 = vld [vmem:[%s26 + $0x40] sm:$0xf]
    %v44 = vld [vmem:[%s26 + $0x44] sm:$0xf]
    %v45 = vld [vmem:[%s26 + $0x48] sm:$0xf]
    %v46 = vld [vmem:[%s26 + $0x4c] sm:$0xf]
    %v47 = vld [vmem:[%s26 + $0x50] sm:$0xf]
    %v48 = vld [vmem:[%s26 + $0x54] sm:$0xf]
    %v49 = vld [vmem:[%s26 + $0x58] sm:$0xf]
    %v50 = vld [vmem:[%s26 + $0x5c] sm:$0xf]
    %v51 = vld [vmem:[%s26 + $0x60] sm:$0xf]
    %v52 = vld [vmem:[%s26 + $0x64] sm:$0xf]
    %v53 = vld [vmem:[%s26 + $0x68] sm:$0xf]
    %v54 = vld [vmem:[%s26 + $0x6c] sm:$0xf]
    %v55 = vld [vmem:[%s26 + $0x70] sm:$0xf]
    %v56 = vld [vmem:[%s26 + $0x74] sm:$0xf]
    %v57 = vld [vmem:[%s26 + $0x78] sm:$0xf]
    %v58 = vld [vmem:[%s26 + $0x7c] sm:$0xf]
    %v59 = vld [vmem:[%s26 + $0x80] sm:$0xf]
    %v60 = vld [vmem:[%s26 + $0x84] sm:$0xf]
    %v61 = vld [vmem:[%s26 + $0x88] sm:$0xf]
    %v62 = vld [vmem:[%s26 + $0x8c] sm:$0xf]
    %v63 = vld [vmem:[%s26 + $0x90] sm:$0xf]
    %v64 = vld [vmem:[%s26 + $0x94] sm:$0xf]
    %v65 = vld [vmem:[%s26 + $0x98] sm:$0xf]
    %v66 = vld [vmem:[%s26 + $0x9c] sm:$0xf]
    %v67 = vld [vmem:[%s26 + $0xa0] sm:$0xf]
    %v68 = vld [vmem:[%s26 + $0xa4] sm:$0xf]
    %v69 = vld [vmem:[%s26 + $0xa8] sm:$0xf]
    %v70 = vld [vmem:[%s26 + $0xac] sm:$0xf]
    %v71 = vld [vmem:[%s26 + $0xb0] sm:$0xf]
    %v72 = vld [vmem:[%s26 + $0xb4] sm:$0xf]
    %v73 = vld [vmem:[%s26 + $0xb8] sm:$0xf]
    %v74 = vld [vmem:[%s26 + $0xbc] sm:$0xf]
    %v75 = vld [vmem:[%s26 + $0xc0] sm:$0xf]
    %v76 = vld [vmem:[%s26 + $0xc4] sm:$0xf]
    %v77 = vld [vmem:[%s26 + $0xc8] sm:$0xf]
    %v78 = vld [vmem:[%s26 + $0xcc] sm:$0xf]
    %v79 = vld [vmem:[%s26 + $0xd0] sm:$0xf]
    %v80 = vld [vmem:[%s26 + $0xd4] sm:$0xf]
    %v81 = vld [vmem:[%s26 + $0xd8] sm:$0xf]
    %v82 = vld [vmem:[%s26 + $0xdc] sm:$0xf]
    %v83 = vld [vmem:[%s26 + $0xe0] sm:$0xf]
    %v84 = vld [vmem:[%s26 + $0xe4] sm:$0xf]
    %v85 = vld [vmem:[%s26 + $0xe8] sm:$0xf]
    %v86 = vld [vmem:[%s26 + $0xec] sm:$0xf]
    %v87 = vld [vmem:[%s26 + $0xf0] sm:$0xf]
    %v88 = vld [vmem:[%s26 + $0xf4] sm:$0xf]
    %v89 = vld [vmem:[%s26 + $0xf8] sm:$0xf]
    %v90 = vld [vmem:[%s26 + $0xfc] sm:$0xf]
    %v91 = vld [vmem:[%s26 + $0x100] sm:$0xf]
    %v92 = vld [vmem:[%s26 + $0x104] sm:$0xf]
    %v93 = vld [vmem:[%s26 + $0x108] sm:$0xf]
    %v94 = vld [vmem:[%s26 + $0x10c] sm:$0xf]
    %v95 = vld [vmem:[%s26 + $0x110] sm:$0xf]
    %v96 = vld [vmem:[%s26 + $0x114] sm:$0xf]
    %v97 = vld [vmem:[%s26 + $0x118] sm:$0xf]
    %v98 = vld [vmem:[%s26 + $0x11c] sm:$0xf]
    %v99 = vld [vmem:[%s26 + $0x120] sm:$0xf]
    %v100 = vld [vmem:[%s26 + $0x124] sm:$0xf]
    %v101 = vld [vmem:[%s26 + $0x128] sm:$0xf]
    %v102 = vld [vmem:[%s26 + $0x12c] sm:$0xf]
    %v103 = vld [vmem:[%s26 + $0x130] sm:$0xf]
    %v104 = vld [vmem:[%s26 + $0x134] sm:$0xf]
    %v105 = vld [vmem:[%s26 + $0x138] sm:$0xf]
    %v106 = vld [vmem:[%s26 + $0x13c] sm:$0xf]
    %v107 = vld [vmem:[%s26 + $0x140] sm:$0xf]
    %v108 = vld [vmem:[%s26 + $0x144] sm:$0xf]
    %v109 = vld [vmem:[%s26 + $0x148] sm:$0xf]
    %v110 = vld [vmem:[%s26 + $0x14c] sm:$0xf]
    %v111 = vld [vmem:[%s26 + $0x150] sm:$0xf]
    %v112 = vld [vmem:[%s26 + $0x154] sm:$0xf]
    %v113 = vld [vmem:[%s26 + $0x158] sm:$0xf]
    %v114 = vld [vmem:[%s26 + $0x15c] sm:$0xf]
    %v115 = vld [vmem:[%s26 + $0x160] sm:$0xf]
    %v116 = vld [vmem:[%s26 + $0x164] sm:$0xf]
    %v117 = vld [vmem:[%s26 + $0x168] sm:$0xf]
    %v118 = vld [vmem:[%s26 + $0x16c] sm:$0xf]
    %v119 = vld [vmem:[%s26 + $0x170] sm:$0xf]
    %v120 = vld [vmem:[%s26 + $0x174] sm:$0xf]
    %v121 = vld [vmem:[%s26 + $0x178] sm:$0xf]
    %v122 = vld [vmem:[%s26 + $0x17c] sm:$0xf]
    %v123 = vld [vmem:[%s26 + $0x180] sm:$0xf]
    %v124 = vld [vmem:[%s26 + $0x184] sm:$0xf]
    %v125 = vld [vmem:[%s26 + $0x188] sm:$0xf]
    %v126 = vld [vmem:[%s26 + $0x18c] sm:$0xf]
    %v127 = vld [vmem:[%s26 + $0x190] sm:$0xf]
    %v128 = vld [vmem:[%s26 + $0x194] sm:$0xf]
    %v129 = vld [vmem:[%s26 + $0x198] sm:$0xf]
    %v130 = vld [vmem:[%s26 + $0x19c] sm:$0xf]
    %v131 = vld [vmem:[%s26 + $0x1a0] sm:$0xf]
    %v132 = vld [vmem:[%s26 + $0x1a4] sm:$0xf]
    %v133 = vld [vmem:[%s26 + $0x1a8] sm:$0xf]
    %v134 = vld [vmem:[%s26 + $0x1ac] sm:$0xf]
    %v135 = vld [vmem:[%s26 + $0x1b0] sm:$0xf]
    %v136 = vld [vmem:[%s26 + $0x1b4] sm:$0xf]
    %v137 = vld [vmem:[%s26 + $0x1b8] sm:$0xf]
    %v138 = vld [vmem:[%s26 + $0x1bc] sm:$0xf]
    %v139 = vld [vmem:[%s26 + $0x1c0] sm:$0xf]
    %v140 = vld [vmem:[%s26 + $0x1c4] sm:$0xf]
    %v141 = vld [vmem:[%s26 + $0x1c8] sm:$0xf]
    %v142 = vld [vmem:[%s26 + $0x1cc] sm:$0xf]
    %v143 = vld [vmem:[%s26 + $0x1d0] sm:$0xf]
    %v144 = vld [vmem:[%s26 + $0x1d4] sm:$0xf]
    %v145 = vld [vmem:[%s26 + $0x1d8] sm:$0xf]
    %v146 = vld [vmem:[%s26 + $0x1dc] sm:$0xf]
    %v147 = vld [vmem:[%s26 + $0x1e0] sm:$0xf]
    %v148 = vld [vmem:[%s26 + $0x1e4] sm:$0xf]
    %v149 = vld [vmem:[%s26 + $0x1e8] sm:$0xf]
    %v150 = vld [vmem:[%s26 + $0x1ec] sm:$0xf]
    %v151 = vld [vmem:[%s26 + $0x1f0] sm:$0xf]
    %v152 = vld [vmem:[%s26 + $0x1f4] sm:$0xf]
    %v153 = vld [vmem:[%s26 + $0x1f8] sm:$0xf]
    %v154 = vld [vmem:[%s26 + $0x1fc] sm:$0xf]
    %v155 = vld [vmem:[#allocation2] sm:$0x3]
    %v156 = vld [vmem:[%s0] sm:$0xff]
    %158 = vst [vmem:[#allocation1] ss:$9 sm:$0xff] %v156
    %v159 = vld [vmem:[#allocation1] sm:$0xff]
    %v160 = vld [vmem:[#allocation1 + $0x9] sm:$0xff]
    %v161 = vld [vmem:[#allocation1 + $0x12] sm:$0xff]
    %v162 = vld [vmem:[#allocation1 + $0x1b] sm:$0xff]
    %v163 = vld [vmem:[#allocation1 + $0x24] sm:$0xff]
    %v164 = vld [vmem:[#allocation1 + $0x2d] sm:$0xff]
    %v165 = vld [vmem:[#allocation1 + $0x36] sm:$0xff]
    %v166 = vld [vmem:[#allocation1 + $0x3f] sm:$0xff]
    %v303 = vunpack.c.l.b16 %v27
    %v304 = vunpack.c.l.b16 %v28
    %v305 = vunpack.c.l.b16 %v29
    %v306 = vunpack.c.l.b16 %v30
    %v307 = vunpack.c.l.b16 %v31
    %v308 = vunpack.c.l.b16 %v32
    %v309 = vunpack.c.l.b16 %v33
    %v310 = vunpack.c.l.b16 %v34
    %v311 = vunpack.c.l.b16 %v35
    %v312 = vunpack.c.l.b16 %v36
    %v313 = vunpack.c.l.b16 %v37
    %v314 = vunpack.c.l.b16 %v38
    %v315 = vunpack.c.l.b16 %v39
    %v316 = vunpack.c.l.b16 %v40
    %v317 = vunpack.c.l.b16 %v41
    %v318 = vunpack.c.l.b16 %v42
    %v319 = vunpack.c.l.b16 %v43
    %v320 = vunpack.c.l.b16 %v44
    %v321 = vunpack.c.l.b16 %v45
    %v322 = vunpack.c.l.b16 %v46
    %v323 = vunpack.c.l.b16 %v47
    %v324 = vunpack.c.l.b16 %v48
    %v325 = vunpack.c.l.b16 %v49
    %v326 = vunpack.c.l.b16 %v50
    %v327 = vunpack.c.l.b16 %v51
    %v328 = vunpack.c.l.b16 %v52
    %v329 = vunpack.c.l.b16 %v53
    %v330 = vunpack.c.l.b16 %v54
    %v331 = vunpack.c.l.b16 %v55
    %v332 = vunpack.c.l.b16 %v56
    %v333 = vunpack.c.l.b16 %v57
    %v334 = vunpack.c.l.b16 %v58
    %v335 = vunpack.c.l.b16 %v59
    %v336 = vunpack.c.l.b16 %v60
    %v337 = vunpack.c.l.b16 %v61
    %v338 = vunpack.c.l.b16 %v62
    %v339 = vunpack.c.l.b16 %v63
    %v340 = vunpack.c.l.b16 %v64
    %v341 = vunpack.c.l.b16 %v65
    %v342 = vunpack.c.l.b16 %v66
    %v343 = vunpack.c.l.b16 %v67
    %v344 = vunpack.c.l.b16 %v68
    %v345 = vunpack.c.l.b16 %v69
    %v346 = vunpack.c.l.b16 %v70
    %v347 = vunpack.c.l.b16 %v71
    %v348 = vunpack.c.l.b16 %v72
    %v349 = vunpack.c.l.b16 %v73
    %v350 = vunpack.c.l.b16 %v74
    %v351 = vunpack.c.l.b16 %v75
    %v352 = vunpack.c.l.b16 %v76
    %v353 = vunpack.c.l.b16 %v77
    %v354 = vunpack.c.l.b16 %v78
    %v355 = vunpack.c.l.b16 %v79
    %v356 = vunpack.c.l.b16 %v80
    %v357 = vunpack.c.l.b16 %v81
    %v358 = vunpack.c.l.b16 %v82
    %v359 = vunpack.c.l.b16 %v83
    %v360 = vunpack.c.l.b16 %v84
    %v361 = vunpack.c.l.b16 %v85
    %v362 = vunpack.c.l.b16 %v86
    %v363 = vunpack.c.l.b16 %v87
    %v364 = vunpack.c.l.b16 %v88
    %v365 = vunpack.c.l.b16 %v89
    %v366 = vunpack.c.l.b16 %v90
    %v367 = vunpack.c.l.b16 %v91
    %v368 = vunpack.c.l.b16 %v92
    %v369 = vunpack.c.l.b16 %v93
    %v370 = vunpack.c.l.b16 %v94
    %v371 = vunpack.c.l.b16 %v95
    %v372 = vunpack.c.l.b16 %v96
    %v373 = vunpack.c.l.b16 %v97
    %v374 = vunpack.c.l.b16 %v98
    %v375 = vunpack.c.l.b16 %v99
    %v376 = vunpack.c.l.b16 %v100
    %v377 = vunpack.c.l.b16 %v101
    %v378 = vunpack.c.l.b16 %v102
    %v379 = vunpack.c.l.b16 %v103
    %v380 = vunpack.c.l.b16 %v104
    %v381 = vunpack.c.l.b16 %v105
    %v382 = vunpack.c.l.b16 %v106
    %v383 = vunpack.c.l.b16 %v107
    %v384 = vunpack.c.l.b16 %v108
    %v385 = vunpack.c.l.b16 %v109
    %v386 = vunpack.c.l.b16 %v110
    %v387 = vunpack.c.l.b16 %v111
    %v388 = vunpack.c.l.b16 %v112
    %v389 = vunpack.c.l.b16 %v113
    %v390 = vunpack.c.l.b16 %v114
    %v391 = vunpack.c.l.b16 %v115
    %v392 = vunpack.c.l.b16 %v116
    %v393 = vunpack.c.l.b16 %v117
    %v394 = vunpack.c.l.b16 %v118
    %v395 = vunpack.c.l.b16 %v119
    %v396 = vunpack.c.l.b16 %v120
    %v397 = vunpack.c.l.b16 %v121
    %v398 = vunpack.c.l.b16 %v122
    %v399 = vunpack.c.l.b16 %v123
    %v400 = vunpack.c.l.b16 %v124
    %v401 = vunpack.c.l.b16 %v125
    %v402 = vunpack.c.l.b16 %v126
    %v403 = vunpack.c.l.b16 %v127
    %v404 = vunpack.c.l.b16 %v128
    %v405 = vunpack.c.l.b16 %v129
    %v406 = vunpack.c.l.b16 %v130
    %v407 = vunpack.c.l.b16 %v131
    %v408 = vunpack.c.l.b16 %v132
    %v409 = vunpack.c.l.b16 %v133
    %v410 = vunpack.c.l.b16 %v134
    %v411 = vunpack.c.l.b16 %v135
    %v412 = vunpack.c.l.b16 %v136
    %v413 = vunpack.c.l.b16 %v137
    %v414 = vunpack.c.l.b16 %v138
    %v415 = vunpack.c.l.b16 %v139
    %v416 = vunpack.c.l.b16 %v140
    %v417 = vunpack.c.l.b16 %v141
    %v418 = vunpack.c.l.b16 %v142
    %v419 = vunpack.c.l.b16 %v143
    %v420 = vunpack.c.l.b16 %v144
    %v421 = vunpack.c.l.b16 %v145
    %v422 = vunpack.c.l.b16 %v146
    %v423 = vunpack.c.l.b16 %v147
    %v424 = vunpack.c.l.b16 %v148
    %v425 = vunpack.c.l.b16 %v149
    %v426 = vunpack.c.l.b16 %v150
    %v427 = vunpack.c.l.b16 %v151
    %v428 = vunpack.c.l.b16 %v152
    %v429 = vunpack.c.l.b16 %v153
    %v430 = vunpack.c.l.b16 %v154
    %v431 = vpack.c.b16 %v304, %v303
    %v432 = vpack.c.b16 %v306, %v305
    %v433 = vpack.c.b16 %v308, %v307
    %v434 = vpack.c.b16 %v310, %v309
    %v435 = vpack.c.b16 %v312, %v311
    %v436 = vpack.c.b16 %v314, %v313
    %v437 = vpack.c.b16 %v316, %v315
    %v438 = vpack.c.b16 %v318, %v317
    %v439 = vpack.c.b16 %v320, %v319
    %v440 = vpack.c.b16 %v322, %v321
    %v441 = vpack.c.b16 %v324, %v323
    %v442 = vpack.c.b16 %v326, %v325
    %v443 = vpack.c.b16 %v328, %v327
    %v444 = vpack.c.b16 %v330, %v329
    %v445 = vpack.c.b16 %v332, %v331
    %v446 = vpack.c.b16 %v334, %v333
    %v447 = vpack.c.b16 %v336, %v335
    %v448 = vpack.c.b16 %v338, %v337
    %v449 = vpack.c.b16 %v340, %v339
    %v450 = vpack.c.b16 %v342, %v341
    %v451 = vpack.c.b16 %v344, %v343
    %v452 = vpack.c.b16 %v346, %v345
    %v453 = vpack.c.b16 %v348, %v347
    %v454 = vpack.c.b16 %v350, %v349
    %v455 = vpack.c.b16 %v352, %v351
    %v456 = vpack.c.b16 %v354, %v353
    %v457 = vpack.c.b16 %v356, %v355
    %v458 = vpack.c.b16 %v358, %v357
    %v459 = vpack.c.b16 %v360, %v359
    %v460 = vpack.c.b16 %v362, %v361
    %v461 = vpack.c.b16 %v364, %v363
    %v462 = vpack.c.b16 %v366, %v365
    %v463 = vpack.c.b16 %v368, %v367
    %v464 = vpack.c.b16 %v370, %v369
    %v465 = vpack.c.b16 %v372, %v371
    %v466 = vpack.c.b16 %v374, %v373
    %v467 = vpack.c.b16 %v376, %v375
    %v468 = vpack.c.b16 %v378, %v377
    %v469 = vpack.c.b16 %v380, %v379
    %v470 = vpack.c.b16 %v382, %v381
    %v471 = vpack.c.b16 %v384, %v383
    %v472 = vpack.c.b16 %v386, %v385
    %v473 = vpack.c.b16 %v388, %v387
    %v474 = vpack.c.b16 %v390, %v389
    %v475 = vpack.c.b16 %v392, %v391
    %v476 = vpack.c.b16 %v394, %v393
    %v477 = vpack.c.b16 %v396, %v395
    %v478 = vpack.c.b16 %v398, %v397
    %v479 = vpack.c.b16 %v400, %v399
    %v480 = vpack.c.b16 %v402, %v401
    %v481 = vpack.c.b16 %v404, %v403
    %v482 = vpack.c.b16 %v406, %v405
    %v483 = vpack.c.b16 %v408, %v407
    %v484 = vpack.c.b16 %v410, %v409
    %v485 = vpack.c.b16 %v412, %v411
    %v486 = vpack.c.b16 %v414, %v413
    %v487 = vpack.c.b16 %v416, %v415
    %v488 = vpack.c.b16 %v418, %v417
    %v489 = vpack.c.b16 %v420, %v419
    %v490 = vpack.c.b16 %v422, %v421
    %v491 = vpack.c.b16 %v424, %v423
    %v492 = vpack.c.b16 %v426, %v425
    %v493 = vpack.c.b16 %v428, %v427
    %v494 = vpack.c.b16 %v430, %v429
    %559 = vmatpush.bf16.msra.mxu0 %v438
    %560 = vmatpush.bf16.msra.mxu0 %v437
    %561 = vmatpush.bf16.msra.mxu0 %v436
    %562 = vmatpush.bf16.msra.mxu0 %v435
    %563 = vmatpush.bf16.msra.mxu0 %v434
    %564 = vmatpush.bf16.msra.mxu0 %v433
    %565 = vmatpush.bf16.msra.mxu0 %v432
    %566 = vmatpush.bf16.msra.mxu0 %v431
    %567 = vmatmul.bf16.gmra.mxu0 %v159
    %v568 = vpop.f32.mrf.mxu0
    %v569 = vadd.f32 0.0, %v568
    %v570 = vpop.f32.mrf.mxu0
    %571 = vdwg.mxu0
    %572 = vmatpush.bf16.msra.mxu0 %v446
    %573 = vmatpush.bf16.msra.mxu0 %v445
    %574 = vmatpush.bf16.msra.mxu0 %v444
    %575 = vmatpush.bf16.msra.mxu0 %v443
    %576 = vmatpush.bf16.msra.mxu0 %v442
    %577 = vmatpush.bf16.msra.mxu0 %v441
    %578 = vmatpush.bf16.msra.mxu0 %v440
    %579 = vmatpush.bf16.msra.mxu0 %v439
    %580 = vmatmul.bf16.gmra.mxu0 %v160
    %v581 = vpop.f32.mrf.mxu0
    %v582 = vadd.f32 %v569, %v581
    %v583 = vpop.f32.mrf.mxu0
    %584 = vdwg.mxu0
    %585 = vmatpush.bf16.msra.mxu0 %v454
    %586 = vmatpush.bf16.msra.mxu0 %v453
    %587 = vmatpush.bf16.msra.mxu0 %v452
    %588 = vmatpush.bf16.msra.mxu0 %v451
    %589 = vmatpush.bf16.msra.mxu0 %v450
    %590 = vmatpush.bf16.msra.mxu0 %v449
    %591 = vmatpush.bf16.msra.mxu0 %v448
    %592 = vmatpush.bf16.msra.mxu0 %v447
    %593 = vmatmul.bf16.gmra.mxu0 %v161
    %v594 = vpop.f32.mrf.mxu0
    %v595 = vadd.f32 %v582, %v594
    %v596 = vpop.f32.mrf.mxu0
    %597 = vdwg.mxu0
    %598 = vmatpush.bf16.msra.mxu0 %v462
    %599 = vmatpush.bf16.msra.mxu0 %v461
    %600 = vmatpush.bf16.msra.mxu0 %v460
    %601 = vmatpush.bf16.msra.mxu0 %v459
    %602 = vmatpush.bf16.msra.mxu0 %v458
    %603 = vmatpush.bf16.msra.mxu0 %v457
    %604 = vmatpush.bf16.msra.mxu0 %v456
    %605 = vmatpush.bf16.msra.mxu0 %v455
    %606 = vmatmul.bf16.gmra.mxu0 %v162
    %v607 = vpop.f32.mrf.mxu0
    %v608 = vadd.f32 %v595, %v607
    %v609 = vpop.f32.mrf.mxu0
    %610 = vdwg.mxu0
    %611 = vmatpush.bf16.msra.mxu0 %v470
    %612 = vmatpush.bf16.msra.mxu0 %v469
    %613 = vmatpush.bf16.msra.mxu0 %v468
    %614 = vmatpush.bf16.msra.mxu0 %v467
    %615 = vmatpush.bf16.msra.mxu0 %v466
    %616 = vmatpush.bf16.msra.mxu0 %v465
    %617 = vmatpush.bf16.msra.mxu0 %v464
    %618 = vmatpush.bf16.msra.mxu0 %v463
    %619 = vmatmul.bf16.gmra.mxu0 %v163
    %v620 = vpop.f32.mrf.mxu0
    %v621 = vadd.f32 %v608, %v620
    %v622 = vpop.f32.mrf.mxu0
    %623 = vdwg.mxu0
    %624 = vmatpush.bf16.msra.mxu0 %v478
    %625 = vmatpush.bf16.msra.mxu0 %v477
    %626 = vmatpush.bf16.msra.mxu0 %v476
    %627 = vmatpush.bf16.msra.mxu0 %v475
    %628 = vmatpush.bf16.msra.mxu0 %v474
    %629 = vmatpush.bf16.msra.mxu0 %v473
    %630 = vmatpush.bf16.msra.mxu0 %v472
    %631 = vmatpush.bf16.msra.mxu0 %v471
    %632 = vmatmul.bf16.gmra.mxu0 %v164
    %v633 = vpop.f32.mrf.mxu0
    %v634 = vadd.f32 %v621, %v633
    %v635 = vpop.f32.mrf.mxu0
    %636 = vdwg.mxu0
    %637 = vmatpush.bf16.msra.mxu0 %v486
    %638 = vmatpush.bf16.msra.mxu0 %v485
    %639 = vmatpush.bf16.msra.mxu0 %v484
    %640 = vmatpush.bf16.msra.mxu0 %v483
    %641 = vmatpush.bf16.msra.mxu0 %v482
    %642 = vmatpush.bf16.msra.mxu0 %v481
    %643 = vmatpush.bf16.msra.mxu0 %v480
    %644 = vmatpush.bf16.msra.mxu0 %v479
    %645 = vmatmul.bf16.gmra.mxu0 %v165
    %v646 = vpop.f32.mrf.mxu0
    %v647 = vadd.f32 %v634, %v646
    %v648 = vpop.f32.mrf.mxu0
    %649 = vdwg.mxu0
    %650 = vmatpush.bf16.msra.mxu0 %v494
    %651 = vmatpush.bf16.msra.mxu0 %v493
    %652 = vmatpush.bf16.msra.mxu0 %v492
    %653 = vmatpush.bf16.msra.mxu0 %v491
    %654 = vmatpush.bf16.msra.mxu0 %v490
    %655 = vmatpush.bf16.msra.mxu0 %v489
    %656 = vmatpush.bf16.msra.mxu0 %v488
    %657 = vmatpush.bf16.msra.mxu0 %v487
    %658 = vmatmul.bf16.gmra.mxu0 %v166
    %v659 = vpop.f32.mrf.mxu0
    %v660 = vadd.f32 %v647, %v659
    %v661 = vpop.f32.mrf.mxu0
    %662 = vdwg.mxu0
    %v663 = vadd.f32 %v155, %v660
    %664 = vst [vmem:[#allocation2] sm:$0x3] %v663
    // Predicated region
    $region18: #{_lambda_.24} parent=1 // pred_check
      %p665 = pneg %p17
    $region19: #{_lambda_.24} parent=1 // pred_check_branch
      %667 = sbr.rel (%p665) target = $region21
    $region20: #{_lambda_.24} parent=1 // pred_region
      %v668 = vld [vmem:[#allocation2] sm:$0x3]
      %v669 = vld [vmem:[%s2] sm:$0x1]
      %v671 = vperm.slane %v669, 0
      %v673 = vadd.f32 %v668, %v671
      %674 = vst [vmem:[#allocation3] sm:$0x3] 0.0
      %v675 = vmax.f32 %v673, 0.0
      %v676 = vpack.c.bf16 %v675, %v675
      %677 = vst [vmem:[%s3] sm:$0x1] %v676
    $region21: #{_lambda_.24} parent=1 // pred_fallthru
      _
    // Predicated region
    $region22: #{_lambda_.24} parent=1 // pred_check
      _
    $region23: #{_lambda_.24} parent=1 // pred_check_branch
      %679 = sbr.rel (0) target = $region25
    $region24: #{_lambda_.24} parent=1 // pred_region
      _
    $region25: #{_lambda_.24} parent=1 // pred_fallthru
      _
    // Predicated region
    $region26: #{_lambda_.24} parent=1 // pred_check
      _
    $region27: #{_lambda_.24} parent=1 // pred_check_branch
      %681 = sbr.rel (0) target = $region29
    $region28: #{_lambda_.24} parent=1 // pred_region
      %683 = vsyncadd [#allocation4], 0
      %s685 = sshll.u32 [#allocation3], 4
      %s686 = int_to_ptr.vmem [resolvable:$true] %s685
      %s687 = sshll.u32 %s4, 4
      %s688 = int_to_ptr.hbm [resolvable:$true] %s687
      %690 = dma.vmem_to_hbm [thread:$0]  %s686, 32, %s688, [#allocation4]
    $region29: #{_lambda_.24} parent=1 // pred_fallthru
      _
    // Predicated region
    $region30: #{_lambda_.24} parent=1 // pred_check
      _
    $region31: #{_lambda_.24} parent=1 // pred_check_branch
      %692 = sbr.rel (0) target = $region33
    $region32: #{_lambda_.24} parent=1 // pred_region
      _
    $region33: #{_lambda_.24} parent=1 // pred_fallthru
      _
    // Predicated region
    $region34: #{_lambda_.24} parent=1 // pred_check
      _
    $region35: #{_lambda_.24} parent=1 // pred_check_branch
      %694 = sbr.rel (0) target = $region37
    $region36: #{_lambda_.24} parent=1 // pred_region
      %696 = dma.done [#allocation4], 32
    $region37: #{_lambda_.24} parent=1 // pred_fallthru
      _
    %697 = vsyncpa [#allocation4], 1

// kernel: _lambda_.27
$region0: #{_lambda_.27}
  #allocation0 [shape = 'u32[]', space=smem, size = 0x4, offset = 0x4, fixed_abs, tag = 'smem constant byte address 0x4 - core index']
  #allocation1 [shape = 'u32[72,128]{1,0:T(1,128)}', space=vmem, size = 0x9000, scoped, tag = 'internal scratch']
  #allocation2 [shape = 'f32[8,128]{1,0:T(8,128)}', space=vmem, size = 0x1000, scoped, tag = 'scratch operand']
  %s0 = inlined_call_operand.vmem [shape: bf16[4,8,512], index: 0, kind: input, shape index: {}]
  %s1 = inlined_call_operand.vmem [shape: bf16[4,512,128], index: 1, kind: input, shape index: {}]
  %s2 = inlined_call_operand.vmem [shape: f32[1,128], index: 2, kind: input, shape index: {}]
  %s3 = inlined_call_operand.vmem [shape: bf16[4,8,128], index: 3, kind: output, shape index: {0}]
  %s4 = inlined_call_operand.vmem [shape: f32[4,1,2,128], index: 4, kind: output, shape index: {1}]
  %5 = xla_tuple %s3, %s4
  %s6 = sld [smem:[#allocation0]]
  $region61: #{_lambda_.27} parent=0
    _
  %s8 = ssub.s32 1, %s6
  %s9 = scalar_select 0, %s8, %s6
  loop: start=0, step=1, limit=6
  $region2: #{_lambda_.27} parent=0 // loop_pre_header
    _
  $region3: #{_lambda_.27} parent=0 // loop_header
    %s11 = sphi 0, %s15
    %p12 = scmp.ge.s32.totalorder %s11, 6
    %s18 = sphi 0, %s37
    %s19 = sphi 0, %s33
    %s20 = sphi 0, %s29
    %s21 = sphi 0, %s18
    %s22 = sphi 0, %s19
    %s23 = sphi 0, %s20
    %s24 = sphi 0, %s21
    %s25 = sphi 0, %s22
    %s26 = sphi 0, %s23
    %s44 = sphi 0, %s46
    %s47 = sphi 0, %s44
    %s48 = sphi 0, %s47
    %s64 = sphi 0, %s48
    %s70 = sphi 0, %s72
    %s73 = sphi 0, %s70
    %s74 = sphi 0, %s73
    %s90 = sphi 0, %s74
    %s94 = sphi 0, %s94
    %s96 = sphi 0, %s94
    %s97 = sphi 0, %s96
    %s111 = sphi 0, %s97
    %s119 = sphi 0, %s121
    %s122 = sphi 0, %s119
    %s123 = sphi 0, %s122
    %s139 = sphi 0, %s123
    %s147 = sphi 0, %s149
    %s150 = sphi 0, %s147
    %s151 = sphi 0, %s150
    %s167 = sphi 0, %s151
  $region4: #{_lambda_.27} parent=0 // loop_header_branch
    %14 = sbr.rel (%p12) target = $region8
  $region5: #{_lambda_.27} parent=0 // loop_body
    %s16 = ssub.s32 %s11, 1
    %s17 = ssub.s32 %s11, 2
    %s27 = sadd.s32 1, %s20
    %p28 = scmp.ge.s32.totalorder %s27, 1
    %s29 = scalar_select %p28, 0, %s27
    %s30 = sadd.s32 1, %s19
    %s31 = scalar_select %p28, %s30, %s19
    %p32 = scmp.ge.s32.totalorder %s31, 1
    %s33 = scalar_select %p32, 0, %s31
    %s34 = sadd.s32 1, %s18
    %s35 = scalar_select %p32, %s34, %s18
    %p36 = scmp.ge.s32.totalorder %s35, 4
    %s37 = scalar_select %p36, 0, %s35
    %s38 = ssub.s32 %s18, %s37
    %s39 = ssub.s32 %s19, %s33
    %s40 = sor.u32 %s38, %s39
    %s41 = ssub.s32 %s20, %s29
    %s42 = sor.u32 %s40, %s41
    %p43 = scmp.eq.s32.totalorder %s42, 0
    %s45 = sadd.s32 %s44, 1
    %s46 = scalar_select %p43, %s44, %s45
    %p49 = pneg %p43
    %p50 = scmp.eq.s32.totalorder %s11, 3
    %p51 = por %p49, %p50
    %p52 = scmp.ne.s32.totalorder %s44, %s47
    %p53 = scmp.eq.s32.totalorder %s11, 0
    %p54 = por %p52, %p53
    %p55 = scmp.ne.s32.totalorder %s44, %s47
    %p56 = scmp.eq.s32.totalorder %s16, 3
    %p57 = por %p55, %p56
    %p58 = scmp.ne.s32.totalorder %s47, %s48
    %p59 = scmp.eq.s32.totalorder %s16, 0
    %p60 = por %p58, %p59
    %p61 = scmp.ne.s32.totalorder %s47, %s48
    %p62 = scmp.eq.s32.totalorder %s17, 3
    %p63 = por %p61, %p62
    %p65 = scmp.ne.s32.totalorder %s48, %s64
    %p66 = scmp.eq.s32.totalorder %s17, 0
    %p67 = por %p65, %p66
    %s68 = ssub.s32 %s18, %s37
    %p69 = scmp.eq.s32.totalorder %s68, 0
    %s71 = sadd.s32 %s70, 1
    %s72 = scalar_select %p69, %s70, %s71
    %p75 = pneg %p69
    %p76 = scmp.eq.s32.totalorder %s11, 3
    %p77 = por %p75, %p76
    %p78 = scmp.ne.s32.totalorder %s70, %s73
    %p79 = scmp.eq.s32.totalorder %s11, 0
    %p80 = por %p78, %p79
    %p81 = scmp.ne.s32.totalorder %s70, %s73
    %p82 = scmp.eq.s32.totalorder %s16, 3
    %p83 = por %p81, %p82
    %p84 = scmp.ne.s32.totalorder %s73, %s74
    %p85 = scmp.eq.s32.totalorder %s16, 0
    %p86 = por %p84, %p85
    %p87 = scmp.ne.s32.totalorder %s73, %s74
    %p88 = scmp.eq.s32.totalorder %s17, 3
    %p89 = por %p87, %p88
    %p91 = scmp.ne.s32.totalorder %s74, %s90
    %p92 = scmp.eq.s32.totalorder %s17, 0
    %p93 = por %p91, %p92
    %s95 = sadd.s32 %s94, 1
    %p98 = scmp.eq.s32.totalorder %s11, 3
    %p99 = scmp.ne.s32.totalorder %s94, %s96
    %p100 = scmp.eq.s32.totalorder %s11, 0
    %p101 = por %p99, %p100
    %p102 = scmp.ne.s32.totalorder %s94, %s96
    %p103 = scmp.eq.s32.totalorder %s16, 3
    %p104 = por %p102, %p103
    %p105 = scmp.ne.s32.totalorder %s96, %s97
    %p106 = scmp.eq.s32.totalorder %s16, 0
    %p107 = por %p105, %p106
    %p108 = scmp.ne.s32.totalorder %s96, %s97
    %p109 = scmp.eq.s32.totalorder %s17, 3
    %p110 = por %p108, %p109
    %p112 = scmp.ne.s32.totalorder %s97, %s111
    %p113 = scmp.eq.s32.totalorder %s17, 0
    %p114 = por %p112, %p113
    %s115 = ssub.s32 %s18, %s37
    %s116 = ssub.s32 %s19, %s33
    %s117 = sor.u32 %s115, %s116
    %p118 = scmp.eq.s32.totalorder %s117, 0
    %s120 = sadd.s32 %s119, 1
    %s121 = scalar_select %p118, %s119, %s120
    %p124 = pneg %p118
    %p125 = scmp.eq.s32.totalorder %s11, 3
    %p126 = por %p124, %p125
    %p127 = scmp.ne.s32.totalorder %s119, %s122
    %p128 = scmp.eq.s32.totalorder %s11, 0
    %p129 = por %p127, %p128
    %p130 = scmp.ne.s32.totalorder %s119, %s122
    %p131 = scmp.eq.s32.totalorder %s16, 3
    %p132 = por %p130, %p131
    %p133 = scmp.ne.s32.totalorder %s122, %s123
    %p134 = scmp.eq.s32.totalorder %s16, 0
    %p135 = por %p133, %p134
    %p136 = scmp.ne.s32.totalorder %s122, %s123
    %p137 = scmp.eq.s32.totalorder %s17, 3
    %p138 = por %p136, %p137
    %p140 = scmp.ne.s32.totalorder %s123, %s139
    %p141 = scmp.eq.s32.totalorder %s17, 0
    %p142 = por %p140, %p141
    %s143 = ssub.s32 %s18, %s37
    %s144 = ssub.s32 %s19, %s33
    %s145 = sor.u32 %s143, %s144
    %p146 = scmp.eq.s32.totalorder %s145, 0
    %s148 = sadd.s32 %s147, 1
    %s149 = scalar_select %p146, %s147, %s148
    %p152 = pneg %p146
    %p153 = scmp.eq.s32.totalorder %s11, 3
    %p154 = por %p152, %p153
    %p155 = scmp.ne.s32.totalorder %s147, %s150
    %p156 = scmp.eq.s32.totalorder %s11, 0
    %p157 = por %p155, %p156
    %p158 = scmp.ne.s32.totalorder %s147, %s150
    %p159 = scmp.eq.s32.totalorder %s16, 3
    %p160 = por %p158, %p159
    %p161 = scmp.ne.s32.totalorder %s150, %s151
    %p162 = scmp.eq.s32.totalorder %s16, 0
    %p163 = por %p161, %p162
    %p164 = scmp.ne.s32.totalorder %s150, %s151
    %p165 = scmp.eq.s32.totalorder %s17, 3
    %p166 = por %p164, %p165
    %p168 = scmp.ne.s32.totalorder %s151, %s167
    %p169 = scmp.eq.s32.totalorder %s17, 0
    %p170 = por %p168, %p169
    %p171 = scmp.le.s32.totalorder 1, %s11
    %p172 = scmp.lt.s32.totalorder %s11, 5
    %p173 = pnand %p171, %p172
    %p174 = pneg %p173
    // Predicated region
    $region9: #{_lambda_.27} parent=5 // pred_check
      _
    $region10: #{_lambda_.27} parent=5 // pred_check_branch
      %176 = sbr.rel (%p173) target = $region12
    $region11: #{_lambda_.27} parent=5 // pred_region
      %s177 = ssub.s32 %s11, 1
      // Predicated region
      $region13: #{_lambda_.27} parent=11 // pred_check
        %p178 = pneg %p107
      $region14: #{_lambda_.27} parent=11 // pred_check_branch
        %180 = sbr.rel (%p178) target = $region16
      $region15: #{_lambda_.27} parent=11 // pred_region
        _
      $region16: #{_lambda_.27} parent=11 // pred_fallthru
        _
    $region12: #{_lambda_.27} parent=5 // pred_fallthru
      _
    %p181 = scmp.lt.s32.totalorder %s11, 4
    // Predicated region
    $region17: #{_lambda_.27} parent=5 // pred_check
      %p182 = pneg %p181
    $region18: #{_lambda_.27} parent=5 // pred_check_branch
      %184 = sbr.rel (%p182) target = $region20
    $region19: #{_lambda_.27} parent=5 // pred_region
      // Predicated region
      $region21: #{_lambda_.27} parent=19 // pred_check
        %p185 = pneg %p54
      $region22: #{_lambda_.27} parent=19 // pred_check_branch
        %187 = sbr.rel (%p185) target = $region24
      $region23: #{_lambda_.27} parent=19 // pred_region
        %s188 = smul.u32 4, %s20
        %p189 = scmp.lt.s32.totalorder %s18, 3
        %s190 = scalar_select %p189, %s18, 3
        %p191 = scmp.lt.s32.totalorder %s19, 0
        %s192 = scalar_select %p191, %s19, 0
        %p193 = scmp.lt.s32.totalorder %s188, 3
        %s194 = scalar_select %p193, %s188, 3
        %s195 = smul.addr %s192, 4
        %s196 = sadd.s32 %s194, %s195
        %s197 = smul.addr %s190, 4
        %s198 = sadd.s32 %s196, %s197
        %s199 = smul.addr %s198, 4
        %s200 = scalar_lea.vmem %s0, %s199
        %s201 = smul.u32 4, %s20
      $region24: #{_lambda_.27} parent=19 // pred_fallthru
        _
      // Predicated region
      $region25: #{_lambda_.27} parent=19 // pred_check
        %p202 = pneg %p80
      $region26: #{_lambda_.27} parent=19 // pred_check_branch
        %204 = sbr.rel (%p202) target = $region28
      $region27: #{_lambda_.27} parent=19 // pred_region
        %p205 = scmp.lt.s32.totalorder %s18, 3
        %s206 = scalar_select %p205, %s18, 3
        %s207 = smul.addr %s206, 64
        %s208 = smul.addr %s207, 4
        %s209 = scalar_lea.vmem %s1, %s208
      $region28: #{_lambda_.27} parent=19 // pred_fallthru
        _
    $region20: #{_lambda_.27} parent=5 // pred_fallthru
      _
    %p210 = scmp.le.s32.totalorder 1, %s11
    %p211 = scmp.lt.s32.totalorder %s11, 5
    %p212 = pnand %p210, %p211
    %p213 = pneg %p212
    // Predicated region
    $region29: #{_lambda_.27} parent=5 // pred_check
      _
    $region30: #{_lambda_.27} parent=5 // pred_check_branch
      %215 = sbr.rel (%p212) target = $region32
    $region31: #{_lambda_.27} parent=5 // pred_region
      %s216 = ssub.s32 %s11, 1
      %s217 = smul.u32 4, %s23
      %p218 = scmp.lt.s32.totalorder %s21, 3
      %s219 = scalar_select %p218, %s21, 3
      %p220 = scmp.lt.s32.totalorder %s22, 0
      %s221 = scalar_select %p220, %s22, 0
      %p222 = scmp.lt.s32.totalorder %s217, 3
      %s223 = scalar_select %p222, %s217, 3
      %s224 = smul.addr %s221, 4
      %s225 = sadd.s32 %s223, %s224
      %s226 = smul.addr %s219, 4
      %s227 = sadd.s32 %s225, %s226
      %s228 = smul.addr %s227, 4
      %s229 = scalar_lea.vmem %s0, %s228
      %p230 = pneg %p60
      %p231 = pneg %p57
      %p232 = scmp.lt.s32.totalorder %s21, 3
      %s233 = scalar_select %p232, %s21, 3
      %s234 = smul.addr %s233, 64
      %s235 = smul.addr %s234, 4
      %s236 = scalar_lea.vmem %s1, %s235
      %p237 = pneg %p86
      %p238 = pneg %p83
      %p239 = pneg %p107
      %p240 = pneg %p104
      %p241 = pneg %p135
      %p242 = pneg %p132
      %p243 = scmp.lt.s32.totalorder %s21, 3
      %s244 = scalar_select %p243, %s21, 3
      %p245 = scmp.lt.s32.totalorder %s22, 0
      %s246 = scalar_select %p245, %s22, 0
      %s247 = sadd.s32 %s246, %s244
      %s248 = smul.addr %s247, 4
      %s249 = scalar_lea.vmem %s3, %s248
      %p250 = pneg %p163
      %p251 = pneg %p160
      %p252 = scmp.lt.s32.totalorder %s21, 3
      %s253 = scalar_select %p252, %s21, 3
      %p254 = scmp.lt.s32.totalorder %s22, 0
      %s255 = scalar_select %p254, %s22, 0
      %s256 = sadd.s32 %s255, %s253
      %s257 = smul.addr %s256, 2
      %s258 = scalar_lea.vmem %s4, %s257
      %s259 = smul.u32 4, %s23
      %p260 = scmp.lt.s32.totalorder %s21, 3
      %s261 = scalar_select %p260, %s21, 3
      %p262 = scmp.lt.s32.totalorder %s22, 0
      %s263 = scalar_select %p262, %s22, 0
      %p264 = scmp.lt.s32.totalorder %s259, 3
      %s265 = scalar_select %p264, %s259, 3
      %s266 = smul.addr %s263, 4
      %s267 = sadd.s32 %s265, %s266
      %s268 = smul.addr %s261, 4
      %s269 = sadd.s32 %s267, %s268
      %s270 = smul.addr %s269, 4
      %s271 = scalar_lea.vmem %s0, %s270
      %s272 = smul.u32 4, %s23
      %p273 = scmp.lt.s32.totalorder %s21, 3
      %s274 = scalar_select %p273, %s21, 3
      %s275 = smul.addr %s274, 64
      %s276 = smul.addr %s275, 4
      %s277 = scalar_lea.vmem %s1, %s276
      %p278 = scmp.lt.s32.totalorder %s21, 3
      %s279 = scalar_select %p278, %s21, 3
      %p280 = scmp.lt.s32.totalorder %s22, 0
      %s281 = scalar_select %p280, %s22, 0
      %s282 = sadd.s32 %s281, %s279
      %s283 = smul.addr %s282, 4
      %s284 = scalar_lea.vmem %s3, %s283
      %p285 = scmp.lt.s32.totalorder %s21, 3
      %s286 = scalar_select %p285, %s21, 3
      %p287 = scmp.lt.s32.totalorder %s22, 0
      %s288 = scalar_select %p287, %s22, 0
      %s289 = sadd.s32 %s288, %s286
      %s290 = smul.addr %s289, 2
      %s291 = scalar_lea.vmem %s4, %s290
      %p292 = scmp.eq.s32.totalorder %s23, 0
      // Predicated region
      $region33: #{_lambda_.27} parent=31 // pred_check
        %p293 = pneg %p292
      $region34: #{_lambda_.27} parent=31 // pred_check_branch
        %295 = sbr.rel (%p293) target = $region36
      $region35: #{_lambda_.27} parent=31 // pred_region
        %296 = vst [vmem:[#allocation2] sm:$0xff] 0.0
      $region36: #{_lambda_.27} parent=31 // pred_fallthru
        _
      %s297 = smul.u32 %s23, 512
      %s298 = sshra.s32 %s297, 3
      %s299 = sand.u32 %s297, 7
      %s300 = smul.addr %s298, 4
      %s301 = scalar_lea.vmem %s277, %s300
      %v302 = vld [vmem:[%s301] sm:$0xf]
      %v303 = vld [vmem:[%s301 + $0x4] sm:$0xf]
      %v304 = vld [vmem:[%s301 + $0x8] sm:$0xf]
      %v305 = vld [vmem:[%s301 + $0xc] sm:$0xf]
      %v306 = vld [vmem:[%s301 + $0x10] sm:$0xf]
      %v307 = vld [vmem:[%s301 + $0x14] sm:$0xf]
      %v308 = vld [vmem:[%s301 + $0x18] sm:$0xf]
      %v309 = vld [vmem:[%s301 + $0x1c] sm:$0xf]
      %v310 = vld [vmem:[%s301 + $0x20] sm:$0xf]
      %v311 = vld [vmem:[%s301 + $0x24] sm:$0xf]
      %v312 = vld [vmem:[%s301 + $0x28] sm:$0xf]
      %v313 = vld [vmem:[%s301 + $0x2c] sm:$0xf]
      %v314 = vld [vmem:[%s301 + $0x30] sm:$0xf]
      %v315 = vld [vmem:[%s301 + $0x34] sm:$0xf]
      %v316 = vld [vmem:[%s301 + $0x38] sm:$0xf]
      %v317 = vld [vmem:[%s301 + $0x3c] sm:$0xf]
      %v318 = vld [vmem:[%s301 + $0x40] sm:$0xf]
      %v319 = vld [vmem:[%s301 + $0x44] sm:$0xf]
      %v320 = vld [vmem:[%s301 + $0x48] sm:$0xf]
      %v321 = vld [vmem:[%s301 + $0x4c] sm:$0xf]
      %v322 = vld [vmem:[%s301 + $0x50] sm:$0xf]
      %v323 = vld [vmem:[%s301 + $0x54] sm:$0xf]
      %v324 = vld [vmem:[%s301 + $0x58] sm:$0xf]
      %v325 = vld [vmem:[%s301 + $0x5c] sm:$0xf]
      %v326 = vld [vmem:[%s301 + $0x60] sm:$0xf]
      %v327 = vld [vmem:[%s301 + $0x64] sm:$0xf]
      %v328 = vld [vmem:[%s301 + $0x68] sm:$0xf]
      %v329 = vld [vmem:[%s301 + $0x6c] sm:$0xf]
      %v330 = vld [vmem:[%s301 + $0x70] sm:$0xf]
      %v331 = vld [vmem:[%s301 + $0x74] sm:$0xf]
      %v332 = vld [vmem:[%s301 + $0x78] sm:$0xf]
      %v333 = vld [vmem:[%s301 + $0x7c] sm:$0xf]
      %v334 = vld [vmem:[%s301 + $0x80] sm:$0xf]
      %v335 = vld [vmem:[%s301 + $0x84] sm:$0xf]
      %v336 = vld [vmem:[%s301 + $0x88] sm:$0xf]
      %v337 = vld [vmem:[%s301 + $0x8c] sm:$0xf]
      %v338 = vld [vmem:[%s301 + $0x90] sm:$0xf]
      %v339 = vld [vmem:[%s301 + $0x94] sm:$0xf]
      %v340 = vld [vmem:[%s301 + $0x98] sm:$0xf]
      %v341 = vld [vmem:[%s301 + $0x9c] sm:$0xf]
      %v342 = vld [vmem:[%s301 + $0xa0] sm:$0xf]
      %v343 = vld [vmem:[%s301 + $0xa4] sm:$0xf]
      %v344 = vld [vmem:[%s301 + $0xa8] sm:$0xf]
      %v345 = vld [vmem:[%s301 + $0xac] sm:$0xf]
      %v346 = vld [vmem:[%s301 + $0xb0] sm:$0xf]
      %v347 = vld [vmem:[%s301 + $0xb4] sm:$0xf]
      %v348 = vld [vmem:[%s301 + $0xb8] sm:$0xf]
      %v349 = vld [vmem:[%s301 + $0xbc] sm:$0xf]
      %v350 = vld [vmem:[%s301 + $0xc0] sm:$0xf]
      %v351 = vld [vmem:[%s301 + $0xc4] sm:$0xf]
      %v352 = vld [vmem:[%s301 + $0xc8] sm:$0xf]
      %v353 = vld [vmem:[%s301 + $0xcc] sm:$0xf]
      %v354 = vld [vmem:[%s301 + $0xd0] sm:$0xf]
      %v355 = vld [vmem:[%s301 + $0xd4] sm:$0xf]
      %v356 = vld [vmem:[%s301 + $0xd8] sm:$0xf]
      %v357 = vld [vmem:[%s301 + $0xdc] sm:$0xf]
      %v358 = vld [vmem:[%s301 + $0xe0] sm:$0xf]
      %v359 = vld [vmem:[%s301 + $0xe4] sm:$0xf]
      %v360 = vld [vmem:[%s301 + $0xe8] sm:$0xf]
      %v361 = vld [vmem:[%s301 + $0xec] sm:$0xf]
      %v362 = vld [vmem:[%s301 + $0xf0] sm:$0xf]
      %v363 = vld [vmem:[%s301 + $0xf4] sm:$0xf]
      %v364 = vld [vmem:[%s301 + $0xf8] sm:$0xf]
      %v365 = vld [vmem:[%s301 + $0xfc] sm:$0xf]
      %v366 = vld [vmem:[#allocation2] sm:$0xff]
      %v367 = vld [vmem:[%s271] sm:$0xff]
      %v368 = vld [vmem:[%s271 + $0x8] sm:$0xff]
      %v371 = vunpack.c.l.b16 %v367
      %v372 = vunpack.c.h.b16 %v367
      %v373 = vunpack.c.l.b16 %v368
      %v374 = vunpack.c.h.b16 %v368
      %v375 = vpack.c.b16 %v371, %v371
      %v376 = vpack.c.b16 %v372, %v372
      %v377 = vpack.c.b16 %v373, %v373
      %v378 = vpack.c.b16 %v374, %v374
      %v447 = vunpack.c.l.b16 %v302
      %v448 = vunpack.c.l.b16 %v303
      %v449 = vunpack.c.l.b16 %v304
      %v450 = vunpack.c.l.b16 %v305
      %v451 = vunpack.c.l.b16 %v306
      %v452 = vunpack.c.l.b16 %v307
      %v453 = vunpack.c.l.b16 %v308
      %v454 = vunpack.c.l.b16 %v309
      %v455 = vunpack.c.l.b16 %v310
      %v456 = vunpack.c.l.b16 %v311
      %v457 = vunpack.c.l.b16 %v312
      %v458 = vunpack.c.l.b16 %v313
      %v459 = vunpack.c.l.b16 %v314
      %v460 = vunpack.c.l.b16 %v315
      %v461 = vunpack.c.l.b16 %v316
      %v462 = vunpack.c.l.b16 %v317
      %v463 = vunpack.c.l.b16 %v318
      %v464 = vunpack.c.l.b16 %v319
      %v465 = vunpack.c.l.b16 %v320
      %v466 = vunpack.c.l.b16 %v321
      %v467 = vunpack.c.l.b16 %v322
      %v468 = vunpack.c.l.b16 %v323
      %v469 = vunpack.c.l.b16 %v324
      %v470 = vunpack.c.l.b16 %v325
      %v471 = vunpack.c.l.b16 %v326
      %v472 = vunpack.c.l.b16 %v327
      %v473 = vunpack.c.l.b16 %v328
      %v474 = vunpack.c.l.b16 %v329
      %v475 = vunpack.c.l.b16 %v330
      %v476 = vunpack.c.l.b16 %v331
      %v477 = vunpack.c.l.b16 %v332
      %v478 = vunpack.c.l.b16 %v333
      %v479 = vunpack.c.l.b16 %v334
      %v480 = vunpack.c.l.b16 %v335
      %v481 = vunpack.c.l.b16 %v336
      %v482 = vunpack.c.l.b16 %v337
      %v483 = vunpack.c.l.b16 %v338
      %v484 = vunpack.c.l.b16 %v339
      %v485 = vunpack.c.l.b16 %v340
      %v486 = vunpack.c.l.b16 %v341
      %v487 = vunpack.c.l.b16 %v342
      %v488 = vunpack.c.l.b16 %v343
      %v489 = vunpack.c.l.b16 %v344
      %v490 = vunpack.c.l.b16 %v345
      %v491 = vunpack.c.l.b16 %v346
      %v492 = vunpack.c.l.b16 %v347
      %v493 = vunpack.c.l.b16 %v348
      %v494 = vunpack.c.l.b16 %v349
      %v495 = vunpack.c.l.b16 %v350
      %v496 = vunpack.c.l.b16 %v351
      %v497 = vunpack.c.l.b16 %v352
      %v498 = vunpack.c.l.b16 %v353
      %v499 = vunpack.c.l.b16 %v354
      %v500 = vunpack.c.l.b16 %v355
      %v501 = vunpack.c.l.b16 %v356
      %v502 = vunpack.c.l.b16 %v357
      %v503 = vunpack.c.l.b16 %v358
      %v504 = vunpack.c.l.b16 %v359
      %v505 = vunpack.c.l.b16 %v360
      %v506 = vunpack.c.l.b16 %v361
      %v507 = vunpack.c.l.b16 %v362
      %v508 = vunpack.c.l.b16 %v363
      %v509 = vunpack.c.l.b16 %v364
      %v510 = vunpack.c.l.b16 %v365
      %v511 = vpack.c.b16 %v448, %v447
      %v512 = vpack.c.b16 %v450, %v449
      %v513 = vpack.c.b16 %v452, %v451
      %v514 = vpack.c.b16 %v454, %v453
      %v515 = vpack.c.b16 %v456, %v455
      %v516 = vpack.c.b16 %v458, %v457
      %v517 = vpack.c.b16 %v460, %v459
      %v518 = vpack.c.b16 %v462, %v461
      %v519 = vpack.c.b16 %v464, %v463
      %v520 = vpack.c.b16 %v466, %v465
      %v521 = vpack.c.b16 %v468, %v467
      %v522 = vpack.c.b16 %v470, %v469
      %v523 = vpack.c.b16 %v472, %v471
      %v524 = vpack.c.b16 %v474, %v473
      %v525 = vpack.c.b16 %v476, %v475
      %v526 = vpack.c.b16 %v478, %v477
      %v527 = vpack.c.b16 %v480, %v479
      %v528 = vpack.c.b16 %v482, %v481
      %v529 = vpack.c.b16 %v484, %v483
      %v530 = vpack.c.b16 %v486, %v485
      %v531 = vpack.c.b16 %v488, %v487
      %v532 = vpack.c.b16 %v490, %v489
      %v533 = vpack.c.b16 %v492, %v491
      %v534 = vpack.c.b16 %v494, %v493
      %v535 = vpack.c.b16 %v496, %v495
      %v536 = vpack.c.b16 %v498, %v497
      %v537 = vpack.c.b16 %v500, %v499
      %v538 = vpack.c.b16 %v502, %v501
      %v539 = vpack.c.b16 %v504, %v503
      %v540 = vpack.c.b16 %v506, %v505
      %v541 = vpack.c.b16 %v508, %v507
      %v542 = vpack.c.b16 %v510, %v509
      %575 = vmatpush.bf16.msra.mxu0 %v518
      %576 = vmatpush.bf16.msra.mxu0 %v517
      %577 = vmatpush.bf16.msra.mxu0 %v516
      %578 = vmatpush.bf16.msra.mxu0 %v515
      %579 = vmatpush.bf16.msra.mxu0 %v514
      %580 = vmatpush.bf16.msra.mxu0 %v513
      %581 = vmatpush.bf16.msra.mxu0 %v512
      %582 = vmatpush.bf16.msra.mxu0 %v511
      %583 = vmatmul.bf16.gmra.mxu0 %v375
      %v584 = vpop.f32.mrf.mxu0
      %v585 = vadd.f32 0.0, %v584
      %v586 = vpop.f32.mrf.mxu0
      %587 = vdwg.mxu0
      %588 = vmatpush.bf16.msra.mxu0 %v526
      %589 = vmatpush.bf16.msra.mxu0 %v525
      %590 = vmatpush.bf16.msra.mxu0 %v524
      %591 = vmatpush.bf16.msra.mxu0 %v523
      %592 = vmatpush.bf16.msra.mxu0 %v522
      %593 = vmatpush.bf16.msra.mxu0 %v521
      %594 = vmatpush.bf16.msra.mxu0 %v520
      %595 = vmatpush.bf16.msra.mxu0 %v519
      %596 = vmatmul.bf16.gmra.mxu0 %v376
      %v597 = vpop.f32.mrf.mxu0
      %v598 = vadd.f32 %v585, %v597
      %v599 = vpop.f32.mrf.mxu0
      %600 = vdwg.mxu0
      %601 = vmatpush.bf16.msra.mxu0 %v534
      %602 = vmatpush.bf16.msra.mxu0 %v533
      %603 = vmatpush.bf16.msra.mxu0 %v532
      %604 = vmatpush.bf16.msra.mxu0 %v531
      %605 = vmatpush.bf16.msra.mxu0 %v530
      %606 = vmatpush.bf16.msra.mxu0 %v529
      %607 = vmatpush.bf16.msra.mxu0 %v528
      %608 = vmatpush.bf16.msra.mxu0 %v527
      %609 = vmatmul.bf16.gmra.mxu0 %v377
      %v610 = vpop.f32.mrf.mxu0
      %v611 = vadd.f32 %v598, %v610
      %v612 = vpop.f32.mrf.mxu0
      %613 = vdwg.mxu0
      %614 = vmatpush.bf16.msra.mxu0 %v542
      %615 = vmatpush.bf16.msra.mxu0 %v541
      %616 = vmatpush.bf16.msra.mxu0 %v540
      %617 = vmatpush.bf16.msra.mxu0 %v539
      %618 = vmatpush.bf16.msra.mxu0 %v538
      %619 = vmatpush.bf16.msra.mxu0 %v537
      %620 = vmatpush.bf16.msra.mxu0 %v536
      %621 = vmatpush.bf16.msra.mxu0 %v535
      %622 = vmatmul.bf16.gmra.mxu0 %v378
      %v623 = vpop.f32.mrf.mxu0
      %v624 = vadd.f32 %v611, %v623
      %v625 = vpop.f32.mrf.mxu0
      %626 = vdwg.mxu0
      %v627 = vadd.f32 %v366, %v624
      %628 = vst [vmem:[#allocation2] sm:$0xff] %v627
      // Predicated region
      $region37: #{_lambda_.27} parent=31 // pred_check
        %p629 = pneg %p292
      $region38: #{_lambda_.27} parent=31 // pred_check_branch
        %631 = sbr.rel (%p629) target = $region40
      $region39: #{_lambda_.27} parent=31 // pred_region
        %v632 = vld [vmem:[#allocation2] sm:$0xff]
        %v633 = vld [vmem:[%s2] sm:$0x1]
        %v635 = vperm.slane %v633, 0
        %v637 = vadd.f32 %v632, %v635
        %v638 = vrot.slane %v637, 4
        %v639 = vadd.f32 %v637, %v638
        %v640 = vrot.slane %v639, 2
        %v641 = vadd.f32 %v639, %v640
        %v642 = vrot.slane %v641, 1
        %v643 = vadd.f32 %v641, %v642
        %644 = vst [vmem:[%s291] sm:$0x1] %v643
        %v645 = vmul.f32 %v637, %v637
        %v646 = vrot.slane %v645, 4
        %v647 = vadd.f32 %v645, %v646
        %v648 = vrot.slane %v647, 2
        %v649 = vadd.f32 %v647, %v648
        %v650 = vrot.slane %v649, 1
        %v651 = vadd.f32 %v649, %v650
        %652 = vst [vmem:[%s291 + $0x1] sm:$0x1] %v651
        %v653 = vpack.c.bf16 %v637, %v637
        %654 = vst [vmem:[%s284] sm:$0xf] %v653
      $region40: #{_lambda_.27} parent=31 // pred_fallthru
        _
      %p655 = scmp.lt.s32.totalorder %s21, 3
      %s656 = scalar_select %p655, %s21, 3
      %p657 = scmp.lt.s32.totalorder %s22, 0
      %s658 = scalar_select %p657, %s22, 0
      %s659 = sadd.s32 %s658, %s656
      %s660 = smul.addr %s659, 4
      %s661 = scalar_lea.vmem %s3, %s660
      %p662 = scmp.lt.s32.totalorder %s21, 3
      %s663 = scalar_select %p662, %s21, 3
      %p664 = scmp.lt.s32.totalorder %s22, 0
      %s665 = scalar_select %p664, %s22, 0
      %s666 = sadd.s32 %s665, %s663
      %s667 = smul.addr %s666, 2
      %s668 = scalar_lea.vmem %s4, %s667
      // Predicated region
      $region41: #{_lambda_.27} parent=31 // pred_check
        %p669 = pneg %p132
      $region42: #{_lambda_.27} parent=31 // pred_check_branch
        %671 = sbr.rel (%p669) target = $region44
      $region43: #{_lambda_.27} parent=31 // pred_region
        _
      $region44: #{_lambda_.27} parent=31 // pred_fallthru
        _
      // Predicated region
      $region45: #{_lambda_.27} parent=31 // pred_check
        %p672 = pneg %p160
      $region46: #{_lambda_.27} parent=31 // pred_check_branch
        %674 = sbr.rel (%p672) target = $region48
      $region47: #{_lambda_.27} parent=31 // pred_region
        _
      $region48: #{_lambda_.27} parent=31 // pred_fallthru
        _
    $region32: #{_lambda_.27} parent=5 // pred_fallthru
      _
    %p675 = scmp.le.s32.totalorder 2, %s11
    // Predicated region
    $region49: #{_lambda_.27} parent=5 // pred_check
      %p676 = pneg %p675
    $region50: #{_lambda_.27} parent=5 // pred_check_branch
      %678 = sbr.rel (%p676) target = $region52
    $region51: #{_lambda_.27} parent=5 // pred_region
      %s679 = ssub.s32 %s11, 2
      // Predicated region
      $region53: #{_lambda_.27} parent=51 // pred_check
        %p680 = pneg %p138
      $region54: #{_lambda_.27} parent=51 // pred_check_branch
        %682 = sbr.rel (%p680) target = $region56
      $region55: #{_lambda_.27} parent=51 // pred_region
        %p683 = scmp.lt.s32.totalorder %s24, 3
        %s684 = scalar_select %p683, %s24, 3
        %p685 = scmp.lt.s32.totalorder %s25, 0
        %s686 = scalar_select %p685, %s25, 0
        %s687 = sadd.s32 %s686, %s684
        %s688 = smul.addr %s687, 4
        %s689 = scalar_lea.vmem %s3, %s688
      $region56: #{_lambda_.27} parent=51 // pred_fallthru
        _
      // Predicated region
      $region57: #{_lambda_.27} parent=51 // pred_check
        %p690 = pneg %p166
      $region58: #{_lambda_.27} parent=51 // pred_check_branch
        %692 = sbr.rel (%p690) target = $region60
      $region59: #{_lambda_.27} parent=51 // pred_region
        %p693 = scmp.lt.s32.totalorder %s24, 3
        %s694 = scalar_select %p693, %s24, 3
        %p695 = scmp.lt.s32.totalorder %s25, 0
        %s696 = scalar_select %p695, %s25, 0
        %s697 = sadd.s32 %s696, %s694
        %s698 = smul.addr %s697, 2
        %s699 = scalar_lea.vmem %s4, %s698
      $region60: #{_lambda_.27} parent=51 // pred_fallthru
        _
    $region52: #{_lambda_.27} parent=5 // pred_fallthru
      _
  $region6: #{_lambda_.27} parent=0 // loop_footer
    %s15 = sadd.s32 1, %s11
  $region7: #{_lambda_.27} parent=0 // loop_footer_branch
    %10 = sbr.rel target = $region3
  $region8: #{_lambda_.27} parent=0 // loop_exit
    _

// kernel: _lambda_.29
$region0: #{_lambda_.29}
  #allocation0 [shape = 'u32[]', space=smem, size = 0x4, offset = 0x4, fixed_abs, tag = 'smem constant byte address 0x4 - core index']
  #allocation1 [shape = 'u32[72,128]{1,0:T(1,128)}', space=vmem, size = 0x9000, scoped, tag = 'internal scratch']
  #allocation2 [shape = 'f32[32,128]{1,0:T(8,128)}', space=vmem, size = 0x4000, scoped, tag = 'scratch operand']
  %s0 = inlined_call_operand.vmem [shape: bf16[4,32,256], index: 0, kind: input, shape index: {}]
  %s1 = inlined_call_operand.vmem [shape: bf16[4,256,128], index: 1, kind: input, shape index: {}]
  %s2 = inlined_call_operand.vmem [shape: f32[1,128], index: 2, kind: input, shape index: {}]
  %s3 = inlined_call_operand.vmem [shape: bf16[4,32,128], index: 3, kind: output, shape index: {0}]
  %s4 = inlined_call_operand.vmem [shape: f32[4,1,2,128], index: 4, kind: output, shape index: {1}]
  %5 = xla_tuple %s3, %s4
  %s6 = sld [smem:[#allocation0]]
  $region61: #{_lambda_.29} parent=0
    _
  %s8 = ssub.s32 1, %s6
  %s9 = scalar_select 0, %s8, %s6
  loop: start=0, step=1, limit=6
  $region2: #{_lambda_.29} parent=0 // loop_pre_header
    _
  $region3: #{_lambda_.29} parent=0 // loop_header
    %s11 = sphi 0, %s15
    %p12 = scmp.ge.s32.totalorder %s11, 6
    %s18 = sphi 0, %s37
    %s19 = sphi 0, %s33
    %s20 = sphi 0, %s29
    %s21 = sphi 0, %s18
    %s22 = sphi 0, %s19
    %s23 = sphi 0, %s20
    %s24 = sphi 0, %s21
    %s25 = sphi 0, %s22
    %s26 = sphi 0, %s23
    %s44 = sphi 0, %s46
    %s47 = sphi 0, %s44
    %s48 = sphi 0, %s47
    %s64 = sphi 0, %s48
    %s70 = sphi 0, %s72
    %s73 = sphi 0, %s70
    %s74 = sphi 0, %s73
    %s90 = sphi 0, %s74
    %s94 = sphi 0, %s94
    %s96 = sphi 0, %s94
    %s97 = sphi 0, %s96
    %s111 = sphi 0, %s97
    %s119 = sphi 0, %s121
    %s122 = sphi 0, %s119
    %s123 = sphi 0, %s122
    %s139 = sphi 0, %s123
    %s147 = sphi 0, %s149
    %s150 = sphi 0, %s147
    %s151 = sphi 0, %s150
    %s167 = sphi 0, %s151
  $region4: #{_lambda_.29} parent=0 // loop_header_branch
    %14 = sbr.rel (%p12) target = $region8
  $region5: #{_lambda_.29} parent=0 // loop_body
    %s16 = ssub.s32 %s11, 1
    %s17 = ssub.s32 %s11, 2
    %s27 = sadd.s32 1, %s20
    %p28 = scmp.ge.s32.totalorder %s27, 1
    %s29 = scalar_select %p28, 0, %s27
    %s30 = sadd.s32 1, %s19
    %s31 = scalar_select %p28, %s30, %s19
    %p32 = scmp.ge.s32.totalorder %s31, 1
    %s33 = scalar_select %p32, 0, %s31
    %s34 = sadd.s32 1, %s18
    %s35 = scalar_select %p32, %s34, %s18
    %p36 = scmp.ge.s32.totalorder %s35, 4
    %s37 = scalar_select %p36, 0, %s35
    %s38 = ssub.s32 %s18, %s37
    %s39 = ssub.s32 %s19, %s33
    %s40 = sor.u32 %s38, %s39
    %s41 = ssub.s32 %s20, %s29
    %s42 = sor.u32 %s40, %s41
    %p43 = scmp.eq.s32.totalorder %s42, 0
    %s45 = sadd.s32 %s44, 1
    %s46 = scalar_select %p43, %s44, %s45
    %p49 = pneg %p43
    %p50 = scmp.eq.s32.totalorder %s11, 3
    %p51 = por %p49, %p50
    %p52 = scmp.ne.s32.totalorder %s44, %s47
    %p53 = scmp.eq.s32.totalorder %s11, 0
    %p54 = por %p52, %p53
    %p55 = scmp.ne.s32.totalorder %s44, %s47
    %p56 = scmp.eq.s32.totalorder %s16, 3
    %p57 = por %p55, %p56
    %p58 = scmp.ne.s32.totalorder %s47, %s48
    %p59 = scmp.eq.s32.totalorder %s16, 0
    %p60 = por %p58, %p59
    %p61 = scmp.ne.s32.totalorder %s47, %s48
    %p62 = scmp.eq.s32.totalorder %s17, 3
    %p63 = por %p61, %p62
    %p65 = scmp.ne.s32.totalorder %s48, %s64
    %p66 = scmp.eq.s32.totalorder %s17, 0
    %p67 = por %p65, %p66
    %s68 = ssub.s32 %s18, %s37
    %p69 = scmp.eq.s32.totalorder %s68, 0
    %s71 = sadd.s32 %s70, 1
    %s72 = scalar_select %p69, %s70, %s71
    %p75 = pneg %p69
    %p76 = scmp.eq.s32.totalorder %s11, 3
    %p77 = por %p75, %p76
    %p78 = scmp.ne.s32.totalorder %s70, %s73
    %p79 = scmp.eq.s32.totalorder %s11, 0
    %p80 = por %p78, %p79
    %p81 = scmp.ne.s32.totalorder %s70, %s73
    %p82 = scmp.eq.s32.totalorder %s16, 3
    %p83 = por %p81, %p82
    %p84 = scmp.ne.s32.totalorder %s73, %s74
    %p85 = scmp.eq.s32.totalorder %s16, 0
    %p86 = por %p84, %p85
    %p87 = scmp.ne.s32.totalorder %s73, %s74
    %p88 = scmp.eq.s32.totalorder %s17, 3
    %p89 = por %p87, %p88
    %p91 = scmp.ne.s32.totalorder %s74, %s90
    %p92 = scmp.eq.s32.totalorder %s17, 0
    %p93 = por %p91, %p92
    %s95 = sadd.s32 %s94, 1
    %p98 = scmp.eq.s32.totalorder %s11, 3
    %p99 = scmp.ne.s32.totalorder %s94, %s96
    %p100 = scmp.eq.s32.totalorder %s11, 0
    %p101 = por %p99, %p100
    %p102 = scmp.ne.s32.totalorder %s94, %s96
    %p103 = scmp.eq.s32.totalorder %s16, 3
    %p104 = por %p102, %p103
    %p105 = scmp.ne.s32.totalorder %s96, %s97
    %p106 = scmp.eq.s32.totalorder %s16, 0
    %p107 = por %p105, %p106
    %p108 = scmp.ne.s32.totalorder %s96, %s97
    %p109 = scmp.eq.s32.totalorder %s17, 3
    %p110 = por %p108, %p109
    %p112 = scmp.ne.s32.totalorder %s97, %s111
    %p113 = scmp.eq.s32.totalorder %s17, 0
    %p114 = por %p112, %p113
    %s115 = ssub.s32 %s18, %s37
    %s116 = ssub.s32 %s19, %s33
    %s117 = sor.u32 %s115, %s116
    %p118 = scmp.eq.s32.totalorder %s117, 0
    %s120 = sadd.s32 %s119, 1
    %s121 = scalar_select %p118, %s119, %s120
    %p124 = pneg %p118
    %p125 = scmp.eq.s32.totalorder %s11, 3
    %p126 = por %p124, %p125
    %p127 = scmp.ne.s32.totalorder %s119, %s122
    %p128 = scmp.eq.s32.totalorder %s11, 0
    %p129 = por %p127, %p128
    %p130 = scmp.ne.s32.totalorder %s119, %s122
    %p131 = scmp.eq.s32.totalorder %s16, 3
    %p132 = por %p130, %p131
    %p133 = scmp.ne.s32.totalorder %s122, %s123
    %p134 = scmp.eq.s32.totalorder %s16, 0
    %p135 = por %p133, %p134
    %p136 = scmp.ne.s32.totalorder %s122, %s123
    %p137 = scmp.eq.s32.totalorder %s17, 3
    %p138 = por %p136, %p137
    %p140 = scmp.ne.s32.totalorder %s123, %s139
    %p141 = scmp.eq.s32.totalorder %s17, 0
    %p142 = por %p140, %p141
    %s143 = ssub.s32 %s18, %s37
    %s144 = ssub.s32 %s19, %s33
    %s145 = sor.u32 %s143, %s144
    %p146 = scmp.eq.s32.totalorder %s145, 0
    %s148 = sadd.s32 %s147, 1
    %s149 = scalar_select %p146, %s147, %s148
    %p152 = pneg %p146
    %p153 = scmp.eq.s32.totalorder %s11, 3
    %p154 = por %p152, %p153
    %p155 = scmp.ne.s32.totalorder %s147, %s150
    %p156 = scmp.eq.s32.totalorder %s11, 0
    %p157 = por %p155, %p156
    %p158 = scmp.ne.s32.totalorder %s147, %s150
    %p159 = scmp.eq.s32.totalorder %s16, 3
    %p160 = por %p158, %p159
    %p161 = scmp.ne.s32.totalorder %s150, %s151
    %p162 = scmp.eq.s32.totalorder %s16, 0
    %p163 = por %p161, %p162
    %p164 = scmp.ne.s32.totalorder %s150, %s151
    %p165 = scmp.eq.s32.totalorder %s17, 3
    %p166 = por %p164, %p165
    %p168 = scmp.ne.s32.totalorder %s151, %s167
    %p169 = scmp.eq.s32.totalorder %s17, 0
    %p170 = por %p168, %p169
    %p171 = scmp.le.s32.totalorder 1, %s11
    %p172 = scmp.lt.s32.totalorder %s11, 5
    %p173 = pnand %p171, %p172
    %p174 = pneg %p173
    // Predicated region
    $region9: #{_lambda_.29} parent=5 // pred_check
      _
    $region10: #{_lambda_.29} parent=5 // pred_check_branch
      %176 = sbr.rel (%p173) target = $region12
    $region11: #{_lambda_.29} parent=5 // pred_region
      %s177 = ssub.s32 %s11, 1
      // Predicated region
      $region13: #{_lambda_.29} parent=11 // pred_check
        %p178 = pneg %p107
      $region14: #{_lambda_.29} parent=11 // pred_check_branch
        %180 = sbr.rel (%p178) target = $region16
      $region15: #{_lambda_.29} parent=11 // pred_region
        _
      $region16: #{_lambda_.29} parent=11 // pred_fallthru
        _
    $region12: #{_lambda_.29} parent=5 // pred_fallthru
      _
    %p181 = scmp.lt.s32.totalorder %s11, 4
    // Predicated region
    $region17: #{_lambda_.29} parent=5 // pred_check
      %p182 = pneg %p181
    $region18: #{_lambda_.29} parent=5 // pred_check_branch
      %184 = sbr.rel (%p182) target = $region20
    $region19: #{_lambda_.29} parent=5 // pred_region
      // Predicated region
      $region21: #{_lambda_.29} parent=19 // pred_check
        %p185 = pneg %p54
      $region22: #{_lambda_.29} parent=19 // pred_check_branch
        %187 = sbr.rel (%p185) target = $region24
      $region23: #{_lambda_.29} parent=19 // pred_region
        %s188 = smul.u32 4, %s19
        %s189 = smul.u32 2, %s20
        %p190 = scmp.lt.s32.totalorder %s18, 3
        %s191 = scalar_select %p190, %s18, 3
        %p192 = scmp.lt.s32.totalorder %s188, 3
        %s193 = scalar_select %p192, %s188, 3
        %p194 = scmp.lt.s32.totalorder %s189, 1
        %s195 = scalar_select %p194, %s189, 1
        %s196 = smul.addr %s193, 2
        %s197 = sadd.s32 %s195, %s196
        %s198 = smul.addr %s191, 8
        %s199 = sadd.s32 %s197, %s198
        %s200 = smul.addr %s199, 4
        %s201 = scalar_lea.vmem %s0, %s200
        %s202 = smul.u32 4, %s19
        %s203 = smul.u32 2, %s20
      $region24: #{_lambda_.29} parent=19 // pred_fallthru
        _
      // Predicated region
      $region25: #{_lambda_.29} parent=19 // pred_check
        %p204 = pneg %p80
      $region26: #{_lambda_.29} parent=19 // pred_check_branch
        %206 = sbr.rel (%p204) target = $region28
      $region27: #{_lambda_.29} parent=19 // pred_region
        %p207 = scmp.lt.s32.totalorder %s18, 3
        %s208 = scalar_select %p207, %s18, 3
        %s209 = smul.addr %s208, 32
        %s210 = smul.addr %s209, 4
        %s211 = scalar_lea.vmem %s1, %s210
      $region28: #{_lambda_.29} parent=19 // pred_fallthru
        _
    $region20: #{_lambda_.29} parent=5 // pred_fallthru
      _
    %p212 = scmp.le.s32.totalorder 1, %s11
    %p213 = scmp.lt.s32.totalorder %s11, 5
    %p214 = pnand %p212, %p213
    %p215 = pneg %p214
    // Predicated region
    $region29: #{_lambda_.29} parent=5 // pred_check
      _
    $region30: #{_lambda_.29} parent=5 // pred_check_branch
      %217 = sbr.rel (%p214) target = $region32
    $region31: #{_lambda_.29} parent=5 // pred_region
      %s218 = ssub.s32 %s11, 1
      %s219 = smul.u32 4, %s22
      %s220 = smul.u32 2, %s23
      %p221 = scmp.lt.s32.totalorder %s21, 3
      %s222 = scalar_select %p221, %s21, 3
      %p223 = scmp.lt.s32.totalorder %s219, 3
      %s224 = scalar_select %p223, %s219, 3
      %p225 = scmp.lt.s32.totalorder %s220, 1
      %s226 = scalar_select %p225, %s220, 1
      %s227 = smul.addr %s224, 2
      %s228 = sadd.s32 %s226, %s227
      %s229 = smul.addr %s222, 8
      %s230 = sadd.s32 %s228, %s229
      %s231 = smul.addr %s230, 4
      %s232 = scalar_lea.vmem %s0, %s231
      %p233 = pneg %p60
      %p234 = pneg %p57
      %p235 = scmp.lt.s32.totalorder %s21, 3
      %s236 = scalar_select %p235, %s21, 3
      %s237 = smul.addr %s236, 32
      %s238 = smul.addr %s237, 4
      %s239 = scalar_lea.vmem %s1, %s238
      %p240 = pneg %p86
      %p241 = pneg %p83
      %p242 = pneg %p107
      %p243 = pneg %p104
      %p244 = pneg %p135
      %p245 = pneg %p132
      %s246 = smul.u32 4, %s22
      %p247 = scmp.lt.s32.totalorder %s21, 3
      %s248 = scalar_select %p247, %s21, 3
      %p249 = scmp.lt.s32.totalorder %s246, 3
      %s250 = scalar_select %p249, %s246, 3
      %s251 = smul.addr %s248, 4
      %s252 = sadd.s32 %s250, %s251
      %s253 = smul.addr %s252, 4
      %s254 = scalar_lea.vmem %s3, %s253
      %p255 = pneg %p163
      %p256 = pneg %p160
      %p257 = scmp.lt.s32.totalorder %s21, 3
      %s258 = scalar_select %p257, %s21, 3
      %p259 = scmp.lt.s32.totalorder %s22, 0
      %s260 = scalar_select %p259, %s22, 0
      %s261 = sadd.s32 %s260, %s258
      %s262 = smul.addr %s261, 2
      %s263 = scalar_lea.vmem %s4, %s262
      %s264 = smul.u32 4, %s22
      %s265 = smul.u32 2, %s23
      %p266 = scmp.lt.s32.totalorder %s21, 3
      %s267 = scalar_select %p266, %s21, 3
      %p268 = scmp.lt.s32.totalorder %s264, 3
      %s269 = scalar_select %p268, %s264, 3
      %p270 = scmp.lt.s32.totalorder %s265, 1
      %s271 = scalar_select %p270, %s265, 1
      %s272 = smul.addr %s269, 2
      %s273 = sadd.s32 %s271, %s272
      %s274 = smul.addr %s267, 8
      %s275 = sadd.s32 %s273, %s274
      %s276 = smul.addr %s275, 4
      %s277 = scalar_lea.vmem %s0, %s276
      %s278 = smul.u32 4, %s22
      %s279 = smul.u32 2, %s23
      %p280 = scmp.lt.s32.totalorder %s21, 3
      %s281 = scalar_select %p280, %s21, 3
      %s282 = smul.addr %s281, 32
      %s283 = smul.addr %s282, 4
      %s284 = scalar_lea.vmem %s1, %s283
      %s285 = smul.u32 4, %s22
      %p286 = scmp.lt.s32.totalorder %s21, 3
      %s287 = scalar_select %p286, %s21, 3
      %p288 = scmp.lt.s32.totalorder %s285, 3
      %s289 = scalar_select %p288, %s285, 3
      %s290 = smul.addr %s287, 4
      %s291 = sadd.s32 %s289, %s290
      %s292 = smul.addr %s291, 4
      %s293 = scalar_lea.vmem %s3, %s292
      %s294 = smul.u32 4, %s22
      %p295 = scmp.lt.s32.totalorder %s21, 3
      %s296 = scalar_select %p295, %s21, 3
      %p297 = scmp.lt.s32.totalorder %s22, 0
      %s298 = scalar_select %p297, %s22, 0
      %s299 = sadd.s32 %s298, %s296
      %s300 = smul.addr %s299, 2
      %s301 = scalar_lea.vmem %s4, %s300
      %p302 = scmp.eq.s32.totalorder %s23, 0
      // Predicated region
      $region33: #{_lambda_.29} parent=31 // pred_check
        %p303 = pneg %p302
      $region34: #{_lambda_.29} parent=31 // pred_check_branch
        %305 = sbr.rel (%p303) target = $region36
      $region35: #{_lambda_.29} parent=31 // pred_region
        %306 = vst [vmem:[#allocation2] sm:$0xff] 0.0
        %307 = vst [vmem:[#allocation2 + $0x8] sm:$0xff] 0.0
        %308 = vst [vmem:[#allocation2 + $0x10] sm:$0xff] 0.0
        %309 = vst [vmem:[#allocation2 + $0x18] sm:$0xff] 0.0
      $region36: #{_lambda_.29} parent=31 // pred_fallthru
        _
      %s310 = smul.u32 %s23, 256
      %s311 = sshra.s32 %s310, 3
      %s312 = sand.u32 %s310, 7
      %s313 = smul.addr %s311, 4
      %s314 = scalar_lea.vmem %s284, %s313
      %v315 = vld [vmem:[%s314] sm:$0xf]
      %v316 = vld [vmem:[%s314 + $0x4] sm:$0xf]
      %v317 = vld [vmem:[%s314 + $0x8] sm:$0xf]
      %v318 = vld [vmem:[%s314 + $0xc] sm:$0xf]
      %v319 = vld [vmem:[%s314 + $0x10] sm:$0xf]
      %v320 = vld [vmem:[%s314 + $0x14] sm:$0xf]
      %v321 = vld [vmem:[%s314 + $0x18] sm:$0xf]
      %v322 = vld [vmem:[%s314 + $0x1c] sm:$0xf]
      %v323 = vld [vmem:[%s314 + $0x20] sm:$0xf]
      %v324 = vld [vmem:[%s314 + $0x24] sm:$0xf]
      %v325 = vld [vmem:[%s314 + $0x28] sm:$0xf]
      %v326 = vld [vmem:[%s314 + $0x2c] sm:$0xf]
      %v327 = vld [vmem:[%s314 + $0x30] sm:$0xf]
      %v328 = vld [vmem:[%s314 + $0x34] sm:$0xf]
      %v329 = vld [vmem:[%s314 + $0x38] sm:$0xf]
      %v330 = vld [vmem:[%s314 + $0x3c] sm:$0xf]
      %v331 = vld [vmem:[%s314 + $0x40] sm:$0xf]
      %v332 = vld [vmem:[%s314 + $0x44] sm:$0xf]
      %v333 = vld [vmem:[%s314 + $0x48] sm:$0xf]
      %v334 = vld [vmem:[%s314 + $0x4c] sm:$0xf]
      %v335 = vld [vmem:[%s314 + $0x50] sm:$0xf]
      %v336 = vld [vmem:[%s314 + $0x54] sm:$0xf]
      %v337 = vld [vmem:[%s314 + $0x58] sm:$0xf]
      %v338 = vld [vmem:[%s314 + $0x5c] sm:$0xf]
      %v339 = vld [vmem:[%s314 + $0x60] sm:$0xf]
      %v340 = vld [vmem:[%s314 + $0x64] sm:$0xf]
      %v341 = vld [vmem:[%s314 + $0x68] sm:$0xf]
      %v342 = vld [vmem:[%s314 + $0x6c] sm:$0xf]
      %v343 = vld [vmem:[%s314 + $0x70] sm:$0xf]
      %v344 = vld [vmem:[%s314 + $0x74] sm:$0xf]
      %v345 = vld [vmem:[%s314 + $0x78] sm:$0xf]
      %v346 = vld [vmem:[%s314 + $0x7c] sm:$0xf]
      %v347 = vld [vmem:[#allocation2] sm:$0xff]
      %v348 = vld [vmem:[#allocation2 + $0x8] sm:$0xff]
      %v349 = vld [vmem:[#allocation2 + $0x10] sm:$0xff]
      %v350 = vld [vmem:[#allocation2 + $0x18] sm:$0xff]
      %v351 = vld [vmem:[%s277] sm:$0xff]
      %v352 = vld [vmem:[%s277 + $0x8] sm:$0xff]
      %v353 = vld [vmem:[%s277 + $0x10] sm:$0xff]
      %v354 = vld [vmem:[%s277 + $0x18] sm:$0xff]
      %v359 = vunpack.c.l.b16 %v351
      %v360 = vunpack.c.h.b16 %v351
      %v361 = vunpack.c.l.b16 %v352
      %v362 = vunpack.c.h.b16 %v352
      %v363 = vunpack.c.l.b16 %v353
      %v364 = vunpack.c.h.b16 %v353
      %v365 = vunpack.c.l.b16 %v354
      %v366 = vunpack.c.h.b16 %v354
      %v367 = vpack.c.b16 %v361, %v359
      %v368 = vpack.c.b16 %v362, %v360
      %v369 = vpack.c.b16 %v365, %v363
      %v370 = vpack.c.b16 %v366, %v364
      %v407 = vunpack.c.l.b16 %v315
      %v408 = vunpack.c.l.b16 %v316
      %v409 = vunpack.c.l.b16 %v317
      %v410 = vunpack.c.l.b16 %v318
      %v411 = vunpack.c.l.b16 %v319
      %v412 = vunpack.c.l.b16 %v320
      %v413 = vunpack.c.l.b16 %v321
      %v414 = vunpack.c.l.b16 %v322
      %v415 = vunpack.c.l.b16 %v323
      %v416 = vunpack.c.l.b16 %v324
      %v417 = vunpack.c.l.b16 %v325
      %v418 = vunpack.c.l.b16 %v326
      %v419 = vunpack.c.l.b16 %v327
      %v420 = vunpack.c.l.b16 %v328
      %v421 = vunpack.c.l.b16 %v329
      %v422 = vunpack.c.l.b16 %v330
      %v423 = vunpack.c.l.b16 %v331
      %v424 = vunpack.c.l.b16 %v332
      %v425 = vunpack.c.l.b16 %v333
      %v426 = vunpack.c.l.b16 %v334
      %v427 = vunpack.c.l.b16 %v335
      %v428 = vunpack.c.l.b16 %v336
      %v429 = vunpack.c.l.b16 %v337
      %v430 = vunpack.c.l.b16 %v338
      %v431 = vunpack.c.l.b16 %v339
      %v432 = vunpack.c.l.b16 %v340
      %v433 = vunpack.c.l.b16 %v341
      %v434 = vunpack.c.l.b16 %v342
      %v435 = vunpack.c.l.b16 %v343
      %v436 = vunpack.c.l.b16 %v344
      %v437 = vunpack.c.l.b16 %v345
      %v438 = vunpack.c.l.b16 %v346
      %v439 = vpack.c.b16 %v408, %v407
      %v440 = vpack.c.b16 %v410, %v409
      %v441 = vpack.c.b16 %v412, %v411
      %v442 = vpack.c.b16 %v414, %v413
      %v443 = vpack.c.b16 %v416, %v415
      %v444 = vpack.c.b16 %v418, %v417
      %v445 = vpack.c.b16 %v420, %v419
      %v446 = vpack.c.b16 %v422, %v421
      %v447 = vpack.c.b16 %v424, %v423
      %v448 = vpack.c.b16 %v426, %v425
      %v449 = vpack.c.b16 %v428, %v427
      %v450 = vpack.c.b16 %v430, %v429
      %v451 = vpack.c.b16 %v432, %v431
      %v452 = vpack.c.b16 %v434, %v433
      %v453 = vpack.c.b16 %v436, %v435
      %v454 = vpack.c.b16 %v438, %v437
      %471 = vmatpush.bf16.msra.mxu0 %v446
      %472 = vmatpush.bf16.msra.mxu0 %v445
      %473 = vmatpush.bf16.msra.mxu0 %v444
      %474 = vmatpush.bf16.msra.mxu0 %v443
      %475 = vmatpush.bf16.msra.mxu0 %v442
      %476 = vmatpush.bf16.msra.mxu0 %v441
      %477 = vmatpush.bf16.msra.mxu0 %v440
      %478 = vmatpush.bf16.msra.mxu0 %v439
      %479 = vmatmul.bf16.gmra.mxu0 %v367
      %v480 = vpop.f32.mrf.mxu0
      %v481 = vadd.f32 0.0, %v480
      %v482 = vpop.f32.mrf.mxu0
      %v483 = vadd.f32 0.0, %v482
      %484 = vmatmul.bf16.gmra.mxu0 %v369
      %v485 = vpop.f32.mrf.mxu0
      %v486 = vadd.f32 0.0, %v485
      %v487 = vpop.f32.mrf.mxu0
      %v488 = vadd.f32 0.0, %v487
      %489 = vdwg.mxu0
      %490 = vmatpush.bf16.msra.mxu0 %v454
      %491 = vmatpush.bf16.msra.mxu0 %v453
      %492 = vmatpush.bf16.msra.mxu0 %v452
      %493 = vmatpush.bf16.msra.mxu0 %v451
      %494 = vmatpush.bf16.msra.mxu0 %v450
      %495 = vmatpush.bf16.msra.mxu0 %v449
      %496 = vmatpush.bf16.msra.mxu0 %v448
      %497 = vmatpush.bf16.msra.mxu0 %v447
      %498 = vmatmul.bf16.gmra.mxu0 %v368
      %v499 = vpop.f32.mrf.mxu0
      %v500 = vadd.f32 %v481, %v499
      %v501 = vpop.f32.mrf.mxu0
      %v502 = vadd.f32 %v483, %v501
      %503 = vmatmul.bf16.gmra.mxu0 %v370
      %v504 = vpop.f32.mrf.mxu0
      %v505 = vadd.f32 %v486, %v504
      %v506 = vpop.f32.mrf.mxu0
      %v507 = vadd.f32 %v488, %v506
      %508 = vdwg.mxu0
      %v509 = vadd.f32 %v347, %v500
      %v510 = vadd.f32 %v348, %v502
      %v511 = vadd.f32 %v349, %v505
      %v512 = vadd.f32 %v350, %v507
      %513 = vst [vmem:[#allocation2] sm:$0xff] %v509
      %514 = vst [vmem:[#allocation2 + $0x8] sm:$0xff] %v510
      %515 = vst [vmem:[#allocation2 + $0x10] sm:$0xff] %v511
      %516 = vst [vmem:[#allocation2 + $0x18] sm:$0xff] %v512
      // Predicated region
      $region37: #{_lambda_.29} parent=31 // pred_check
        %p517 = pneg %p302
      $region38: #{_lambda_.29} parent=31 // pred_check_branch
        %519 = sbr.rel (%p517) target = $region40
      $region39: #{_lambda_.29} parent=31 // pred_region
        %v520 = vld [vmem:[#allocation2] sm:$0xff]
        %v521 = vld [vmem:[#allocation2 + $0x8] sm:$0xff]
        %v522 = vld [vmem:[#allocation2 + $0x10] sm:$0xff]
        %v523 = vld [vmem:[#allocation2 + $0x18] sm:$0xff]
        %v524 = vld [vmem:[%s2] sm:$0x1]
        %v526 = vperm.slane %v524, 0
        %v528 = vadd.f32 %v520, %v526
        %v529 = vadd.f32 %v521, %v526
        %v530 = vadd.f32 %v522, %v526
        %v531 = vadd.f32 %v523, %v526
        %v532 = vadd.f32 %v528, %v529
        %v533 = vadd.f32 %v532, %v530
        %v534 = vadd.f32 %v533, %v531
        %v535 = vrot.slane %v534, 4
        %v536 = vadd.f32 %v534, %v535
        %v537 = vrot.slane %v536, 2
        %v538 = vadd.f32 %v536, %v537
        %v539 = vrot.slane %v538, 1
        %v540 = vadd.f32 %v538, %v539
        %541 = vst [vmem:[%s301] sm:$0x1] %v540
        %v542 = vmul.f32 %v528, %v528
        %v543 = vmul.f32 %v529, %v529
        %v544 = vmul.f32 %v530, %v530
        %v545 = vmul.f32 %v531, %v531
        %v546 = vadd.f32 %v542, %v543
        %v547 = vadd.f32 %v546, %v544
        %v548 = vadd.f32 %v547, %v545
        %v549 = vrot.slane %v548, 4
        %v550 = vadd.f32 %v548, %v549
        %v551 = vrot.slane %v550, 2
        %v552 = vadd.f32 %v550, %v551
        %v553 = vrot.slane %v552, 1
        %v554 = vadd.f32 %v552, %v553
        %555 = vst [vmem:[%s301 + $0x1] sm:$0x1] %v554
        %v556 = vpack.c.bf16 %v528, %v528
        %v557 = vpack.c.bf16 %v529, %v529
        %v558 = vpack.c.bf16 %v530, %v530
        %v559 = vpack.c.bf16 %v531, %v531
        %560 = vst [vmem:[%s293] sm:$0xf] %v556
        %561 = vst [vmem:[%s293 + $0x4] sm:$0xf] %v557
        %562 = vst [vmem:[%s293 + $0x8] sm:$0xf] %v558
        %563 = vst [vmem:[%s293 + $0xc] sm:$0xf] %v559
      $region40: #{_lambda_.29} parent=31 // pred_fallthru
        _
      %s564 = smul.u32 4, %s22
      %p565 = scmp.lt.s32.totalorder %s21, 3
      %s566 = scalar_select %p565, %s21, 3
      %p567 = scmp.lt.s32.totalorder %s564, 3
      %s568 = scalar_select %p567, %s564, 3
      %s569 = smul.addr %s566, 4
      %s570 = sadd.s32 %s568, %s569
      %s571 = smul.addr %s570, 4
      %s572 = scalar_lea.vmem %s3, %s571
      %p573 = scmp.lt.s32.totalorder %s21, 3
      %s574 = scalar_select %p573, %s21, 3
      %p575 = scmp.lt.s32.totalorder %s22, 0
      %s576 = scalar_select %p575, %s22, 0
      %s577 = sadd.s32 %s576, %s574
      %s578 = smul.addr %s577, 2
      %s579 = scalar_lea.vmem %s4, %s578
      // Predicated region
      $region41: #{_lambda_.29} parent=31 // pred_check
        %p580 = pneg %p132
      $region42: #{_lambda_.29} parent=31 // pred_check_branch
        %582 = sbr.rel (%p580) target = $region44
      $region43: #{_lambda_.29} parent=31 // pred_region
        %s583 = smul.u32 4, %s22
      $region44: #{_lambda_.29} parent=31 // pred_fallthru
        _
      // Predicated region
      $region45: #{_lambda_.29} parent=31 // pred_check
        %p584 = pneg %p160
      $region46: #{_lambda_.29} parent=31 // pred_check_branch
        %586 = sbr.rel (%p584) target = $region48
      $region47: #{_lambda_.29} parent=31 // pred_region
        _
      $region48: #{_lambda_.29} parent=31 // pred_fallthru
        _
    $region32: #{_lambda_.29} parent=5 // pred_fallthru
      _
    %p587 = scmp.le.s32.totalorder 2, %s11
    // Predicated region
    $region49: #{_lambda_.29} parent=5 // pred_check
      %p588 = pneg %p587
    $region50: #{_lambda_.29} parent=5 // pred_check_branch
      %590 = sbr.rel (%p588) target = $region52
    $region51: #{_lambda_.29} parent=5 // pred_region
      %s591 = ssub.s32 %s11, 2
      // Predicated region
      $region53: #{_lambda_.29} parent=51 // pred_check
        %p592 = pneg %p138
      $region54: #{_lambda_.29} parent=51 // pred_check_branch
        %594 = sbr.rel (%p592) target = $region56
      $region55: #{_lambda_.29} parent=51 // pred_region
        %s595 = smul.u32 4, %s25
        %p596 = scmp.lt.s32.totalorder %s24, 3
        %s597 = scalar_select %p596, %s24, 3
        %p598 = scmp.lt.s32.totalorder %s595, 3
        %s599 = scalar_select %p598, %s595, 3
        %s600 = smul.addr %s597, 4
        %s601 = sadd.s32 %s599, %s600
        %s602 = smul.addr %s601, 4
        %s603 = scalar_lea.vmem %s3, %s602
      $region56: #{_lambda_.29} parent=51 // pred_fallthru
        _
      // Predicated region
      $region57: #{_lambda_.29} parent=51 // pred_check
        %p604 = pneg %p166
      $region58: #{_lambda_.29} parent=51 // pred_check_branch
        %606 = sbr.rel (%p604) target = $region60
      $region59: #{_lambda_.29} parent=51 // pred_region
        %p607 = scmp.lt.s32.totalorder %s24, 3
        %s608 = scalar_select %p607, %s24, 3
        %p609 = scmp.lt.s32.totalorder %s25, 0
        %s610 = scalar_select %p609, %s25, 0
        %s611 = sadd.s32 %s610, %s608
        %s612 = smul.addr %s611, 2
        %s613 = scalar_lea.vmem %s4, %s612
      $region60: #{_lambda_.29} parent=51 // pred_fallthru
        _
    $region52: #{_lambda_.29} parent=5 // pred_fallthru
      _
  $region6: #{_lambda_.29} parent=0 // loop_footer
    %s15 = sadd.s32 1, %s11
  $region7: #{_lambda_.29} parent=0 // loop_footer_branch
    %10 = sbr.rel target = $region3
  $region8: #{_lambda_.29} parent=0 // loop_exit
    _

// kernel: _lambda_.31
$region0: #{_lambda_.31}
  #allocation0 [shape = 'u32[]', space=smem, size = 0x4, offset = 0x4, fixed_abs, tag = 'smem constant byte address 0x4 - core index']
  #allocation1 [shape = 'u32[72,128]{1,0:T(1,128)}', space=vmem, size = 0x9000, scoped, tag = 'internal scratch']
  #allocation2 [shape = 'f32[128,128]{1,0:T(8,128)}', space=vmem, size = 0x10000, scoped, tag = 'scratch operand']
  %s0 = inlined_call_operand.vmem [shape: bf16[4,128,128], index: 0, kind: input, shape index: {}]
  %s1 = inlined_call_operand.vmem [shape: bf16[4,128,128], index: 1, kind: input, shape index: {}]
  %s2 = inlined_call_operand.vmem [shape: f32[1,128], index: 2, kind: input, shape index: {}]
  %s3 = inlined_call_operand.vmem [shape: bf16[4,128,128], index: 3, kind: output, shape index: {0}]
  %s4 = inlined_call_operand.vmem [shape: f32[4,1,2,128], index: 4, kind: output, shape index: {1}]
  %5 = xla_tuple %s3, %s4
  %s6 = sld [smem:[#allocation0]]
  $region61: #{_lambda_.31} parent=0
    _
  %s8 = ssub.s32 1, %s6
  %s9 = scalar_select 0, %s8, %s6
  loop: start=0, step=1, limit=6
  $region2: #{_lambda_.31} parent=0 // loop_pre_header
    _
  $region3: #{_lambda_.31} parent=0 // loop_header
    %s11 = sphi 0, %s15
    %p12 = scmp.ge.s32.totalorder %s11, 6
    %s18 = sphi 0, %s37
    %s19 = sphi 0, %s33
    %s20 = sphi 0, %s29
    %s21 = sphi 0, %s18
    %s22 = sphi 0, %s19
    %s23 = sphi 0, %s20
    %s24 = sphi 0, %s21
    %s25 = sphi 0, %s22
    %s26 = sphi 0, %s23
    %s44 = sphi 0, %s46
    %s47 = sphi 0, %s44
    %s48 = sphi 0, %s47
    %s64 = sphi 0, %s48
    %s70 = sphi 0, %s72
    %s73 = sphi 0, %s70
    %s74 = sphi 0, %s73
    %s90 = sphi 0, %s74
    %s94 = sphi 0, %s94
    %s96 = sphi 0, %s94
    %s97 = sphi 0, %s96
    %s111 = sphi 0, %s97
    %s119 = sphi 0, %s121
    %s122 = sphi 0, %s119
    %s123 = sphi 0, %s122
    %s139 = sphi 0, %s123
    %s147 = sphi 0, %s149
    %s150 = sphi 0, %s147
    %s151 = sphi 0, %s150
    %s167 = sphi 0, %s151
  $region4: #{_lambda_.31} parent=0 // loop_header_branch
    %14 = sbr.rel (%p12) target = $region8
  $region5: #{_lambda_.31} parent=0 // loop_body
    %s16 = ssub.s32 %s11, 1
    %s17 = ssub.s32 %s11, 2
    %s27 = sadd.s32 1, %s20
    %p28 = scmp.ge.s32.totalorder %s27, 1
    %s29 = scalar_select %p28, 0, %s27
    %s30 = sadd.s32 1, %s19
    %s31 = scalar_select %p28, %s30, %s19
    %p32 = scmp.ge.s32.totalorder %s31, 1
    %s33 = scalar_select %p32, 0, %s31
    %s34 = sadd.s32 1, %s18
    %s35 = scalar_select %p32, %s34, %s18
    %p36 = scmp.ge.s32.totalorder %s35, 4
    %s37 = scalar_select %p36, 0, %s35
    %s38 = ssub.s32 %s18, %s37
    %s39 = ssub.s32 %s19, %s33
    %s40 = sor.u32 %s38, %s39
    %s41 = ssub.s32 %s20, %s29
    %s42 = sor.u32 %s40, %s41
    %p43 = scmp.eq.s32.totalorder %s42, 0
    %s45 = sadd.s32 %s44, 1
    %s46 = scalar_select %p43, %s44, %s45
    %p49 = pneg %p43
    %p50 = scmp.eq.s32.totalorder %s11, 3
    %p51 = por %p49, %p50
    %p52 = scmp.ne.s32.totalorder %s44, %s47
    %p53 = scmp.eq.s32.totalorder %s11, 0
    %p54 = por %p52, %p53
    %p55 = scmp.ne.s32.totalorder %s44, %s47
    %p56 = scmp.eq.s32.totalorder %s16, 3
    %p57 = por %p55, %p56
    %p58 = scmp.ne.s32.totalorder %s47, %s48
    %p59 = scmp.eq.s32.totalorder %s16, 0
    %p60 = por %p58, %p59
    %p61 = scmp.ne.s32.totalorder %s47, %s48
    %p62 = scmp.eq.s32.totalorder %s17, 3
    %p63 = por %p61, %p62
    %p65 = scmp.ne.s32.totalorder %s48, %s64
    %p66 = scmp.eq.s32.totalorder %s17, 0
    %p67 = por %p65, %p66
    %s68 = ssub.s32 %s18, %s37
    %p69 = scmp.eq.s32.totalorder %s68, 0
    %s71 = sadd.s32 %s70, 1
    %s72 = scalar_select %p69, %s70, %s71
    %p75 = pneg %p69
    %p76 = scmp.eq.s32.totalorder %s11, 3
    %p77 = por %p75, %p76
    %p78 = scmp.ne.s32.totalorder %s70, %s73
    %p79 = scmp.eq.s32.totalorder %s11, 0
    %p80 = por %p78, %p79
    %p81 = scmp.ne.s32.totalorder %s70, %s73
    %p82 = scmp.eq.s32.totalorder %s16, 3
    %p83 = por %p81, %p82
    %p84 = scmp.ne.s32.totalorder %s73, %s74
    %p85 = scmp.eq.s32.totalorder %s16, 0
    %p86 = por %p84, %p85
    %p87 = scmp.ne.s32.totalorder %s73, %s74
    %p88 = scmp.eq.s32.totalorder %s17, 3
    %p89 = por %p87, %p88
    %p91 = scmp.ne.s32.totalorder %s74, %s90
    %p92 = scmp.eq.s32.totalorder %s17, 0
    %p93 = por %p91, %p92
    %s95 = sadd.s32 %s94, 1
    %p98 = scmp.eq.s32.totalorder %s11, 3
    %p99 = scmp.ne.s32.totalorder %s94, %s96
    %p100 = scmp.eq.s32.totalorder %s11, 0
    %p101 = por %p99, %p100
    %p102 = scmp.ne.s32.totalorder %s94, %s96
    %p103 = scmp.eq.s32.totalorder %s16, 3
    %p104 = por %p102, %p103
    %p105 = scmp.ne.s32.totalorder %s96, %s97
    %p106 = scmp.eq.s32.totalorder %s16, 0
    %p107 = por %p105, %p106
    %p108 = scmp.ne.s32.totalorder %s96, %s97
    %p109 = scmp.eq.s32.totalorder %s17, 3
    %p110 = por %p108, %p109
    %p112 = scmp.ne.s32.totalorder %s97, %s111
    %p113 = scmp.eq.s32.totalorder %s17, 0
    %p114 = por %p112, %p113
    %s115 = ssub.s32 %s18, %s37
    %s116 = ssub.s32 %s19, %s33
    %s117 = sor.u32 %s115, %s116
    %p118 = scmp.eq.s32.totalorder %s117, 0
    %s120 = sadd.s32 %s119, 1
    %s121 = scalar_select %p118, %s119, %s120
    %p124 = pneg %p118
    %p125 = scmp.eq.s32.totalorder %s11, 3
    %p126 = por %p124, %p125
    %p127 = scmp.ne.s32.totalorder %s119, %s122
    %p128 = scmp.eq.s32.totalorder %s11, 0
    %p129 = por %p127, %p128
    %p130 = scmp.ne.s32.totalorder %s119, %s122
    %p131 = scmp.eq.s32.totalorder %s16, 3
    %p132 = por %p130, %p131
    %p133 = scmp.ne.s32.totalorder %s122, %s123
    %p134 = scmp.eq.s32.totalorder %s16, 0
    %p135 = por %p133, %p134
    %p136 = scmp.ne.s32.totalorder %s122, %s123
    %p137 = scmp.eq.s32.totalorder %s17, 3
    %p138 = por %p136, %p137
    %p140 = scmp.ne.s32.totalorder %s123, %s139
    %p141 = scmp.eq.s32.totalorder %s17, 0
    %p142 = por %p140, %p141
    %s143 = ssub.s32 %s18, %s37
    %s144 = ssub.s32 %s19, %s33
    %s145 = sor.u32 %s143, %s144
    %p146 = scmp.eq.s32.totalorder %s145, 0
    %s148 = sadd.s32 %s147, 1
    %s149 = scalar_select %p146, %s147, %s148
    %p152 = pneg %p146
    %p153 = scmp.eq.s32.totalorder %s11, 3
    %p154 = por %p152, %p153
    %p155 = scmp.ne.s32.totalorder %s147, %s150
    %p156 = scmp.eq.s32.totalorder %s11, 0
    %p157 = por %p155, %p156
    %p158 = scmp.ne.s32.totalorder %s147, %s150
    %p159 = scmp.eq.s32.totalorder %s16, 3
    %p160 = por %p158, %p159
    %p161 = scmp.ne.s32.totalorder %s150, %s151
    %p162 = scmp.eq.s32.totalorder %s16, 0
    %p163 = por %p161, %p162
    %p164 = scmp.ne.s32.totalorder %s150, %s151
    %p165 = scmp.eq.s32.totalorder %s17, 3
    %p166 = por %p164, %p165
    %p168 = scmp.ne.s32.totalorder %s151, %s167
    %p169 = scmp.eq.s32.totalorder %s17, 0
    %p170 = por %p168, %p169
    %p171 = scmp.le.s32.totalorder 1, %s11
    %p172 = scmp.lt.s32.totalorder %s11, 5
    %p173 = pnand %p171, %p172
    %p174 = pneg %p173
    // Predicated region
    $region9: #{_lambda_.31} parent=5 // pred_check
      _
    $region10: #{_lambda_.31} parent=5 // pred_check_branch
      %176 = sbr.rel (%p173) target = $region12
    $region11: #{_lambda_.31} parent=5 // pred_region
      %s177 = ssub.s32 %s11, 1
      // Predicated region
      $region13: #{_lambda_.31} parent=11 // pred_check
        %p178 = pneg %p107
      $region14: #{_lambda_.31} parent=11 // pred_check_branch
        %180 = sbr.rel (%p178) target = $region16
      $region15: #{_lambda_.31} parent=11 // pred_region
        _
      $region16: #{_lambda_.31} parent=11 // pred_fallthru
        _
    $region12: #{_lambda_.31} parent=5 // pred_fallthru
      _
    %p181 = scmp.lt.s32.totalorder %s11, 4
    // Predicated region
    $region17: #{_lambda_.31} parent=5 // pred_check
      %p182 = pneg %p181
    $region18: #{_lambda_.31} parent=5 // pred_check_branch
      %184 = sbr.rel (%p182) target = $region20
    $region19: #{_lambda_.31} parent=5 // pred_region
      // Predicated region
      $region21: #{_lambda_.31} parent=19 // pred_check
        %p185 = pneg %p54
      $region22: #{_lambda_.31} parent=19 // pred_check_branch
        %187 = sbr.rel (%p185) target = $region24
      $region23: #{_lambda_.31} parent=19 // pred_region
        %s188 = smul.u32 16, %s19
        %p189 = scmp.lt.s32.totalorder %s18, 3
        %s190 = scalar_select %p189, %s18, 3
        %p191 = scmp.lt.s32.totalorder %s188, 15
        %s192 = scalar_select %p191, %s188, 15
        %p193 = scmp.lt.s32.totalorder %s20, 0
        %s194 = scalar_select %p193, %s20, 0
        %s195 = sadd.s32 %s194, %s192
        %s196 = smul.addr %s190, 16
        %s197 = sadd.s32 %s195, %s196
        %s198 = smul.addr %s197, 4
        %s199 = scalar_lea.vmem %s0, %s198
        %s200 = smul.u32 16, %s19
      $region24: #{_lambda_.31} parent=19 // pred_fallthru
        _
      // Predicated region
      $region25: #{_lambda_.31} parent=19 // pred_check
        %p201 = pneg %p80
      $region26: #{_lambda_.31} parent=19 // pred_check_branch
        %203 = sbr.rel (%p201) target = $region28
      $region27: #{_lambda_.31} parent=19 // pred_region
        %p204 = scmp.lt.s32.totalorder %s18, 3
        %s205 = scalar_select %p204, %s18, 3
        %s206 = smul.addr %s205, 16
        %s207 = smul.addr %s206, 4
        %s208 = scalar_lea.vmem %s1, %s207
      $region28: #{_lambda_.31} parent=19 // pred_fallthru
        _
    $region20: #{_lambda_.31} parent=5 // pred_fallthru
      _
    %p209 = scmp.le.s32.totalorder 1, %s11
    %p210 = scmp.lt.s32.totalorder %s11, 5
    %p211 = pnand %p209, %p210
    %p212 = pneg %p211
    // Predicated region
    $region29: #{_lambda_.31} parent=5 // pred_check
      _
    $region30: #{_lambda_.31} parent=5 // pred_check_branch
      %214 = sbr.rel (%p211) target = $region32
    $region31: #{_lambda_.31} parent=5 // pred_region
      %s215 = ssub.s32 %s11, 1
      %s216 = smul.u32 16, %s22
      %p217 = scmp.lt.s32.totalorder %s21, 3
      %s218 = scalar_select %p217, %s21, 3
      %p219 = scmp.lt.s32.totalorder %s216, 15
      %s220 = scalar_select %p219, %s216, 15
      %p221 = scmp.lt.s32.totalorder %s23, 0
      %s222 = scalar_select %p221, %s23, 0
      %s223 = sadd.s32 %s222, %s220
      %s224 = smul.addr %s218, 16
      %s225 = sadd.s32 %s223, %s224
      %s226 = smul.addr %s225, 4
      %s227 = scalar_lea.vmem %s0, %s226
      %p228 = pneg %p60
      %p229 = pneg %p57
      %p230 = scmp.lt.s32.totalorder %s21, 3
      %s231 = scalar_select %p230, %s21, 3
      %s232 = smul.addr %s231, 16
      %s233 = smul.addr %s232, 4
      %s234 = scalar_lea.vmem %s1, %s233
      %p235 = pneg %p86
      %p236 = pneg %p83
      %p237 = pneg %p107
      %p238 = pneg %p104
      %p239 = pneg %p135
      %p240 = pneg %p132
      %s241 = smul.u32 16, %s22
      %p242 = scmp.lt.s32.totalorder %s21, 3
      %s243 = scalar_select %p242, %s21, 3
      %p244 = scmp.lt.s32.totalorder %s241, 15
      %s245 = scalar_select %p244, %s241, 15
      %s246 = smul.addr %s243, 16
      %s247 = sadd.s32 %s245, %s246
      %s248 = smul.addr %s247, 4
      %s249 = scalar_lea.vmem %s3, %s248
      %p250 = pneg %p163
      %p251 = pneg %p160
      %p252 = scmp.lt.s32.totalorder %s21, 3
      %s253 = scalar_select %p252, %s21, 3
      %p254 = scmp.lt.s32.totalorder %s22, 0
      %s255 = scalar_select %p254, %s22, 0
      %s256 = sadd.s32 %s255, %s253
      %s257 = smul.addr %s256, 2
      %s258 = scalar_lea.vmem %s4, %s257
      %s259 = smul.u32 16, %s22
      %p260 = scmp.lt.s32.totalorder %s21, 3
      %s261 = scalar_select %p260, %s21, 3
      %p262 = scmp.lt.s32.totalorder %s259, 15
      %s263 = scalar_select %p262, %s259, 15
      %p264 = scmp.lt.s32.totalorder %s23, 0
      %s265 = scalar_select %p264, %s23, 0
      %s266 = sadd.s32 %s265, %s263
      %s267 = smul.addr %s261, 16
      %s268 = sadd.s32 %s266, %s267
      %s269 = smul.addr %s268, 4
      %s270 = scalar_lea.vmem %s0, %s269
      %s271 = smul.u32 16, %s22
      %p272 = scmp.lt.s32.totalorder %s21, 3
      %s273 = scalar_select %p272, %s21, 3
      %s274 = smul.addr %s273, 16
      %s275 = smul.addr %s274, 4
      %s276 = scalar_lea.vmem %s1, %s275
      %s277 = smul.u32 16, %s22
      %p278 = scmp.lt.s32.totalorder %s21, 3
      %s279 = scalar_select %p278, %s21, 3
      %p280 = scmp.lt.s32.totalorder %s277, 15
      %s281 = scalar_select %p280, %s277, 15
      %s282 = smul.addr %s279, 16
      %s283 = sadd.s32 %s281, %s282
      %s284 = smul.addr %s283, 4
      %s285 = scalar_lea.vmem %s3, %s284
      %s286 = smul.u32 16, %s22
      %p287 = scmp.lt.s32.totalorder %s21, 3
      %s288 = scalar_select %p287, %s21, 3
      %p289 = scmp.lt.s32.totalorder %s22, 0
      %s290 = scalar_select %p289, %s22, 0
      %s291 = sadd.s32 %s290, %s288
      %s292 = smul.addr %s291, 2
      %s293 = scalar_lea.vmem %s4, %s292
      %p294 = scmp.eq.s32.totalorder %s23, 0
      // Predicated region
      $region33: #{_lambda_.31} parent=31 // pred_check
        %p295 = pneg %p294
      $region34: #{_lambda_.31} parent=31 // pred_check_branch
        %297 = sbr.rel (%p295) target = $region36
      $region35: #{_lambda_.31} parent=31 // pred_region
        %298 = vst [vmem:[#allocation2] sm:$0xff] 0.0
        %299 = vst [vmem:[#allocation2 + $0x8] sm:$0xff] 0.0
        %300 = vst [vmem:[#allocation2 + $0x10] sm:$0xff] 0.0
        %301 = vst [vmem:[#allocation2 + $0x18] sm:$0xff] 0.0
        %302 = vst [vmem:[#allocation2 + $0x20] sm:$0xff] 0.0
        %303 = vst [vmem:[#allocation2 + $0x28] sm:$0xff] 0.0
        %304 = vst [vmem:[#allocation2 + $0x30] sm:$0xff] 0.0
        %305 = vst [vmem:[#allocation2 + $0x38] sm:$0xff] 0.0
        %306 = vst [vmem:[#allocation2 + $0x40] sm:$0xff] 0.0
        %307 = vst [vmem:[#allocation2 + $0x48] sm:$0xff] 0.0
        %308 = vst [vmem:[#allocation2 + $0x50] sm:$0xff] 0.0
        %309 = vst [vmem:[#allocation2 + $0x58] sm:$0xff] 0.0
        %310 = vst [vmem:[#allocation2 + $0x60] sm:$0xff] 0.0
        %311 = vst [vmem:[#allocation2 + $0x68] sm:$0xff] 0.0
        %312 = vst [vmem:[#allocation2 + $0x70] sm:$0xff] 0.0
        %313 = vst [vmem:[#allocation2 + $0x78] sm:$0xff] 0.0
      $region36: #{_lambda_.31} parent=31 // pred_fallthru
        _
      %s314 = smul.u32 %s23, 128
      %s315 = sshra.s32 %s314, 3
      %s316 = sand.u32 %s314, 7
      %s317 = smul.addr %s315, 4
      %s318 = scalar_lea.vmem %s276, %s317
      %v319 = vld [vmem:[%s318] sm:$0xf]
      %v320 = vld [vmem:[%s318 + $0x4] sm:$0xf]
      %v321 = vld [vmem:[%s318 + $0x8] sm:$0xf]
      %v322 = vld [vmem:[%s318 + $0xc] sm:$0xf]
      %v323 = vld [vmem:[%s318 + $0x10] sm:$0xf]
      %v324 = vld [vmem:[%s318 + $0x14] sm:$0xf]
      %v325 = vld [vmem:[%s318 + $0x18] sm:$0xf]
      %v326 = vld [vmem:[%s318 + $0x1c] sm:$0xf]
      %v327 = vld [vmem:[%s318 + $0x20] sm:$0xf]
      %v328 = vld [vmem:[%s318 + $0x24] sm:$0xf]
      %v329 = vld [vmem:[%s318 + $0x28] sm:$0xf]
      %v330 = vld [vmem:[%s318 + $0x2c] sm:$0xf]
      %v331 = vld [vmem:[%s318 + $0x30] sm:$0xf]
      %v332 = vld [vmem:[%s318 + $0x34] sm:$0xf]
      %v333 = vld [vmem:[%s318 + $0x38] sm:$0xf]
      %v334 = vld [vmem:[%s318 + $0x3c] sm:$0xf]
      %v335 = vld [vmem:[#allocation2] sm:$0xff]
      %v336 = vld [vmem:[#allocation2 + $0x8] sm:$0xff]
      %v337 = vld [vmem:[#allocation2 + $0x10] sm:$0xff]
      %v338 = vld [vmem:[#allocation2 + $0x18] sm:$0xff]
      %v339 = vld [vmem:[#allocation2 + $0x20] sm:$0xff]
      %v340 = vld [vmem:[#allocation2 + $0x28] sm:$0xff]
      %v341 = vld [vmem:[#allocation2 + $0x30] sm:$0xff]
      %v342 = vld [vmem:[#allocation2 + $0x38] sm:$0xff]
      %v343 = vld [vmem:[#allocation2 + $0x40] sm:$0xff]
      %v344 = vld [vmem:[#allocation2 + $0x48] sm:$0xff]
      %v345 = vld [vmem:[#allocation2 + $0x50] sm:$0xff]
      %v346 = vld [vmem:[#allocation2 + $0x58] sm:$0xff]
      %v347 = vld [vmem:[#allocation2 + $0x60] sm:$0xff]
      %v348 = vld [vmem:[#allocation2 + $0x68] sm:$0xff]
      %v349 = vld [vmem:[#allocation2 + $0x70] sm:$0xff]
      %v350 = vld [vmem:[#allocation2 + $0x78] sm:$0xff]
      %v351 = vld [vmem:[%s270] sm:$0xf]
      %v352 = vld [vmem:[%s270 + $0x4] sm:$0xf]
      %v353 = vld [vmem:[%s270 + $0x8] sm:$0xf]
      %v354 = vld [vmem:[%s270 + $0xc] sm:$0xf]
      %v355 = vld [vmem:[%s270 + $0x10] sm:$0xf]
      %v356 = vld [vmem:[%s270 + $0x14] sm:$0xf]
      %v357 = vld [vmem:[%s270 + $0x18] sm:$0xf]
      %v358 = vld [vmem:[%s270 + $0x1c] sm:$0xf]
      %v359 = vld [vmem:[%s270 + $0x20] sm:$0xf]
      %v360 = vld [vmem:[%s270 + $0x24] sm:$0xf]
      %v361 = vld [vmem:[%s270 + $0x28] sm:$0xf]
      %v362 = vld [vmem:[%s270 + $0x2c] sm:$0xf]
      %v363 = vld [vmem:[%s270 + $0x30] sm:$0xf]
      %v364 = vld [vmem:[%s270 + $0x34] sm:$0xf]
      %v365 = vld [vmem:[%s270 + $0x38] sm:$0xf]
      %v366 = vld [vmem:[%s270 + $0x3c] sm:$0xf]
      %v383 = vunpack.c.l.b16 %v351
      %v384 = vunpack.c.l.b16 %v352
      %v385 = vunpack.c.l.b16 %v353
      %v386 = vunpack.c.l.b16 %v354
      %v387 = vunpack.c.l.b16 %v355
      %v388 = vunpack.c.l.b16 %v356
      %v389 = vunpack.c.l.b16 %v357
      %v390 = vunpack.c.l.b16 %v358
      %v391 = vunpack.c.l.b16 %v359
      %v392 = vunpack.c.l.b16 %v360
      %v393 = vunpack.c.l.b16 %v361
      %v394 = vunpack.c.l.b16 %v362
      %v395 = vunpack.c.l.b16 %v363
      %v396 = vunpack.c.l.b16 %v364
      %v397 = vunpack.c.l.b16 %v365
      %v398 = vunpack.c.l.b16 %v366
      %v399 = vpack.c.b16 %v384, %v383
      %v400 = vpack.c.b16 %v386, %v385
      %v401 = vpack.c.b16 %v388, %v387
      %v402 = vpack.c.b16 %v390, %v389
      %v403 = vpack.c.b16 %v392, %v391
      %v404 = vpack.c.b16 %v394, %v393
      %v405 = vpack.c.b16 %v396, %v395
      %v406 = vpack.c.b16 %v398, %v397
      %v431 = vunpack.c.l.b16 %v319
      %v432 = vunpack.c.l.b16 %v320
      %v433 = vunpack.c.l.b16 %v321
      %v434 = vunpack.c.l.b16 %v322
      %v435 = vunpack.c.l.b16 %v323
      %v436 = vunpack.c.l.b16 %v324
      %v437 = vunpack.c.l.b16 %v325
      %v438 = vunpack.c.l.b16 %v326
      %v439 = vunpack.c.l.b16 %v327
      %v440 = vunpack.c.l.b16 %v328
      %v441 = vunpack.c.l.b16 %v329
      %v442 = vunpack.c.l.b16 %v330
      %v443 = vunpack.c.l.b16 %v331
      %v444 = vunpack.c.l.b16 %v332
      %v445 = vunpack.c.l.b16 %v333
      %v446 = vunpack.c.l.b16 %v334
      %v447 = vpack.c.b16 %v432, %v431
      %v448 = vpack.c.b16 %v434, %v433
      %v449 = vpack.c.b16 %v436, %v435
      %v450 = vpack.c.b16 %v438, %v437
      %v451 = vpack.c.b16 %v440, %v439
      %v452 = vpack.c.b16 %v442, %v441
      %v453 = vpack.c.b16 %v444, %v443
      %v454 = vpack.c.b16 %v446, %v445
      %463 = vmatpush.bf16.msra.mxu0 %v454
      %464 = vmatpush.bf16.msra.mxu0 %v453
      %465 = vmatpush.bf16.msra.mxu0 %v452
      %466 = vmatpush.bf16.msra.mxu0 %v451
      %467 = vmatpush.bf16.msra.mxu0 %v450
      %468 = vmatpush.bf16.msra.mxu0 %v449
      %469 = vmatpush.bf16.msra.mxu0 %v448
      %470 = vmatpush.bf16.msra.mxu0 %v447
      %471 = vmatmul.bf16.gmra.mxu0 %v399
      %v472 = vpop.f32.mrf.mxu0
      %v473 = vadd.f32 0.0, %v472
      %v474 = vpop.f32.mrf.mxu0
      %v475 = vadd.f32 0.0, %v474
      %476 = vmatmul.bf16.gmra.mxu0 %v400
      %v477 = vpop.f32.mrf.mxu0
      %v478 = vadd.f32 0.0, %v477
      %v479 = vpop.f32.mrf.mxu0
      %v480 = vadd.f32 0.0, %v479
      %481 = vmatmul.bf16.gmra.mxu0 %v401
      %v482 = vpop.f32.mrf.mxu0
      %v483 = vadd.f32 0.0, %v482
      %v484 = vpop.f32.mrf.mxu0
      %v485 = vadd.f32 0.0, %v484
      %486 = vmatmul.bf16.gmra.mxu0 %v402
      %v487 = vpop.f32.mrf.mxu0
      %v488 = vadd.f32 0.0, %v487
      %v489 = vpop.f32.mrf.mxu0
      %v490 = vadd.f32 0.0, %v489
      %491 = vmatmul.bf16.gmra.mxu0 %v403
      %v492 = vpop.f32.mrf.mxu0
      %v493 = vadd.f32 0.0, %v492
      %v494 = vpop.f32.mrf.mxu0
      %v495 = vadd.f32 0.0, %v494
      %496 = vmatmul.bf16.gmra.mxu0 %v404
      %v497 = vpop.f32.mrf.mxu0
      %v498 = vadd.f32 0.0, %v497
      %v499 = vpop.f32.mrf.mxu0
      %v500 = vadd.f32 0.0, %v499
      %501 = vmatmul.bf16.gmra.mxu0 %v405
      %v502 = vpop.f32.mrf.mxu0
      %v503 = vadd.f32 0.0, %v502
      %v504 = vpop.f32.mrf.mxu0
      %v505 = vadd.f32 0.0, %v504
      %506 = vmatmul.bf16.gmra.mxu0 %v406
      %v507 = vpop.f32.mrf.mxu0
      %v508 = vadd.f32 0.0, %v507
      %v509 = vpop.f32.mrf.mxu0
      %v510 = vadd.f32 0.0, %v509
      %511 = vdwg.mxu0
      %v512 = vadd.f32 %v335, %v473
      %v513 = vadd.f32 %v336, %v475
      %v514 = vadd.f32 %v337, %v478
      %v515 = vadd.f32 %v338, %v480
      %v516 = vadd.f32 %v339, %v483
      %v517 = vadd.f32 %v340, %v485
      %v518 = vadd.f32 %v341, %v488
      %v519 = vadd.f32 %v342, %v490
      %v520 = vadd.f32 %v343, %v493
      %v521 = vadd.f32 %v344, %v495
      %v522 = vadd.f32 %v345, %v498
      %v523 = vadd.f32 %v346, %v500
      %v524 = vadd.f32 %v347, %v503
      %v525 = vadd.f32 %v348, %v505
      %v526 = vadd.f32 %v349, %v508
      %v527 = vadd.f32 %v350, %v510
      %528 = vst [vmem:[#allocation2] sm:$0xff] %v512
      %529 = vst [vmem:[#allocation2 + $0x8] sm:$0xff] %v513
      %530 = vst [vmem:[#allocation2 + $0x10] sm:$0xff] %v514
      %531 = vst [vmem:[#allocation2 + $0x18] sm:$0xff] %v515
      %532 = vst [vmem:[#allocation2 + $0x20] sm:$0xff] %v516
      %533 = vst [vmem:[#allocation2 + $0x28] sm:$0xff] %v517
      %534 = vst [vmem:[#allocation2 + $0x30] sm:$0xff] %v518
      %535 = vst [vmem:[#allocation2 + $0x38] sm:$0xff] %v519
      %536 = vst [vmem:[#allocation2 + $0x40] sm:$0xff] %v520
      %537 = vst [vmem:[#allocation2 + $0x48] sm:$0xff] %v521
      %538 = vst [vmem:[#allocation2 + $0x50] sm:$0xff] %v522
      %539 = vst [vmem:[#allocation2 + $0x58] sm:$0xff] %v523
      %540 = vst [vmem:[#allocation2 + $0x60] sm:$0xff] %v524
      %541 = vst [vmem:[#allocation2 + $0x68] sm:$0xff] %v525
      %542 = vst [vmem:[#allocation2 + $0x70] sm:$0xff] %v526
      %543 = vst [vmem:[#allocation2 + $0x78] sm:$0xff] %v527
      // Predicated region
      $region37: #{_lambda_.31} parent=31 // pred_check
        %p544 = pneg %p294
      $region38: #{_lambda_.31} parent=31 // pred_check_branch
        %546 = sbr.rel (%p544) target = $region40
      $region39: #{_lambda_.31} parent=31 // pred_region
        %v547 = vld [vmem:[#allocation2] sm:$0xff]
        %v548 = vld [vmem:[#allocation2 + $0x8] sm:$0xff]
        %v549 = vld [vmem:[#allocation2 + $0x10] sm:$0xff]
        %v550 = vld [vmem:[#allocation2 + $0x18] sm:$0xff]
        %v551 = vld [vmem:[#allocation2 + $0x20] sm:$0xff]
        %v552 = vld [vmem:[#allocation2 + $0x28] sm:$0xff]
        %v553 = vld [vmem:[#allocation2 + $0x30] sm:$0xff]
        %v554 = vld [vmem:[#allocation2 + $0x38] sm:$0xff]
        %v555 = vld [vmem:[#allocation2 + $0x40] sm:$0xff]
        %v556 = vld [vmem:[#allocation2 + $0x48] sm:$0xff]
        %v557 = vld [vmem:[#allocation2 + $0x50] sm:$0xff]
        %v558 = vld [vmem:[#allocation2 + $0x58] sm:$0xff]
        %v559 = vld [vmem:[#allocation2 + $0x60] sm:$0xff]
        %v560 = vld [vmem:[#allocation2 + $0x68] sm:$0xff]
        %v561 = vld [vmem:[#allocation2 + $0x70] sm:$0xff]
        %v562 = vld [vmem:[#allocation2 + $0x78] sm:$0xff]
        %v563 = vld [vmem:[%s2] sm:$0x1]
        %v565 = vperm.slane %v563, 0
        %v567 = vadd.f32 %v547, %v565
        %v568 = vadd.f32 %v548, %v565
        %v569 = vadd.f32 %v549, %v565
        %v570 = vadd.f32 %v550, %v565
        %v571 = vadd.f32 %v551, %v565
        %v572 = vadd.f32 %v552, %v565
        %v573 = vadd.f32 %v553, %v565
        %v574 = vadd.f32 %v554, %v565
        %v575 = vadd.f32 %v555, %v565
        %v576 = vadd.f32 %v556, %v565
        %v577 = vadd.f32 %v557, %v565
        %v578 = vadd.f32 %v558, %v565
        %v579 = vadd.f32 %v559, %v565
        %v580 = vadd.f32 %v560, %v565
        %v581 = vadd.f32 %v561, %v565
        %v582 = vadd.f32 %v562, %v565
        %v583 = vadd.f32 %v567, %v568
        %v584 = vadd.f32 %v583, %v569
        %v585 = vadd.f32 %v584, %v570
        %v586 = vadd.f32 %v585, %v571
        %v587 = vadd.f32 %v586, %v572
        %v588 = vadd.f32 %v587, %v573
        %v589 = vadd.f32 %v588, %v574
        %v590 = vadd.f32 %v589, %v575
        %v591 = vadd.f32 %v590, %v576
        %v592 = vadd.f32 %v591, %v577
        %v593 = vadd.f32 %v592, %v578
        %v594 = vadd.f32 %v593, %v579
        %v595 = vadd.f32 %v594, %v580
        %v596 = vadd.f32 %v595, %v581
        %v597 = vadd.f32 %v596, %v582
        %v598 = vrot.slane %v597, 4
        %v599 = vadd.f32 %v597, %v598
        %v600 = vrot.slane %v599, 2
        %v601 = vadd.f32 %v599, %v600
        %v602 = vrot.slane %v601, 1
        %v603 = vadd.f32 %v601, %v602
        %604 = vst [vmem:[%s293] sm:$0x1] %v603
        %v605 = vmul.f32 %v567, %v567
        %v606 = vmul.f32 %v568, %v568
        %v607 = vmul.f32 %v569, %v569
        %v608 = vmul.f32 %v570, %v570
        %v609 = vmul.f32 %v571, %v571
        %v610 = vmul.f32 %v572, %v572
        %v611 = vmul.f32 %v573, %v573
        %v612 = vmul.f32 %v574, %v574
        %v613 = vmul.f32 %v575, %v575
        %v614 = vmul.f32 %v576, %v576
        %v615 = vmul.f32 %v577, %v577
        %v616 = vmul.f32 %v578, %v578
        %v617 = vmul.f32 %v579, %v579
        %v618 = vmul.f32 %v580, %v580
        %v619 = vmul.f32 %v581, %v581
        %v620 = vmul.f32 %v582, %v582
        %v621 = vadd.f32 %v605, %v606
        %v622 = vadd.f32 %v621, %v607
        %v623 = vadd.f32 %v622, %v608
        %v624 = vadd.f32 %v623, %v609
        %v625 = vadd.f32 %v624, %v610
        %v626 = vadd.f32 %v625, %v611
        %v627 = vadd.f32 %v626, %v612
        %v628 = vadd.f32 %v627, %v613
        %v629 = vadd.f32 %v628, %v614
        %v630 = vadd.f32 %v629, %v615
        %v631 = vadd.f32 %v630, %v616
        %v632 = vadd.f32 %v631, %v617
        %v633 = vadd.f32 %v632, %v618
        %v634 = vadd.f32 %v633, %v619
        %v635 = vadd.f32 %v634, %v620
        %v636 = vrot.slane %v635, 4
        %v637 = vadd.f32 %v635, %v636
        %v638 = vrot.slane %v637, 2
        %v639 = vadd.f32 %v637, %v638
        %v640 = vrot.slane %v639, 1
        %v641 = vadd.f32 %v639, %v640
        %642 = vst [vmem:[%s293 + $0x1] sm:$0x1] %v641
        %v643 = vpack.c.bf16 %v567, %v567
        %v644 = vpack.c.bf16 %v568, %v568
        %v645 = vpack.c.bf16 %v569, %v569
        %v646 = vpack.c.bf16 %v570, %v570
        %v647 = vpack.c.bf16 %v571, %v571
        %v648 = vpack.c.bf16 %v572, %v572
        %v649 = vpack.c.bf16 %v573, %v573
        %v650 = vpack.c.bf16 %v574, %v574
        %v651 = vpack.c.bf16 %v575, %v575
        %v652 = vpack.c.bf16 %v576, %v576
        %v653 = vpack.c.bf16 %v577, %v577
        %v654 = vpack.c.bf16 %v578, %v578
        %v655 = vpack.c.bf16 %v579, %v579
        %v656 = vpack.c.bf16 %v580, %v580
        %v657 = vpack.c.bf16 %v581, %v581
        %v658 = vpack.c.bf16 %v582, %v582
        %659 = vst [vmem:[%s285] sm:$0xf] %v643
        %660 = vst [vmem:[%s285 + $0x4] sm:$0xf] %v644
        %661 = vst [vmem:[%s285 + $0x8] sm:$0xf] %v645
        %662 = vst [vmem:[%s285 + $0xc] sm:$0xf] %v646
        %663 = vst [vmem:[%s285 + $0x10] sm:$0xf] %v647
        %664 = vst [vmem:[%s285 + $0x14] sm:$0xf] %v648
        %665 = vst [vmem:[%s285 + $0x18] sm:$0xf] %v649
        %666 = vst [vmem:[%s285 + $0x1c] sm:$0xf] %v650
        %667 = vst [vmem:[%s285 + $0x20] sm:$0xf] %v651
        %668 = vst [vmem:[%s285 + $0x24] sm:$0xf] %v652
        %669 = vst [vmem:[%s285 + $0x28] sm:$0xf] %v653
        %670 = vst [vmem:[%s285 + $0x2c] sm:$0xf] %v654
        %671 = vst [vmem:[%s285 + $0x30] sm:$0xf] %v655
        %672 = vst [vmem:[%s285 + $0x34] sm:$0xf] %v656
        %673 = vst [vmem:[%s285 + $0x38] sm:$0xf] %v657
        %674 = vst [vmem:[%s285 + $0x3c] sm:$0xf] %v658
      $region40: #{_lambda_.31} parent=31 // pred_fallthru
        _
      %s675 = smul.u32 16, %s22
      %p676 = scmp.lt.s32.totalorder %s21, 3
      %s677 = scalar_select %p676, %s21, 3
      %p678 = scmp.lt.s32.totalorder %s675, 15
      %s679 = scalar_select %p678, %s675, 15
      %s680 = smul.addr %s677, 16
      %s681 = sadd.s32 %s679, %s680
      %s682 = smul.addr %s681, 4
      %s683 = scalar_lea.vmem %s3, %s682
      %p684 = scmp.lt.s32.totalorder %s21, 3
      %s685 = scalar_select %p684, %s21, 3
      %p686 = scmp.lt.s32.totalorder %s22, 0
      %s687 = scalar_select %p686, %s22, 0
      %s688 = sadd.s32 %s687, %s685
      %s689 = smul.addr %s688, 2
      %s690 = scalar_lea.vmem %s4, %s689
      // Predicated region
      $region41: #{_lambda_.31} parent=31 // pred_check
        %p691 = pneg %p132
      $region42: #{_lambda_.31} parent=31 // pred_check_branch
        %693 = sbr.rel (%p691) target = $region44
      $region43: #{_lambda_.31} parent=31 // pred_region
        %s694 = smul.u32 16, %s22
      $region44: #{_lambda_.31} parent=31 // pred_fallthru
        _
      // Predicated region
      $region45: #{_lambda_.31} parent=31 // pred_check
        %p695 = pneg %p160
      $region46: #{_lambda_.31} parent=31 // pred_check_branch
        %697 = sbr.rel (%p695) target = $region48
      $region47: #{_lambda_.31} parent=31 // pred_region
        _
      $region48: #{_lambda_.31} parent=31 // pred_fallthru
        _
    $region32: #{_lambda_.31} parent=5 // pred_fallthru
      _
    %p698 = scmp.le.s32.totalorder 2, %s11
    // Predicated region
    $region49: #{_lambda_.31} parent=5 // pred_check
      %p699 = pneg %p698
    $region50: #{_lambda_.31} parent=5 // pred_check_branch
      %701 = sbr.rel (%p699) target = $region52
    $region51: #{_lambda_.31} parent=5 // pred_region
      %s702 = ssub.s32 %s11, 2
      // Predicated region
      $region53: #{_lambda_.31} parent=51 // pred_check
        %p703 = pneg %p138
      $region54: #{_lambda_.31} parent=51 // pred_check_branch
        %705 = sbr.rel (%p703) target = $region56
      $region55: #{_lambda_.31} parent=51 // pred_region
        %s706 = smul.u32 16, %s25
        %p707 = scmp.lt.s32.totalorder %s24, 3
        %s708 = scalar_select %p707, %s24, 3
        %p709 = scmp.lt.s32.totalorder %s706, 15
        %s710 = scalar_select %p709, %s706, 15
        %s711 = smul.addr %s708, 16
        %s712 = sadd.s32 %s710, %s711
        %s713 = smul.addr %s712, 4
        %s714 = scalar_lea.vmem %s3, %s713
      $region56: #{_lambda_.31} parent=51 // pred_fallthru
        _
      // Predicated region
      $region57: #{_lambda_.31} parent=51 // pred_check
        %p715 = pneg %p166
      $region58: #{_lambda_.31} parent=51 // pred_check_branch
        %717 = sbr.rel (%p715) target = $region60
      $region59: #{_lambda_.31} parent=51 // pred_region
        %p718 = scmp.lt.s32.totalorder %s24, 3
        %s719 = scalar_select %p718, %s24, 3
        %p720 = scmp.lt.s32.totalorder %s25, 0
        %s721 = scalar_select %p720, %s25, 0
        %s722 = sadd.s32 %s721, %s719
        %s723 = smul.addr %s722, 2
        %s724 = scalar_lea.vmem %s4, %s723
      $region60: #{_lambda_.31} parent=51 // pred_fallthru
        _
    $region52: #{_lambda_.31} parent=5 // pred_fallthru
      _
  $region6: #{_lambda_.31} parent=0 // loop_footer
    %s15 = sadd.s32 1, %s11
  $region7: #{_lambda_.31} parent=0 // loop_footer_branch
    %10 = sbr.rel target = $region3
  $region8: #{_lambda_.31} parent=0 // loop_exit
    _

// kernel: _lambda_.32
$region0: #{_lambda_.32}
  #allocation0 [shape = 'u32[]', space=smem, size = 0x4, offset = 0x4, fixed_abs, tag = 'smem constant byte address 0x4 - core index']
  #allocation1 [shape = 'u32[72,128]{1,0:T(1,128)}', space=vmem, size = 0x9000, scoped, tag = 'internal scratch']
  %s0 = inlined_call_operand.vmem [shape: bf16[512,128], index: 0, kind: input, shape index: {}]
  %s1 = inlined_call_operand.vmem [shape: f32[1,128], index: 1, kind: input, shape index: {}]
  %s2 = inlined_call_operand.vmem [shape: f32[1,128], index: 2, kind: input, shape index: {}]
  %s3 = inlined_call_operand.vmem [shape: bf16[512,128], index: 3, kind: output, shape index: {}]
  %s4 = sld [smem:[#allocation0]]
  $region22: #{_lambda_.32} parent=0
    _
  %s6 = ssub.s32 1, %s4
  %s7 = scalar_select 0, %s6, %s4
  // Predicated region
  $region2: #{_lambda_.32} parent=0 // pred_check
    _
  $region3: #{_lambda_.32} parent=0 // pred_check_branch
    %9 = sbr.rel (0) target = $region5
  $region4: #{_lambda_.32} parent=0 // pred_region
    _
  $region5: #{_lambda_.32} parent=0 // pred_fallthru
    _
  // Predicated region
  $region6: #{_lambda_.32} parent=0 // pred_check
    _
  $region7: #{_lambda_.32} parent=0 // pred_check_branch
    %11 = sbr.rel (0) target = $region9
  $region8: #{_lambda_.32} parent=0 // pred_region
    _
  $region9: #{_lambda_.32} parent=0 // pred_fallthru
    _
  // Predicated region
  $region10: #{_lambda_.32} parent=0 // pred_check
    _
  $region11: #{_lambda_.32} parent=0 // pred_check_branch
    %13 = sbr.rel (0) target = $region13
  $region12: #{_lambda_.32} parent=0 // pred_region
    _
  $region13: #{_lambda_.32} parent=0 // pred_fallthru
    _
  %v14 = vld [vmem:[%s0] sm:$0xf]
  %v15 = vld [vmem:[%s0 + $0x4] sm:$0xf]
  %v16 = vld [vmem:[%s0 + $0x8] sm:$0xf]
  %v17 = vld [vmem:[%s0 + $0xc] sm:$0xf]
  %v18 = vld [vmem:[%s0 + $0x10] sm:$0xf]
  %v19 = vld [vmem:[%s0 + $0x14] sm:$0xf]
  %v20 = vld [vmem:[%s0 + $0x18] sm:$0xf]
  %v21 = vld [vmem:[%s0 + $0x1c] sm:$0xf]
  %v22 = vld [vmem:[%s0 + $0x20] sm:$0xf]
  %v23 = vld [vmem:[%s0 + $0x24] sm:$0xf]
  %v24 = vld [vmem:[%s0 + $0x28] sm:$0xf]
  %v25 = vld [vmem:[%s0 + $0x2c] sm:$0xf]
  %v26 = vld [vmem:[%s0 + $0x30] sm:$0xf]
  %v27 = vld [vmem:[%s0 + $0x34] sm:$0xf]
  %v28 = vld [vmem:[%s0 + $0x38] sm:$0xf]
  %v29 = vld [vmem:[%s0 + $0x3c] sm:$0xf]
  %v30 = vld [vmem:[%s0 + $0x40] sm:$0xf]
  %v31 = vld [vmem:[%s0 + $0x44] sm:$0xf]
  %v32 = vld [vmem:[%s0 + $0x48] sm:$0xf]
  %v33 = vld [vmem:[%s0 + $0x4c] sm:$0xf]
  %v34 = vld [vmem:[%s0 + $0x50] sm:$0xf]
  %v35 = vld [vmem:[%s0 + $0x54] sm:$0xf]
  %v36 = vld [vmem:[%s0 + $0x58] sm:$0xf]
  %v37 = vld [vmem:[%s0 + $0x5c] sm:$0xf]
  %v38 = vld [vmem:[%s0 + $0x60] sm:$0xf]
  %v39 = vld [vmem:[%s0 + $0x64] sm:$0xf]
  %v40 = vld [vmem:[%s0 + $0x68] sm:$0xf]
  %v41 = vld [vmem:[%s0 + $0x6c] sm:$0xf]
  %v42 = vld [vmem:[%s0 + $0x70] sm:$0xf]
  %v43 = vld [vmem:[%s0 + $0x74] sm:$0xf]
  %v44 = vld [vmem:[%s0 + $0x78] sm:$0xf]
  %v45 = vld [vmem:[%s0 + $0x7c] sm:$0xf]
  %v46 = vld [vmem:[%s0 + $0x80] sm:$0xf]
  %v47 = vld [vmem:[%s0 + $0x84] sm:$0xf]
  %v48 = vld [vmem:[%s0 + $0x88] sm:$0xf]
  %v49 = vld [vmem:[%s0 + $0x8c] sm:$0xf]
  %v50 = vld [vmem:[%s0 + $0x90] sm:$0xf]
  %v51 = vld [vmem:[%s0 + $0x94] sm:$0xf]
  %v52 = vld [vmem:[%s0 + $0x98] sm:$0xf]
  %v53 = vld [vmem:[%s0 + $0x9c] sm:$0xf]
  %v54 = vld [vmem:[%s0 + $0xa0] sm:$0xf]
  %v55 = vld [vmem:[%s0 + $0xa4] sm:$0xf]
  %v56 = vld [vmem:[%s0 + $0xa8] sm:$0xf]
  %v57 = vld [vmem:[%s0 + $0xac] sm:$0xf]
  %v58 = vld [vmem:[%s0 + $0xb0] sm:$0xf]
  %v59 = vld [vmem:[%s0 + $0xb4] sm:$0xf]
  %v60 = vld [vmem:[%s0 + $0xb8] sm:$0xf]
  %v61 = vld [vmem:[%s0 + $0xbc] sm:$0xf]
  %v62 = vld [vmem:[%s0 + $0xc0] sm:$0xf]
  %v63 = vld [vmem:[%s0 + $0xc4] sm:$0xf]
  %v64 = vld [vmem:[%s0 + $0xc8] sm:$0xf]
  %v65 = vld [vmem:[%s0 + $0xcc] sm:$0xf]
  %v66 = vld [vmem:[%s0 + $0xd0] sm:$0xf]
  %v67 = vld [vmem:[%s0 + $0xd4] sm:$0xf]
  %v68 = vld [vmem:[%s0 + $0xd8] sm:$0xf]
  %v69 = vld [vmem:[%s0 + $0xdc] sm:$0xf]
  %v70 = vld [vmem:[%s0 + $0xe0] sm:$0xf]
  %v71 = vld [vmem:[%s0 + $0xe4] sm:$0xf]
  %v72 = vld [vmem:[%s0 + $0xe8] sm:$0xf]
  %v73 = vld [vmem:[%s0 + $0xec] sm:$0xf]
  %v74 = vld [vmem:[%s0 + $0xf0] sm:$0xf]
  %v75 = vld [vmem:[%s0 + $0xf4] sm:$0xf]
  %v76 = vld [vmem:[%s0 + $0xf8] sm:$0xf]
  %v77 = vld [vmem:[%s0 + $0xfc] sm:$0xf]
  %v78 = vunpack.c.l.bf16 %v14
  %v79 = vunpack.c.l.bf16 %v15
  %v80 = vunpack.c.l.bf16 %v16
  %v81 = vunpack.c.l.bf16 %v17
  %v82 = vunpack.c.l.bf16 %v18
  %v83 = vunpack.c.l.bf16 %v19
  %v84 = vunpack.c.l.bf16 %v20
  %v85 = vunpack.c.l.bf16 %v21
  %v86 = vunpack.c.l.bf16 %v22
  %v87 = vunpack.c.l.bf16 %v23
  %v88 = vunpack.c.l.bf16 %v24
  %v89 = vunpack.c.l.bf16 %v25
  %v90 = vunpack.c.l.bf16 %v26
  %v91 = vunpack.c.l.bf16 %v27
  %v92 = vunpack.c.l.bf16 %v28
  %v93 = vunpack.c.l.bf16 %v29
  %v94 = vunpack.c.l.bf16 %v30
  %v95 = vunpack.c.l.bf16 %v31
  %v96 = vunpack.c.l.bf16 %v32
  %v97 = vunpack.c.l.bf16 %v33
  %v98 = vunpack.c.l.bf16 %v34
  %v99 = vunpack.c.l.bf16 %v35
  %v100 = vunpack.c.l.bf16 %v36
  %v101 = vunpack.c.l.bf16 %v37
  %v102 = vunpack.c.l.bf16 %v38
  %v103 = vunpack.c.l.bf16 %v39
  %v104 = vunpack.c.l.bf16 %v40
  %v105 = vunpack.c.l.bf16 %v41
  %v106 = vunpack.c.l.bf16 %v42
  %v107 = vunpack.c.l.bf16 %v43
  %v108 = vunpack.c.l.bf16 %v44
  %v109 = vunpack.c.l.bf16 %v45
  %v110 = vunpack.c.l.bf16 %v46
  %v111 = vunpack.c.l.bf16 %v47
  %v112 = vunpack.c.l.bf16 %v48
  %v113 = vunpack.c.l.bf16 %v49
  %v114 = vunpack.c.l.bf16 %v50
  %v115 = vunpack.c.l.bf16 %v51
  %v116 = vunpack.c.l.bf16 %v52
  %v117 = vunpack.c.l.bf16 %v53
  %v118 = vunpack.c.l.bf16 %v54
  %v119 = vunpack.c.l.bf16 %v55
  %v120 = vunpack.c.l.bf16 %v56
  %v121 = vunpack.c.l.bf16 %v57
  %v122 = vunpack.c.l.bf16 %v58
  %v123 = vunpack.c.l.bf16 %v59
  %v124 = vunpack.c.l.bf16 %v60
  %v125 = vunpack.c.l.bf16 %v61
  %v126 = vunpack.c.l.bf16 %v62
  %v127 = vunpack.c.l.bf16 %v63
  %v128 = vunpack.c.l.bf16 %v64
  %v129 = vunpack.c.l.bf16 %v65
  %v130 = vunpack.c.l.bf16 %v66
  %v131 = vunpack.c.l.bf16 %v67
  %v132 = vunpack.c.l.bf16 %v68
  %v133 = vunpack.c.l.bf16 %v69
  %v134 = vunpack.c.l.bf16 %v70
  %v135 = vunpack.c.l.bf16 %v71
  %v136 = vunpack.c.l.bf16 %v72
  %v137 = vunpack.c.l.bf16 %v73
  %v138 = vunpack.c.l.bf16 %v74
  %v139 = vunpack.c.l.bf16 %v75
  %v140 = vunpack.c.l.bf16 %v76
  %v141 = vunpack.c.l.bf16 %v77
  %v142 = vld [vmem:[%s1] sm:$0x1]
  %v144 = vperm.slane %v142, 0
  %v146 = vmul.f32 %v78, %v144
  %v147 = vmul.f32 %v79, %v144
  %v148 = vmul.f32 %v80, %v144
  %v149 = vmul.f32 %v81, %v144
  %v150 = vmul.f32 %v82, %v144
  %v151 = vmul.f32 %v83, %v144
  %v152 = vmul.f32 %v84, %v144
  %v153 = vmul.f32 %v85, %v144
  %v154 = vmul.f32 %v86, %v144
  %v155 = vmul.f32 %v87, %v144
  %v156 = vmul.f32 %v88, %v144
  %v157 = vmul.f32 %v89, %v144
  %v158 = vmul.f32 %v90, %v144
  %v159 = vmul.f32 %v91, %v144
  %v160 = vmul.f32 %v92, %v144
  %v161 = vmul.f32 %v93, %v144
  %v162 = vmul.f32 %v94, %v144
  %v163 = vmul.f32 %v95, %v144
  %v164 = vmul.f32 %v96, %v144
  %v165 = vmul.f32 %v97, %v144
  %v166 = vmul.f32 %v98, %v144
  %v167 = vmul.f32 %v99, %v144
  %v168 = vmul.f32 %v100, %v144
  %v169 = vmul.f32 %v101, %v144
  %v170 = vmul.f32 %v102, %v144
  %v171 = vmul.f32 %v103, %v144
  %v172 = vmul.f32 %v104, %v144
  %v173 = vmul.f32 %v105, %v144
  %v174 = vmul.f32 %v106, %v144
  %v175 = vmul.f32 %v107, %v144
  %v176 = vmul.f32 %v108, %v144
  %v177 = vmul.f32 %v109, %v144
  %v178 = vmul.f32 %v110, %v144
  %v179 = vmul.f32 %v111, %v144
  %v180 = vmul.f32 %v112, %v144
  %v181 = vmul.f32 %v113, %v144
  %v182 = vmul.f32 %v114, %v144
  %v183 = vmul.f32 %v115, %v144
  %v184 = vmul.f32 %v116, %v144
  %v185 = vmul.f32 %v117, %v144
  %v186 = vmul.f32 %v118, %v144
  %v187 = vmul.f32 %v119, %v144
  %v188 = vmul.f32 %v120, %v144
  %v189 = vmul.f32 %v121, %v144
  %v190 = vmul.f32 %v122, %v144
  %v191 = vmul.f32 %v123, %v144
  %v192 = vmul.f32 %v124, %v144
  %v193 = vmul.f32 %v125, %v144
  %v194 = vmul.f32 %v126, %v144
  %v195 = vmul.f32 %v127, %v144
  %v196 = vmul.f32 %v128, %v144
  %v197 = vmul.f32 %v129, %v144
  %v198 = vmul.f32 %v130, %v144
  %v199 = vmul.f32 %v131, %v144
  %v200 = vmul.f32 %v132, %v144
  %v201 = vmul.f32 %v133, %v144
  %v202 = vmul.f32 %v134, %v144
  %v203 = vmul.f32 %v135, %v144
  %v204 = vmul.f32 %v136, %v144
  %v205 = vmul.f32 %v137, %v144
  %v206 = vmul.f32 %v138, %v144
  %v207 = vmul.f32 %v139, %v144
  %v208 = vmul.f32 %v140, %v144
  %v209 = vmul.f32 %v141, %v144
  %v210 = vld [vmem:[%s2] sm:$0x1]
  %v212 = vperm.slane %v210, 0
  %v214 = vadd.f32 %v146, %v212
  %v215 = vadd.f32 %v147, %v212
  %v216 = vadd.f32 %v148, %v212
  %v217 = vadd.f32 %v149, %v212
  %v218 = vadd.f32 %v150, %v212
  %v219 = vadd.f32 %v151, %v212
  %v220 = vadd.f32 %v152, %v212
  %v221 = vadd.f32 %v153, %v212
  %v222 = vadd.f32 %v154, %v212
  %v223 = vadd.f32 %v155, %v212
  %v224 = vadd.f32 %v156, %v212
  %v225 = vadd.f32 %v157, %v212
  %v226 = vadd.f32 %v158, %v212
  %v227 = vadd.f32 %v159, %v212
  %v228 = vadd.f32 %v160, %v212
  %v229 = vadd.f32 %v161, %v212
  %v230 = vadd.f32 %v162, %v212
  %v231 = vadd.f32 %v163, %v212
  %v232 = vadd.f32 %v164, %v212
  %v233 = vadd.f32 %v165, %v212
  %v234 = vadd.f32 %v166, %v212
  %v235 = vadd.f32 %v167, %v212
  %v236 = vadd.f32 %v168, %v212
  %v237 = vadd.f32 %v169, %v212
  %v238 = vadd.f32 %v170, %v212
  %v239 = vadd.f32 %v171, %v212
  %v240 = vadd.f32 %v172, %v212
  %v241 = vadd.f32 %v173, %v212
  %v242 = vadd.f32 %v174, %v212
  %v243 = vadd.f32 %v175, %v212
  %v244 = vadd.f32 %v176, %v212
  %v245 = vadd.f32 %v177, %v212
  %v246 = vadd.f32 %v178, %v212
  %v247 = vadd.f32 %v179, %v212
  %v248 = vadd.f32 %v180, %v212
  %v249 = vadd.f32 %v181, %v212
  %v250 = vadd.f32 %v182, %v212
  %v251 = vadd.f32 %v183, %v212
  %v252 = vadd.f32 %v184, %v212
  %v253 = vadd.f32 %v185, %v212
  %v254 = vadd.f32 %v186, %v212
  %v255 = vadd.f32 %v187, %v212
  %v256 = vadd.f32 %v188, %v212
  %v257 = vadd.f32 %v189, %v212
  %v258 = vadd.f32 %v190, %v212
  %v259 = vadd.f32 %v191, %v212
  %v260 = vadd.f32 %v192, %v212
  %v261 = vadd.f32 %v193, %v212
  %v262 = vadd.f32 %v194, %v212
  %v263 = vadd.f32 %v195, %v212
  %v264 = vadd.f32 %v196, %v212
  %v265 = vadd.f32 %v197, %v212
  %v266 = vadd.f32 %v198, %v212
  %v267 = vadd.f32 %v199, %v212
  %v268 = vadd.f32 %v200, %v212
  %v269 = vadd.f32 %v201, %v212
  %v270 = vadd.f32 %v202, %v212
  %v271 = vadd.f32 %v203, %v212
  %v272 = vadd.f32 %v204, %v212
  %v273 = vadd.f32 %v205, %v212
  %v274 = vadd.f32 %v206, %v212
  %v275 = vadd.f32 %v207, %v212
  %v276 = vadd.f32 %v208, %v212
  %v277 = vadd.f32 %v209, %v212
  %v278 = vpack.c.bf16 %v214, %v214
  %v279 = vpack.c.bf16 %v215, %v215
  %v280 = vpack.c.bf16 %v216, %v216
  %v281 = vpack.c.bf16 %v217, %v217
  %v282 = vpack.c.bf16 %v218, %v218
  %v283 = vpack.c.bf16 %v219, %v219
  %v284 = vpack.c.bf16 %v220, %v220
  %v285 = vpack.c.bf16 %v221, %v221
  %v286 = vpack.c.bf16 %v222, %v222
  %v287 = vpack.c.bf16 %v223, %v223
  %v288 = vpack.c.bf16 %v224, %v224
  %v289 = vpack.c.bf16 %v225, %v225
  %v290 = vpack.c.bf16 %v226, %v226
  %v291 = vpack.c.bf16 %v227, %v227
  %v292 = vpack.c.bf16 %v228, %v228
  %v293 = vpack.c.bf16 %v229, %v229
  %v294 = vpack.c.bf16 %v230, %v230
  %v295 = vpack.c.bf16 %v231, %v231
  %v296 = vpack.c.bf16 %v232, %v232
  %v297 = vpack.c.bf16 %v233, %v233
  %v298 = vpack.c.bf16 %v234, %v234
  %v299 = vpack.c.bf16 %v235, %v235
  %v300 = vpack.c.bf16 %v236, %v236
  %v301 = vpack.c.bf16 %v237, %v237
  %v302 = vpack.c.bf16 %v238, %v238
  %v303 = vpack.c.bf16 %v239, %v239
  %v304 = vpack.c.bf16 %v240, %v240
  %v305 = vpack.c.bf16 %v241, %v241
  %v306 = vpack.c.bf16 %v242, %v242
  %v307 = vpack.c.bf16 %v243, %v243
  %v308 = vpack.c.bf16 %v244, %v244
  %v309 = vpack.c.bf16 %v245, %v245
  %v310 = vpack.c.bf16 %v246, %v246
  %v311 = vpack.c.bf16 %v247, %v247
  %v312 = vpack.c.bf16 %v248, %v248
  %v313 = vpack.c.bf16 %v249, %v249
  %v314 = vpack.c.bf16 %v250, %v250
  %v315 = vpack.c.bf16 %v251, %v251
  %v316 = vpack.c.bf16 %v252, %v252
  %v317 = vpack.c.bf16 %v253, %v253
  %v318 = vpack.c.bf16 %v254, %v254
  %v319 = vpack.c.bf16 %v255, %v255
  %v320 = vpack.c.bf16 %v256, %v256
  %v321 = vpack.c.bf16 %v257, %v257
  %v322 = vpack.c.bf16 %v258, %v258
  %v323 = vpack.c.bf16 %v259, %v259
  %v324 = vpack.c.bf16 %v260, %v260
  %v325 = vpack.c.bf16 %v261, %v261
  %v326 = vpack.c.bf16 %v262, %v262
  %v327 = vpack.c.bf16 %v263, %v263
  %v328 = vpack.c.bf16 %v264, %v264
  %v329 = vpack.c.bf16 %v265, %v265
  %v330 = vpack.c.bf16 %v266, %v266
  %v331 = vpack.c.bf16 %v267, %v267
  %v332 = vpack.c.bf16 %v268, %v268
  %v333 = vpack.c.bf16 %v269, %v269
  %v334 = vpack.c.bf16 %v270, %v270
  %v335 = vpack.c.bf16 %v271, %v271
  %v336 = vpack.c.bf16 %v272, %v272
  %v337 = vpack.c.bf16 %v273, %v273
  %v338 = vpack.c.bf16 %v274, %v274
  %v339 = vpack.c.bf16 %v275, %v275
  %v340 = vpack.c.bf16 %v276, %v276
  %v341 = vpack.c.bf16 %v277, %v277
  %342 = vst [vmem:[%s3] sm:$0xf] %v278
  %343 = vst [vmem:[%s3 + $0x4] sm:$0xf] %v279
  %344 = vst [vmem:[%s3 + $0x8] sm:$0xf] %v280
  %345 = vst [vmem:[%s3 + $0xc] sm:$0xf] %v281
  %346 = vst [vmem:[%s3 + $0x10] sm:$0xf] %v282
  %347 = vst [vmem:[%s3 + $0x14] sm:$0xf] %v283
  %348 = vst [vmem:[%s3 + $0x18] sm:$0xf] %v284
  %349 = vst [vmem:[%s3 + $0x1c] sm:$0xf] %v285
  %350 = vst [vmem:[%s3 + $0x20] sm:$0xf] %v286
  %351 = vst [vmem:[%s3 + $0x24] sm:$0xf] %v287
  %352 = vst [vmem:[%s3 + $0x28] sm:$0xf] %v288
  %353 = vst [vmem:[%s3 + $0x2c] sm:$0xf] %v289
  %354 = vst [vmem:[%s3 + $0x30] sm:$0xf] %v290
  %355 = vst [vmem:[%s3 + $0x34] sm:$0xf] %v291
  %356 = vst [vmem:[%s3 + $0x38] sm:$0xf] %v292
  %357 = vst [vmem:[%s3 + $0x3c] sm:$0xf] %v293
  %358 = vst [vmem:[%s3 + $0x40] sm:$0xf] %v294
  %359 = vst [vmem:[%s3 + $0x44] sm:$0xf] %v295
  %360 = vst [vmem:[%s3 + $0x48] sm:$0xf] %v296
  %361 = vst [vmem:[%s3 + $0x4c] sm:$0xf] %v297
  %362 = vst [vmem:[%s3 + $0x50] sm:$0xf] %v298
  %363 = vst [vmem:[%s3 + $0x54] sm:$0xf] %v299
  %364 = vst [vmem:[%s3 + $0x58] sm:$0xf] %v300
  %365 = vst [vmem:[%s3 + $0x5c] sm:$0xf] %v301
  %366 = vst [vmem:[%s3 + $0x60] sm:$0xf] %v302
  %367 = vst [vmem:[%s3 + $0x64] sm:$0xf] %v303
  %368 = vst [vmem:[%s3 + $0x68] sm:$0xf] %v304
  %369 = vst [vmem:[%s3 + $0x6c] sm:$0xf] %v305
  %370 = vst [vmem:[%s3 + $0x70] sm:$0xf] %v306
  %371 = vst [vmem:[%s3 + $0x74] sm:$0xf] %v307
  %372 = vst [vmem:[%s3 + $0x78] sm:$0xf] %v308
  %373 = vst [vmem:[%s3 + $0x7c] sm:$0xf] %v309
  %374 = vst [vmem:[%s3 + $0x80] sm:$0xf] %v310
  %375 = vst [vmem:[%s3 + $0x84] sm:$0xf] %v311
  %376 = vst [vmem:[%s3 + $0x88] sm:$0xf] %v312
  %377 = vst [vmem:[%s3 + $0x8c] sm:$0xf] %v313
  %378 = vst [vmem:[%s3 + $0x90] sm:$0xf] %v314
  %379 = vst [vmem:[%s3 + $0x94] sm:$0xf] %v315
  %380 = vst [vmem:[%s3 + $0x98] sm:$0xf] %v316
  %381 = vst [vmem:[%s3 + $0x9c] sm:$0xf] %v317
  %382 = vst [vmem:[%s3 + $0xa0] sm:$0xf] %v318
  %383 = vst [vmem:[%s3 + $0xa4] sm:$0xf] %v319
  %384 = vst [vmem:[%s3 + $0xa8] sm:$0xf] %v320
  %385 = vst [vmem:[%s3 + $0xac] sm:$0xf] %v321
  %386 = vst [vmem:[%s3 + $0xb0] sm:$0xf] %v322
  %387 = vst [vmem:[%s3 + $0xb4] sm:$0xf] %v323
  %388 = vst [vmem:[%s3 + $0xb8] sm:$0xf] %v324
  %389 = vst [vmem:[%s3 + $0xbc] sm:$0xf] %v325
  %390 = vst [vmem:[%s3 + $0xc0] sm:$0xf] %v326
  %391 = vst [vmem:[%s3 + $0xc4] sm:$0xf] %v327
  %392 = vst [vmem:[%s3 + $0xc8] sm:$0xf] %v328
  %393 = vst [vmem:[%s3 + $0xcc] sm:$0xf] %v329
  %394 = vst [vmem:[%s3 + $0xd0] sm:$0xf] %v330
  %395 = vst [vmem:[%s3 + $0xd4] sm:$0xf] %v331
  %396 = vst [vmem:[%s3 + $0xd8] sm:$0xf] %v332
  %397 = vst [vmem:[%s3 + $0xdc] sm:$0xf] %v333
  %398 = vst [vmem:[%s3 + $0xe0] sm:$0xf] %v334
  %399 = vst [vmem:[%s3 + $0xe4] sm:$0xf] %v335
  %400 = vst [vmem:[%s3 + $0xe8] sm:$0xf] %v336
  %401 = vst [vmem:[%s3 + $0xec] sm:$0xf] %v337
  %402 = vst [vmem:[%s3 + $0xf0] sm:$0xf] %v338
  %403 = vst [vmem:[%s3 + $0xf4] sm:$0xf] %v339
  %404 = vst [vmem:[%s3 + $0xf8] sm:$0xf] %v340
  %405 = vst [vmem:[%s3 + $0xfc] sm:$0xf] %v341
  // Predicated region
  $region14: #{_lambda_.32} parent=0 // pred_check
    _
  $region15: #{_lambda_.32} parent=0 // pred_check_branch
    %407 = sbr.rel (0) target = $region17
  $region16: #{_lambda_.32} parent=0 // pred_region
    _
  $region17: #{_lambda_.32} parent=0 // pred_fallthru
    _
  // Predicated region
  $region18: #{_lambda_.32} parent=0 // pred_check
    _
  $region19: #{_lambda_.32} parent=0 // pred_check_branch
    %409 = sbr.rel (0) target = $region21
  $region20: #{_lambda_.32} parent=0 // pred_region
    _
  $region21: #{_lambda_.32} parent=0 // pred_fallthru
    _

// kernel: _lambda_.33
$region0: #{_lambda_.33}
  #allocation0 [shape = 'u32[]', space=smem, size = 0x4, offset = 0x4, fixed_abs, tag = 'smem constant byte address 0x4 - core index']
  #allocation1 [shape = 'u32[72,128]{1,0:T(1,128)}', space=vmem, size = 0x9000, scoped, tag = 'internal scratch']
  #allocation2 [shape = 'f32[512,128]{1,0:T(8,128)}', space=vmem, size = 0x40000, scoped, tag = 'scratch operand']
  %s0 = inlined_call_operand.vmem [shape: bf16[4,512,128], index: 0, kind: input, shape index: {}]
  %s1 = inlined_call_operand.vmem [shape: bf16[4,128,128], index: 1, kind: input, shape index: {}]
  %s2 = inlined_call_operand.vmem [shape: f32[1,128], index: 2, kind: input, shape index: {}]
  %s3 = inlined_call_operand.vmem [shape: f32[4,512,128], index: 3, kind: output, shape index: {0}]
  %s4 = inlined_call_operand.hbm [shape: f32[4,1,2,128], index: 4, kind: output, shape index: {1}]
  %5 = xla_tuple %s3, %s4
  %s6 = sld [smem:[#allocation0]]
  $region61: #{_lambda_.33} parent=0
    _
  %s8 = ssub.s32 1, %s6
  %s9 = scalar_select 0, %s8, %s6
  $region1: #{_lambda_.33} parent=0
    #allocation3 [shape = 'u8[2048]{0}', space=vmem, size = 0x800, scoped, tag = 'output window, operand 1']
    #allocation4 [shape = 's32[2]{0}', space=sflag, size = 0x8, scoped, tag = 'scoped memory for _lambda_.33']
    %10 = vsyncpa [#allocation4], 0
    %s11 = scalar_lea.sflag [#allocation4], 1
    %12 = vsyncpa %s11, 0
    loop: start=0, step=1, limit=6
    $region2: #{_lambda_.33} parent=1 // loop_pre_header
      _
    $region3: #{_lambda_.33} parent=1 // loop_header
      %s14 = sphi 0, %s18
      %p15 = scmp.ge.s32.totalorder %s14, 6
      %s21 = sphi 0, %s40
      %s22 = sphi 0, %s36
      %s23 = sphi 0, %s32
      %s24 = sphi 0, %s21
      %s25 = sphi 0, %s22
      %s26 = sphi 0, %s23
      %s27 = sphi 0, %s24
      %s28 = sphi 0, %s25
      %s29 = sphi 0, %s26
      %s47 = sphi 0, %s49
      %s50 = sphi 0, %s47
      %s51 = sphi 0, %s50
      %s67 = sphi 0, %s51
      %s73 = sphi 0, %s75
      %s76 = sphi 0, %s73
      %s77 = sphi 0, %s76
      %s93 = sphi 0, %s77
      %s97 = sphi 0, %s97
      %s99 = sphi 0, %s97
      %s100 = sphi 0, %s99
      %s114 = sphi 0, %s100
      %s122 = sphi 0, %s124
      %s125 = sphi 0, %s122
      %s126 = sphi 0, %s125
      %s142 = sphi 0, %s126
      %s150 = sphi 0, %s152
      %s153 = sphi 0, %s150
      %s154 = sphi 0, %s153
      %s170 = sphi 0, %s154
    $region4: #{_lambda_.33} parent=1 // loop_header_branch
      %17 = sbr.rel (%p15) target = $region8
    $region5: #{_lambda_.33} parent=1 // loop_body
      %s19 = ssub.s32 %s14, 1
      %s20 = ssub.s32 %s14, 2
      %s30 = sadd.s32 1, %s23
      %p31 = scmp.ge.s32.totalorder %s30, 1
      %s32 = scalar_select %p31, 0, %s30
      %s33 = sadd.s32 1, %s22
      %s34 = scalar_select %p31, %s33, %s22
      %p35 = scmp.ge.s32.totalorder %s34, 1
      %s36 = scalar_select %p35, 0, %s34
      %s37 = sadd.s32 1, %s21
      %s38 = scalar_select %p35, %s37, %s21
      %p39 = scmp.ge.s32.totalorder %s38, 4
      %s40 = scalar_select %p39, 0, %s38
      %s41 = ssub.s32 %s21, %s40
      %s42 = ssub.s32 %s22, %s36
      %s43 = sor.u32 %s41, %s42
      %s44 = ssub.s32 %s23, %s32
      %s45 = sor.u32 %s43, %s44
      %p46 = scmp.eq.s32.totalorder %s45, 0
      %s48 = sadd.s32 %s47, 1
      %s49 = scalar_select %p46, %s47, %s48
      %p52 = pneg %p46
      %p53 = scmp.eq.s32.totalorder %s14, 3
      %p54 = por %p52, %p53
      %p55 = scmp.ne.s32.totalorder %s47, %s50
      %p56 = scmp.eq.s32.totalorder %s14, 0
      %p57 = por %p55, %p56
      %p58 = scmp.ne.s32.totalorder %s47, %s50
      %p59 = scmp.eq.s32.totalorder %s19, 3
      %p60 = por %p58, %p59
      %p61 = scmp.ne.s32.totalorder %s50, %s51
      %p62 = scmp.eq.s32.totalorder %s19, 0
      %p63 = por %p61, %p62
      %p64 = scmp.ne.s32.totalorder %s50, %s51
      %p65 = scmp.eq.s32.totalorder %s20, 3
      %p66 = por %p64, %p65
      %p68 = scmp.ne.s32.totalorder %s51, %s67
      %p69 = scmp.eq.s32.totalorder %s20, 0
      %p70 = por %p68, %p69
      %s71 = ssub.s32 %s21, %s40
      %p72 = scmp.eq.s32.totalorder %s71, 0
      %s74 = sadd.s32 %s73, 1
      %s75 = scalar_select %p72, %s73, %s74
      %p78 = pneg %p72
      %p79 = scmp.eq.s32.totalorder %s14, 3
      %p80 = por %p78, %p79
      %p81 = scmp.ne.s32.totalorder %s73, %s76
      %p82 = scmp.eq.s32.totalorder %s14, 0
      %p83 = por %p81, %p82
      %p84 = scmp.ne.s32.totalorder %s73, %s76
      %p85 = scmp.eq.s32.totalorder %s19, 3
      %p86 = por %p84, %p85
      %p87 = scmp.ne.s32.totalorder %s76, %s77
      %p88 = scmp.eq.s32.totalorder %s19, 0
      %p89 = por %p87, %p88
      %p90 = scmp.ne.s32.totalorder %s76, %s77
      %p91 = scmp.eq.s32.totalorder %s20, 3
      %p92 = por %p90, %p91
      %p94 = scmp.ne.s32.totalorder %s77, %s93
      %p95 = scmp.eq.s32.totalorder %s20, 0
      %p96 = por %p94, %p95
      %s98 = sadd.s32 %s97, 1
      %p101 = scmp.eq.s32.totalorder %s14, 3
      %p102 = scmp.ne.s32.totalorder %s97, %s99
      %p103 = scmp.eq.s32.totalorder %s14, 0
      %p104 = por %p102, %p103
      %p105 = scmp.ne.s32.totalorder %s97, %s99
      %p106 = scmp.eq.s32.totalorder %s19, 3
      %p107 = por %p105, %p106
      %p108 = scmp.ne.s32.totalorder %s99, %s100
      %p109 = scmp.eq.s32.totalorder %s19, 0
      %p110 = por %p108, %p109
      %p111 = scmp.ne.s32.totalorder %s99, %s100
      %p112 = scmp.eq.s32.totalorder %s20, 3
      %p113 = por %p111, %p112
      %p115 = scmp.ne.s32.totalorder %s100, %s114
      %p116 = scmp.eq.s32.totalorder %s20, 0
      %p117 = por %p115, %p116
      %s118 = ssub.s32 %s21, %s40
      %s119 = ssub.s32 %s22, %s36
      %s120 = sor.u32 %s118, %s119
      %p121 = scmp.eq.s32.totalorder %s120, 0
      %s123 = sadd.s32 %s122, 1
      %s124 = scalar_select %p121, %s122, %s123
      %p127 = pneg %p121
      %p128 = scmp.eq.s32.totalorder %s14, 3
      %p129 = por %p127, %p128
      %p130 = scmp.ne.s32.totalorder %s122, %s125
      %p131 = scmp.eq.s32.totalorder %s14, 0
      %p132 = por %p130, %p131
      %p133 = scmp.ne.s32.totalorder %s122, %s125
      %p134 = scmp.eq.s32.totalorder %s19, 3
      %p135 = por %p133, %p134
      %p136 = scmp.ne.s32.totalorder %s125, %s126
      %p137 = scmp.eq.s32.totalorder %s19, 0
      %p138 = por %p136, %p137
      %p139 = scmp.ne.s32.totalorder %s125, %s126
      %p140 = scmp.eq.s32.totalorder %s20, 3
      %p141 = por %p139, %p140
      %p143 = scmp.ne.s32.totalorder %s126, %s142
      %p144 = scmp.eq.s32.totalorder %s20, 0
      %p145 = por %p143, %p144
      %s146 = ssub.s32 %s21, %s40
      %s147 = ssub.s32 %s22, %s36
      %s148 = sor.u32 %s146, %s147
      %p149 = scmp.eq.s32.totalorder %s148, 0
      %s151 = sadd.s32 %s150, 1
      %s152 = scalar_select %p149, %s150, %s151
      %p155 = pneg %p149
      %p156 = scmp.eq.s32.totalorder %s14, 3
      %p157 = por %p155, %p156
      %p158 = scmp.ne.s32.totalorder %s150, %s153
      %p159 = scmp.eq.s32.totalorder %s14, 0
      %p160 = por %p158, %p159
      %p161 = scmp.ne.s32.totalorder %s150, %s153
      %p162 = scmp.eq.s32.totalorder %s19, 3
      %p163 = por %p161, %p162
      %p164 = scmp.ne.s32.totalorder %s153, %s154
      %p165 = scmp.eq.s32.totalorder %s19, 0
      %p166 = por %p164, %p165
      %p167 = scmp.ne.s32.totalorder %s153, %s154
      %p168 = scmp.eq.s32.totalorder %s20, 3
      %p169 = por %p167, %p168
      %p171 = scmp.ne.s32.totalorder %s154, %s170
      %p172 = scmp.eq.s32.totalorder %s20, 0
      %p173 = por %p171, %p172
      %p174 = scmp.le.s32.totalorder 1, %s14
      %p175 = scmp.lt.s32.totalorder %s14, 5
      %p176 = pnand %p174, %p175
      %p177 = pneg %p176
      // Predicated region
      $region9: #{_lambda_.33} parent=5 // pred_check
        _
      $region10: #{_lambda_.33} parent=5 // pred_check_branch
        %179 = sbr.rel (%p176) target = $region12
      $region11: #{_lambda_.33} parent=5 // pred_region
        %s180 = ssub.s32 %s14, 1
        // Predicated region
        $region13: #{_lambda_.33} parent=11 // pred_check
          %p181 = pneg %p110
        $region14: #{_lambda_.33} parent=11 // pred_check_branch
          %183 = sbr.rel (%p181) target = $region16
        $region15: #{_lambda_.33} parent=11 // pred_region
          _
        $region16: #{_lambda_.33} parent=11 // pred_fallthru
          _
      $region12: #{_lambda_.33} parent=5 // pred_fallthru
        _
      %p184 = scmp.lt.s32.totalorder %s14, 4
      // Predicated region
      $region17: #{_lambda_.33} parent=5 // pred_check
        %p185 = pneg %p184
      $region18: #{_lambda_.33} parent=5 // pred_check_branch
        %187 = sbr.rel (%p185) target = $region20
      $region19: #{_lambda_.33} parent=5 // pred_region
        // Predicated region
        $region21: #{_lambda_.33} parent=19 // pred_check
          %p188 = pneg %p57
        $region22: #{_lambda_.33} parent=19 // pred_check_branch
          %190 = sbr.rel (%p188) target = $region24
        $region23: #{_lambda_.33} parent=19 // pred_region
          %s191 = smul.u32 64, %s22
          %p192 = scmp.lt.s32.totalorder %s21, 3
          %s193 = scalar_select %p192, %s21, 3
          %p194 = scmp.lt.s32.totalorder %s191, 63
          %s195 = scalar_select %p194, %s191, 63
          %p196 = scmp.lt.s32.totalorder %s23, 0
          %s197 = scalar_select %p196, %s23, 0
          %s198 = sadd.s32 %s197, %s195
          %s199 = smul.addr %s193, 64
          %s200 = sadd.s32 %s198, %s199
          %s201 = smul.addr %s200, 4
          %s202 = scalar_lea.vmem %s0, %s201
          %s203 = smul.u32 64, %s22
        $region24: #{_lambda_.33} parent=19 // pred_fallthru
          _
        // Predicated region
        $region25: #{_lambda_.33} parent=19 // pred_check
          %p204 = pneg %p83
        $region26: #{_lambda_.33} parent=19 // pred_check_branch
          %206 = sbr.rel (%p204) target = $region28
        $region27: #{_lambda_.33} parent=19 // pred_region
          %p207 = scmp.lt.s32.totalorder %s21, 3
          %s208 = scalar_select %p207, %s21, 3
          %s209 = smul.addr %s208, 16
          %s210 = smul.addr %s209, 4
          %s211 = scalar_lea.vmem %s1, %s210
        $region28: #{_lambda_.33} parent=19 // pred_fallthru
          _
      $region20: #{_lambda_.33} parent=5 // pred_fallthru
        _
      %p212 = scmp.le.s32.totalorder 1, %s14
      %p213 = scmp.lt.s32.totalorder %s14, 5
      %p214 = pnand %p212, %p213
      %p215 = pneg %p214
      // Predicated region
      $region29: #{_lambda_.33} parent=5 // pred_check
        _
      $region30: #{_lambda_.33} parent=5 // pred_check_branch
        %217 = sbr.rel (%p214) target = $region32
      $region31: #{_lambda_.33} parent=5 // pred_region
        %s218 = ssub.s32 %s14, 1
        %s219 = smul.u32 64, %s25
        %p220 = scmp.lt.s32.totalorder %s24, 3
        %s221 = scalar_select %p220, %s24, 3
        %p222 = scmp.lt.s32.totalorder %s219, 63
        %s223 = scalar_select %p222, %s219, 63
        %p224 = scmp.lt.s32.totalorder %s26, 0
        %s225 = scalar_select %p224, %s26, 0
        %s226 = sadd.s32 %s225, %s223
        %s227 = smul.addr %s221, 64
        %s228 = sadd.s32 %s226, %s227
        %s229 = smul.addr %s228, 4
        %s230 = scalar_lea.vmem %s0, %s229
        %p231 = pneg %p63
        %p232 = pneg %p60
        %p233 = scmp.lt.s32.totalorder %s24, 3
        %s234 = scalar_select %p233, %s24, 3
        %s235 = smul.addr %s234, 16
        %s236 = smul.addr %s235, 4
        %s237 = scalar_lea.vmem %s1, %s236
        %p238 = pneg %p89
        %p239 = pneg %p86
        %p240 = pneg %p110
        %p241 = pneg %p107
        %p242 = pneg %p138
        %p243 = pneg %p135
        %s244 = smul.u32 64, %s25
        %p245 = scmp.lt.s32.totalorder %s24, 3
        %s246 = scalar_select %p245, %s24, 3
        %p247 = scmp.lt.s32.totalorder %s244, 63
        %s248 = scalar_select %p247, %s244, 63
        %s249 = smul.addr %s246, 64
        %s250 = sadd.s32 %s248, %s249
        %s251 = smul.addr %s250, 8
        %s252 = scalar_lea.vmem %s3, %s251
        %p253 = pneg %p166
        %p254 = pneg %p163
        %s255 = sand.u32 %s153, 1
        %s256 = scalar_lea.sflag [#allocation4], %s255
        %s257 = sand.u32 %s153, 1
        %s258 = smul.addr %s257, 2
        %s259 = scalar_lea.vmem [#allocation3], %s258
        %s260 = smul.u32 64, %s25
        %p261 = scmp.lt.s32.totalorder %s24, 3
        %s262 = scalar_select %p261, %s24, 3
        %p263 = scmp.lt.s32.totalorder %s260, 63
        %s264 = scalar_select %p263, %s260, 63
        %p265 = scmp.lt.s32.totalorder %s26, 0
        %s266 = scalar_select %p265, %s26, 0
        %s267 = sadd.s32 %s266, %s264
        %s268 = smul.addr %s262, 64
        %s269 = sadd.s32 %s267, %s268
        %s270 = smul.addr %s269, 4
        %s271 = scalar_lea.vmem %s0, %s270
        %s272 = smul.u32 64, %s25
        %p273 = scmp.lt.s32.totalorder %s24, 3
        %s274 = scalar_select %p273, %s24, 3
        %s275 = smul.addr %s274, 16
        %s276 = smul.addr %s275, 4
        %s277 = scalar_lea.vmem %s1, %s276
        %s278 = smul.u32 64, %s25
        %p279 = scmp.lt.s32.totalorder %s24, 3
        %s280 = scalar_select %p279, %s24, 3
        %p281 = scmp.lt.s32.totalorder %s278, 63
        %s282 = scalar_select %p281, %s278, 63
        %s283 = smul.addr %s280, 64
        %s284 = sadd.s32 %s282, %s283
        %s285 = smul.addr %s284, 8
        %s286 = scalar_lea.vmem %s3, %s285
        %s287 = smul.u32 64, %s25
        %p288 = scmp.eq.s32.totalorder %s26, 0
        // Predicated region
        $region33: #{_lambda_.33} parent=31 // pred_check
          %p289 = pneg %p288
        $region34: #{_lambda_.33} parent=31 // pred_check_branch
          %291 = sbr.rel (%p289) target = $region36
        $region35: #{_lambda_.33} parent=31 // pred_region
          %292 = vst [vmem:[#allocation2] sm:$0xff] 0.0
          %293 = vst [vmem:[#allocation2 + $0x8] sm:$0xff] 0.0
          %294 = vst [vmem:[#allocation2 + $0x10] sm:$0xff] 0.0
          %295 = vst [vmem:[#allocation2 + $0x18] sm:$0xff] 0.0
          %296 = vst [vmem:[#allocation2 + $0x20] sm:$0xff] 0.0
          %297 = vst [vmem:[#allocation2 + $0x28] sm:$0xff] 0.0
          %298 = vst [vmem:[#allocation2 + $0x30] sm:$0xff] 0.0
          %299 = vst [vmem:[#allocation2 + $0x38] sm:$0xff] 0.0
          %300 = vst [vmem:[#allocation2 + $0x40] sm:$0xff] 0.0
          %301 = vst [vmem:[#allocation2 + $0x48] sm:$0xff] 0.0
          %302 = vst [vmem:[#allocation2 + $0x50] sm:$0xff] 0.0
          %303 = vst [vmem:[#allocation2 + $0x58] sm:$0xff] 0.0
          %304 = vst [vmem:[#allocation2 + $0x60] sm:$0xff] 0.0
          %305 = vst [vmem:[#allocation2 + $0x68] sm:$0xff] 0.0
          %306 = vst [vmem:[#allocation2 + $0x70] sm:$0xff] 0.0
          %307 = vst [vmem:[#allocation2 + $0x78] sm:$0xff] 0.0
          %308 = vst [vmem:[#allocation2 + $0x80] sm:$0xff] 0.0
          %309 = vst [vmem:[#allocation2 + $0x88] sm:$0xff] 0.0
          %310 = vst [vmem:[#allocation2 + $0x90] sm:$0xff] 0.0
          %311 = vst [vmem:[#allocation2 + $0x98] sm:$0xff] 0.0
          %312 = vst [vmem:[#allocation2 + $0xa0] sm:$0xff] 0.0
          %313 = vst [vmem:[#allocation2 + $0xa8] sm:$0xff] 0.0
          %314 = vst [vmem:[#allocation2 + $0xb0] sm:$0xff] 0.0
          %315 = vst [vmem:[#allocation2 + $0xb8] sm:$0xff] 0.0
          %316 = vst [vmem:[#allocation2 + $0xc0] sm:$0xff] 0.0
          %317 = vst [vmem:[#allocation2 + $0xc8] sm:$0xff] 0.0
          %318 = vst [vmem:[#allocation2 + $0xd0] sm:$0xff] 0.0
          %319 = vst [vmem:[#allocation2 + $0xd8] sm:$0xff] 0.0
          %320 = vst [vmem:[#allocation2 + $0xe0] sm:$0xff] 0.0
          %321 = vst [vmem:[#allocation2 + $0xe8] sm:$0xff] 0.0
          %322 = vst [vmem:[#allocation2 + $0xf0] sm:$0xff] 0.0
          %323 = vst [vmem:[#allocation2 + $0xf8] sm:$0xff] 0.0
          %324 = vst [vmem:[#allocation2 + $0x100] sm:$0xff] 0.0
          %325 = vst [vmem:[#allocation2 + $0x108] sm:$0xff] 0.0
          %326 = vst [vmem:[#allocation2 + $0x110] sm:$0xff] 0.0
          %327 = vst [vmem:[#allocation2 + $0x118] sm:$0xff] 0.0
          %328 = vst [vmem:[#allocation2 + $0x120] sm:$0xff] 0.0
          %329 = vst [vmem:[#allocation2 + $0x128] sm:$0xff] 0.0
          %330 = vst [vmem:[#allocation2 + $0x130] sm:$0xff] 0.0
          %331 = vst [vmem:[#allocation2 + $0x138] sm:$0xff] 0.0
          %332 = vst [vmem:[#allocation2 + $0x140] sm:$0xff] 0.0
          %333 = vst [vmem:[#allocation2 + $0x148] sm:$0xff] 0.0
          %334 = vst [vmem:[#allocation2 + $0x150] sm:$0xff] 0.0
          %335 = vst [vmem:[#allocation2 + $0x158] sm:$0xff] 0.0
          %336 = vst [vmem:[#allocation2 + $0x160] sm:$0xff] 0.0
          %337 = vst [vmem:[#allocation2 + $0x168] sm:$0xff] 0.0
          %338 = vst [vmem:[#allocation2 + $0x170] sm:$0xff] 0.0
          %339 = vst [vmem:[#allocation2 + $0x178] sm:$0xff] 0.0
          %340 = vst [vmem:[#allocation2 + $0x180] sm:$0xff] 0.0
          %341 = vst [vmem:[#allocation2 + $0x188] sm:$0xff] 0.0
          %342 = vst [vmem:[#allocation2 + $0x190] sm:$0xff] 0.0
          %343 = vst [vmem:[#allocation2 + $0x198] sm:$0xff] 0.0
          %344 = vst [vmem:[#allocation2 + $0x1a0] sm:$0xff] 0.0
          %345 = vst [vmem:[#allocation2 + $0x1a8] sm:$0xff] 0.0
          %346 = vst [vmem:[#allocation2 + $0x1b0] sm:$0xff] 0.0
          %347 = vst [vmem:[#allocation2 + $0x1b8] sm:$0xff] 0.0
          %348 = vst [vmem:[#allocation2 + $0x1c0] sm:$0xff] 0.0
          %349 = vst [vmem:[#allocation2 + $0x1c8] sm:$0xff] 0.0
          %350 = vst [vmem:[#allocation2 + $0x1d0] sm:$0xff] 0.0
          %351 = vst [vmem:[#allocation2 + $0x1d8] sm:$0xff] 0.0
          %352 = vst [vmem:[#allocation2 + $0x1e0] sm:$0xff] 0.0
          %353 = vst [vmem:[#allocation2 + $0x1e8] sm:$0xff] 0.0
          %354 = vst [vmem:[#allocation2 + $0x1f0] sm:$0xff] 0.0
          %355 = vst [vmem:[#allocation2 + $0x1f8] sm:$0xff] 0.0
        $region36: #{_lambda_.33} parent=31 // pred_fallthru
          _
        %s356 = smul.u32 %s26, 128
        %s357 = sshra.s32 %s356, 3
        %s358 = sand.u32 %s356, 7
        %s359 = smul.addr %s357, 4
        %s360 = scalar_lea.vmem %s277, %s359
        %v361 = vld [vmem:[%s360] sm:$0xf]
        %v362 = vld [vmem:[%s360 + $0x4] sm:$0xf]
        %v363 = vld [vmem:[%s360 + $0x8] sm:$0xf]
        %v364 = vld [vmem:[%s360 + $0xc] sm:$0xf]
        %v365 = vld [vmem:[%s360 + $0x10] sm:$0xf]
        %v366 = vld [vmem:[%s360 + $0x14] sm:$0xf]
        %v367 = vld [vmem:[%s360 + $0x18] sm:$0xf]
        %v368 = vld [vmem:[%s360 + $0x1c] sm:$0xf]
        %v369 = vld [vmem:[%s360 + $0x20] sm:$0xf]
        %v370 = vld [vmem:[%s360 + $0x24] sm:$0xf]
        %v371 = vld [vmem:[%s360 + $0x28] sm:$0xf]
        %v372 = vld [vmem:[%s360 + $0x2c] sm:$0xf]
        %v373 = vld [vmem:[%s360 + $0x30] sm:$0xf]
        %v374 = vld [vmem:[%s360 + $0x34] sm:$0xf]
        %v375 = vld [vmem:[%s360 + $0x38] sm:$0xf]
        %v376 = vld [vmem:[%s360 + $0x3c] sm:$0xf]
        %v377 = vld [vmem:[#allocation2] sm:$0xff]
        %v378 = vld [vmem:[#allocation2 + $0x8] sm:$0xff]
        %v379 = vld [vmem:[#allocation2 + $0x10] sm:$0xff]
        %v380 = vld [vmem:[#allocation2 + $0x18] sm:$0xff]
        %v381 = vld [vmem:[#allocation2 + $0x20] sm:$0xff]
        %v382 = vld [vmem:[#allocation2 + $0x28] sm:$0xff]
        %v383 = vld [vmem:[#allocation2 + $0x30] sm:$0xff]
        %v384 = vld [vmem:[#allocation2 + $0x38] sm:$0xff]
        %v385 = vld [vmem:[#allocation2 + $0x40] sm:$0xff]
        %v386 = vld [vmem:[#allocation2 + $0x48] sm:$0xff]
        %v387 = vld [vmem:[#allocation2 + $0x50] sm:$0xff]
        %v388 = vld [vmem:[#allocation2 + $0x58] sm:$0xff]
        %v389 = vld [vmem:[#allocation2 + $0x60] sm:$0xff]
        %v390 = vld [vmem:[#allocation2 + $0x68] sm:$0xff]
        %v391 = vld [vmem:[#allocation2 + $0x70] sm:$0xff]
        %v392 = vld [vmem:[#allocation2 + $0x78] sm:$0xff]
        %v393 = vld [vmem:[#allocation2 + $0x80] sm:$0xff]
        %v394 = vld [vmem:[#allocation2 + $0x88] sm:$0xff]
        %v395 = vld [vmem:[#allocation2 + $0x90] sm:$0xff]
        %v396 = vld [vmem:[#allocation2 + $0x98] sm:$0xff]
        %v397 = vld [vmem:[#allocation2 + $0xa0] sm:$0xff]
        %v398 = vld [vmem:[#allocation2 + $0xa8] sm:$0xff]
        %v399 = vld [vmem:[#allocation2 + $0xb0] sm:$0xff]
        %v400 = vld [vmem:[#allocation2 + $0xb8] sm:$0xff]
        %v401 = vld [vmem:[#allocation2 + $0xc0] sm:$0xff]
        %v402 = vld [vmem:[#allocation2 + $0xc8] sm:$0xff]
        %v403 = vld [vmem:[#allocation2 + $0xd0] sm:$0xff]
        %v404 = vld [vmem:[#allocation2 + $0xd8] sm:$0xff]
        %v405 = vld [vmem:[#allocation2 + $0xe0] sm:$0xff]
        %v406 = vld [vmem:[#allocation2 + $0xe8] sm:$0xff]
        %v407 = vld [vmem:[#allocation2 + $0xf0] sm:$0xff]
        %v408 = vld [vmem:[#allocation2 + $0xf8] sm:$0xff]
        %v409 = vld [vmem:[#allocation2 + $0x100] sm:$0xff]
        %v410 = vld [vmem:[#allocation2 + $0x108] sm:$0xff]
        %v411 = vld [vmem:[#allocation2 + $0x110] sm:$0xff]
        %v412 = vld [vmem:[#allocation2 + $0x118] sm:$0xff]
        %v413 = vld [vmem:[#allocation2 + $0x120] sm:$0xff]
        %v414 = vld [vmem:[#allocation2 + $0x128] sm:$0xff]
        %v415 = vld [vmem:[#allocation2 + $0x130] sm:$0xff]
        %v416 = vld [vmem:[#allocation2 + $0x138] sm:$0xff]
        %v417 = vld [vmem:[#allocation2 + $0x140] sm:$0xff]
        %v418 = vld [vmem:[#allocation2 + $0x148] sm:$0xff]
        %v419 = vld [vmem:[#allocation2 + $0x150] sm:$0xff]
        %v420 = vld [vmem:[#allocation2 + $0x158] sm:$0xff]
        %v421 = vld [vmem:[#allocation2 + $0x160] sm:$0xff]
        %v422 = vld [vmem:[#allocation2 + $0x168] sm:$0xff]
        %v423 = vld [vmem:[#allocation2 + $0x170] sm:$0xff]
        %v424 = vld [vmem:[#allocation2 + $0x178] sm:$0xff]
        %v425 = vld [vmem:[#allocation2 + $0x180] sm:$0xff]
        %v426 = vld [vmem:[#allocation2 + $0x188] sm:$0xff]
        %v427 = vld [vmem:[#allocation2 + $0x190] sm:$0xff]
        %v428 = vld [vmem:[#allocation2 + $0x198] sm:$0xff]
        %v429 = vld [vmem:[#allocation2 + $0x1a0] sm:$0xff]
        %v430 = vld [vmem:[#allocation2 + $0x1a8] sm:$0xff]
        %v431 = vld [vmem:[#allocation2 + $0x1b0] sm:$0xff]
        %v432 = vld [vmem:[#allocation2 + $0x1b8] sm:$0xff]
        %v433 = vld [vmem:[#allocation2 + $0x1c0] sm:$0xff]
        %v434 = vld [vmem:[#allocation2 + $0x1c8] sm:$0xff]
        %v435 = vld [vmem:[#allocation2 + $0x1d0] sm:$0xff]
        %v436 = vld [vmem:[#allocation2 + $0x1d8] sm:$0xff]
        %v437 = vld [vmem:[#allocation2 + $0x1e0] sm:$0xff]
        %v438 = vld [vmem:[#allocation2 + $0x1e8] sm:$0xff]
        %v439 = vld [vmem:[#allocation2 + $0x1f0] sm:$0xff]
        %v440 = vld [vmem:[#allocation2 + $0x1f8] sm:$0xff]
        %v441 = vld [vmem:[%s271] sm:$0xf]
        %v442 = vld [vmem:[%s271 + $0x4] sm:$0xf]
        %v443 = vld [vmem:[%s271 + $0x8] sm:$0xf]
        %v444 = vld [vmem:[%s271 + $0xc] sm:$0xf]
        %v445 = vld [vmem:[%s271 + $0x10] sm:$0xf]
        %v446 = vld [vmem:[%s271 + $0x14] sm:$0xf]
        %v447 = vld [vmem:[%s271 + $0x18] sm:$0xf]
        %v448 = vld [vmem:[%s271 + $0x1c] sm:$0xf]
        %v449 = vld [vmem:[%s271 + $0x20] sm:$0xf]
        %v450 = vld [vmem:[%s271 + $0x24] sm:$0xf]
        %v451 = vld [vmem:[%s271 + $0x28] sm:$0xf]
        %v452 = vld [vmem:[%s271 + $0x2c] sm:$0xf]
        %v453 = vld [vmem:[%s271 + $0x30] sm:$0xf]
        %v454 = vld [vmem:[%s271 + $0x34] sm:$0xf]
        %v455 = vld [vmem:[%s271 + $0x38] sm:$0xf]
        %v456 = vld [vmem:[%s271 + $0x3c] sm:$0xf]
        %v457 = vld [vmem:[%s271 + $0x40] sm:$0xf]
        %v458 = vld [vmem:[%s271 + $0x44] sm:$0xf]
        %v459 = vld [vmem:[%s271 + $0x48] sm:$0xf]
        %v460 = vld [vmem:[%s271 + $0x4c] sm:$0xf]
        %v461 = vld [vmem:[%s271 + $0x50] sm:$0xf]
        %v462 = vld [vmem:[%s271 + $0x54] sm:$0xf]
        %v463 = vld [vmem:[%s271 + $0x58] sm:$0xf]
        %v464 = vld [vmem:[%s271 + $0x5c] sm:$0xf]
        %v465 = vld [vmem:[%s271 + $0x60] sm:$0xf]
        %v466 = vld [vmem:[%s271 + $0x64] sm:$0xf]
        %v467 = vld [vmem:[%s271 + $0x68] sm:$0xf]
        %v468 = vld [vmem:[%s271 + $0x6c] sm:$0xf]
        %v469 = vld [vmem:[%s271 + $0x70] sm:$0xf]
        %v470 = vld [vmem:[%s271 + $0x74] sm:$0xf]
        %v471 = vld [vmem:[%s271 + $0x78] sm:$0xf]
        %v472 = vld [vmem:[%s271 + $0x7c] sm:$0xf]
        %v473 = vld [vmem:[%s271 + $0x80] sm:$0xf]
        %v474 = vld [vmem:[%s271 + $0x84] sm:$0xf]
        %v475 = vld [vmem:[%s271 + $0x88] sm:$0xf]
        %v476 = vld [vmem:[%s271 + $0x8c] sm:$0xf]
        %v477 = vld [vmem:[%s271 + $0x90] sm:$0xf]
        %v478 = vld [vmem:[%s271 + $0x94] sm:$0xf]
        %v479 = vld [vmem:[%s271 + $0x98] sm:$0xf]
        %v480 = vld [vmem:[%s271 + $0x9c] sm:$0xf]
        %v481 = vld [vmem:[%s271 + $0xa0] sm:$0xf]
        %v482 = vld [vmem:[%s271 + $0xa4] sm:$0xf]
        %v483 = vld [vmem:[%s271 + $0xa8] sm:$0xf]
        %v484 = vld [vmem:[%s271 + $0xac] sm:$0xf]
        %v485 = vld [vmem:[%s271 + $0xb0] sm:$0xf]
        %v486 = vld [vmem:[%s271 + $0xb4] sm:$0xf]
        %v487 = vld [vmem:[%s271 + $0xb8] sm:$0xf]
        %v488 = vld [vmem:[%s271 + $0xbc] sm:$0xf]
        %v489 = vld [vmem:[%s271 + $0xc0] sm:$0xf]
        %v490 = vld [vmem:[%s271 + $0xc4] sm:$0xf]
        %v491 = vld [vmem:[%s271 + $0xc8] sm:$0xf]
        %v492 = vld [vmem:[%s271 + $0xcc] sm:$0xf]
        %v493 = vld [vmem:[%s271 + $0xd0] sm:$0xf]
        %v494 = vld [vmem:[%s271 + $0xd4] sm:$0xf]
        %v495 = vld [vmem:[%s271 + $0xd8] sm:$0xf]
        %v496 = vld [vmem:[%s271 + $0xdc] sm:$0xf]
        %v497 = vld [vmem:[%s271 + $0xe0] sm:$0xf]
        %v498 = vld [vmem:[%s271 + $0xe4] sm:$0xf]
        %v499 = vld [vmem:[%s271 + $0xe8] sm:$0xf]
        %v500 = vld [vmem:[%s271 + $0xec] sm:$0xf]
        %v501 = vld [vmem:[%s271 + $0xf0] sm:$0xf]
        %v502 = vld [vmem:[%s271 + $0xf4] sm:$0xf]
        %v503 = vld [vmem:[%s271 + $0xf8] sm:$0xf]
        %v504 = vld [vmem:[%s271 + $0xfc] sm:$0xf]
        %v569 = vunpack.c.l.b16 %v441
        %v570 = vunpack.c.l.b16 %v442
        %v571 = vunpack.c.l.b16 %v443
        %v572 = vunpack.c.l.b16 %v444
        %v573 = vunpack.c.l.b16 %v445
        %v574 = vunpack.c.l.b16 %v446
        %v575 = vunpack.c.l.b16 %v447
        %v576 = vunpack.c.l.b16 %v448
        %v577 = vunpack.c.l.b16 %v449
        %v578 = vunpack.c.l.b16 %v450
        %v579 = vunpack.c.l.b16 %v451
        %v580 = vunpack.c.l.b16 %v452
        %v581 = vunpack.c.l.b16 %v453
        %v582 = vunpack.c.l.b16 %v454
        %v583 = vunpack.c.l.b16 %v455
        %v584 = vunpack.c.l.b16 %v456
        %v585 = vunpack.c.l.b16 %v457
        %v586 = vunpack.c.l.b16 %v458
        %v587 = vunpack.c.l.b16 %v459
        %v588 = vunpack.c.l.b16 %v460
        %v589 = vunpack.c.l.b16 %v461
        %v590 = vunpack.c.l.b16 %v462
        %v591 = vunpack.c.l.b16 %v463
        %v592 = vunpack.c.l.b16 %v464
        %v593 = vunpack.c.l.b16 %v465
        %v594 = vunpack.c.l.b16 %v466
        %v595 = vunpack.c.l.b16 %v467
        %v596 = vunpack.c.l.b16 %v468
        %v597 = vunpack.c.l.b16 %v469
        %v598 = vunpack.c.l.b16 %v470
        %v599 = vunpack.c.l.b16 %v471
        %v600 = vunpack.c.l.b16 %v472
        %v601 = vunpack.c.l.b16 %v473
        %v602 = vunpack.c.l.b16 %v474
        %v603 = vunpack.c.l.b16 %v475
        %v604 = vunpack.c.l.b16 %v476
        %v605 = vunpack.c.l.b16 %v477
        %v606 = vunpack.c.l.b16 %v478
        %v607 = vunpack.c.l.b16 %v479
        %v608 = vunpack.c.l.b16 %v480
        %v609 = vunpack.c.l.b16 %v481
        %v610 = vunpack.c.l.b16 %v482
        %v611 = vunpack.c.l.b16 %v483
        %v612 = vunpack.c.l.b16 %v484
        %v613 = vunpack.c.l.b16 %v485
        %v614 = vunpack.c.l.b16 %v486
        %v615 = vunpack.c.l.b16 %v487
        %v616 = vunpack.c.l.b16 %v488
        %v617 = vunpack.c.l.b16 %v489
        %v618 = vunpack.c.l.b16 %v490
        %v619 = vunpack.c.l.b16 %v491
        %v620 = vunpack.c.l.b16 %v492
        %v621 = vunpack.c.l.b16 %v493
        %v622 = vunpack.c.l.b16 %v494
        %v623 = vunpack.c.l.b16 %v495
        %v624 = vunpack.c.l.b16 %v496
        %v625 = vunpack.c.l.b16 %v497
        %v626 = vunpack.c.l.b16 %v498
        %v627 = vunpack.c.l.b16 %v499
        %v628 = vunpack.c.l.b16 %v500
        %v629 = vunpack.c.l.b16 %v501
        %v630 = vunpack.c.l.b16 %v502
        %v631 = vunpack.c.l.b16 %v503
        %v632 = vunpack.c.l.b16 %v504
        %v633 = vpack.c.b16 %v570, %v569
        %v634 = vpack.c.b16 %v572, %v571
        %v635 = vpack.c.b16 %v574, %v573
        %v636 = vpack.c.b16 %v576, %v575
        %v637 = vpack.c.b16 %v578, %v577
        %v638 = vpack.c.b16 %v580, %v579
        %v639 = vpack.c.b16 %v582, %v581
        %v640 = vpack.c.b16 %v584, %v583
        %v641 = vpack.c.b16 %v586, %v585
        %v642 = vpack.c.b16 %v588, %v587
        %v643 = vpack.c.b16 %v590, %v589
        %v644 = vpack.c.b16 %v592, %v591
        %v645 = vpack.c.b16 %v594, %v593
        %v646 = vpack.c.b16 %v596, %v595
        %v647 = vpack.c.b16 %v598, %v597
        %v648 = vpack.c.b16 %v600, %v599
        %v649 = vpack.c.b16 %v602, %v601
        %v650 = vpack.c.b16 %v604, %v603
        %v651 = vpack.c.b16 %v606, %v605
        %v652 = vpack.c.b16 %v608, %v607
        %v653 = vpack.c.b16 %v610, %v609
        %v654 = vpack.c.b16 %v612, %v611
        %v655 = vpack.c.b16 %v614, %v613
        %v656 = vpack.c.b16 %v616, %v615
        %v657 = vpack.c.b16 %v618, %v617
        %v658 = vpack.c.b16 %v620, %v619
        %v659 = vpack.c.b16 %v622, %v621
        %v660 = vpack.c.b16 %v624, %v623
        %v661 = vpack.c.b16 %v626, %v625
        %v662 = vpack.c.b16 %v628, %v627
        %v663 = vpack.c.b16 %v630, %v629
        %v664 = vpack.c.b16 %v632, %v631
        %v713 = vunpack.c.l.b16 %v361
        %v714 = vunpack.c.l.b16 %v362
        %v715 = vunpack.c.l.b16 %v363
        %v716 = vunpack.c.l.b16 %v364
        %v717 = vunpack.c.l.b16 %v365
        %v718 = vunpack.c.l.b16 %v366
        %v719 = vunpack.c.l.b16 %v367
        %v720 = vunpack.c.l.b16 %v368
        %v721 = vunpack.c.l.b16 %v369
        %v722 = vunpack.c.l.b16 %v370
        %v723 = vunpack.c.l.b16 %v371
        %v724 = vunpack.c.l.b16 %v372
        %v725 = vunpack.c.l.b16 %v373
        %v726 = vunpack.c.l.b16 %v374
        %v727 = vunpack.c.l.b16 %v375
        %v728 = vunpack.c.l.b16 %v376
        %v729 = vpack.c.b16 %v714, %v713
        %v730 = vpack.c.b16 %v716, %v715
        %v731 = vpack.c.b16 %v718, %v717
        %v732 = vpack.c.b16 %v720, %v719
        %v733 = vpack.c.b16 %v722, %v721
        %v734 = vpack.c.b16 %v724, %v723
        %v735 = vpack.c.b16 %v726, %v725
        %v736 = vpack.c.b16 %v728, %v727
        %745 = vmatpush.bf16.msra.mxu0 %v736
        %746 = vmatpush.bf16.msra.mxu0 %v735
        %747 = vmatpush.bf16.msra.mxu0 %v734
        %748 = vmatpush.bf16.msra.mxu0 %v733
        %749 = vmatpush.bf16.msra.mxu0 %v732
        %750 = vmatpush.bf16.msra.mxu0 %v731
        %751 = vmatpush.bf16.msra.mxu0 %v730
        %752 = vmatpush.bf16.msra.mxu0 %v729
        %753 = vmatmul.bf16.gmra.mxu0 %v633
        %v754 = vpop.f32.mrf.mxu0
        %v755 = vadd.f32 0.0, %v754
        %v756 = vpop.f32.mrf.mxu0
        %v757 = vadd.f32 0.0, %v756
        %758 = vmatmul.bf16.gmra.mxu0 %v634
        %v759 = vpop.f32.mrf.mxu0
        %v760 = vadd.f32 0.0, %v759
        %v761 = vpop.f32.mrf.mxu0
        %v762 = vadd.f32 0.0, %v761
        %763 = vmatmul.bf16.gmra.mxu0 %v635
        %v764 = vpop.f32.mrf.mxu0
        %v765 = vadd.f32 0.0, %v764
        %v766 = vpop.f32.mrf.mxu0
        %v767 = vadd.f32 0.0, %v766
        %768 = vmatmul.bf16.gmra.mxu0 %v636
        %v769 = vpop.f32.mrf.mxu0
        %v770 = vadd.f32 0.0, %v769
        %v771 = vpop.f32.mrf.mxu0
        %v772 = vadd.f32 0.0, %v771
        %773 = vmatmul.bf16.gmra.mxu0 %v637
        %v774 = vpop.f32.mrf.mxu0
        %v775 = vadd.f32 0.0, %v774
        %v776 = vpop.f32.mrf.mxu0
        %v777 = vadd.f32 0.0, %v776
        %778 = vmatmul.bf16.gmra.mxu0 %v638
        %v779 = vpop.f32.mrf.mxu0
        %v780 = vadd.f32 0.0, %v779
        %v781 = vpop.f32.mrf.mxu0
        %v782 = vadd.f32 0.0, %v781
        %783 = vmatmul.bf16.gmra.mxu0 %v639
        %v784 = vpop.f32.mrf.mxu0
        %v785 = vadd.f32 0.0, %v784
        %v786 = vpop.f32.mrf.mxu0
        %v787 = vadd.f32 0.0, %v786
        %788 = vmatmul.bf16.gmra.mxu0 %v640
        %v789 = vpop.f32.mrf.mxu0
        %v790 = vadd.f32 0.0, %v789
        %v791 = vpop.f32.mrf.mxu0
        %v792 = vadd.f32 0.0, %v791
        %793 = vmatmul.bf16.gmra.mxu0 %v641
        %v794 = vpop.f32.mrf.mxu0
        %v795 = vadd.f32 0.0, %v794
        %v796 = vpop.f32.mrf.mxu0
        %v797 = vadd.f32 0.0, %v796
        %798 = vmatmul.bf16.gmra.mxu0 %v642
        %v799 = vpop.f32.mrf.mxu0
        %v800 = vadd.f32 0.0, %v799
        %v801 = vpop.f32.mrf.mxu0
        %v802 = vadd.f32 0.0, %v801
        %803 = vmatmul.bf16.gmra.mxu0 %v643
        %v804 = vpop.f32.mrf.mxu0
        %v805 = vadd.f32 0.0, %v804
        %v806 = vpop.f32.mrf.mxu0
        %v807 = vadd.f32 0.0, %v806
        %808 = vmatmul.bf16.gmra.mxu0 %v644
        %v809 = vpop.f32.mrf.mxu0
        %v810 = vadd.f32 0.0, %v809
        %v811 = vpop.f32.mrf.mxu0
        %v812 = vadd.f32 0.0, %v811
        %813 = vmatmul.bf16.gmra.mxu0 %v645
        %v814 = vpop.f32.mrf.mxu0
        %v815 = vadd.f32 0.0, %v814
        %v816 = vpop.f32.mrf.mxu0
        %v817 = vadd.f32 0.0, %v816
        %818 = vmatmul.bf16.gmra.mxu0 %v646
        %v819 = vpop.f32.mrf.mxu0
        %v820 = vadd.f32 0.0, %v819
        %v821 = vpop.f32.mrf.mxu0
        %v822 = vadd.f32 0.0, %v821
        %823 = vmatmul.bf16.gmra.mxu0 %v647
        %v824 = vpop.f32.mrf.mxu0
        %v825 = vadd.f32 0.0, %v824
        %v826 = vpop.f32.mrf.mxu0
        %v827 = vadd.f32 0.0, %v826
        %828 = vmatmul.bf16.gmra.mxu0 %v648
        %v829 = vpop.f32.mrf.mxu0
        %v830 = vadd.f32 0.0, %v829
        %v831 = vpop.f32.mrf.mxu0
        %v832 = vadd.f32 0.0, %v831
        %833 = vmatmul.bf16.gmra.mxu0 %v649
        %v834 = vpop.f32.mrf.mxu0
        %v835 = vadd.f32 0.0, %v834
        %v836 = vpop.f32.mrf.mxu0
        %v837 = vadd.f32 0.0, %v836
        %838 = vmatmul.bf16.gmra.mxu0 %v650
        %v839 = vpop.f32.mrf.mxu0
        %v840 = vadd.f32 0.0, %v839
        %v841 = vpop.f32.mrf.mxu0
        %v842 = vadd.f32 0.0, %v841
        %843 = vmatmul.bf16.gmra.mxu0 %v651
        %v844 = vpop.f32.mrf.mxu0
        %v845 = vadd.f32 0.0, %v844
        %v846 = vpop.f32.mrf.mxu0
        %v847 = vadd.f32 0.0, %v846
        %848 = vmatmul.bf16.gmra.mxu0 %v652
        %v849 = vpop.f32.mrf.mxu0
        %v850 = vadd.f32 0.0, %v849
        %v851 = vpop.f32.mrf.mxu0
        %v852 = vadd.f32 0.0, %v851
        %853 = vmatmul.bf16.gmra.mxu0 %v653
        %v854 = vpop.f32.mrf.mxu0
        %v855 = vadd.f32 0.0, %v854
        %v856 = vpop.f32.mrf.mxu0
        %v857 = vadd.f32 0.0, %v856
        %858 = vmatmul.bf16.gmra.mxu0 %v654
        %v859 = vpop.f32.mrf.mxu0
        %v860 = vadd.f32 0.0, %v859
        %v861 = vpop.f32.mrf.mxu0
        %v862 = vadd.f32 0.0, %v861
        %863 = vmatmul.bf16.gmra.mxu0 %v655
        %v864 = vpop.f32.mrf.mxu0
        %v865 = vadd.f32 0.0, %v864
        %v866 = vpop.f32.mrf.mxu0
        %v867 = vadd.f32 0.0, %v866
        %868 = vmatmul.bf16.gmra.mxu0 %v656
        %v869 = vpop.f32.mrf.mxu0
        %v870 = vadd.f32 0.0, %v869
        %v871 = vpop.f32.mrf.mxu0
        %v872 = vadd.f32 0.0, %v871
        %873 = vmatmul.bf16.gmra.mxu0 %v657
        %v874 = vpop.f32.mrf.mxu0
        %v875 = vadd.f32 0.0, %v874
        %v876 = vpop.f32.mrf.mxu0
        %v877 = vadd.f32 0.0, %v876
        %878 = vmatmul.bf16.gmra.mxu0 %v658
        %v879 = vpop.f32.mrf.mxu0
        %v880 = vadd.f32 0.0, %v879
        %v881 = vpop.f32.mrf.mxu0
        %v882 = vadd.f32 0.0, %v881
        %883 = vmatmul.bf16.gmra.mxu0 %v659
        %v884 = vpop.f32.mrf.mxu0
        %v885 = vadd.f32 0.0, %v884
        %v886 = vpop.f32.mrf.mxu0
        %v887 = vadd.f32 0.0, %v886
        %888 = vmatmul.bf16.gmra.mxu0 %v660
        %v889 = vpop.f32.mrf.mxu0
        %v890 = vadd.f32 0.0, %v889
        %v891 = vpop.f32.mrf.mxu0
        %v892 = vadd.f32 0.0, %v891
        %893 = vmatmul.bf16.gmra.mxu0 %v661
        %v894 = vpop.f32.mrf.mxu0
        %v895 = vadd.f32 0.0, %v894
        %v896 = vpop.f32.mrf.mxu0
        %v897 = vadd.f32 0.0, %v896
        %898 = vmatmul.bf16.gmra.mxu0 %v662
        %v899 = vpop.f32.mrf.mxu0
        %v900 = vadd.f32 0.0, %v899
        %v901 = vpop.f32.mrf.mxu0
        %v902 = vadd.f32 0.0, %v901
        %903 = vmatmul.bf16.gmra.mxu0 %v663
        %v904 = vpop.f32.mrf.mxu0
        %v905 = vadd.f32 0.0, %v904
        %v906 = vpop.f32.mrf.mxu0
        %v907 = vadd.f32 0.0, %v906
        %908 = vmatmul.bf16.gmra.mxu0 %v664
        %v909 = vpop.f32.mrf.mxu0
        %v910 = vadd.f32 0.0, %v909
        %v911 = vpop.f32.mrf.mxu0
        %v912 = vadd.f32 0.0, %v911
        %913 = vdwg.mxu0
        %v914 = vadd.f32 %v377, %v755
        %v915 = vadd.f32 %v378, %v757
        %v916 = vadd.f32 %v379, %v760
        %v917 = vadd.f32 %v380, %v762
        %v918 = vadd.f32 %v381, %v765
        %v919 = vadd.f32 %v382, %v767
        %v920 = vadd.f32 %v383, %v770
        %v921 = vadd.f32 %v384, %v772
        %v922 = vadd.f32 %v385, %v775
        %v923 = vadd.f32 %v386, %v777
        %v924 = vadd.f32 %v387, %v780
        %v925 = vadd.f32 %v388, %v782
        %v926 = vadd.f32 %v389, %v785
        %v927 = vadd.f32 %v390, %v787
        %v928 = vadd.f32 %v391, %v790
        %v929 = vadd.f32 %v392, %v792
        %v930 = vadd.f32 %v393, %v795
        %v931 = vadd.f32 %v394, %v797
        %v932 = vadd.f32 %v395, %v800
        %v933 = vadd.f32 %v396, %v802
        %v934 = vadd.f32 %v397, %v805
        %v935 = vadd.f32 %v398, %v807
        %v936 = vadd.f32 %v399, %v810
        %v937 = vadd.f32 %v400, %v812
        %v938 = vadd.f32 %v401, %v815
        %v939 = vadd.f32 %v402, %v817
        %v940 = vadd.f32 %v403, %v820
        %v941 = vadd.f32 %v404, %v822
        %v942 = vadd.f32 %v405, %v825
        %v943 = vadd.f32 %v406, %v827
        %v944 = vadd.f32 %v407, %v830
        %v945 = vadd.f32 %v408, %v832
        %v946 = vadd.f32 %v409, %v835
        %v947 = vadd.f32 %v410, %v837
        %v948 = vadd.f32 %v411, %v840
        %v949 = vadd.f32 %v412, %v842
        %v950 = vadd.f32 %v413, %v845
        %v951 = vadd.f32 %v414, %v847
        %v952 = vadd.f32 %v415, %v850
        %v953 = vadd.f32 %v416, %v852
        %v954 = vadd.f32 %v417, %v855
        %v955 = vadd.f32 %v418, %v857
        %v956 = vadd.f32 %v419, %v860
        %v957 = vadd.f32 %v420, %v862
        %v958 = vadd.f32 %v421, %v865
        %v959 = vadd.f32 %v422, %v867
        %v960 = vadd.f32 %v423, %v870
        %v961 = vadd.f32 %v424, %v872
        %v962 = vadd.f32 %v425, %v875
        %v963 = vadd.f32 %v426, %v877
        %v964 = vadd.f32 %v427, %v880
        %v965 = vadd.f32 %v428, %v882
        %v966 = vadd.f32 %v429, %v885
        %v967 = vadd.f32 %v430, %v887
        %v968 = vadd.f32 %v431, %v890
        %v969 = vadd.f32 %v432, %v892
        %v970 = vadd.f32 %v433, %v895
        %v971 = vadd.f32 %v434, %v897
        %v972 = vadd.f32 %v435, %v900
        %v973 = vadd.f32 %v436, %v902
        %v974 = vadd.f32 %v437, %v905
        %v975 = vadd.f32 %v438, %v907
        %v976 = vadd.f32 %v439, %v910
        %v977 = vadd.f32 %v440, %v912
        %978 = vst [vmem:[#allocation2] sm:$0xff] %v914
        %979 = vst [vmem:[#allocation2 + $0x8] sm:$0xff] %v915
        %980 = vst [vmem:[#allocation2 + $0x10] sm:$0xff] %v916
        %981 = vst [vmem:[#allocation2 + $0x18] sm:$0xff] %v917
        %982 = vst [vmem:[#allocation2 + $0x20] sm:$0xff] %v918
        %983 = vst [vmem:[#allocation2 + $0x28] sm:$0xff] %v919
        %984 = vst [vmem:[#allocation2 + $0x30] sm:$0xff] %v920
        %985 = vst [vmem:[#allocation2 + $0x38] sm:$0xff] %v921
        %986 = vst [vmem:[#allocation2 + $0x40] sm:$0xff] %v922
        %987 = vst [vmem:[#allocation2 + $0x48] sm:$0xff] %v923
        %988 = vst [vmem:[#allocation2 + $0x50] sm:$0xff] %v924
        %989 = vst [vmem:[#allocation2 + $0x58] sm:$0xff] %v925
        %990 = vst [vmem:[#allocation2 + $0x60] sm:$0xff] %v926
        %991 = vst [vmem:[#allocation2 + $0x68] sm:$0xff] %v927
        %992 = vst [vmem:[#allocation2 + $0x70] sm:$0xff] %v928
        %993 = vst [vmem:[#allocation2 + $0x78] sm:$0xff] %v929
        %994 = vst [vmem:[#allocation2 + $0x80] sm:$0xff] %v930
        %995 = vst [vmem:[#allocation2 + $0x88] sm:$0xff] %v931
        %996 = vst [vmem:[#allocation2 + $0x90] sm:$0xff] %v932
        %997 = vst [vmem:[#allocation2 + $0x98] sm:$0xff] %v933
        %998 = vst [vmem:[#allocation2 + $0xa0] sm:$0xff] %v934
        %999 = vst [vmem:[#allocation2 + $0xa8] sm:$0xff] %v935
        %1000 = vst [vmem:[#allocation2 + $0xb0] sm:$0xff] %v936
        %1001 = vst [vmem:[#allocation2 + $0xb8] sm:$0xff] %v937
        %1002 = vst [vmem:[#allocation2 + $0xc0] sm:$0xff] %v938
        %1003 = vst [vmem:[#allocation2 + $0xc8] sm:$0xff] %v939
        %1004 = vst [vmem:[#allocation2 + $0xd0] sm:$0xff] %v940
        %1005 = vst [vmem:[#allocation2 + $0xd8] sm:$0xff] %v941
        %1006 = vst [vmem:[#allocation2 + $0xe0] sm:$0xff] %v942
        %1007 = vst [vmem:[#allocation2 + $0xe8] sm:$0xff] %v943
        %1008 = vst [vmem:[#allocation2 + $0xf0] sm:$0xff] %v944
        %1009 = vst [vmem:[#allocation2 + $0xf8] sm:$0xff] %v945
        %1010 = vst [vmem:[#allocation2 + $0x100] sm:$0xff] %v946
        %1011 = vst [vmem:[#allocation2 + $0x108] sm:$0xff] %v947
        %1012 = vst [vmem:[#allocation2 + $0x110] sm:$0xff] %v948
        %1013 = vst [vmem:[#allocation2 + $0x118] sm:$0xff] %v949
        %1014 = vst [vmem:[#allocation2 + $0x120] sm:$0xff] %v950
        %1015 = vst [vmem:[#allocation2 + $0x128] sm:$0xff] %v951
        %1016 = vst [vmem:[#allocation2 + $0x130] sm:$0xff] %v952
        %1017 = vst [vmem:[#allocation2 + $0x138] sm:$0xff] %v953
        %1018 = vst [vmem:[#allocation2 + $0x140] sm:$0xff] %v954
        %1019 = vst [vmem:[#allocation2 + $0x148] sm:$0xff] %v955
        %1020 = vst [vmem:[#allocation2 + $0x150] sm:$0xff] %v956
        %1021 = vst [vmem:[#allocation2 + $0x158] sm:$0xff] %v957
        %1022 = vst [vmem:[#allocation2 + $0x160] sm:$0xff] %v958
        %1023 = vst [vmem:[#allocation2 + $0x168] sm:$0xff] %v959
        %1024 = vst [vmem:[#allocation2 + $0x170] sm:$0xff] %v960
        %1025 = vst [vmem:[#allocation2 + $0x178] sm:$0xff] %v961
        %1026 = vst [vmem:[#allocation2 + $0x180] sm:$0xff] %v962
        %1027 = vst [vmem:[#allocation2 + $0x188] sm:$0xff] %v963
        %1028 = vst [vmem:[#allocation2 + $0x190] sm:$0xff] %v964
        %1029 = vst [vmem:[#allocation2 + $0x198] sm:$0xff] %v965
        %1030 = vst [vmem:[#allocation2 + $0x1a0] sm:$0xff] %v966
        %1031 = vst [vmem:[#allocation2 + $0x1a8] sm:$0xff] %v967
        %1032 = vst [vmem:[#allocation2 + $0x1b0] sm:$0xff] %v968
        %1033 = vst [vmem:[#allocation2 + $0x1b8] sm:$0xff] %v969
        %1034 = vst [vmem:[#allocation2 + $0x1c0] sm:$0xff] %v970
        %1035 = vst [vmem:[#allocation2 + $0x1c8] sm:$0xff] %v971
        %1036 = vst [vmem:[#allocation2 + $0x1d0] sm:$0xff] %v972
        %1037 = vst [vmem:[#allocation2 + $0x1d8] sm:$0xff] %v973
        %1038 = vst [vmem:[#allocation2 + $0x1e0] sm:$0xff] %v974
        %1039 = vst [vmem:[#allocation2 + $0x1e8] sm:$0xff] %v975
        %1040 = vst [vmem:[#allocation2 + $0x1f0] sm:$0xff] %v976
        %1041 = vst [vmem:[#allocation2 + $0x1f8] sm:$0xff] %v977
        // Predicated region
        $region37: #{_lambda_.33} parent=31 // pred_check
          %p1042 = pneg %p288
        $region38: #{_lambda_.33} parent=31 // pred_check_branch
          %1044 = sbr.rel (%p1042) target = $region40
        $region39: #{_lambda_.33} parent=31 // pred_region
          %v1045 = vld [vmem:[#allocation2] sm:$0xff]
          %v1046 = vld [vmem:[#allocation2 + $0x8] sm:$0xff]
          %v1047 = vld [vmem:[#allocation2 + $0x10] sm:$0xff]
          %v1048 = vld [vmem:[#allocation2 + $0x18] sm:$0xff]
          %v1049 = vld [vmem:[#allocation2 + $0x20] sm:$0xff]
          %v1050 = vld [vmem:[#allocation2 + $0x28] sm:$0xff]
          %v1051 = vld [vmem:[#allocation2 + $0x30] sm:$0xff]
          %v1052 = vld [vmem:[#allocation2 + $0x38] sm:$0xff]
          %v1053 = vld [vmem:[#allocation2 + $0x40] sm:$0xff]
          %v1054 = vld [vmem:[#allocation2 + $0x48] sm:$0xff]
          %v1055 = vld [vmem:[#allocation2 + $0x50] sm:$0xff]
          %v1056 = vld [vmem:[#allocation2 + $0x58] sm:$0xff]
          %v1057 = vld [vmem:[#allocation2 + $0x60] sm:$0xff]
          %v1058 = vld [vmem:[#allocation2 + $0x68] sm:$0xff]
          %v1059 = vld [vmem:[#allocation2 + $0x70] sm:$0xff]
          %v1060 = vld [vmem:[#allocation2 + $0x78] sm:$0xff]
          %v1061 = vld [vmem:[#allocation2 + $0x80] sm:$0xff]
          %v1062 = vld [vmem:[#allocation2 + $0x88] sm:$0xff]
          %v1063 = vld [vmem:[#allocation2 + $0x90] sm:$0xff]
          %v1064 = vld [vmem:[#allocation2 + $0x98] sm:$0xff]
          %v1065 = vld [vmem:[#allocation2 + $0xa0] sm:$0xff]
          %v1066 = vld [vmem:[#allocation2 + $0xa8] sm:$0xff]
          %v1067 = vld [vmem:[#allocation2 + $0xb0] sm:$0xff]
          %v1068 = vld [vmem:[#allocation2 + $0xb8] sm:$0xff]
          %v1069 = vld [vmem:[#allocation2 + $0xc0] sm:$0xff]
          %v1070 = vld [vmem:[#allocation2 + $0xc8] sm:$0xff]
          %v1071 = vld [vmem:[#allocation2 + $0xd0] sm:$0xff]
          %v1072 = vld [vmem:[#allocation2 + $0xd8] sm:$0xff]
          %v1073 = vld [vmem:[#allocation2 + $0xe0] sm:$0xff]
          %v1074 = vld [vmem:[#allocation2 + $0xe8] sm:$0xff]
          %v1075 = vld [vmem:[#allocation2 + $0xf0] sm:$0xff]
          %v1076 = vld [vmem:[#allocation2 + $0xf8] sm:$0xff]
          %v1077 = vld [vmem:[#allocation2 + $0x100] sm:$0xff]
          %v1078 = vld [vmem:[#allocation2 + $0x108] sm:$0xff]
          %v1079 = vld [vmem:[#allocation2 + $0x110] sm:$0xff]
          %v1080 = vld [vmem:[#allocation2 + $0x118] sm:$0xff]
          %v1081 = vld [vmem:[#allocation2 + $0x120] sm:$0xff]
          %v1082 = vld [vmem:[#allocation2 + $0x128] sm:$0xff]
          %v1083 = vld [vmem:[#allocation2 + $0x130] sm:$0xff]
          %v1084 = vld [vmem:[#allocation2 + $0x138] sm:$0xff]
          %v1085 = vld [vmem:[#allocation2 + $0x140] sm:$0xff]
          %v1086 = vld [vmem:[#allocation2 + $0x148] sm:$0xff]
          %v1087 = vld [vmem:[#allocation2 + $0x150] sm:$0xff]
          %v1088 = vld [vmem:[#allocation2 + $0x158] sm:$0xff]
          %v1089 = vld [vmem:[#allocation2 + $0x160] sm:$0xff]
          %v1090 = vld [vmem:[#allocation2 + $0x168] sm:$0xff]
          %v1091 = vld [vmem:[#allocation2 + $0x170] sm:$0xff]
          %v1092 = vld [vmem:[#allocation2 + $0x178] sm:$0xff]
          %v1093 = vld [vmem:[#allocation2 + $0x180] sm:$0xff]
          %v1094 = vld [vmem:[#allocation2 + $0x188] sm:$0xff]
          %v1095 = vld [vmem:[#allocation2 + $0x190] sm:$0xff]
          %v1096 = vld [vmem:[#allocation2 + $0x198] sm:$0xff]
          %v1097 = vld [vmem:[#allocation2 + $0x1a0] sm:$0xff]
          %v1098 = vld [vmem:[#allocation2 + $0x1a8] sm:$0xff]
          %v1099 = vld [vmem:[#allocation2 + $0x1b0] sm:$0xff]
          %v1100 = vld [vmem:[#allocation2 + $0x1b8] sm:$0xff]
          %v1101 = vld [vmem:[#allocation2 + $0x1c0] sm:$0xff]
          %v1102 = vld [vmem:[#allocation2 + $0x1c8] sm:$0xff]
          %v1103 = vld [vmem:[#allocation2 + $0x1d0] sm:$0xff]
          %v1104 = vld [vmem:[#allocation2 + $0x1d8] sm:$0xff]
          %v1105 = vld [vmem:[#allocation2 + $0x1e0] sm:$0xff]
          %v1106 = vld [vmem:[#allocation2 + $0x1e8] sm:$0xff]
          %v1107 = vld [vmem:[#allocation2 + $0x1f0] sm:$0xff]
          %v1108 = vld [vmem:[#allocation2 + $0x1f8] sm:$0xff]
          %v1109 = vld [vmem:[%s2] sm:$0x1]
          %v1111 = vperm.slane %v1109, 0
          %v1113 = vadd.f32 %v1045, %v1111
          %v1114 = vadd.f32 %v1046, %v1111
          %v1115 = vadd.f32 %v1047, %v1111
          %v1116 = vadd.f32 %v1048, %v1111
          %v1117 = vadd.f32 %v1049, %v1111
          %v1118 = vadd.f32 %v1050, %v1111
          %v1119 = vadd.f32 %v1051, %v1111
          %v1120 = vadd.f32 %v1052, %v1111
          %v1121 = vadd.f32 %v1053, %v1111
          %v1122 = vadd.f32 %v1054, %v1111
          %v1123 = vadd.f32 %v1055, %v1111
          %v1124 = vadd.f32 %v1056, %v1111
          %v1125 = vadd.f32 %v1057, %v1111
          %v1126 = vadd.f32 %v1058, %v1111
          %v1127 = vadd.f32 %v1059, %v1111
          %v1128 = vadd.f32 %v1060, %v1111
          %v1129 = vadd.f32 %v1061, %v1111
          %v1130 = vadd.f32 %v1062, %v1111
          %v1131 = vadd.f32 %v1063, %v1111
          %v1132 = vadd.f32 %v1064, %v1111
          %v1133 = vadd.f32 %v1065, %v1111
          %v1134 = vadd.f32 %v1066, %v1111
          %v1135 = vadd.f32 %v1067, %v1111
          %v1136 = vadd.f32 %v1068, %v1111
          %v1137 = vadd.f32 %v1069, %v1111
          %v1138 = vadd.f32 %v1070, %v1111
          %v1139 = vadd.f32 %v1071, %v1111
          %v1140 = vadd.f32 %v1072, %v1111
          %v1141 = vadd.f32 %v1073, %v1111
          %v1142 = vadd.f32 %v1074, %v1111
          %v1143 = vadd.f32 %v1075, %v1111
          %v1144 = vadd.f32 %v1076, %v1111
          %v1145 = vadd.f32 %v1077, %v1111
          %v1146 = vadd.f32 %v1078, %v1111
          %v1147 = vadd.f32 %v1079, %v1111
          %v1148 = vadd.f32 %v1080, %v1111
          %v1149 = vadd.f32 %v1081, %v1111
          %v1150 = vadd.f32 %v1082, %v1111
          %v1151 = vadd.f32 %v1083, %v1111
          %v1152 = vadd.f32 %v1084, %v1111
          %v1153 = vadd.f32 %v1085, %v1111
          %v1154 = vadd.f32 %v1086, %v1111
          %v1155 = vadd.f32 %v1087, %v1111
          %v1156 = vadd.f32 %v1088, %v1111
          %v1157 = vadd.f32 %v1089, %v1111
          %v1158 = vadd.f32 %v1090, %v1111
          %v1159 = vadd.f32 %v1091, %v1111
          %v1160 = vadd.f32 %v1092, %v1111
          %v1161 = vadd.f32 %v1093, %v1111
          %v1162 = vadd.f32 %v1094, %v1111
          %v1163 = vadd.f32 %v1095, %v1111
          %v1164 = vadd.f32 %v1096, %v1111
          %v1165 = vadd.f32 %v1097, %v1111
          %v1166 = vadd.f32 %v1098, %v1111
          %v1167 = vadd.f32 %v1099, %v1111
          %v1168 = vadd.f32 %v1100, %v1111
          %v1169 = vadd.f32 %v1101, %v1111
          %v1170 = vadd.f32 %v1102, %v1111
          %v1171 = vadd.f32 %v1103, %v1111
          %v1172 = vadd.f32 %v1104, %v1111
          %v1173 = vadd.f32 %v1105, %v1111
          %v1174 = vadd.f32 %v1106, %v1111
          %v1175 = vadd.f32 %v1107, %v1111
          %v1176 = vadd.f32 %v1108, %v1111
          %1177 = vst [vmem:[%s259] sm:$0x3] 0.0
          %v1178 = vtanh.pop %v1113
          %v1179 = vtanh.pop %v1114
          %v1180 = vtanh.pop %v1115
          %v1181 = vtanh.pop %v1116
          %v1182 = vtanh.pop %v1117
          %v1183 = vtanh.pop %v1118
          %v1184 = vtanh.pop %v1119
          %v1185 = vtanh.pop %v1120
          %v1186 = vtanh.pop %v1121
          %v1187 = vtanh.pop %v1122
          %v1188 = vtanh.pop %v1123
          %v1189 = vtanh.pop %v1124
          %v1190 = vtanh.pop %v1125
          %v1191 = vtanh.pop %v1126
          %v1192 = vtanh.pop %v1127
          %v1193 = vtanh.pop %v1128
          %v1194 = vtanh.pop %v1129
          %v1195 = vtanh.pop %v1130
          %v1196 = vtanh.pop %v1131
          %v1197 = vtanh.pop %v1132
          %v1198 = vtanh.pop %v1133
          %v1199 = vtanh.pop %v1134
          %v1200 = vtanh.pop %v1135
          %v1201 = vtanh.pop %v1136
          %v1202 = vtanh.pop %v1137
          %v1203 = vtanh.pop %v1138
          %v1204 = vtanh.pop %v1139
          %v1205 = vtanh.pop %v1140
          %v1206 = vtanh.pop %v1141
          %v1207 = vtanh.pop %v1142
          %v1208 = vtanh.pop %v1143
          %v1209 = vtanh.pop %v1144
          %v1210 = vtanh.pop %v1145
          %v1211 = vtanh.pop %v1146
          %v1212 = vtanh.pop %v1147
          %v1213 = vtanh.pop %v1148
          %v1214 = vtanh.pop %v1149
          %v1215 = vtanh.pop %v1150
          %v1216 = vtanh.pop %v1151
          %v1217 = vtanh.pop %v1152
          %v1218 = vtanh.pop %v1153
          %v1219 = vtanh.pop %v1154
          %v1220 = vtanh.pop %v1155
          %v1221 = vtanh.pop %v1156
          %v1222 = vtanh.pop %v1157
          %v1223 = vtanh.pop %v1158
          %v1224 = vtanh.pop %v1159
          %v1225 = vtanh.pop %v1160
          %v1226 = vtanh.pop %v1161
          %v1227 = vtanh.pop %v1162
          %v1228 = vtanh.pop %v1163
          %v1229 = vtanh.pop %v1164
          %v1230 = vtanh.pop %v1165
          %v1231 = vtanh.pop %v1166
          %v1232 = vtanh.pop %v1167
          %v1233 = vtanh.pop %v1168
          %v1234 = vtanh.pop %v1169
          %v1235 = vtanh.pop %v1170
          %v1236 = vtanh.pop %v1171
          %v1237 = vtanh.pop %v1172
          %v1238 = vtanh.pop %v1173
          %v1239 = vtanh.pop %v1174
          %v1240 = vtanh.pop %v1175
          %v1241 = vtanh.pop %v1176
          %1242 = vst [vmem:[%s286] sm:$0xff] %v1178
          %1243 = vst [vmem:[%s286 + $0x8] sm:$0xff] %v1179
          %1244 = vst [vmem:[%s286 + $0x10] sm:$0xff] %v1180
          %1245 = vst [vmem:[%s286 + $0x18] sm:$0xff] %v1181
          %1246 = vst [vmem:[%s286 + $0x20] sm:$0xff] %v1182
          %1247 = vst [vmem:[%s286 + $0x28] sm:$0xff] %v1183
          %1248 = vst [vmem:[%s286 + $0x30] sm:$0xff] %v1184
          %1249 = vst [vmem:[%s286 + $0x38] sm:$0xff] %v1185
          %1250 = vst [vmem:[%s286 + $0x40] sm:$0xff] %v1186
          %1251 = vst [vmem:[%s286 + $0x48] sm:$0xff] %v1187
          %1252 = vst [vmem:[%s286 + $0x50] sm:$0xff] %v1188
          %1253 = vst [vmem:[%s286 + $0x58] sm:$0xff] %v1189
          %1254 = vst [vmem:[%s286 + $0x60] sm:$0xff] %v1190
          %1255 = vst [vmem:[%s286 + $0x68] sm:$0xff] %v1191
          %1256 = vst [vmem:[%s286 + $0x70] sm:$0xff] %v1192
          %1257 = vst [vmem:[%s286 + $0x78] sm:$0xff] %v1193
          %1258 = vst [vmem:[%s286 + $0x80] sm:$0xff] %v1194
          %1259 = vst [vmem:[%s286 + $0x88] sm:$0xff] %v1195
          %1260 = vst [vmem:[%s286 + $0x90] sm:$0xff] %v1196
          %1261 = vst [vmem:[%s286 + $0x98] sm:$0xff] %v1197
          %1262 = vst [vmem:[%s286 + $0xa0] sm:$0xff] %v1198
          %1263 = vst [vmem:[%s286 + $0xa8] sm:$0xff] %v1199
          %1264 = vst [vmem:[%s286 + $0xb0] sm:$0xff] %v1200
          %1265 = vst [vmem:[%s286 + $0xb8] sm:$0xff] %v1201
          %1266 = vst [vmem:[%s286 + $0xc0] sm:$0xff] %v1202
          %1267 = vst [vmem:[%s286 + $0xc8] sm:$0xff] %v1203
          %1268 = vst [vmem:[%s286 + $0xd0] sm:$0xff] %v1204
          %1269 = vst [vmem:[%s286 + $0xd8] sm:$0xff] %v1205
          %1270 = vst [vmem:[%s286 + $0xe0] sm:$0xff] %v1206
          %1271 = vst [vmem:[%s286 + $0xe8] sm:$0xff] %v1207
          %1272 = vst [vmem:[%s286 + $0xf0] sm:$0xff] %v1208
          %1273 = vst [vmem:[%s286 + $0xf8] sm:$0xff] %v1209
          %1274 = vst [vmem:[%s286 + $0x100] sm:$0xff] %v1210
          %1275 = vst [vmem:[%s286 + $0x108] sm:$0xff] %v1211
          %1276 = vst [vmem:[%s286 + $0x110] sm:$0xff] %v1212
          %1277 = vst [vmem:[%s286 + $0x118] sm:$0xff] %v1213
          %1278 = vst [vmem:[%s286 + $0x120] sm:$0xff] %v1214
          %1279 = vst [vmem:[%s286 + $0x128] sm:$0xff] %v1215
          %1280 = vst [vmem:[%s286 + $0x130] sm:$0xff] %v1216
          %1281 = vst [vmem:[%s286 + $0x138] sm:$0xff] %v1217
          %1282 = vst [vmem:[%s286 + $0x140] sm:$0xff] %v1218
          %1283 = vst [vmem:[%s286 + $0x148] sm:$0xff] %v1219
          %1284 = vst [vmem:[%s286 + $0x150] sm:$0xff] %v1220
          %1285 = vst [vmem:[%s286 + $0x158] sm:$0xff] %v1221
          %1286 = vst [vmem:[%s286 + $0x160] sm:$0xff] %v1222
          %1287 = vst [vmem:[%s286 + $0x168] sm:$0xff] %v1223
          %1288 = vst [vmem:[%s286 + $0x170] sm:$0xff] %v1224
          %1289 = vst [vmem:[%s286 + $0x178] sm:$0xff] %v1225
          %1290 = vst [vmem:[%s286 + $0x180] sm:$0xff] %v1226
          %1291 = vst [vmem:[%s286 + $0x188] sm:$0xff] %v1227
          %1292 = vst [vmem:[%s286 + $0x190] sm:$0xff] %v1228
          %1293 = vst [vmem:[%s286 + $0x198] sm:$0xff] %v1229
          %1294 = vst [vmem:[%s286 + $0x1a0] sm:$0xff] %v1230
          %1295 = vst [vmem:[%s286 + $0x1a8] sm:$0xff] %v1231
          %1296 = vst [vmem:[%s286 + $0x1b0] sm:$0xff] %v1232
          %1297 = vst [vmem:[%s286 + $0x1b8] sm:$0xff] %v1233
          %1298 = vst [vmem:[%s286 + $0x1c0] sm:$0xff] %v1234
          %1299 = vst [vmem:[%s286 + $0x1c8] sm:$0xff] %v1235
          %1300 = vst [vmem:[%s286 + $0x1d0] sm:$0xff] %v1236
          %1301 = vst [vmem:[%s286 + $0x1d8] sm:$0xff] %v1237
          %1302 = vst [vmem:[%s286 + $0x1e0] sm:$0xff] %v1238
          %1303 = vst [vmem:[%s286 + $0x1e8] sm:$0xff] %v1239
          %1304 = vst [vmem:[%s286 + $0x1f0] sm:$0xff] %v1240
          %1305 = vst [vmem:[%s286 + $0x1f8] sm:$0xff] %v1241
        $region40: #{_lambda_.33} parent=31 // pred_fallthru
          _
        %s1306 = smul.u32 64, %s25
        %p1307 = scmp.lt.s32.totalorder %s24, 3
        %s1308 = scalar_select %p1307, %s24, 3
        %p1309 = scmp.lt.s32.totalorder %s1306, 63
        %s1310 = scalar_select %p1309, %s1306, 63
        %s1311 = smul.addr %s1308, 64
        %s1312 = sadd.s32 %s1310, %s1311
        %s1313 = smul.addr %s1312, 8
        %s1314 = scalar_lea.vmem %s3, %s1313
        %s1315 = sand.u32 %s153, 1
        %s1316 = scalar_lea.sflag [#allocation4], %s1315
        %s1317 = sand.u32 %s153, 1
        %s1318 = smul.addr %s1317, 2
        %s1319 = scalar_lea.vmem [#allocation3], %s1318
        // Predicated region
        $region41: #{_lambda_.33} parent=31 // pred_check
          %p1320 = pneg %p135
        $region42: #{_lambda_.33} parent=31 // pred_check_branch
          %1322 = sbr.rel (%p1320) target = $region44
        $region43: #{_lambda_.33} parent=31 // pred_region
          %s1323 = smul.u32 64, %s25
        $region44: #{_lambda_.33} parent=31 // pred_fallthru
          _
        // Predicated region
        $region45: #{_lambda_.33} parent=31 // pred_check
          %p1324 = pneg %p163
        $region46: #{_lambda_.33} parent=31 // pred_check_branch
          %1326 = sbr.rel (%p1324) target = $region48
        $region47: #{_lambda_.33} parent=31 // pred_region
          %1328 = vsyncadd %s1316, 0
          %s1329 = sadd.s32 %s25, %s24
          %s1330 = smul.addr %s1329, 2
          %s1331 = scalar_lea.hbm %s4, %s1330
          %s1333 = sshll.u32 %s1319, 4
          %s1334 = int_to_ptr.vmem [resolvable:$true] %s1333
          %s1335 = sshll.u32 %s1331, 4
          %s1336 = int_to_ptr.hbm [resolvable:$true] %s1335
          %1338 = dma.vmem_to_hbm [thread:$0]  %s1334, 32, %s1336, %s1316
        $region48: #{_lambda_.33} parent=31 // pred_fallthru
          _
      $region32: #{_lambda_.33} parent=5 // pred_fallthru
        _
      %p1339 = scmp.le.s32.totalorder 2, %s14
      // Predicated region
      $region49: #{_lambda_.33} parent=5 // pred_check
        %p1340 = pneg %p1339
      $region50: #{_lambda_.33} parent=5 // pred_check_branch
        %1342 = sbr.rel (%p1340) target = $region52
      $region51: #{_lambda_.33} parent=5 // pred_region
        %s1343 = ssub.s32 %s14, 2
        // Predicated region
        $region53: #{_lambda_.33} parent=51 // pred_check
          %p1344 = pneg %p141
        $region54: #{_lambda_.33} parent=51 // pred_check_branch
          %1346 = sbr.rel (%p1344) target = $region56
        $region55: #{_lambda_.33} parent=51 // pred_region
          %s1347 = smul.u32 64, %s28
          %p1348 = scmp.lt.s32.totalorder %s27, 3
          %s1349 = scalar_select %p1348, %s27, 3
          %p1350 = scmp.lt.s32.totalorder %s1347, 63
          %s1351 = scalar_select %p1350, %s1347, 63
          %s1352 = smul.addr %s1349, 64
          %s1353 = sadd.s32 %s1351, %s1352
          %s1354 = smul.addr %s1353, 8
          %s1355 = scalar_lea.vmem %s3, %s1354
        $region56: #{_lambda_.33} parent=51 // pred_fallthru
          _
        // Predicated region
        $region57: #{_lambda_.33} parent=51 // pred_check
          %p1356 = pneg %p169
        $region58: #{_lambda_.33} parent=51 // pred_check_branch
          %1358 = sbr.rel (%p1356) target = $region60
        $region59: #{_lambda_.33} parent=51 // pred_region
          %s1359 = sand.u32 %s154, 1
          %s1360 = scalar_lea.sflag [#allocation4], %s1359
          %s1361 = sand.u32 %s154, 1
          %s1362 = smul.addr %s1361, 2
          %s1363 = scalar_lea.vmem [#allocation3], %s1362
          %1365 = dma.done %s1360, 32
        $region60: #{_lambda_.33} parent=51 // pred_fallthru
          _
      $region52: #{_lambda_.33} parent=5 // pred_fallthru
        _
    $region6: #{_lambda_.33} parent=1 // loop_footer
      %s18 = sadd.s32 1, %s14
    $region7: #{_lambda_.33} parent=1 // loop_footer_branch
      %13 = sbr.rel target = $region3
    $region8: #{_lambda_.33} parent=1 // loop_exit
      _
    %1366 = vsyncpa [#allocation4], 1
    %s1367 = scalar_lea.sflag [#allocation4], 1
    %1368 = vsyncpa %s1367, 1

</llo_original>
